<compile_context>
chip_gen: v7x
topology: tpu7x:2x2x1
jax: 0.10.0
libtpu: 0.0.40
codegen_flags: <defaults>
</compile_context>

<pallas_src>
import functools

import jax
import jax.numpy as jnp
import numpy as np
from jax.experimental import pallas as pl
from jax.experimental.pallas import tpu as pltpu

# ---------------------------------------------------------------------------
# Static configuration (the constant tap/pool matrices bake in these shapes).
# ---------------------------------------------------------------------------
BATCH = 2
IMG = 32
N_CLASSES = 1            # TODO(synk): n_classes > 1 would swap the mul+reduce head for a small dot
FEAT_DIM = 1000          # FishNet201 emits 1000 features before last_linear
FEAT_PAD = 1024
CPAD = 128               # lane-width channel padding inside the fused tail
RES_HW = 8               # spatial size entering the residual block (32/2/2)
RES_M = BATCH * RES_HW * RES_HW
POOL_ROWS = 8            # sublane-padded batch rows for pooled/feature tensors
MAX_TK = 512             # single-K-tile fast-path threshold


def _round_up(x, m):
    return (x + m - 1) // m * m


def _pick_tm(m):
    # Prefer >= 2 M tiles (keeps both v7x TensorCores busy via "parallel"
    # semantics) while capping at 256 rows (matches v6e's 256-wide MXU).
    if m >= 512:
        return 256
    if m >= 16 and m % 16 == 0:
        return m // 2
    return m


# ---------------------------------------------------------------------------
# Stem GEMM kernels:  C = relu(A @ B + bias), bf16 in / bf16 out, f32 accum.
# ---------------------------------------------------------------------------
def _gemm_fast_kernel(a_ref, b_ref, bias_ref, o_ref, *, apply_relu):
    # Single K tile: dot straight to the output — no VMEM accumulator pass.
    acc = jnp.dot(a_ref[...], b_ref[...], preferred_element_type=jnp.float32)
    acc = acc + bias_ref[...]
    if apply_relu:
        acc = jnp.maximum(acc, 0.0)
    o_ref[...] = acc.astype(o_ref.dtype)


def _gemm_acc_kernel(a_ref, b_ref, bias_ref, o_ref, acc_ref, *, apply_relu):
    # General K-tiled path (unused at these shapes, kept for generality).
    kk = pl.program_id(2)
    prod = jnp.dot(a_ref[...], b_ref[...], preferred_element_type=jnp.float32)

    @pl.when(kk == 0)
    def _():
        acc_ref[...] = prod           # write, don't zero-fill then accumulate

    @pl.when(kk > 0)
    def _():
        acc_ref[...] += prod

    @pl.when(kk == pl.num_programs(2) - 1)
    def _():
        acc = acc_ref[...] + bias_ref[...]
        if apply_relu:
            acc = jnp.maximum(acc, 0.0)
        o_ref[...] = acc.astype(o_ref.dtype)


def gemm_bias_act(a, b, bias, *, apply_relu=True):
    """relu(A @ B + bias).  A:(M,K) bf16, B:(K,N) bf16 (K,N multiples of 128),
    bias:(1,N) f32.  Returns (M,N) bf16."""
    m, k = a.shape
    k2, n = b.shape
    assert k == k2 and k % 128 == 0 and n % 128 == 0

    tm = _pick_tm(m)
    m_pad = _round_up(m, tm)
    if m_pad != m:
        a = jnp.pad(a, ((0, m_pad - m), (0, 0)))
    tn = 256 if n % 256 == 0 else 128

    if k <= MAX_TK:
        out = pl.pallas_call(
            functools.partial(_gemm_fast_kernel, apply_relu=apply_relu),
            out_shape=jax.ShapeDtypeStruct((m_pad, n), jnp.bfloat16),
            grid=(m_pad // tm, n // tn),
            in_specs=[
                pl.BlockSpec((tm, k), lambda i, j: (i, 0)),
                pl.BlockSpec((k, tn), lambda i, j: (0, j)),
                pl.BlockSpec((1, tn), lambda i, j: (0, j)),
            ],
            out_specs=pl.BlockSpec((tm, tn), lambda i, j: (i, j)),
            compiler_params=pltpu.CompilerParams(
                dimension_semantics=("parallel", "parallel")),
        )(a, b, bias)
    else:
        tk = MAX_TK
        k_pad = _round_up(k, tk)
        if k_pad != k:
            a = jnp.pad(a, ((0, 0), (0, k_pad - k)))
            b = jnp.pad(b, ((0, k_pad - k), (0, 0)))
        out = pl.pallas_call(
            functools.partial(_gemm_acc_kernel, apply_relu=apply_relu),
            out_shape=jax.ShapeDtypeStruct((m_pad, n), jnp.bfloat16),
            grid=(m_pad // tm, n // tn, k_pad // tk),
            in_specs=[
                pl.BlockSpec((tm, tk), lambda i, j, kk: (i, kk)),
                pl.BlockSpec((tk, tn), lambda i, j, kk: (kk, j)),
                pl.BlockSpec((1, tn), lambda i, j, kk: (0, j)),
            ],
            out_specs=pl.BlockSpec((tm, tn), lambda i, j, kk: (i, j)),
            scratch_shapes=[pltpu.VMEM((tm, tn), jnp.float32)],
            compiler_params=pltpu.CompilerParams(
                dimension_semantics=("parallel", "parallel", "arbitrary")),
        )(a, b, bias)
    return out[:m] if m_pad != m else out


# ---------------------------------------------------------------------------
# Stem conv = XLA im2col (bf16, K lane-padded inside the same concat)
#             + one single-K-tile Pallas GEMM with fused bias + ReLU.
# TODO(synk): an in-kernel halo-BlockSpec im2col would remove the kh*kw HBM
# duplication; at 32x32 every cols tensor is < 300 KiB so it stays XLA glue.
# ---------------------------------------------------------------------------
def _im2col(x_nhwc, kh, kw, stride, padding, k_pad):
    x = jnp.pad(x_nhwc, ((0, 0), (padding, padding), (padding, padding), (0, 0)))
    n, h, w, c = x.shape
    oh = (h - kh) // stride + 1
    ow = (w - kw) // stride + 1
    cols = [x[:, i:i + stride * oh:stride, j:j + stride * ow:stride, :]
            for i in range(kh) for j in range(kw)]
    k = kh * kw * c
    if k_pad > k:                       # lane-pad K with the same concat
        cols.append(jnp.zeros((n, oh, ow, k_pad - k), x.dtype))
    col = jnp.concatenate(cols, axis=-1)
    return col.reshape(n * oh * ow, k_pad), oh, ow


def conv_gemm(x_nhwc, w_pad, b_pad, *, stride, padding, kh=3, kw=3):
    """Returns the flat, channel-padded bf16 output (N*oh*ow, 128), oh, ow."""
    k_pad, _ = w_pad.shape
    cols, oh, ow = _im2col(x_nhwc, kh, kw, stride, padding, k_pad)
    out = gemm_bias_act(cols, w_pad, b_pad, apply_relu=True)
    return out, oh, ow


# ---------------------------------------------------------------------------
# Fused tail kernel: res1 + res2(+residual+ReLU) + GAP + score proj + head.
# ---------------------------------------------------------------------------
def _tail_kernel(x3_ref, taps_ref, w1_ref, b1_ref, w2_ref, b2_ref,
                 pool_ref, ws_ref, bs_ref, wl_ref, bl_ref, o_ref):
    # x3: (RES_M, CPAD) bf16 flat conv3 output; it is also the residual.
    x3 = x3_ref[...]
    x3_f32 = x3.astype(jnp.float32)

    def conv3x3(act_bf16, w_ref, b_ref):
        acc = None
        for t in range(9):              # static unroll over the 9 taps
            # tap shift + edge mask as a 0/1 selection matmul (exact for bf16)
            sel = jnp.dot(taps_ref[t], act_bf16,
                          preferred_element_type=jnp.float32)
            term = jnp.dot(sel.astype(jnp.bfloat16), w_ref[t],
                           preferred_element_type=jnp.float32)
            acc = term if acc is None else acc + term
        return acc + b_ref[...]

    # res1 = relu(conv(x3) + b1)
    r1 = jnp.maximum(conv3x3(x3, w1_ref, b1_ref), 0.0).astype(jnp.bfloat16)
    # res2 = relu(conv(r1) + b2 + x3)   (residual add fused)
    r2 = jnp.maximum(conv3x3(r1, w2_ref, b2_ref) + x3_f32, 0.0)
    # global average pool as one tiny matmul with a constant pooling matrix
    pooled = jnp.dot(pool_ref[...], r2, preferred_element_type=jnp.float32)
    # FishNet score projection C -> 1000 features (+bias)
    feats = jnp.dot(pooled.astype(jnp.bfloat16), ws_ref[...],
                    preferred_element_type=jnp.float32) + bs_ref[...]
    # last_linear(1000 -> n_classes=1): VPU multiply + lane reduction
    logits = jnp.sum(feats * wl_ref[...], axis=1, keepdims=True) + bl_ref[...]
    o_ref[...] = logits


# ---------------------------------------------------------------------------
# Constant selection / pooling matrices (built once at init, not per step).
# ---------------------------------------------------------------------------
def _make_tap_matrices(n_batch, h, w):
    m = n_batch * h * w
    taps = np.zeros((9, m, m), np.float32)
    for di in range(3):
        for dj in range(3):
            t = di * 3 + dj
            for n in range(n_batch):
                for y in range(h):
                    for x in range(w):
                        ys, xs = y + di - 1, x + dj - 1
                        if 0 <= ys < h and 0 <= xs < w:
                            taps[t, (n * h + y) * w + x, (n * h + ys) * w + xs] = 1.0
    return taps


def _make_pool_matrix(n_batch, hw):
    pm = np.zeros((POOL_ROWS, n_batch * hw), np.float32)
    for n in range(n_batch):
        pm[n, n * hw:(n + 1) * hw] = 1.0 / hw
    return pm


# ---------------------------------------------------------------------------
# Parameters (deterministic synthetic init; all padding/casting hoisted here).
# ---------------------------------------------------------------------------
def init_params(key):
    ks = jax.random.split(key, 8)

    def winit(k, shape, scale=0.05):
        return jax.random.normal(k, shape, jnp.float32) * scale

    def pad2(a, rows, cols):
        return jnp.pad(a, ((0, rows - a.shape[0]), (0, cols - a.shape[1])))

    p = {}

    # Stem convs: (K, N) weights, zero-padded lane-dense, bf16.
    def stem(k, cin, cout, k_pad):
        w4 = winit(k, (3, 3, cin, cout))
        wp = pad2(w4.reshape(9 * cin, cout), k_pad, CPAD).astype(jnp.bfloat16)
        return wp, jnp.zeros((1, CPAD), jnp.float32)

    p["conv1_w"], p["conv1_b"] = stem(ks[0], 3, 16, 128)
    p["conv2_w"], p["conv2_b"] = stem(ks[1], 16, 16, 256)
    p["conv3_w"], p["conv3_b"] = stem(ks[2], 16, 32, 256)

    # Residual block weights for the fused tail: per-tap (CPAD, CPAD) stacks.
    def res(k, cin, cout):
        w4 = winit(k, (3, 3, cin, cout)).reshape(9, cin, cout)
        wt = jnp.zeros((9, CPAD, CPAD), jnp.float32).at[:, :cin, :cout].set(w4)
        return wt.astype(jnp.bfloat16), jnp.zeros((1, CPAD), jnp.float32)

    p["res1_w"], p["res1_b"] = res(ks[3], 32, 32)
    p["res2_w"], p["res2_b"] = res(ks[4], 32, 32)

    # Head: score projection 32 -> 1000 and last_linear(1000, n_classes).
    p["score_w"] = pad2(winit(ks[5], (32, FEAT_DIM)), CPAD, FEAT_PAD).astype(jnp.bfloat16)
    p["score_b"] = jnp.zeros((1, FEAT_PAD), jnp.float32)
    p["last_w"] = pad2(winit(ks[6], (FEAT_DIM, N_CLASSES), 0.02).T, 1, FEAT_PAD)
    p["last_b"] = jnp.zeros((1, 1), jnp.float32)

    # Constant tap-selection / pooling matrices consumed by the fused tail.
    p["taps"] = jnp.asarray(_make_tap_matrices(BATCH, RES_HW, RES_HW), jnp.bfloat16)
    p["pool"] = jnp.asarray(_make_pool_matrix(BATCH, RES_HW * RES_HW), jnp.float32)
    return p


# ---------------------------------------------------------------------------
# Forward pass
# ---------------------------------------------------------------------------
@jax.jit
def fishnet201_cls_forward(params, x_nchw):
    n = x_nchw.shape[0]
    # NCHW (PyTorch) -> NHWC, bf16 activations through the conv stack.
    x = jnp.transpose(x_nchw, (0, 2, 3, 1)).astype(jnp.bfloat16)

    # --- reduced FishNet-style stem (see module TODO): 3 im2col + GEMM calls
    y, oh, ow = conv_gemm(x, params["conv1_w"], params["conv1_b"], stride=2, padding=1)
    x = y[:, :16].reshape(n, oh, ow, 16)                       # 32 -> 16
    y, oh, ow = conv_gemm(x, params["conv2_w"], params["conv2_b"], stride=1, padding=1)
    x = y[:, :16].reshape(n, oh, ow, 16)
    x3, _, _ = conv_gemm(x, params["conv3_w"], params["conv3_b"], stride=2, padding=1)
    # x3 stays flat & channel-padded: (BATCH*8*8, 128) bf16 feeds the fused
    # tail as-is (its zero-padded channels line up with zero weight rows).

    # --- fused tail: res1 + res2(+residual+ReLU) + GAP + score proj + head ---
    logits = pl.pallas_call(
        _tail_kernel,
        out_shape=jax.ShapeDtypeStruct((POOL_ROWS, N_CLASSES), jnp.float32),
    )(x3, params["taps"], params["res1_w"], params["res1_b"],
      params["res2_w"], params["res2_b"], params["pool"],
      params["score_w"], params["score_b"], params["last_w"], params["last_b"])
    return logits[:n, :]


if __name__ == "__main__":
    key = jax.random.PRNGKey(0)
    pkey, xkey = jax.random.split(key)
    params = init_params(pkey)

    # small deterministic input: batch=2, 3-channel 32x32 image (NCHW layout)
    x = jax.random.normal(xkey, (BATCH, 3, IMG, IMG), jnp.float32)

    out = fishnet201_cls_forward(params, x)
    out = jax.block_until_ready(out)
    assert out.shape == (BATCH, N_CLASSES), out.shape
    assert bool(jnp.all(jnp.isfinite(out)))
    print("KERNEL_OK")
</pallas_src>

<mosaic_0001>
module attributes {stable_mosaic.version = 11 : i64} {
  func.func @_gemm_fast_kernel(%arg0: i32, %arg1: i32, %arg2: memref<256x128xbf16, #tpu.memory_space<vmem>>, %arg3: memref<128x128xbf16, #tpu.memory_space<vmem>>, %arg4: memref<1x128xf32, #tpu.memory_space<vmem>>, %arg5: memref<256x128xbf16, #tpu.memory_space<vmem>>) attributes {dimension_semantics = [#tpu.dimension_semantics<parallel>, #tpu.dimension_semantics<parallel>], iteration_bounds = array<i64: 2, 1>, scalar_prefetch = 0 : i64, scratch_operands = 0 : i64, tpu.core_type = #tpu.core_type<tc>, window_params = [{transform_indices = @transform_0, window_bounds = array<i64: 256, 128>}, {transform_indices = @transform_1, window_bounds = array<i64: 128, 128>}, {transform_indices = @transform_2, window_bounds = array<i64: 1, 128>}, {transform_indices = @transform_3, window_bounds = array<i64: 256, 128>}]} {
    %c0 = arith.constant 0 : index
    %c0_0 = arith.constant 0 : index
    %0 = vector.load %arg2[%c0, %c0_0] : memref<256x128xbf16, #tpu.memory_space<vmem>>, vector<256x128xbf16>
    %c0_1 = arith.constant 0 : index
    %c0_2 = arith.constant 0 : index
    %1 = vector.load %arg3[%c0_1, %c0_2] : memref<128x128xbf16, #tpu.memory_space<vmem>>, vector<128x128xbf16>
    %cst = arith.constant dense<0.000000e+00> : vector<256x128xf32>
    %2 = tpu.matmul %0, %1, %cst {dimension_numbers = #tpu.dot_dimension_numbers<[1], [0], [0], [1], [0, 0, 1, 1], [], []>} : vector<256x128xbf16>, vector<128x128xbf16>, vector<256x128xf32> -> vector<256x128xf32>
    %c0_3 = arith.constant 0 : index
    %c0_4 = arith.constant 0 : index
    %3 = vector.load %arg4[%c0_3, %c0_4] : memref<1x128xf32, #tpu.memory_space<vmem>>, vector<1x128xf32>
    %4 = vector.broadcast %3 : vector<1x128xf32> to vector<256x128xf32>
    %5 = arith.addf %2, %4 : vector<256x128xf32>
    %cst_5 = arith.constant 0.000000e+00 : f32
    %6 = vector.broadcast %cst_5 : f32 to vector<256x128xf32>
    %7 = arith.maximumf %5, %6 : vector<256x128xf32>
    %8 = arith.truncf %7 : vector<256x128xf32> to vector<256x128xbf16>
    %c0_6 = arith.constant 0 : index
    %c0_7 = arith.constant 0 : index
    %9 = vector.load %arg5[%c0_6, %c0_7] : memref<256x128xbf16, #tpu.memory_space<vmem>>, vector<256x128xbf16>
    tpu.vector_store %arg5[%c0_6, %c0_7], %8 {strides = array<i32>} : memref<256x128xbf16, #tpu.memory_space<vmem>>, vector<256x128xbf16>,
    return
  }
  func.func @transform_0(%arg0: i32, %arg1: i32) -> (i32, i32) {
    %c0_i32 = arith.constant 0 : i32
    %c0_i32_0 = arith.constant 0 : i32
    return %arg0, %c0_i32 : i32, i32
  }
  func.func @transform_1(%arg0: i32, %arg1: i32) -> (i32, i32) {
    %c0_i32 = arith.constant 0 : i32
    %c0_i32_0 = arith.constant 0 : i32
    return %c0_i32, %arg1 : i32, i32
  }
  func.func @transform_2(%arg0: i32, %arg1: i32) -> (i32, i32) {
    %c0_i32 = arith.constant 0 : i32
    %c0_i32_0 = arith.constant 0 : i32
    return %c0_i32, %arg1 : i32, i32
  }
  func.func @transform_3(%arg0: i32, %arg1: i32) -> (i32, i32) {
    %c0_i32 = arith.constant 0 : i32
    return %arg0, %arg1 : i32, i32
  }
}

module attributes {stable_mosaic.version = 11 : i64} {
  func.func @_gemm_fast_kernel(%arg0: i32, %arg1: i32, %arg2: memref<256x256xbf16, #tpu.memory_space<vmem>>, %arg3: memref<256x128xbf16, #tpu.memory_space<vmem>>, %arg4: memref<1x128xf32, #tpu.memory_space<vmem>>, %arg5: memref<256x128xbf16, #tpu.memory_space<vmem>>) attributes {dimension_semantics = [#tpu.dimension_semantics<parallel>, #tpu.dimension_semantics<parallel>], iteration_bounds = array<i64: 2, 1>, scalar_prefetch = 0 : i64, scratch_operands = 0 : i64, tpu.core_type = #tpu.core_type<tc>, window_params = [{transform_indices = @transform_0, window_bounds = array<i64: 256, 256>}, {transform_indices = @transform_1, window_bounds = array<i64: 256, 128>}, {transform_indices = @transform_2, window_bounds = array<i64: 1, 128>}, {transform_indices = @transform_3, window_bounds = array<i64: 256, 128>}]} {
    %c0 = arith.constant 0 : index
    %c0_0 = arith.constant 0 : index
    %0 = vector.load %arg2[%c0, %c0_0] : memref<256x256xbf16, #tpu.memory_space<vmem>>, vector<256x256xbf16>
    %c0_1 = arith.constant 0 : index
    %c0_2 = arith.constant 0 : index
    %1 = vector.load %arg3[%c0_1, %c0_2] : memref<256x128xbf16, #tpu.memory_space<vmem>>, vector<256x128xbf16>
    %cst = arith.constant dense<0.000000e+00> : vector<256x128xf32>
    %2 = tpu.matmul %0, %1, %cst {dimension_numbers = #tpu.dot_dimension_numbers<[1], [0], [0], [1], [0, 0, 1, 1], [], []>} : vector<256x256xbf16>, vector<256x128xbf16>, vector<256x128xf32> -> vector<256x128xf32>
    %c0_3 = arith.constant 0 : index
    %c0_4 = arith.constant 0 : index
    %3 = vector.load %arg4[%c0_3, %c0_4] : memref<1x128xf32, #tpu.memory_space<vmem>>, vector<1x128xf32>
    %4 = vector.broadcast %3 : vector<1x128xf32> to vector<256x128xf32>
    %5 = arith.addf %2, %4 : vector<256x128xf32>
    %cst_5 = arith.constant 0.000000e+00 : f32
    %6 = vector.broadcast %cst_5 : f32 to vector<256x128xf32>
    %7 = arith.maximumf %5, %6 : vector<256x128xf32>
    %8 = arith.truncf %7 : vector<256x128xf32> to vector<256x128xbf16>
    %c0_6 = arith.constant 0 : index
    %c0_7 = arith.constant 0 : index
    %9 = vector.load %arg5[%c0_6, %c0_7] : memref<256x128xbf16, #tpu.memory_space<vmem>>, vector<256x128xbf16>
    tpu.vector_store %arg5[%c0_6, %c0_7], %8 {strides = array<i32>} : memref<256x128xbf16, #tpu.memory_space<vmem>>, vector<256x128xbf16>,
    return
  }
  func.func @transform_0(%arg0: i32, %arg1: i32) -> (i32, i32) {
    %c0_i32 = arith.constant 0 : i32
    %c0_i32_0 = arith.constant 0 : i32
    return %arg0, %c0_i32 : i32, i32
  }
  func.func @transform_1(%arg0: i32, %arg1: i32) -> (i32, i32) {
    %c0_i32 = arith.constant 0 : i32
    %c0_i32_0 = arith.constant 0 : i32
    return %c0_i32, %arg1 : i32, i32
  }
  func.func @transform_2(%arg0: i32, %arg1: i32) -> (i32, i32) {
    %c0_i32 = arith.constant 0 : i32
    %c0_i32_0 = arith.constant 0 : i32
    return %c0_i32, %arg1 : i32, i32
  }
  func.func @transform_3(%arg0: i32, %arg1: i32) -> (i32, i32) {
    %c0_i32 = arith.constant 0 : i32
    return %arg0, %arg1 : i32, i32
  }
}

module attributes {stable_mosaic.version = 11 : i64} {
  func.func @_tail_kernel(%arg0: memref<128x128xbf16, #tpu.memory_space<vmem>>, %arg1: memref<9x128x128xbf16, #tpu.memory_space<vmem>>, %arg2: memref<9x128x128xbf16, #tpu.memory_space<vmem>>, %arg3: memref<1x128xf32, #tpu.memory_space<vmem>>, %arg4: memref<9x128x128xbf16, #tpu.memory_space<vmem>>, %arg5: memref<1x128xf32, #tpu.memory_space<vmem>>, %arg6: memref<8x128xf32, #tpu.memory_space<vmem>>, %arg7: memref<128x1024xbf16, #tpu.memory_space<vmem>>, %arg8: memref<1x1024xf32, #tpu.memory_space<vmem>>, %arg9: memref<1x1024xf32, #tpu.memory_space<vmem>>, %arg10: memref<1x1xf32, #tpu.memory_space<vmem>>, %arg11: memref<8x1xf32, #tpu.memory_space<vmem>>) attributes {dimension_semantics = [], scalar_prefetch = 0 : i64, scratch_operands = 0 : i64, tpu.core_type = #tpu.core_type<tc>} {
    %c0 = arith.constant 0 : index
    %c0_0 = arith.constant 0 : index
    %0 = vector.load %arg0[%c0, %c0_0] : memref<128x128xbf16, #tpu.memory_space<vmem>>, vector<128x128xbf16>
    %1 = arith.extf %0 : vector<128x128xbf16> to vector<128x128xf32>
    %c0_1 = arith.constant 0 : index
    %c0_2 = arith.constant 0 : index
    %c0_3 = arith.constant 0 : index
    %2 = vector.load %arg1[%c0_1, %c0_2, %c0_3] : memref<9x128x128xbf16, #tpu.memory_space<vmem>>, vector<1x128x128xbf16>
    %3 = vector.shape_cast %2 : vector<1x128x128xbf16> to vector<128x128xbf16>
    %cst = arith.constant dense<0.000000e+00> : vector<128x128xf32>
    %4 = tpu.matmul %3, %0, %cst {dimension_numbers = #tpu.dot_dimension_numbers<[1], [0], [0], [1], [0, 0, 1, 1], [], []>} : vector<128x128xbf16>, vector<128x128xbf16>, vector<128x128xf32> -> vector<128x128xf32>
    %5 = arith.truncf %4 : vector<128x128xf32> to vector<128x128xbf16>
    %c0_4 = arith.constant 0 : index
    %c0_5 = arith.constant 0 : index
    %c0_6 = arith.constant 0 : index
    %6 = vector.load %arg2[%c0_4, %c0_5, %c0_6] : memref<9x128x128xbf16, #tpu.memory_space<vmem>>, vector<1x128x128xbf16>
    %7 = vector.shape_cast %6 : vector<1x128x128xbf16> to vector<128x128xbf16>
    %cst_7 = arith.constant dense<0.000000e+00> : vector<128x128xf32>
    %8 = tpu.matmul %5, %7, %cst_7 {dimension_numbers = #tpu.dot_dimension_numbers<[1], [0], [0], [1], [0, 0, 1, 1], [], []>} : vector<128x128xbf16>, vector<128x128xbf16>, vector<128x128xf32> -> vector<128x128xf32>
    %c1 = arith.constant 1 : index
    %c0_8 = arith.constant 0 : index
    %c0_9 = arith.constant 0 : index
    %9 = vector.load %arg1[%c1, %c0_8, %c0_9] : memref<9x128x128xbf16, #tpu.memory_space<vmem>>, vector<1x128x128xbf16>
    %10 = vector.shape_cast %9 : vector<1x128x128xbf16> to vector<128x128xbf16>
    %cst_10 = arith.constant dense<0.000000e+00> : vector<128x128xf32>
    %11 = tpu.matmul %10, %0, %cst_10 {dimension_numbers = #tpu.dot_dimension_numbers<[1], [0], [0], [1], [0, 0, 1, 1], [], []>} : vector<128x128xbf16>, vector<128x128xbf16>, vector<128x128xf32> -> vector<128x128xf32>
    %12 = arith.truncf %11 : vector<128x128xf32> to vector<128x128xbf16>
    %c1_11 = arith.constant 1 : index
    %c0_12 = arith.constant 0 : index
    %c0_13 = arith.constant 0 : index
    %13 = vector.load %arg2[%c1_11, %c0_12, %c0_13] : memref<9x128x128xbf16, #tpu.memory_space<vmem>>, vector<1x128x128xbf16>
    %14 = vector.shape_cast %13 : vector<1x128x128xbf16> to vector<128x128xbf16>
    %cst_14 = arith.constant dense<0.000000e+00> : vector<128x128xf32>
    %15 = tpu.matmul %12, %14, %cst_14 {dimension_numbers = #tpu.dot_dimension_numbers<[1], [0], [0], [1], [0, 0, 1, 1], [], []>} : vector<128x128xbf16>, vector<128x128xbf16>, vector<128x128xf32> -> vector<128x128xf32>
    %16 = arith.addf %8, %15 : vector<128x128xf32>
    %c2 = arith.constant 2 : index
    %c0_15 = arith.constant 0 : index
    %c0_16 = arith.constant 0 : index
    %17 = vector.load %arg1[%c2, %c0_15, %c0_16] : memref<9x128x128xbf16, #tpu.memory_space<vmem>>, vector<1x128x128xbf16>
    %18 = vector.shape_cast %17 : vector<1x128x128xbf16> to vector<128x128xbf16>
    %cst_17 = arith.constant dense<0.000000e+00> : vector<128x128xf32>
    %19 = tpu.matmul %18, %0, %cst_17 {dimension_numbers = #tpu.dot_dimension_numbers<[1], [0], [0], [1], [0, 0, 1, 1], [], []>} : vector<128x128xbf16>, vector<128x128xbf16>, vector<128x128xf32> -> vector<128x128xf32>
    %20 = arith.truncf %19 : vector<128x128xf32> to vector<128x128xbf16>
    %c2_18 = arith.constant 2 : index
    %c0_19 = arith.constant 0 : index
    %c0_20 = arith.constant 0 : index
    %21 = vector.load %arg2[%c2_18, %c0_19, %c0_20] : memref<9x128x128xbf16, #tpu.memory_space<vmem>>, vector<1x128x128xbf16>
    %22 = vector.shape_cast %21 : vector<1x128x128xbf16> to vector<128x128xbf16>
    %cst_21 = arith.constant dense<0.000000e+00> : vector<128x128xf32>
    %23 = tpu.matmul %20, %22, %cst_21 {dimension_numbers = #tpu.dot_dimension_numbers<[1], [0], [0], [1], [0, 0, 1, 1], [], []>} : vector<128x128xbf16>, vector<128x128xbf16>, vector<128x128xf32> -> vector<128x128xf32>
    %24 = arith.addf %16, %23 : vector<128x128xf32>
    %c3 = arith.constant 3 : index
    %c0_22 = arith.constant 0 : index
    %c0_23 = arith.constant 0 : index
    %25 = vector.load %arg1[%c3, %c0_22, %c0_23] : memref<9x128x128xbf16, #tpu.memory_space<vmem>>, vector<1x128x128xbf16>
    %26 = vector.shape_cast %25 : vector<1x128x128xbf16> to vector<128x128xbf16>
    %cst_24 = arith.constant dense<0.000000e+00> : vector<128x128xf32>
    %27 = tpu.matmul %26, %0, %cst_24 {dimension_numbers = #tpu.dot_dimension_numbers<[1], [0], [0], [1], [0, 0, 1, 1], [], []>} : vector<128x128xbf16>, vector<128x128xbf16>, vector<128x128xf32> -> vector<128x128xf32>
    %28 = arith.truncf %27 : vector<128x128xf32> to vector<128x128xbf16>
    %c3_25 = arith.constant 3 : index
    %c0_26 = arith.constant 0 : index
    %c0_27 = arith.constant 0 : index
    %29 = vector.load %arg2[%c3_25, %c0_26, %c0_27] : memref<9x128x128xbf16, #tpu.memory_space<vmem>>, vector<1x128x128xbf16>
    %30 = vector.shape_cast %29 : vector<1x128x128xbf16> to vector<128x128xbf16>
    %cst_28 = arith.constant dense<0.000000e+00> : vector<128x128xf32>
    %31 = tpu.matmul %28, %30, %cst_28 {dimension_numbers = #tpu.dot_dimension_numbers<[1], [0], [0], [1], [0, 0, 1, 1], [], []>} : vector<128x128xbf16>, vector<128x128xbf16>, vector<128x128xf32> -> vector<128x128xf32>
    %32 = arith.addf %24, %31 : vector<128x128xf32>
    %c4 = arith.constant 4 : index
    %c0_29 = arith.constant 0 : index
    %c0_30 = arith.constant 0 : index
    %33 = vector.load %arg1[%c4, %c0_29, %c0_30] : memref<9x128x128xbf16, #tpu.memory_space<vmem>>, vector<1x128x128xbf16>
    %34 = vector.shape_cast %33 : vector<1x128x128xbf16> to vector<128x128xbf16>
    %cst_31 = arith.constant dense<0.000000e+00> : vector<128x128xf32>
    %35 = tpu.matmul %34, %0, %cst_31 {dimension_numbers = #tpu.dot_dimension_numbers<[1], [0], [0], [1], [0, 0, 1, 1], [], []>} : vector<128x128xbf16>, vector<128x128xbf16>, vector<128x128xf32> -> vector<128x128xf32>
    %36 = arith.truncf %35 : vector<128x128xf32> to vector<128x128xbf16>
    %c4_32 = arith.constant 4 : index
    %c0_33 = arith.constant 0 : index
    %c0_34 = arith.constant 0 : index
    %37 = vector.load %arg2[%c4_32, %c0_33, %c0_34] : memref<9x128x128xbf16, #tpu.memory_space<vmem>>, vector<1x128x128xbf16>
    %38 = vector.shape_cast %37 : vector<1x128x128xbf16> to vector<128x128xbf16>
    %cst_35 = arith.constant dense<0.000000e+00> : vector<128x128xf32>
    %39 = tpu.matmul %36, %38, %cst_35 {dimension_numbers = #tpu.dot_dimension_numbers<[1], [0], [0], [1], [0, 0, 1, 1], [], []>} : vector<128x128xbf16>, vector<128x128xbf16>, vector<128x128xf32> -> vector<128x128xf32>
    %40 = arith.addf %32, %39 : vector<128x128xf32>
    %c5 = arith.constant 5 : index
    %c0_36 = arith.constant 0 : index
    %c0_37 = arith.constant 0 : index
    %41 = vector.load %arg1[%c5, %c0_36, %c0_37] : memref<9x128x128xbf16, #tpu.memory_space<vmem>>, vector<1x128x128xbf16>
    %42 = vector.shape_cast %41 : vector<1x128x128xbf16> to vector<128x128xbf16>
    %cst_38 = arith.constant dense<0.000000e+00> : vector<128x128xf32>
    %43 = tpu.matmul %42, %0, %cst_38 {dimension_numbers = #tpu.dot_dimension_numbers<[1], [0], [0], [1], [0, 0, 1, 1], [], []>} : vector<128x128xbf16>, vector<128x128xbf16>, vector<128x128xf32> -> vector<128x128xf32>
    %44 = arith.truncf %43 : vector<128x128xf32> to vector<128x128xbf16>
    %c5_39 = arith.constant 5 : index
    %c0_40 = arith.constant 0 : index
    %c0_41 = arith.constant 0 : index
    %45 = vector.load %arg2[%c5_39, %c0_40, %c0_41] : memref<9x128x128xbf16, #tpu.memory_space<vmem>>, vector<1x128x128xbf16>
    %46 = vector.shape_cast %45 : vector<1x128x128xbf16> to vector<128x128xbf16>
    %cst_42 = arith.constant dense<0.000000e+00> : vector<128x128xf32>
    %47 = tpu.matmul %44, %46, %cst_42 {dimension_numbers = #tpu.dot_dimension_numbers<[1], [0], [0], [1], [0, 0, 1, 1], [], []>} : vector<128x128xbf16>, vector<128x128xbf16>, vector<128x128xf32> -> vector<128x128xf32>
    %48 = arith.addf %40, %47 : vector<128x128xf32>
    %c6 = arith.constant 6 : index
    %c0_43 = arith.constant 0 : index
    %c0_44 = arith.constant 0 : index
    %49 = vector.load %arg1[%c6, %c0_43, %c0_44] : memref<9x128x128xbf16, #tpu.memory_space<vmem>>, vector<1x128x128xbf16>
    %50 = vector.shape_cast %49 : vector<1x128x128xbf16> to vector<128x128xbf16>
    %cst_45 = arith.constant dense<0.000000e+00> : vector<128x128xf32>
    %51 = tpu.matmul %50, %0, %cst_45 {dimension_numbers = #tpu.dot_dimension_numbers<[1], [0], [0], [1], [0, 0, 1, 1], [], []>} : vector<128x128xbf16>, vector<128x128xbf16>, vector<128x128xf32> -> vector<128x128xf32>
    %52 = arith.truncf %51 : vector<128x128xf32> to vector<128x128xbf16>
    %c6_46 = arith.constant 6 : index
    %c0_47 = arith.constant 0 : index
    %c0_48 = arith.constant 0 : index
    %53 = vector.load %arg2[%c6_46, %c0_47, %c0_48] : memref<9x128x128xbf16, #tpu.memory_space<vmem>>, vector<1x128x128xbf16>
    %54 = vector.shape_cast %53 : vector<1x128x128xbf16> to vector<128x128xbf16>
    %cst_49 = arith.constant dense<0.000000e+00> : vector<128x128xf32>
    %55 = tpu.matmul %52, %54, %cst_49 {dimension_numbers = #tpu.dot_dimension_numbers<[1], [0], [0], [1], [0, 0, 1, 1], [], []>} : vector<128x128xbf16>, vector<128x128xbf16>, vector<128x128xf32> -> vector<128x128xf32>
    %56 = arith.addf %48, %55 : vector<128x128xf32>
    %c7 = arith.constant 7 : index
    %c0_50 = arith.constant 0 : index
    %c0_51 = arith.constant 0 : index
    %57 = vector.load %arg1[%c7, %c0_50, %c0_51] : memref<9x128x128xbf16, #tpu.memory_space<vmem>>, vector<1x128x128xbf16>
    %58 = vector.shape_cast %57 : vector<1x128x128xbf16> to vector<128x128xbf16>
    %cst_52 = arith.constant dense<0.000000e+00> : vector<128x128xf32>
    %59 = tpu.matmul %58, %0, %cst_52 {dimension_numbers = #tpu.dot_dimension_numbers<[1], [0], [0], [1], [0, 0, 1, 1], [], []>} : vector<128x128xbf16>, vector<128x128xbf16>, vector<128x128xf32> -> vector<128x128xf32>
    %60 = arith.truncf %59 : vector<128x128xf32> to vector<128x128xbf16>
    %c7_53 = arith.constant 7 : index
    %c0_54 = arith.constant 0 : index
    %c0_55 = arith.constant 0 : index
    %61 = vector.load %arg2[%c7_53, %c0_54, %c0_55] : memref<9x128x128xbf16, #tpu.memory_space<vmem>>, vector<1x128x128xbf16>
    %62 = vector.shape_cast %61 : vector<1x128x128xbf16> to vector<128x128xbf16>
    %cst_56 = arith.constant dense<0.000000e+00> : vector<128x128xf32>
    %63 = tpu.matmul %60, %62, %cst_56 {dimension_numbers = #tpu.dot_dimension_numbers<[1], [0], [0], [1], [0, 0, 1, 1], [], []>} : vector<128x128xbf16>, vector<128x128xbf16>, vector<128x128xf32> -> vector<128x128xf32>
    %64 = arith.addf %56, %63 : vector<128x128xf32>
    %c8 = arith.constant 8 : index
    %c0_57 = arith.constant 0 : index
    %c0_58 = arith.constant 0 : index
    %65 = vector.load %arg1[%c8, %c0_57, %c0_58] : memref<9x128x128xbf16, #tpu.memory_space<vmem>>, vector<1x128x128xbf16>
    %66 = vector.shape_cast %65 : vector<1x128x128xbf16> to vector<128x128xbf16>
    %cst_59 = arith.constant dense<0.000000e+00> : vector<128x128xf32>
    %67 = tpu.matmul %66, %0, %cst_59 {dimension_numbers = #tpu.dot_dimension_numbers<[1], [0], [0], [1], [0, 0, 1, 1], [], []>} : vector<128x128xbf16>, vector<128x128xbf16>, vector<128x128xf32> -> vector<128x128xf32>
    %68 = arith.truncf %67 : vector<128x128xf32> to vector<128x128xbf16>
    %c8_60 = arith.constant 8 : index
    %c0_61 = arith.constant 0 : index
    %c0_62 = arith.constant 0 : index
    %69 = vector.load %arg2[%c8_60, %c0_61, %c0_62] : memref<9x128x128xbf16, #tpu.memory_space<vmem>>, vector<1x128x128xbf16>
    %70 = vector.shape_cast %69 : vector<1x128x128xbf16> to vector<128x128xbf16>
    %cst_63 = arith.constant dense<0.000000e+00> : vector<128x128xf32>
    %71 = tpu.matmul %68, %70, %cst_63 {dimension_numbers = #tpu.dot_dimension_numbers<[1], [0], [0], [1], [0, 0, 1, 1], [], []>} : vector<128x128xbf16>, vector<128x128xbf16>, vector<128x128xf32> -> vector<128x128xf32>
    %72 = arith.addf %64, %71 : vector<128x128xf32>
    %c0_64 = arith.constant 0 : index
    %c0_65 = arith.constant 0 : index
    %73 = vector.load %arg3[%c0_64, %c0_65] : memref<1x128xf32, #tpu.memory_space<vmem>>, vector<1x128xf32>
    %74 = vector.broadcast %73 : vector<1x128xf32> to vector<128x128xf32>
    %75 = arith.addf %72, %74 : vector<128x128xf32>
    %cst_66 = arith.constant 0.000000e+00 : f32
    %76 = vector.broadcast %cst_66 : f32 to vector<128x128xf32>
    %77 = arith.maximumf %75, %76 : vector<128x128xf32>
    %78 = arith.truncf %77 : vector<128x128xf32> to vector<128x128xbf16>
    %c0_67 = arith.constant 0 : index
    %c0_68 = arith.constant 0 : index
    %c0_69 = arith.constant 0 : index
    %79 = vector.load %arg1[%c0_67, %c0_68, %c0_69] : memref<9x128x128xbf16, #tpu.memory_space<vmem>>, vector<1x128x128xbf16>
    %80 = vector.shape_cast %79 : vector<1x128x128xbf16> to vector<128x128xbf16>
    %cst_70 = arith.constant dense<0.000000e+00> : vector<128x128xf32>
    %81 = tpu.matmul %80, %78, %cst_70 {dimension_numbers = #tpu.dot_dimension_numbers<[1], [0], [0], [1], [0, 0, 1, 1], [], []>} : vector<128x128xbf16>, vector<128x128xbf16>, vector<128x128xf32> -> vector<128x128xf32>
    %82 = arith.truncf %81 : vector<128x128xf32> to vector<128x128xbf16>
    %c0_71 = arith.constant 0 : index
    %c0_72 = arith.constant 0 : index
    %c0_73 = arith.constant 0 : index
    %83 = vector.load %arg4[%c0_71, %c0_72, %c0_73] : memref<9x128x128xbf16, #tpu.memory_space<vmem>>, vector<1x128x128xbf16>
    %84 = vector.shape_cast %83 : vector<1x128x128xbf16> to vector<128x128xbf16>
    %cst_74 = arith.constant dense<0.000000e+00> : vector<128x128xf32>
    %85 = tpu.matmul %82, %84, %cst_74 {dimension_numbers = #tpu.dot_dimension_numbers<[1], [0], [0], [1], [0, 0, 1, 1], [], []>} : vector<128x128xbf16>, vector<128x128xbf16>, vector<128x128xf32> -> vector<128x128xf32>
    %c1_75 = arith.constant 1 : index
    %c0_76 = arith.constant 0 : index
    %c0_77 = arith.constant 0 : index
    %86 = vector.load %arg1[%c1_75, %c0_76, %c0_77] : memref<9x128x128xbf16, #tpu.memory_space<vmem>>, vector<1x128x128xbf16>
    %87 = vector.shape_cast %86 : vector<1x128x128xbf16> to vector<128x128xbf16>
    %cst_78 = arith.constant dense<0.000000e+00> : vector<128x128xf32>
    %88 = tpu.matmul %87, %78, %cst_78 {dimension_numbers = #tpu.dot_dimension_numbers<[1], [0], [0], [1], [0, 0, 1, 1], [], []>} : vector<128x128xbf16>, vector<128x128xbf16>, vector<128x128xf32> -> vector<128x128xf32>
    %89 = arith.truncf %88 : vector<128x128xf32> to vector<128x128xbf16>
    %c1_79 = arith.constant 1 : index
    %c0_80 = arith.constant 0 : index
    %c0_81 = arith.constant 0 : index
    %90 = vector.load %arg4[%c1_79, %c0_80, %c0_81] : memref<9x128x128xbf16, #tpu.memory_space<vmem>>, vector<1x128x128xbf16>
    %91 = vector.shape_cast %90 : vector<1x128x128xbf16> to vector<128x128xbf16>
    %cst_82 = arith.constant dense<0.000000e+00> : vector<128x128xf32>
    %92 = tpu.matmul %89, %91, %cst_82 {dimension_numbers = #tpu.dot_dimension_numbers<[1], [0], [0], [1], [0, 0, 1, 1], [], []>} : vector<128x128xbf16>, vector<128x128xbf16>, vector<128x128xf32> -> vector<128x128xf32>
    %93 = arith.addf %85, %92 : vector<128x128xf32>
    %c2_83 = arith.constant 2 : index
    %c0_84 = arith.constant 0 : index
    %c0_85 = arith.constant 0 : index
    %94 = vector.load %arg1[%c2_83, %c0_84, %c0_85] : memref<9x128x128xbf16, #tpu.memory_space<vmem>>, vector<1x128x128xbf16>
    %95 = vector.shape_cast %94 : vector<1x128x128xbf16> to vector<128x128xbf16>
    %cst_86 = arith.constant dense<0.000000e+00> : vector<128x128xf32>
    %96 = tpu.matmul %95, %78, %cst_86 {dimension_numbers = #tpu.dot_dimension_numbers<[1], [0], [0], [1], [0, 0, 1, 1], [], []>} : vector<128x128xbf16>, vector<128x128xbf16>, vector<128x128xf32> -> vector<128x128xf32>
    %97 = arith.truncf %96 : vector<128x128xf32> to vector<128x128xbf16>
    %c2_87 = arith.constant 2 : index
    %c0_88 = arith.constant 0 : index
    %c0_89 = arith.constant 0 : index
    %98 = vector.load %arg4[%c2_87, %c0_88, %c0_89] : memref<9x128x128xbf16, #tpu.memory_space<vmem>>, vector<1x128x128xbf16>
    %99 = vector.shape_cast %98 : vector<1x128x128xbf16> to vector<128x128xbf16>
    %cst_90 = arith.constant dense<0.000000e+00> : vector<128x128xf32>
    %100 = tpu.matmul %97, %99, %cst_90 {dimension_numbers = #tpu.dot_dimension_numbers<[1], [0], [0], [1], [0, 0, 1, 1], [], []>} : vector<128x128xbf16>, vector<128x128xbf16>, vector<128x128xf32> -> vector<128x128xf32>
    %101 = arith.addf %93, %100 : vector<128x128xf32>
    %c3_91 = arith.constant 3 : index
    %c0_92 = arith.constant 0 : index
    %c0_93 = arith.constant 0 : index
    %102 = vector.load %arg1[%c3_91, %c0_92, %c0_93] : memref<9x128x128xbf16, #tpu.memory_space<vmem>>, vector<1x128x128xbf16>
    %103 = vector.shape_cast %102 : vector<1x128x128xbf16> to vector<128x128xbf16>
    %cst_94 = arith.constant dense<0.000000e+00> : vector<128x128xf32>
    %104 = tpu.matmul %103, %78, %cst_94 {dimension_numbers = #tpu.dot_dimension_numbers<[1], [0], [0], [1], [0, 0, 1, 1], [], []>} : vector<128x128xbf16>, vector<128x128xbf16>, vector<128x128xf32> -> vector<128x128xf32>
    %105 = arith.truncf %104 : vector<128x128xf32> to vector<128x128xbf16>
    %c3_95 = arith.constant 3 : index
    %c0_96 = arith.constant 0 : index
    %c0_97 = arith.constant 0 : index
    %106 = vector.load %arg4[%c3_95, %c0_96, %c0_97] : memref<9x128x128xbf16, #tpu.memory_space<vmem>>, vector<1x128x128xbf16>
    %107 = vector.shape_cast %106 : vector<1x128x128xbf16> to vector<128x128xbf16>
    %cst_98 = arith.constant dense<0.000000e+00> : vector<128x128xf32>
    %108 = tpu.matmul %105, %107, %cst_98 {dimension_numbers = #tpu.dot_dimension_numbers<[1], [0], [0], [1], [0, 0, 1, 1], [], []>} : vector<128x128xbf16>, vector<128x128xbf16>, vector<128x128xf32> -> vector<128x128xf32>
    %109 = arith.addf %101, %108 : vector<128x128xf32>
    %c4_99 = arith.constant 4 : index
    %c0_100 = arith.constant 0 : index
    %c0_101 = arith.constant 0 : index
    %110 = vector.load %arg1[%c4_99, %c0_100, %c0_101] : memref<9x128x128xbf16, #tpu.memory_space<vmem>>, vector<1x128x128xbf16>
    %111 = vector.shape_cast %110 : vector<1x128x128xbf16> to vector<128x128xbf16>
    %cst_102 = arith.constant dense<0.000000e+00> : vector<128x128xf32>
    %112 = tpu.matmul %111, %78, %cst_102 {dimension_numbers = #tpu.dot_dimension_numbers<[1], [0], [0], [1], [0, 0, 1, 1], [], []>} : vector<128x128xbf16>, vector<128x128xbf16>, vector<128x128xf32> -> vector<128x128xf32>
    %113 = arith.truncf %112 : vector<128x128xf32> to vector<128x128xbf16>
    %c4_103 = arith.constant 4 : index
    %c0_104 = arith.constant 0 : index
    %c0_105 = arith.constant 0 : index
    %114 = vector.load %arg4[%c4_103, %c0_104, %c0_105] : memref<9x128x128xbf16, #tpu.memory_space<vmem>>, vector<1x128x128xbf16>
    %115 = vector.shape_cast %114 : vector<1x128x128xbf16> to vector<128x128xbf16>
    %cst_106 = arith.constant dense<0.000000e+00> : vector<128x128xf32>
    %116 = tpu.matmul %113, %115, %cst_106 {dimension_numbers = #tpu.dot_dimension_numbers<[1], [0], [0], [1], [0, 0, 1, 1], [], []>} : vector<128x128xbf16>, vector<128x128xbf16>, vector<128x128xf32> -> vector<128x128xf32>
    %117 = arith.addf %109, %116 : vector<128x128xf32>
    %c5_107 = arith.constant 5 : index
    %c0_108 = arith.constant 0 : index
    %c0_109 = arith.constant 0 : index
    %118 = vector.load %arg1[%c5_107, %c0_108, %c0_109] : memref<9x128x128xbf16, #tpu.memory_space<vmem>>, vector<1x128x128xbf16>
    %119 = vector.shape_cast %118 : vector<1x128x128xbf16> to vector<128x128xbf16>
    %cst_110 = arith.constant dense<0.000000e+00> : vector<128x128xf32>
    %120 = tpu.matmul %119, %78, %cst_110 {dimension_numbers = #tpu.dot_dimension_numbers<[1], [0], [0], [1], [0, 0, 1, 1], [], []>} : vector<128x128xbf16>, vector<128x128xbf16>, vector<128x128xf32> -> vector<128x128xf32>
    %121 = arith.truncf %120 : vector<128x128xf32> to vector<128x128xbf16>
    %c5_111 = arith.constant 5 : index
    %c0_112 = arith.constant 0 : index
    %c0_113 = arith.constant 0 : index
    %122 = vector.load %arg4[%c5_111, %c0_112, %c0_113] : memref<9x128x128xbf16, #tpu.memory_space<vmem>>, vector<1x128x128xbf16>
    %123 = vector.shape_cast %122 : vector<1x128x128xbf16> to vector<128x128xbf16>
    %cst_114 = arith.constant dense<0.000000e+00> : vector<128x128xf32>
    %124 = tpu.matmul %121, %123, %cst_114 {dimension_numbers = #tpu.dot_dimension_numbers<[1], [0], [0], [1], [0, 0, 1, 1], [], []>} : vector<128x128xbf16>, vector<128x128xbf16>, vector<128x128xf32> -> vector<128x128xf32>
    %125 = arith.addf %117, %124 : vector<128x128xf32>
    %c6_115 = arith.constant 6 : index
    %c0_116 = arith.constant 0 : index
    %c0_117 = arith.constant 0 : index
    %126 = vector.load %arg1[%c6_115, %c0_116, %c0_117] : memref<9x128x128xbf16, #tpu.memory_space<vmem>>, vector<1x128x128xbf16>
    %127 = vector.shape_cast %126 : vector<1x128x128xbf16> to vector<128x128xbf16>
    %cst_118 = arith.constant dense<0.000000e+00> : vector<128x128xf32>
    %128 = tpu.matmul %127, %78, %cst_118 {dimension_numbers = #tpu.dot_dimension_numbers<[1], [0], [0], [1], [0, 0, 1, 1], [], []>} : vector<128x128xbf16>, vector<128x128xbf16>, vector<128x128xf32> -> vector<128x128xf32>
    %129 = arith.truncf %128 : vector<128x128xf32> to vector<128x128xbf16>
    %c6_119 = arith.constant 6 : index
    %c0_120 = arith.constant 0 : index
    %c0_121 = arith.constant 0 : index
    %130 = vector.load %arg4[%c6_119, %c0_120, %c0_121] : memref<9x128x128xbf16, #tpu.memory_space<vmem>>, vector<1x128x128xbf16>
    %131 = vector.shape_cast %130 : vector<1x128x128xbf16> to vector<128x128xbf16>
    %cst_122 = arith.constant dense<0.000000e+00> : vector<128x128xf32>
    %132 = tpu.matmul %129, %131, %cst_122 {dimension_numbers = #tpu.dot_dimension_numbers<[1], [0], [0], [1], [0, 0, 1, 1], [], []>} : vector<128x128xbf16>, vector<128x128xbf16>, vector<128x128xf32> -> vector<128x128xf32>
    %133 = arith.addf %125, %132 : vector<128x128xf32>
    %c7_123 = arith.constant 7 : index
    %c0_124 = arith.constant 0 : index
    %c0_125 = arith.constant 0 : index
    %134 = vector.load %arg1[%c7_123, %c0_124, %c0_125] : memref<9x128x128xbf16, #tpu.memory_space<vmem>>, vector<1x128x128xbf16>
    %135 = vector.shape_cast %134 : vector<1x128x128xbf16> to vector<128x128xbf16>
    %cst_126 = arith.constant dense<0.000000e+00> : vector<128x128xf32>
    %136 = tpu.matmul %135, %78, %cst_126 {dimension_numbers = #tpu.dot_dimension_numbers<[1], [0], [0], [1], [0, 0, 1, 1], [], []>} : vector<128x128xbf16>, vector<128x128xbf16>, vector<128x128xf32> -> vector<128x128xf32>
    %137 = arith.truncf %136 : vector<128x128xf32> to vector<128x128xbf16>
    %c7_127 = arith.constant 7 : index
    %c0_128 = arith.constant 0 : index
    %c0_129 = arith.constant 0 : index
    %138 = vector.load %arg4[%c7_127, %c0_128, %c0_129] : memref<9x128x128xbf16, #tpu.memory_space<vmem>>, vector<1x128x128xbf16>
    %139 = vector.shape_cast %138 : vector<1x128x128xbf16> to vector<128x128xbf16>
    %cst_130 = arith.constant dense<0.000000e+00> : vector<128x128xf32>
    %140 = tpu.matmul %137, %139, %cst_130 {dimension_numbers = #tpu.dot_dimension_numbers<[1], [0], [0], [1], [0, 0, 1, 1], [], []>} : vector<128x128xbf16>, vector<128x128xbf16>, vector<128x128xf32> -> vector<128x128xf32>
    %141 = arith.addf %133, %140 : vector<128x128xf32>
    %c8_131 = arith.constant 8 : index
    %c0_132 = arith.constant 0 : index
    %c0_133 = arith.constant 0 : index
    %142 = vector.load %arg1[%c8_131, %c0_132, %c0_133] : memref<9x128x128xbf16, #tpu.memory_space<vmem>>, vector<1x128x128xbf16>
    %143 = vector.shape_cast %142 : vector<1x128x128xbf16> to vector<128x128xbf16>
    %cst_134 = arith.constant dense<0.000000e+00> : vector<128x128xf32>
    %144 = tpu.matmul %143, %78, %cst_134 {dimension_numbers = #tpu.dot_dimension_numbers<[1], [0], [0], [1], [0, 0, 1, 1], [], []>} : vector<128x128xbf16>, vector<128x128xbf16>, vector<128x128xf32> -> vector<128x128xf32>
    %145 = arith.truncf %144 : vector<128x128xf32> to vector<128x128xbf16>
    %c8_135 = arith.constant 8 : index
    %c0_136 = arith.constant 0 : index
    %c0_137 = arith.constant 0 : index
    %146 = vector.load %arg4[%c8_135, %c0_136, %c0_137] : memref<9x128x128xbf16, #tpu.memory_space<vmem>>, vector<1x128x128xbf16>
    %147 = vector.shape_cast %146 : vector<1x128x128xbf16> to vector<128x128xbf16>
    %cst_138 = arith.constant dense<0.000000e+00> : vector<128x128xf32>
    %148 = tpu.matmul %145, %147, %cst_138 {dimension_numbers = #tpu.dot_dimension_numbers<[1], [0], [0], [1], [0, 0, 1, 1], [], []>} : vector<128x128xbf16>, vector<128x128xbf16>, vector<128x128xf32> -> vector<128x128xf32>
    %149 = arith.addf %141, %148 : vector<128x128xf32>
    %c0_139 = arith.constant 0 : index
    %c0_140 = arith.constant 0 : index
    %150 = vector.load %arg5[%c0_139, %c0_140] : memref<1x128xf32, #tpu.memory_space<vmem>>, vector<1x128xf32>
    %151 = vector.broadcast %150 : vector<1x128xf32> to vector<128x128xf32>
    %152 = arith.addf %149, %151 : vector<128x128xf32>
    %153 = arith.addf %152, %1 : vector<128x128xf32>
    %cst_141 = arith.constant 0.000000e+00 : f32
    %154 = vector.broadcast %cst_141 : f32 to vector<128x128xf32>
    %155 = arith.maximumf %153, %154 : vector<128x128xf32>
    %c0_142 = arith.constant 0 : index
    %c0_143 = arith.constant 0 : index
    %156 = vector.load %arg6[%c0_142, %c0_143] : memref<8x128xf32, #tpu.memory_space<vmem>>, vector<8x128xf32>
    %cst_144 = arith.constant dense<0.000000e+00> : vector<8x128xf32>
    %157 = tpu.matmul %156, %155, %cst_144 {dimension_numbers = #tpu.dot_dimension_numbers<[1], [0], [0], [1], [0, 0, 1, 1], [], []>} : vector<8x128xf32>, vector<128x128xf32>, vector<8x128xf32> -> vector<8x128xf32>
    %158 = arith.truncf %157 : vector<8x128xf32> to vector<8x128xbf16>
    %c0_145 = arith.constant 0 : index
    %c0_146 = arith.constant 0 : index
    %159 = vector.load %arg7[%c0_145, %c0_146] : memref<128x1024xbf16, #tpu.memory_space<vmem>>, vector<128x1024xbf16>
    %cst_147 = arith.constant dense<0.000000e+00> : vector<8x1024xf32>
    %160 = tpu.matmul %158, %159, %cst_147 {dimension_numbers = #tpu.dot_dimension_numbers<[1], [0], [0], [1], [0, 0, 1, 1], [], []>} : vector<8x128xbf16>, vector<128x1024xbf16>, vector<8x1024xf32> -> vector<8x1024xf32>
    %c0_148 = arith.constant 0 : index
    %c0_149 = arith.constant 0 : index
    %161 = vector.load %arg8[%c0_148, %c0_149] : memref<1x1024xf32, #tpu.memory_space<vmem>>, vector<1x1024xf32>
    %162 = vector.broadcast %161 : vector<1x1024xf32> to vector<8x1024xf32>
    %163 = arith.addf %160, %162 : vector<8x1024xf32>
    %c0_150 = arith.constant 0 : index
    %c0_151 = arith.constant 0 : index
    %164 = vector.load %arg9[%c0_150, %c0_151] : memref<1x1024xf32, #tpu.memory_space<vmem>>, vector<1x1024xf32>
    %165 = vector.broadcast %164 : vector<1x1024xf32> to vector<8x1024xf32>
    %166 = arith.mulf %163, %165 : vector<8x1024xf32>
    %cst_152 = arith.constant dense<0.000000e+00> : vector<8xf32>
    %167 = vector.multi_reduction <add>, %166, %cst_152 [1] : vector<8x1024xf32> to vector<8xf32>
    %168 = vector.shape_cast %167 : vector<8xf32> to vector<8x1xf32>
    %c0_153 = arith.constant 0 : index
    %c0_154 = arith.constant 0 : index
    %169 = vector.load %arg10[%c0_153, %c0_154] : memref<1x1xf32, #tpu.memory_space<vmem>>, vector<1x1xf32>
    %170 = vector.broadcast %169 : vector<1x1xf32> to vector<8x1xf32>
    %171 = arith.addf %168, %170 : vector<8x1xf32>
    %c0_155 = arith.constant 0 : index
    %c0_156 = arith.constant 0 : index
    %172 = vector.load %arg11[%c0_155, %c0_156] : memref<8x1xf32, #tpu.memory_space<vmem>>, vector<8x1xf32>
    tpu.vector_store %arg11[%c0_155, %c0_156], %171 {strides = array<i32>} : memref<8x1xf32, #tpu.memory_space<vmem>>, vector<8x1xf32>,
    return
  }
}

module attributes {stable_mosaic.version = 11 : i64} {
  func.func @_gemm_fast_kernel(%arg0: i32, %arg1: i32, %arg2: memref<64x256xbf16, #tpu.memory_space<vmem>>, %arg3: memref<256x128xbf16, #tpu.memory_space<vmem>>, %arg4: memref<1x128xf32, #tpu.memory_space<vmem>>, %arg5: memref<64x128xbf16, #tpu.memory_space<vmem>>) attributes {dimension_semantics = [#tpu.dimension_semantics<parallel>, #tpu.dimension_semantics<parallel>], iteration_bounds = array<i64: 2, 1>, scalar_prefetch = 0 : i64, scratch_operands = 0 : i64, tpu.core_type = #tpu.core_type<tc>, window_params = [{transform_indices = @transform_0, window_bounds = array<i64: 64, 256>}, {transform_indices = @transform_1, window_bounds = array<i64: 256, 128>}, {transform_indices = @transform_2, window_bounds = array<i64: 1, 128>}, {transform_indices = @transform_3, window_bounds = array<i64: 64, 128>}]} {
    %c0 = arith.constant 0 : index
    %c0_0 = arith.constant 0 : index
    %0 = vector.load %arg2[%c0, %c0_0] : memref<64x256xbf16, #tpu.memory_space<vmem>>, vector<64x256xbf16>
    %c0_1 = arith.constant 0 : index
    %c0_2 = arith.constant 0 : index
    %1 = vector.load %arg3[%c0_1, %c0_2] : memref<256x128xbf16, #tpu.memory_space<vmem>>, vector<256x128xbf16>
    %cst = arith.constant dense<0.000000e+00> : vector<64x128xf32>
    %2 = tpu.matmul %0, %1, %cst {dimension_numbers = #tpu.dot_dimension_numbers<[1], [0], [0], [1], [0, 0, 1, 1], [], []>} : vector<64x256xbf16>, vector<256x128xbf16>, vector<64x128xf32> -> vector<64x128xf32>
    %c0_3 = arith.constant 0 : index
    %c0_4 = arith.constant 0 : index
    %3 = vector.load %arg4[%c0_3, %c0_4] : memref<1x128xf32, #tpu.memory_space<vmem>>, vector<1x128xf32>
    %4 = vector.broadcast %3 : vector<1x128xf32> to vector<64x128xf32>
    %5 = arith.addf %2, %4 : vector<64x128xf32>
    %cst_5 = arith.constant 0.000000e+00 : f32
    %6 = vector.broadcast %cst_5 : f32 to vector<64x128xf32>
    %7 = arith.maximumf %5, %6 : vector<64x128xf32>
    %8 = arith.truncf %7 : vector<64x128xf32> to vector<64x128xbf16>
    %c0_6 = arith.constant 0 : index
    %c0_7 = arith.constant 0 : index
    %9 = vector.load %arg5[%c0_6, %c0_7] : memref<64x128xbf16, #tpu.memory_space<vmem>>, vector<64x128xbf16>
    tpu.vector_store %arg5[%c0_6, %c0_7], %8 {strides = array<i32>} : memref<64x128xbf16, #tpu.memory_space<vmem>>, vector<64x128xbf16>,
    return
  }
  func.func @transform_0(%arg0: i32, %arg1: i32) -> (i32, i32) {
    %c0_i32 = arith.constant 0 : i32
    %c0_i32_0 = arith.constant 0 : i32
    return %arg0, %c0_i32 : i32, i32
  }
  func.func @transform_1(%arg0: i32, %arg1: i32) -> (i32, i32) {
    %c0_i32 = arith.constant 0 : i32
    %c0_i32_0 = arith.constant 0 : i32
    return %c0_i32, %arg1 : i32, i32
  }
  func.func @transform_2(%arg0: i32, %arg1: i32) -> (i32, i32) {
    %c0_i32 = arith.constant 0 : i32
    %c0_i32_0 = arith.constant 0 : i32
    return %c0_i32, %arg1 : i32, i32
  }
  func.func @transform_3(%arg0: i32, %arg1: i32) -> (i32, i32) {
    %c0_i32 = arith.constant 0 : i32
    return %arg0, %arg1 : i32, i32
  }
}

</mosaic_0001>

<llo_original>
// kernel: fishnet201_cls_forward.4
$region0: #{fishnet201_cls_forward.4}
  #allocation0 [shape = 'u32[]', space=smem, size = 0x4, offset = 0x4, fixed_abs, tag = 'smem constant byte address 0x4 - core index']
  #allocation1 [shape = 'u32[144,128]{1,0:T(1,128)}', space=vmem, size = 0x12000, scoped, tag = 'internal scratch']
  %s0 = inlined_call_operand.vmem [shape: bf16[512,128], index: 0, kind: input, shape index: {}]
  %s1 = inlined_call_operand.vmem [shape: bf16[128,128], index: 1, kind: input, shape index: {}]
  %s2 = inlined_call_operand.vmem [shape: f32[1,128], index: 2, kind: input, shape index: {}]
  %s3 = inlined_call_operand.vmem [shape: bf16[512,128], index: 3, kind: output, shape index: {}]
  %s4 = sld [smem:[#allocation0]]
  $region45: #{fishnet201_cls_forward.4} parent=0
    _
  %s6 = ssub.s32 1, %s4
  %s7 = scalar_select 0, %s6, %s4
  loop: start=0, step=1, limit=4
  $region2: #{fishnet201_cls_forward.4} parent=0 // loop_pre_header
    _
  $region3: #{fishnet201_cls_forward.4} parent=0 // loop_header
    %s9 = sphi 0, %s13
    %p10 = scmp.ge.s32.totalorder %s9, 4
    %s16 = sphi 0, %s28
    %s17 = sphi 0, %s24
    %s18 = sphi 0, %s16
    %s19 = sphi 0, %s17
    %s20 = sphi 0, %s18
    %s21 = sphi 0, %s19
    %s31 = sphi 0, %s33
    %s34 = sphi 0, %s31
    %s35 = sphi 0, %s34
    %s51 = sphi 0, %s35
    %s57 = sphi 0, %s59
    %s60 = sphi 0, %s57
    %s61 = sphi 0, %s60
    %s77 = sphi 0, %s61
    %s83 = sphi 0, %s85
    %s86 = sphi 0, %s83
    %s87 = sphi 0, %s86
    %s103 = sphi 0, %s87
    %s111 = sphi 0, %s113
    %s114 = sphi 0, %s111
    %s115 = sphi 0, %s114
    %s131 = sphi 0, %s115
  $region4: #{fishnet201_cls_forward.4} parent=0 // loop_header_branch
    %12 = sbr.rel (%p10) target = $region8
  $region5: #{fishnet201_cls_forward.4} parent=0 // loop_body
    %s14 = ssub.s32 %s9, 1
    %s15 = ssub.s32 %s9, 2
    %s22 = sadd.s32 1, %s17
    %p23 = scmp.ge.s32.totalorder %s22, 1
    %s24 = scalar_select %p23, 0, %s22
    %s25 = sadd.s32 1, %s16
    %s26 = scalar_select %p23, %s25, %s16
    %p27 = scmp.ge.s32.totalorder %s26, 2
    %s28 = scalar_select %p27, 0, %s26
    %s29 = ssub.s32 %s16, %s28
    %p30 = scmp.eq.s32.totalorder %s29, 0
    %s32 = sadd.s32 %s31, 1
    %s33 = scalar_select %p30, %s31, %s32
    %p36 = pneg %p30
    %p37 = scmp.eq.s32.totalorder %s9, 1
    %p38 = por %p36, %p37
    %p39 = scmp.ne.s32.totalorder %s31, %s34
    %p40 = scmp.eq.s32.totalorder %s9, 0
    %p41 = por %p39, %p40
    %p42 = scmp.ne.s32.totalorder %s31, %s34
    %p43 = scmp.eq.s32.totalorder %s14, 1
    %p44 = por %p42, %p43
    %p45 = scmp.ne.s32.totalorder %s34, %s35
    %p46 = scmp.eq.s32.totalorder %s14, 0
    %p47 = por %p45, %p46
    %p48 = scmp.ne.s32.totalorder %s34, %s35
    %p49 = scmp.eq.s32.totalorder %s15, 1
    %p50 = por %p48, %p49
    %p52 = scmp.ne.s32.totalorder %s35, %s51
    %p53 = scmp.eq.s32.totalorder %s15, 0
    %p54 = por %p52, %p53
    %s55 = ssub.s32 %s17, %s24
    %p56 = scmp.eq.s32.totalorder %s55, 0
    %s58 = sadd.s32 %s57, 1
    %s59 = scalar_select %p56, %s57, %s58
    %p62 = pneg %p56
    %p63 = scmp.eq.s32.totalorder %s9, 1
    %p64 = por %p62, %p63
    %p65 = scmp.ne.s32.totalorder %s57, %s60
    %p66 = scmp.eq.s32.totalorder %s9, 0
    %p67 = por %p65, %p66
    %p68 = scmp.ne.s32.totalorder %s57, %s60
    %p69 = scmp.eq.s32.totalorder %s14, 1
    %p70 = por %p68, %p69
    %p71 = scmp.ne.s32.totalorder %s60, %s61
    %p72 = scmp.eq.s32.totalorder %s14, 0
    %p73 = por %p71, %p72
    %p74 = scmp.ne.s32.totalorder %s60, %s61
    %p75 = scmp.eq.s32.totalorder %s15, 1
    %p76 = por %p74, %p75
    %p78 = scmp.ne.s32.totalorder %s61, %s77
    %p79 = scmp.eq.s32.totalorder %s15, 0
    %p80 = por %p78, %p79
    %s81 = ssub.s32 %s17, %s24
    %p82 = scmp.eq.s32.totalorder %s81, 0
    %s84 = sadd.s32 %s83, 1
    %s85 = scalar_select %p82, %s83, %s84
    %p88 = pneg %p82
    %p89 = scmp.eq.s32.totalorder %s9, 1
    %p90 = por %p88, %p89
    %p91 = scmp.ne.s32.totalorder %s83, %s86
    %p92 = scmp.eq.s32.totalorder %s9, 0
    %p93 = por %p91, %p92
    %p94 = scmp.ne.s32.totalorder %s83, %s86
    %p95 = scmp.eq.s32.totalorder %s14, 1
    %p96 = por %p94, %p95
    %p97 = scmp.ne.s32.totalorder %s86, %s87
    %p98 = scmp.eq.s32.totalorder %s14, 0
    %p99 = por %p97, %p98
    %p100 = scmp.ne.s32.totalorder %s86, %s87
    %p101 = scmp.eq.s32.totalorder %s15, 1
    %p102 = por %p100, %p101
    %p104 = scmp.ne.s32.totalorder %s87, %s103
    %p105 = scmp.eq.s32.totalorder %s15, 0
    %p106 = por %p104, %p105
    %s107 = ssub.s32 %s16, %s28
    %s108 = ssub.s32 %s17, %s24
    %s109 = sor.u32 %s107, %s108
    %p110 = scmp.eq.s32.totalorder %s109, 0
    %s112 = sadd.s32 %s111, 1
    %s113 = scalar_select %p110, %s111, %s112
    %p116 = pneg %p110
    %p117 = scmp.eq.s32.totalorder %s9, 1
    %p118 = por %p116, %p117
    %p119 = scmp.ne.s32.totalorder %s111, %s114
    %p120 = scmp.eq.s32.totalorder %s9, 0
    %p121 = por %p119, %p120
    %p122 = scmp.ne.s32.totalorder %s111, %s114
    %p123 = scmp.eq.s32.totalorder %s14, 1
    %p124 = por %p122, %p123
    %p125 = scmp.ne.s32.totalorder %s114, %s115
    %p126 = scmp.eq.s32.totalorder %s14, 0
    %p127 = por %p125, %p126
    %p128 = scmp.ne.s32.totalorder %s114, %s115
    %p129 = scmp.eq.s32.totalorder %s15, 1
    %p130 = por %p128, %p129
    %p132 = scmp.ne.s32.totalorder %s115, %s131
    %p133 = scmp.eq.s32.totalorder %s15, 0
    %p134 = por %p132, %p133
    %p135 = scmp.le.s32.totalorder 1, %s9
    %p136 = scmp.lt.s32.totalorder %s9, 3
    %p137 = pnand %p135, %p136
    %p138 = pneg %p137
    // Predicated region
    $region9: #{fishnet201_cls_forward.4} parent=5 // pred_check
      _
    $region10: #{fishnet201_cls_forward.4} parent=5 // pred_check_branch
      %140 = sbr.rel (%p137) target = $region12
    $region11: #{fishnet201_cls_forward.4} parent=5 // pred_region
      %s141 = ssub.s32 %s9, 1
      // Predicated region
      $region13: #{fishnet201_cls_forward.4} parent=11 // pred_check
        %p142 = pneg %p73
      $region14: #{fishnet201_cls_forward.4} parent=11 // pred_check_branch
        %144 = sbr.rel (%p142) target = $region16
      $region15: #{fishnet201_cls_forward.4} parent=11 // pred_region
        %p145 = scmp.lt.s32.totalorder %s19, 0
        %s146 = scalar_select %p145, %s19, 0
        %s147 = smul.addr %s146, 4
        %s148 = scalar_lea.vmem %s1, %s147
      $region16: #{fishnet201_cls_forward.4} parent=11 // pred_fallthru
        _
      // Predicated region
      $region17: #{fishnet201_cls_forward.4} parent=11 // pred_check
        %p149 = pneg %p99
      $region18: #{fishnet201_cls_forward.4} parent=11 // pred_check_branch
        %151 = sbr.rel (%p149) target = $region20
      $region19: #{fishnet201_cls_forward.4} parent=11 // pred_region
        %p152 = scmp.lt.s32.totalorder %s19, 0
        %s153 = scalar_select %p152, %s19, 0
        %s154 = scalar_lea.vmem %s2, %s153
      $region20: #{fishnet201_cls_forward.4} parent=11 // pred_fallthru
        _
    $region12: #{fishnet201_cls_forward.4} parent=5 // pred_fallthru
      _
    %p155 = scmp.lt.s32.totalorder %s9, 2
    // Predicated region
    $region21: #{fishnet201_cls_forward.4} parent=5 // pred_check
      %p156 = pneg %p155
    $region22: #{fishnet201_cls_forward.4} parent=5 // pred_check_branch
      %158 = sbr.rel (%p156) target = $region24
    $region23: #{fishnet201_cls_forward.4} parent=5 // pred_region
      // Predicated region
      $region25: #{fishnet201_cls_forward.4} parent=23 // pred_check
        %p159 = pneg %p41
      $region26: #{fishnet201_cls_forward.4} parent=23 // pred_check_branch
        %161 = sbr.rel (%p159) target = $region28
      $region27: #{fishnet201_cls_forward.4} parent=23 // pred_region
        %s162 = smul.u32 32, %s16
        %p163 = scmp.lt.s32.totalorder %s162, 63
        %s164 = scalar_select %p163, %s162, 63
        %s165 = smul.addr %s164, 4
        %s166 = scalar_lea.vmem %s0, %s165
        %s167 = smul.u32 32, %s16
      $region28: #{fishnet201_cls_forward.4} parent=23 // pred_fallthru
        _
    $region24: #{fishnet201_cls_forward.4} parent=5 // pred_fallthru
      _
    %p168 = scmp.le.s32.totalorder 1, %s9
    %p169 = scmp.lt.s32.totalorder %s9, 3
    %p170 = pnand %p168, %p169
    %p171 = pneg %p170
    // Predicated region
    $region29: #{fishnet201_cls_forward.4} parent=5 // pred_check
      _
    $region30: #{fishnet201_cls_forward.4} parent=5 // pred_check_branch
      %173 = sbr.rel (%p170) target = $region32
    $region31: #{fishnet201_cls_forward.4} parent=5 // pred_region
      %s174 = ssub.s32 %s9, 1
      %s175 = smul.u32 32, %s18
      %p176 = scmp.lt.s32.totalorder %s175, 63
      %s177 = scalar_select %p176, %s175, 63
      %s178 = smul.addr %s177, 4
      %s179 = scalar_lea.vmem %s0, %s178
      %p180 = pneg %p47
      %p181 = pneg %p44
      %p182 = scmp.lt.s32.totalorder %s19, 0
      %s183 = scalar_select %p182, %s19, 0
      %s184 = smul.addr %s183, 4
      %s185 = scalar_lea.vmem %s1, %s184
      %p186 = pneg %p73
      %p187 = pneg %p70
      %p188 = scmp.lt.s32.totalorder %s19, 0
      %s189 = scalar_select %p188, %s19, 0
      %s190 = scalar_lea.vmem %s2, %s189
      %p191 = pneg %p99
      %p192 = pneg %p96
      %p193 = pneg %p127
      %p194 = pneg %p124
      %s195 = smul.u32 32, %s18
      %p196 = scmp.lt.s32.totalorder %s195, 63
      %s197 = scalar_select %p196, %s195, 63
      %p198 = scmp.lt.s32.totalorder %s19, 0
      %s199 = scalar_select %p198, %s19, 0
      %s200 = sadd.s32 %s199, %s197
      %s201 = smul.addr %s200, 4
      %s202 = scalar_lea.vmem %s3, %s201
      %s203 = smul.u32 32, %s18
      %p204 = scmp.lt.s32.totalorder %s203, 63
      %s205 = scalar_select %p204, %s203, 63
      %s206 = smul.addr %s205, 4
      %s207 = scalar_lea.vmem %s0, %s206
      %s208 = smul.u32 32, %s18
      %p209 = scmp.lt.s32.totalorder %s19, 0
      %s210 = scalar_select %p209, %s19, 0
      %s211 = smul.addr %s210, 4
      %s212 = scalar_lea.vmem %s1, %s211
      %p213 = scmp.lt.s32.totalorder %s19, 0
      %s214 = scalar_select %p213, %s19, 0
      %s215 = scalar_lea.vmem %s2, %s214
      %s216 = smul.u32 32, %s18
      %p217 = scmp.lt.s32.totalorder %s216, 63
      %s218 = scalar_select %p217, %s216, 63
      %p219 = scmp.lt.s32.totalorder %s19, 0
      %s220 = scalar_select %p219, %s19, 0
      %s221 = sadd.s32 %s220, %s218
      %s222 = smul.addr %s221, 4
      %s223 = scalar_lea.vmem %s3, %s222
      %s224 = smul.u32 32, %s18
      %v226 = vld [vmem:[%s207] sm:$0xf]
      %v227 = vld [vmem:[%s207 + $0x4] sm:$0xf]
      %v228 = vld [vmem:[%s207 + $0x8] sm:$0xf]
      %v229 = vld [vmem:[%s207 + $0xc] sm:$0xf]
      %v230 = vld [vmem:[%s207 + $0x10] sm:$0xf]
      %v231 = vld [vmem:[%s207 + $0x14] sm:$0xf]
      %v232 = vld [vmem:[%s207 + $0x18] sm:$0xf]
      %v233 = vld [vmem:[%s207 + $0x1c] sm:$0xf]
      %v234 = vld [vmem:[%s207 + $0x20] sm:$0xf]
      %v235 = vld [vmem:[%s207 + $0x24] sm:$0xf]
      %v236 = vld [vmem:[%s207 + $0x28] sm:$0xf]
      %v237 = vld [vmem:[%s207 + $0x2c] sm:$0xf]
      %v238 = vld [vmem:[%s207 + $0x30] sm:$0xf]
      %v239 = vld [vmem:[%s207 + $0x34] sm:$0xf]
      %v240 = vld [vmem:[%s207 + $0x38] sm:$0xf]
      %v241 = vld [vmem:[%s207 + $0x3c] sm:$0xf]
      %v242 = vld [vmem:[%s207 + $0x40] sm:$0xf]
      %v243 = vld [vmem:[%s207 + $0x44] sm:$0xf]
      %v244 = vld [vmem:[%s207 + $0x48] sm:$0xf]
      %v245 = vld [vmem:[%s207 + $0x4c] sm:$0xf]
      %v246 = vld [vmem:[%s207 + $0x50] sm:$0xf]
      %v247 = vld [vmem:[%s207 + $0x54] sm:$0xf]
      %v248 = vld [vmem:[%s207 + $0x58] sm:$0xf]
      %v249 = vld [vmem:[%s207 + $0x5c] sm:$0xf]
      %v250 = vld [vmem:[%s207 + $0x60] sm:$0xf]
      %v251 = vld [vmem:[%s207 + $0x64] sm:$0xf]
      %v252 = vld [vmem:[%s207 + $0x68] sm:$0xf]
      %v253 = vld [vmem:[%s207 + $0x6c] sm:$0xf]
      %v254 = vld [vmem:[%s207 + $0x70] sm:$0xf]
      %v255 = vld [vmem:[%s207 + $0x74] sm:$0xf]
      %v256 = vld [vmem:[%s207 + $0x78] sm:$0xf]
      %v257 = vld [vmem:[%s207 + $0x7c] sm:$0xf]
      %v258 = vld [vmem:[%s212] sm:$0xf]
      %v259 = vld [vmem:[%s212 + $0x4] sm:$0xf]
      %v260 = vld [vmem:[%s212 + $0x8] sm:$0xf]
      %v261 = vld [vmem:[%s212 + $0xc] sm:$0xf]
      %v262 = vld [vmem:[%s212 + $0x10] sm:$0xf]
      %v263 = vld [vmem:[%s212 + $0x14] sm:$0xf]
      %v264 = vld [vmem:[%s212 + $0x18] sm:$0xf]
      %v265 = vld [vmem:[%s212 + $0x1c] sm:$0xf]
      %v266 = vld [vmem:[%s212 + $0x20] sm:$0xf]
      %v267 = vld [vmem:[%s212 + $0x24] sm:$0xf]
      %v268 = vld [vmem:[%s212 + $0x28] sm:$0xf]
      %v269 = vld [vmem:[%s212 + $0x2c] sm:$0xf]
      %v270 = vld [vmem:[%s212 + $0x30] sm:$0xf]
      %v271 = vld [vmem:[%s212 + $0x34] sm:$0xf]
      %v272 = vld [vmem:[%s212 + $0x38] sm:$0xf]
      %v273 = vld [vmem:[%s212 + $0x3c] sm:$0xf]
      %v274 = vld [vmem:[%s215] sm:$0x1]
      %v276 = vlaneseq
      %v277 = vshrl.u32 %v276, 7
      %v278 = vsub.s32 0, %v277
      %v279 = vrot.slane %v274, %v278
      %v313 = vunpack.c.l.b16 %v226
      %v314 = vunpack.c.l.b16 %v227
      %v315 = vunpack.c.l.b16 %v228
      %v316 = vunpack.c.l.b16 %v229
      %v317 = vunpack.c.l.b16 %v230
      %v318 = vunpack.c.l.b16 %v231
      %v319 = vunpack.c.l.b16 %v232
      %v320 = vunpack.c.l.b16 %v233
      %v321 = vunpack.c.l.b16 %v234
      %v322 = vunpack.c.l.b16 %v235
      %v323 = vunpack.c.l.b16 %v236
      %v324 = vunpack.c.l.b16 %v237
      %v325 = vunpack.c.l.b16 %v238
      %v326 = vunpack.c.l.b16 %v239
      %v327 = vunpack.c.l.b16 %v240
      %v328 = vunpack.c.l.b16 %v241
      %v329 = vunpack.c.l.b16 %v242
      %v330 = vunpack.c.l.b16 %v243
      %v331 = vunpack.c.l.b16 %v244
      %v332 = vunpack.c.l.b16 %v245
      %v333 = vunpack.c.l.b16 %v246
      %v334 = vunpack.c.l.b16 %v247
      %v335 = vunpack.c.l.b16 %v248
      %v336 = vunpack.c.l.b16 %v249
      %v337 = vunpack.c.l.b16 %v250
      %v338 = vunpack.c.l.b16 %v251
      %v339 = vunpack.c.l.b16 %v252
      %v340 = vunpack.c.l.b16 %v253
      %v341 = vunpack.c.l.b16 %v254
      %v342 = vunpack.c.l.b16 %v255
      %v343 = vunpack.c.l.b16 %v256
      %v344 = vunpack.c.l.b16 %v257
      %v345 = vpack.c.b16 %v314, %v313
      %v346 = vpack.c.b16 %v316, %v315
      %v347 = vpack.c.b16 %v318, %v317
      %v348 = vpack.c.b16 %v320, %v319
      %v349 = vpack.c.b16 %v322, %v321
      %v350 = vpack.c.b16 %v324, %v323
      %v351 = vpack.c.b16 %v326, %v325
      %v352 = vpack.c.b16 %v328, %v327
      %v353 = vpack.c.b16 %v330, %v329
      %v354 = vpack.c.b16 %v332, %v331
      %v355 = vpack.c.b16 %v334, %v333
      %v356 = vpack.c.b16 %v336, %v335
      %v357 = vpack.c.b16 %v338, %v337
      %v358 = vpack.c.b16 %v340, %v339
      %v359 = vpack.c.b16 %v342, %v341
      %v360 = vpack.c.b16 %v344, %v343
      %v393 = vunpack.c.l.b16 %v258
      %v394 = vunpack.c.l.b16 %v259
      %v395 = vunpack.c.l.b16 %v260
      %v396 = vunpack.c.l.b16 %v261
      %v397 = vunpack.c.l.b16 %v262
      %v398 = vunpack.c.l.b16 %v263
      %v399 = vunpack.c.l.b16 %v264
      %v400 = vunpack.c.l.b16 %v265
      %v401 = vunpack.c.l.b16 %v266
      %v402 = vunpack.c.l.b16 %v267
      %v403 = vunpack.c.l.b16 %v268
      %v404 = vunpack.c.l.b16 %v269
      %v405 = vunpack.c.l.b16 %v270
      %v406 = vunpack.c.l.b16 %v271
      %v407 = vunpack.c.l.b16 %v272
      %v408 = vunpack.c.l.b16 %v273
      %v409 = vpack.c.b16 %v394, %v393
      %v410 = vpack.c.b16 %v396, %v395
      %v411 = vpack.c.b16 %v398, %v397
      %v412 = vpack.c.b16 %v400, %v399
      %v413 = vpack.c.b16 %v402, %v401
      %v414 = vpack.c.b16 %v404, %v403
      %v415 = vpack.c.b16 %v406, %v405
      %v416 = vpack.c.b16 %v408, %v407
      %425 = vmatprep.subr.bf16.mxu0 0
      %426 = vmatpush1.bf16.msra.mxu0 %v409
      %427 = vmatprep.subr.bf16.mxu0 0
      %428 = vmatpush1.bf16.msra.mxu0 %v410
      %429 = vmatprep.subr.bf16.mxu0 0
      %430 = vmatpush1.bf16.msra.mxu0 %v411
      %431 = vmatprep.subr.bf16.mxu0 0
      %432 = vmatpush1.bf16.msra.mxu0 %v412
      %433 = vmatprep.subr.bf16.mxu0 0
      %434 = vmatpush1.bf16.msra.mxu0 %v413
      %435 = vmatprep.subr.bf16.mxu0 0
      %436 = vmatpush1.bf16.msra.mxu0 %v414
      %437 = vmatprep.subr.bf16.mxu0 0
      %438 = vmatpush1.bf16.msra.mxu0 %v415
      %439 = vmatprep.subr.bf16.mxu0 0
      %440 = vmatpush1.bf16.msra.mxu0 %v416
      %441 = vmatprep.subr.bf16.mxu0 0
      %442 = vmatpush1.bf16.msra.mxu0 0
      %443 = vmatprep.subr.bf16.mxu0 0
      %444 = vmatpush1.bf16.msra.mxu0 0
      %445 = vmatprep.subr.bf16.mxu0 0
      %446 = vmatpush1.bf16.msra.mxu0 0
      %447 = vmatprep.subr.bf16.mxu0 0
      %448 = vmatpush1.bf16.msra.mxu0 0
      %449 = vmatprep.subr.bf16.mxu0 0
      %450 = vmatpush1.bf16.msra.mxu0 0
      %451 = vmatprep.subr.bf16.mxu0 0
      %452 = vmatpush1.bf16.msra.mxu0 0
      %453 = vmatprep.subr.bf16.mxu0 0
      %454 = vmatpush1.bf16.msra.mxu0 0
      %455 = vmatprep.subr.bf16.mxu0 0
      %456 = vmatpush1.bf16.msra.mxu0 0
      %457 = vmatprep.mubr.bf16.mxu0 0
      %458 = vmatmul.mubr.bf16.gmra.mrb[0].mxu0 %v345
      %v459 = vpop.f32.mrb[0].mxu0
      %v460 = vadd.f32 %v279, %v459
      %v461 = vpop.f32.mrb[0].mxu0
      %v462 = vpop.f32.mrb[0].mxu0
      %v463 = vadd.f32 %v279, %v462
      %v464 = vpop.f32.mrb[0].mxu0
      %465 = vmatprep.mubr.bf16.mxu0 0
      %466 = vmatmul.mubr.bf16.gmra.mrb[0].mxu0 %v346
      %v467 = vpop.f32.mrb[0].mxu0
      %v468 = vadd.f32 %v279, %v467
      %v469 = vpop.f32.mrb[0].mxu0
      %v470 = vpop.f32.mrb[0].mxu0
      %v471 = vadd.f32 %v279, %v470
      %v472 = vpop.f32.mrb[0].mxu0
      %473 = vmatprep.mubr.bf16.mxu0 0
      %474 = vmatmul.mubr.bf16.gmra.mrb[0].mxu0 %v347
      %v475 = vpop.f32.mrb[0].mxu0
      %v476 = vadd.f32 %v279, %v475
      %v477 = vpop.f32.mrb[0].mxu0
      %v478 = vpop.f32.mrb[0].mxu0
      %v479 = vadd.f32 %v279, %v478
      %v480 = vpop.f32.mrb[0].mxu0
      %481 = vmatprep.mubr.bf16.mxu0 0
      %482 = vmatmul.mubr.bf16.gmra.mrb[0].mxu0 %v348
      %v483 = vpop.f32.mrb[0].mxu0
      %v484 = vadd.f32 %v279, %v483
      %v485 = vpop.f32.mrb[0].mxu0
      %v486 = vpop.f32.mrb[0].mxu0
      %v487 = vadd.f32 %v279, %v486
      %v488 = vpop.f32.mrb[0].mxu0
      %489 = vmatprep.mubr.bf16.mxu0 0
      %490 = vmatmul.mubr.bf16.gmra.mrb[0].mxu0 %v349
      %v491 = vpop.f32.mrb[0].mxu0
      %v492 = vadd.f32 %v279, %v491
      %v493 = vpop.f32.mrb[0].mxu0
      %v494 = vpop.f32.mrb[0].mxu0
      %v495 = vadd.f32 %v279, %v494
      %v496 = vpop.f32.mrb[0].mxu0
      %497 = vmatprep.mubr.bf16.mxu0 0
      %498 = vmatmul.mubr.bf16.gmra.mrb[0].mxu0 %v350
      %v499 = vpop.f32.mrb[0].mxu0
      %v500 = vadd.f32 %v279, %v499
      %v501 = vpop.f32.mrb[0].mxu0
      %v502 = vpop.f32.mrb[0].mxu0
      %v503 = vadd.f32 %v279, %v502
      %v504 = vpop.f32.mrb[0].mxu0
      %505 = vmatprep.mubr.bf16.mxu0 0
      %506 = vmatmul.mubr.bf16.gmra.mrb[0].mxu0 %v351
      %v507 = vpop.f32.mrb[0].mxu0
      %v508 = vadd.f32 %v279, %v507
      %v509 = vpop.f32.mrb[0].mxu0
      %v510 = vpop.f32.mrb[0].mxu0
      %v511 = vadd.f32 %v279, %v510
      %v512 = vpop.f32.mrb[0].mxu0
      %513 = vmatprep.mubr.bf16.mxu0 0
      %514 = vmatmul.mubr.bf16.gmra.mrb[0].mxu0 %v352
      %v515 = vpop.f32.mrb[0].mxu0
      %v516 = vadd.f32 %v279, %v515
      %v517 = vpop.f32.mrb[0].mxu0
      %v518 = vpop.f32.mrb[0].mxu0
      %v519 = vadd.f32 %v279, %v518
      %v520 = vpop.f32.mrb[0].mxu0
      %521 = vmatprep.mubr.bf16.mxu0 0
      %522 = vmatmul.mubr.bf16.gmra.mrb[0].mxu0 %v353
      %v523 = vpop.f32.mrb[0].mxu0
      %v524 = vadd.f32 %v279, %v523
      %v525 = vpop.f32.mrb[0].mxu0
      %v526 = vpop.f32.mrb[0].mxu0
      %v527 = vadd.f32 %v279, %v526
      %v528 = vpop.f32.mrb[0].mxu0
      %529 = vmatprep.mubr.bf16.mxu0 0
      %530 = vmatmul.mubr.bf16.gmra.mrb[0].mxu0 %v354
      %v531 = vpop.f32.mrb[0].mxu0
      %v532 = vadd.f32 %v279, %v531
      %v533 = vpop.f32.mrb[0].mxu0
      %v534 = vpop.f32.mrb[0].mxu0
      %v535 = vadd.f32 %v279, %v534
      %v536 = vpop.f32.mrb[0].mxu0
      %537 = vmatprep.mubr.bf16.mxu0 0
      %538 = vmatmul.mubr.bf16.gmra.mrb[0].mxu0 %v355
      %v539 = vpop.f32.mrb[0].mxu0
      %v540 = vadd.f32 %v279, %v539
      %v541 = vpop.f32.mrb[0].mxu0
      %v542 = vpop.f32.mrb[0].mxu0
      %v543 = vadd.f32 %v279, %v542
      %v544 = vpop.f32.mrb[0].mxu0
      %545 = vmatprep.mubr.bf16.mxu0 0
      %546 = vmatmul.mubr.bf16.gmra.mrb[0].mxu0 %v356
      %v547 = vpop.f32.mrb[0].mxu0
      %v548 = vadd.f32 %v279, %v547
      %v549 = vpop.f32.mrb[0].mxu0
      %v550 = vpop.f32.mrb[0].mxu0
      %v551 = vadd.f32 %v279, %v550
      %v552 = vpop.f32.mrb[0].mxu0
      %553 = vmatprep.mubr.bf16.mxu0 0
      %554 = vmatmul.mubr.bf16.gmra.mrb[0].mxu0 %v357
      %v555 = vpop.f32.mrb[0].mxu0
      %v556 = vadd.f32 %v279, %v555
      %v557 = vpop.f32.mrb[0].mxu0
      %v558 = vpop.f32.mrb[0].mxu0
      %v559 = vadd.f32 %v279, %v558
      %v560 = vpop.f32.mrb[0].mxu0
      %561 = vmatprep.mubr.bf16.mxu0 0
      %562 = vmatmul.mubr.bf16.gmra.mrb[0].mxu0 %v358
      %v563 = vpop.f32.mrb[0].mxu0
      %v564 = vadd.f32 %v279, %v563
      %v565 = vpop.f32.mrb[0].mxu0
      %v566 = vpop.f32.mrb[0].mxu0
      %v567 = vadd.f32 %v279, %v566
      %v568 = vpop.f32.mrb[0].mxu0
      %569 = vmatprep.mubr.bf16.mxu0 0
      %570 = vmatmul.mubr.bf16.gmra.mrb[0].mxu0 %v359
      %v571 = vpop.f32.mrb[0].mxu0
      %v572 = vadd.f32 %v279, %v571
      %v573 = vpop.f32.mrb[0].mxu0
      %v574 = vpop.f32.mrb[0].mxu0
      %v575 = vadd.f32 %v279, %v574
      %v576 = vpop.f32.mrb[0].mxu0
      %577 = vmatprep.mubr.bf16.mxu0 0
      %578 = vmatmul.mubr.bf16.gmra.mrb[0].mxu0 %v360
      %v579 = vpop.f32.mrb[0].mxu0
      %v580 = vadd.f32 %v279, %v579
      %v581 = vpop.f32.mrb[0].mxu0
      %v582 = vpop.f32.mrb[0].mxu0
      %v583 = vadd.f32 %v279, %v582
      %v584 = vpop.f32.mrb[0].mxu0
      %585 = vdwg.mxu0
      %v586 = vmax.f32 %v460, 0.0
      %v587 = vmax.f32 %v463, 0.0
      %v588 = vmax.f32 %v468, 0.0
      %v589 = vmax.f32 %v471, 0.0
      %v590 = vmax.f32 %v476, 0.0
      %v591 = vmax.f32 %v479, 0.0
      %v592 = vmax.f32 %v484, 0.0
      %v593 = vmax.f32 %v487, 0.0
      %v594 = vmax.f32 %v492, 0.0
      %v595 = vmax.f32 %v495, 0.0
      %v596 = vmax.f32 %v500, 0.0
      %v597 = vmax.f32 %v503, 0.0
      %v598 = vmax.f32 %v508, 0.0
      %v599 = vmax.f32 %v511, 0.0
      %v600 = vmax.f32 %v516, 0.0
      %v601 = vmax.f32 %v519, 0.0
      %v602 = vmax.f32 %v524, 0.0
      %v603 = vmax.f32 %v527, 0.0
      %v604 = vmax.f32 %v532, 0.0
      %v605 = vmax.f32 %v535, 0.0
      %v606 = vmax.f32 %v540, 0.0
      %v607 = vmax.f32 %v543, 0.0
      %v608 = vmax.f32 %v548, 0.0
      %v609 = vmax.f32 %v551, 0.0
      %v610 = vmax.f32 %v556, 0.0
      %v611 = vmax.f32 %v559, 0.0
      %v612 = vmax.f32 %v564, 0.0
      %v613 = vmax.f32 %v567, 0.0
      %v614 = vmax.f32 %v572, 0.0
      %v615 = vmax.f32 %v575, 0.0
      %v616 = vmax.f32 %v580, 0.0
      %v617 = vmax.f32 %v583, 0.0
      %v618 = vpack.c.bf16 %v587, %v586
      %v619 = vpack.c.bf16 %v589, %v588
      %v620 = vpack.c.bf16 %v591, %v590
      %v621 = vpack.c.bf16 %v593, %v592
      %v622 = vpack.c.bf16 %v595, %v594
      %v623 = vpack.c.bf16 %v597, %v596
      %v624 = vpack.c.bf16 %v599, %v598
      %v625 = vpack.c.bf16 %v601, %v600
      %v626 = vpack.c.bf16 %v603, %v602
      %v627 = vpack.c.bf16 %v605, %v604
      %v628 = vpack.c.bf16 %v607, %v606
      %v629 = vpack.c.bf16 %v609, %v608
      %v630 = vpack.c.bf16 %v611, %v610
      %v631 = vpack.c.bf16 %v613, %v612
      %v632 = vpack.c.bf16 %v615, %v614
      %v633 = vpack.c.bf16 %v617, %v616
      %v650 = vunpack.c.l.b16 %v618
      %v651 = vunpack.c.h.b16 %v618
      %v652 = vunpack.c.l.b16 %v619
      %v653 = vunpack.c.h.b16 %v619
      %v654 = vunpack.c.l.b16 %v620
      %v655 = vunpack.c.h.b16 %v620
      %v656 = vunpack.c.l.b16 %v621
      %v657 = vunpack.c.h.b16 %v621
      %v658 = vunpack.c.l.b16 %v622
      %v659 = vunpack.c.h.b16 %v622
      %v660 = vunpack.c.l.b16 %v623
      %v661 = vunpack.c.h.b16 %v623
      %v662 = vunpack.c.l.b16 %v624
      %v663 = vunpack.c.h.b16 %v624
      %v664 = vunpack.c.l.b16 %v625
      %v665 = vunpack.c.h.b16 %v625
      %v666 = vunpack.c.l.b16 %v626
      %v667 = vunpack.c.h.b16 %v626
      %v668 = vunpack.c.l.b16 %v627
      %v669 = vunpack.c.h.b16 %v627
      %v670 = vunpack.c.l.b16 %v628
      %v671 = vunpack.c.h.b16 %v628
      %v672 = vunpack.c.l.b16 %v629
      %v673 = vunpack.c.h.b16 %v629
      %v674 = vunpack.c.l.b16 %v630
      %v675 = vunpack.c.h.b16 %v630
      %v676 = vunpack.c.l.b16 %v631
      %v677 = vunpack.c.h.b16 %v631
      %v678 = vunpack.c.l.b16 %v632
      %v679 = vunpack.c.h.b16 %v632
      %v680 = vunpack.c.l.b16 %v633
      %v681 = vunpack.c.h.b16 %v633
      %v682 = vpack.c.b16 %v650, %v650
      %v683 = vpack.c.b16 %v651, %v651
      %v684 = vpack.c.b16 %v652, %v652
      %v685 = vpack.c.b16 %v653, %v653
      %v686 = vpack.c.b16 %v654, %v654
      %v687 = vpack.c.b16 %v655, %v655
      %v688 = vpack.c.b16 %v656, %v656
      %v689 = vpack.c.b16 %v657, %v657
      %v690 = vpack.c.b16 %v658, %v658
      %v691 = vpack.c.b16 %v659, %v659
      %v692 = vpack.c.b16 %v660, %v660
      %v693 = vpack.c.b16 %v661, %v661
      %v694 = vpack.c.b16 %v662, %v662
      %v695 = vpack.c.b16 %v663, %v663
      %v696 = vpack.c.b16 %v664, %v664
      %v697 = vpack.c.b16 %v665, %v665
      %v698 = vpack.c.b16 %v666, %v666
      %v699 = vpack.c.b16 %v667, %v667
      %v700 = vpack.c.b16 %v668, %v668
      %v701 = vpack.c.b16 %v669, %v669
      %v702 = vpack.c.b16 %v670, %v670
      %v703 = vpack.c.b16 %v671, %v671
      %v704 = vpack.c.b16 %v672, %v672
      %v705 = vpack.c.b16 %v673, %v673
      %v706 = vpack.c.b16 %v674, %v674
      %v707 = vpack.c.b16 %v675, %v675
      %v708 = vpack.c.b16 %v676, %v676
      %v709 = vpack.c.b16 %v677, %v677
      %v710 = vpack.c.b16 %v678, %v678
      %v711 = vpack.c.b16 %v679, %v679
      %v712 = vpack.c.b16 %v680, %v680
      %v713 = vpack.c.b16 %v681, %v681
      %746 = vst [vmem:[%s223] sm:$0xf] %v682
      %747 = vst [vmem:[%s223 + $0x4] sm:$0xf] %v683
      %748 = vst [vmem:[%s223 + $0x8] sm:$0xf] %v684
      %749 = vst [vmem:[%s223 + $0xc] sm:$0xf] %v685
      %750 = vst [vmem:[%s223 + $0x10] sm:$0xf] %v686
      %751 = vst [vmem:[%s223 + $0x14] sm:$0xf] %v687
      %752 = vst [vmem:[%s223 + $0x18] sm:$0xf] %v688
      %753 = vst [vmem:[%s223 + $0x1c] sm:$0xf] %v689
      %754 = vst [vmem:[%s223 + $0x20] sm:$0xf] %v690
      %755 = vst [vmem:[%s223 + $0x24] sm:$0xf] %v691
      %756 = vst [vmem:[%s223 + $0x28] sm:$0xf] %v692
      %757 = vst [vmem:[%s223 + $0x2c] sm:$0xf] %v693
      %758 = vst [vmem:[%s223 + $0x30] sm:$0xf] %v694
      %759 = vst [vmem:[%s223 + $0x34] sm:$0xf] %v695
      %760 = vst [vmem:[%s223 + $0x38] sm:$0xf] %v696
      %761 = vst [vmem:[%s223 + $0x3c] sm:$0xf] %v697
      %762 = vst [vmem:[%s223 + $0x40] sm:$0xf] %v698
      %763 = vst [vmem:[%s223 + $0x44] sm:$0xf] %v699
      %764 = vst [vmem:[%s223 + $0x48] sm:$0xf] %v700
      %765 = vst [vmem:[%s223 + $0x4c] sm:$0xf] %v701
      %766 = vst [vmem:[%s223 + $0x50] sm:$0xf] %v702
      %767 = vst [vmem:[%s223 + $0x54] sm:$0xf] %v703
      %768 = vst [vmem:[%s223 + $0x58] sm:$0xf] %v704
      %769 = vst [vmem:[%s223 + $0x5c] sm:$0xf] %v705
      %770 = vst [vmem:[%s223 + $0x60] sm:$0xf] %v706
      %771 = vst [vmem:[%s223 + $0x64] sm:$0xf] %v707
      %772 = vst [vmem:[%s223 + $0x68] sm:$0xf] %v708
      %773 = vst [vmem:[%s223 + $0x6c] sm:$0xf] %v709
      %774 = vst [vmem:[%s223 + $0x70] sm:$0xf] %v710
      %775 = vst [vmem:[%s223 + $0x74] sm:$0xf] %v711
      %776 = vst [vmem:[%s223 + $0x78] sm:$0xf] %v712
      %777 = vst [vmem:[%s223 + $0x7c] sm:$0xf] %v713
      %s778 = smul.u32 32, %s18
      %p779 = scmp.lt.s32.totalorder %s778, 63
      %s780 = scalar_select %p779, %s778, 63
      %p781 = scmp.lt.s32.totalorder %s19, 0
      %s782 = scalar_select %p781, %s19, 0
      %s783 = sadd.s32 %s782, %s780
      %s784 = smul.addr %s783, 4
      %s785 = scalar_lea.vmem %s3, %s784
      // Predicated region
      $region33: #{fishnet201_cls_forward.4} parent=31 // pred_check
        %p786 = pneg %p124
      $region34: #{fishnet201_cls_forward.4} parent=31 // pred_check_branch
        %788 = sbr.rel (%p786) target = $region36
      $region35: #{fishnet201_cls_forward.4} parent=31 // pred_region
        %s789 = smul.u32 32, %s18
      $region36: #{fishnet201_cls_forward.4} parent=31 // pred_fallthru
        _
    $region32: #{fishnet201_cls_forward.4} parent=5 // pred_fallthru
      _
    %p790 = scmp.le.s32.totalorder 2, %s9
    // Predicated region
    $region37: #{fishnet201_cls_forward.4} parent=5 // pred_check
      %p791 = pneg %p790
    $region38: #{fishnet201_cls_forward.4} parent=5 // pred_check_branch
      %793 = sbr.rel (%p791) target = $region40
    $region39: #{fishnet201_cls_forward.4} parent=5 // pred_region
      %s794 = ssub.s32 %s9, 2
      // Predicated region
      $region41: #{fishnet201_cls_forward.4} parent=39 // pred_check
        %p795 = pneg %p130
      $region42: #{fishnet201_cls_forward.4} parent=39 // pred_check_branch
        %797 = sbr.rel (%p795) target = $region44
      $region43: #{fishnet201_cls_forward.4} parent=39 // pred_region
        %s798 = smul.u32 32, %s20
        %p799 = scmp.lt.s32.totalorder %s798, 63
        %s800 = scalar_select %p799, %s798, 63
        %p801 = scmp.lt.s32.totalorder %s21, 0
        %s802 = scalar_select %p801, %s21, 0
        %s803 = sadd.s32 %s802, %s800
        %s804 = smul.addr %s803, 4
        %s805 = scalar_lea.vmem %s3, %s804
      $region44: #{fishnet201_cls_forward.4} parent=39 // pred_fallthru
        _
    $region40: #{fishnet201_cls_forward.4} parent=5 // pred_fallthru
      _
  $region6: #{fishnet201_cls_forward.4} parent=0 // loop_footer
    %s13 = sadd.s32 1, %s9
  $region7: #{fishnet201_cls_forward.4} parent=0 // loop_footer_branch
    %8 = sbr.rel target = $region3
  $region8: #{fishnet201_cls_forward.4} parent=0 // loop_exit
    _

// kernel: fishnet201_cls_forward.5
$region0: #{fishnet201_cls_forward.5}
  #allocation0 [shape = 'u32[]', space=smem, size = 0x4, offset = 0x4, fixed_abs, tag = 'smem constant byte address 0x4 - core index']
  #allocation1 [shape = 'u32[144,128]{1,0:T(1,128)}', space=vmem, size = 0x12000, scoped, tag = 'internal scratch']
  %s0 = inlined_call_operand.vmem [shape: bf16[512,256], index: 0, kind: input, shape index: {}]
  %s1 = inlined_call_operand.vmem [shape: bf16[256,128], index: 1, kind: input, shape index: {}]
  %s2 = inlined_call_operand.vmem [shape: f32[1,128], index: 2, kind: input, shape index: {}]
  %s3 = inlined_call_operand.vmem [shape: bf16[512,128], index: 3, kind: output, shape index: {}]
  %s4 = sld [smem:[#allocation0]]
  $region45: #{fishnet201_cls_forward.5} parent=0
    _
  %s6 = ssub.s32 1, %s4
  %s7 = scalar_select 0, %s6, %s4
  loop: start=0, step=1, limit=4
  $region2: #{fishnet201_cls_forward.5} parent=0 // loop_pre_header
    _
  $region3: #{fishnet201_cls_forward.5} parent=0 // loop_header
    %s9 = sphi 0, %s13
    %p10 = scmp.ge.s32.totalorder %s9, 4
    %s16 = sphi 0, %s28
    %s17 = sphi 0, %s24
    %s18 = sphi 0, %s16
    %s19 = sphi 0, %s17
    %s20 = sphi 0, %s18
    %s21 = sphi 0, %s19
    %s31 = sphi 0, %s33
    %s34 = sphi 0, %s31
    %s35 = sphi 0, %s34
    %s51 = sphi 0, %s35
    %s57 = sphi 0, %s59
    %s60 = sphi 0, %s57
    %s61 = sphi 0, %s60
    %s77 = sphi 0, %s61
    %s83 = sphi 0, %s85
    %s86 = sphi 0, %s83
    %s87 = sphi 0, %s86
    %s103 = sphi 0, %s87
    %s111 = sphi 0, %s113
    %s114 = sphi 0, %s111
    %s115 = sphi 0, %s114
    %s131 = sphi 0, %s115
  $region4: #{fishnet201_cls_forward.5} parent=0 // loop_header_branch
    %12 = sbr.rel (%p10) target = $region8
  $region5: #{fishnet201_cls_forward.5} parent=0 // loop_body
    %s14 = ssub.s32 %s9, 1
    %s15 = ssub.s32 %s9, 2
    %s22 = sadd.s32 1, %s17
    %p23 = scmp.ge.s32.totalorder %s22, 1
    %s24 = scalar_select %p23, 0, %s22
    %s25 = sadd.s32 1, %s16
    %s26 = scalar_select %p23, %s25, %s16
    %p27 = scmp.ge.s32.totalorder %s26, 2
    %s28 = scalar_select %p27, 0, %s26
    %s29 = ssub.s32 %s16, %s28
    %p30 = scmp.eq.s32.totalorder %s29, 0
    %s32 = sadd.s32 %s31, 1
    %s33 = scalar_select %p30, %s31, %s32
    %p36 = pneg %p30
    %p37 = scmp.eq.s32.totalorder %s9, 1
    %p38 = por %p36, %p37
    %p39 = scmp.ne.s32.totalorder %s31, %s34
    %p40 = scmp.eq.s32.totalorder %s9, 0
    %p41 = por %p39, %p40
    %p42 = scmp.ne.s32.totalorder %s31, %s34
    %p43 = scmp.eq.s32.totalorder %s14, 1
    %p44 = por %p42, %p43
    %p45 = scmp.ne.s32.totalorder %s34, %s35
    %p46 = scmp.eq.s32.totalorder %s14, 0
    %p47 = por %p45, %p46
    %p48 = scmp.ne.s32.totalorder %s34, %s35
    %p49 = scmp.eq.s32.totalorder %s15, 1
    %p50 = por %p48, %p49
    %p52 = scmp.ne.s32.totalorder %s35, %s51
    %p53 = scmp.eq.s32.totalorder %s15, 0
    %p54 = por %p52, %p53
    %s55 = ssub.s32 %s17, %s24
    %p56 = scmp.eq.s32.totalorder %s55, 0
    %s58 = sadd.s32 %s57, 1
    %s59 = scalar_select %p56, %s57, %s58
    %p62 = pneg %p56
    %p63 = scmp.eq.s32.totalorder %s9, 1
    %p64 = por %p62, %p63
    %p65 = scmp.ne.s32.totalorder %s57, %s60
    %p66 = scmp.eq.s32.totalorder %s9, 0
    %p67 = por %p65, %p66
    %p68 = scmp.ne.s32.totalorder %s57, %s60
    %p69 = scmp.eq.s32.totalorder %s14, 1
    %p70 = por %p68, %p69
    %p71 = scmp.ne.s32.totalorder %s60, %s61
    %p72 = scmp.eq.s32.totalorder %s14, 0
    %p73 = por %p71, %p72
    %p74 = scmp.ne.s32.totalorder %s60, %s61
    %p75 = scmp.eq.s32.totalorder %s15, 1
    %p76 = por %p74, %p75
    %p78 = scmp.ne.s32.totalorder %s61, %s77
    %p79 = scmp.eq.s32.totalorder %s15, 0
    %p80 = por %p78, %p79
    %s81 = ssub.s32 %s17, %s24
    %p82 = scmp.eq.s32.totalorder %s81, 0
    %s84 = sadd.s32 %s83, 1
    %s85 = scalar_select %p82, %s83, %s84
    %p88 = pneg %p82
    %p89 = scmp.eq.s32.totalorder %s9, 1
    %p90 = por %p88, %p89
    %p91 = scmp.ne.s32.totalorder %s83, %s86
    %p92 = scmp.eq.s32.totalorder %s9, 0
    %p93 = por %p91, %p92
    %p94 = scmp.ne.s32.totalorder %s83, %s86
    %p95 = scmp.eq.s32.totalorder %s14, 1
    %p96 = por %p94, %p95
    %p97 = scmp.ne.s32.totalorder %s86, %s87
    %p98 = scmp.eq.s32.totalorder %s14, 0
    %p99 = por %p97, %p98
    %p100 = scmp.ne.s32.totalorder %s86, %s87
    %p101 = scmp.eq.s32.totalorder %s15, 1
    %p102 = por %p100, %p101
    %p104 = scmp.ne.s32.totalorder %s87, %s103
    %p105 = scmp.eq.s32.totalorder %s15, 0
    %p106 = por %p104, %p105
    %s107 = ssub.s32 %s16, %s28
    %s108 = ssub.s32 %s17, %s24
    %s109 = sor.u32 %s107, %s108
    %p110 = scmp.eq.s32.totalorder %s109, 0
    %s112 = sadd.s32 %s111, 1
    %s113 = scalar_select %p110, %s111, %s112
    %p116 = pneg %p110
    %p117 = scmp.eq.s32.totalorder %s9, 1
    %p118 = por %p116, %p117
    %p119 = scmp.ne.s32.totalorder %s111, %s114
    %p120 = scmp.eq.s32.totalorder %s9, 0
    %p121 = por %p119, %p120
    %p122 = scmp.ne.s32.totalorder %s111, %s114
    %p123 = scmp.eq.s32.totalorder %s14, 1
    %p124 = por %p122, %p123
    %p125 = scmp.ne.s32.totalorder %s114, %s115
    %p126 = scmp.eq.s32.totalorder %s14, 0
    %p127 = por %p125, %p126
    %p128 = scmp.ne.s32.totalorder %s114, %s115
    %p129 = scmp.eq.s32.totalorder %s15, 1
    %p130 = por %p128, %p129
    %p132 = scmp.ne.s32.totalorder %s115, %s131
    %p133 = scmp.eq.s32.totalorder %s15, 0
    %p134 = por %p132, %p133
    %p135 = scmp.le.s32.totalorder 1, %s9
    %p136 = scmp.lt.s32.totalorder %s9, 3
    %p137 = pnand %p135, %p136
    %p138 = pneg %p137
    // Predicated region
    $region9: #{fishnet201_cls_forward.5} parent=5 // pred_check
      _
    $region10: #{fishnet201_cls_forward.5} parent=5 // pred_check_branch
      %140 = sbr.rel (%p137) target = $region12
    $region11: #{fishnet201_cls_forward.5} parent=5 // pred_region
      %s141 = ssub.s32 %s9, 1
      // Predicated region
      $region13: #{fishnet201_cls_forward.5} parent=11 // pred_check
        %p142 = pneg %p73
      $region14: #{fishnet201_cls_forward.5} parent=11 // pred_check_branch
        %144 = sbr.rel (%p142) target = $region16
      $region15: #{fishnet201_cls_forward.5} parent=11 // pred_region
        %p145 = scmp.lt.s32.totalorder %s19, 0
        %s146 = scalar_select %p145, %s19, 0
        %s147 = smul.addr %s146, 4
        %s148 = scalar_lea.vmem %s1, %s147
      $region16: #{fishnet201_cls_forward.5} parent=11 // pred_fallthru
        _
      // Predicated region
      $region17: #{fishnet201_cls_forward.5} parent=11 // pred_check
        %p149 = pneg %p99
      $region18: #{fishnet201_cls_forward.5} parent=11 // pred_check_branch
        %151 = sbr.rel (%p149) target = $region20
      $region19: #{fishnet201_cls_forward.5} parent=11 // pred_region
        %p152 = scmp.lt.s32.totalorder %s19, 0
        %s153 = scalar_select %p152, %s19, 0
        %s154 = scalar_lea.vmem %s2, %s153
      $region20: #{fishnet201_cls_forward.5} parent=11 // pred_fallthru
        _
    $region12: #{fishnet201_cls_forward.5} parent=5 // pred_fallthru
      _
    %p155 = scmp.lt.s32.totalorder %s9, 2
    // Predicated region
    $region21: #{fishnet201_cls_forward.5} parent=5 // pred_check
      %p156 = pneg %p155
    $region22: #{fishnet201_cls_forward.5} parent=5 // pred_check_branch
      %158 = sbr.rel (%p156) target = $region24
    $region23: #{fishnet201_cls_forward.5} parent=5 // pred_region
      // Predicated region
      $region25: #{fishnet201_cls_forward.5} parent=23 // pred_check
        %p159 = pneg %p41
      $region26: #{fishnet201_cls_forward.5} parent=23 // pred_check_branch
        %161 = sbr.rel (%p159) target = $region28
      $region27: #{fishnet201_cls_forward.5} parent=23 // pred_region
        %s162 = smul.u32 32, %s16
        %p163 = scmp.lt.s32.totalorder %s162, 63
        %s164 = scalar_select %p163, %s162, 63
        %s165 = smul.addr %s164, 2
        %s166 = smul.addr %s165, 4
        %s167 = scalar_lea.vmem %s0, %s166
        %s168 = smul.u32 32, %s16
      $region28: #{fishnet201_cls_forward.5} parent=23 // pred_fallthru
        _
    $region24: #{fishnet201_cls_forward.5} parent=5 // pred_fallthru
      _
    %p169 = scmp.le.s32.totalorder 1, %s9
    %p170 = scmp.lt.s32.totalorder %s9, 3
    %p171 = pnand %p169, %p170
    %p172 = pneg %p171
    // Predicated region
    $region29: #{fishnet201_cls_forward.5} parent=5 // pred_check
      _
    $region30: #{fishnet201_cls_forward.5} parent=5 // pred_check_branch
      %174 = sbr.rel (%p171) target = $region32
    $region31: #{fishnet201_cls_forward.5} parent=5 // pred_region
      %s175 = ssub.s32 %s9, 1
      %s176 = smul.u32 32, %s18
      %p177 = scmp.lt.s32.totalorder %s176, 63
      %s178 = scalar_select %p177, %s176, 63
      %s179 = smul.addr %s178, 2
      %s180 = smul.addr %s179, 4
      %s181 = scalar_lea.vmem %s0, %s180
      %p182 = pneg %p47
      %p183 = pneg %p44
      %p184 = scmp.lt.s32.totalorder %s19, 0
      %s185 = scalar_select %p184, %s19, 0
      %s186 = smul.addr %s185, 4
      %s187 = scalar_lea.vmem %s1, %s186
      %p188 = pneg %p73
      %p189 = pneg %p70
      %p190 = scmp.lt.s32.totalorder %s19, 0
      %s191 = scalar_select %p190, %s19, 0
      %s192 = scalar_lea.vmem %s2, %s191
      %p193 = pneg %p99
      %p194 = pneg %p96
      %p195 = pneg %p127
      %p196 = pneg %p124
      %s197 = smul.u32 32, %s18
      %p198 = scmp.lt.s32.totalorder %s197, 63
      %s199 = scalar_select %p198, %s197, 63
      %p200 = scmp.lt.s32.totalorder %s19, 0
      %s201 = scalar_select %p200, %s19, 0
      %s202 = sadd.s32 %s201, %s199
      %s203 = smul.addr %s202, 4
      %s204 = scalar_lea.vmem %s3, %s203
      %s205 = smul.u32 32, %s18
      %p206 = scmp.lt.s32.totalorder %s205, 63
      %s207 = scalar_select %p206, %s205, 63
      %s208 = smul.addr %s207, 2
      %s209 = smul.addr %s208, 4
      %s210 = scalar_lea.vmem %s0, %s209
      %s211 = smul.u32 32, %s18
      %p212 = scmp.lt.s32.totalorder %s19, 0
      %s213 = scalar_select %p212, %s19, 0
      %s214 = smul.addr %s213, 4
      %s215 = scalar_lea.vmem %s1, %s214
      %p216 = scmp.lt.s32.totalorder %s19, 0
      %s217 = scalar_select %p216, %s19, 0
      %s218 = scalar_lea.vmem %s2, %s217
      %s219 = smul.u32 32, %s18
      %p220 = scmp.lt.s32.totalorder %s219, 63
      %s221 = scalar_select %p220, %s219, 63
      %p222 = scmp.lt.s32.totalorder %s19, 0
      %s223 = scalar_select %p222, %s19, 0
      %s224 = sadd.s32 %s223, %s221
      %s225 = smul.addr %s224, 4
      %s226 = scalar_lea.vmem %s3, %s225
      %s227 = smul.u32 32, %s18
      %v229 = vld [vmem:[%s210] sm:$0xff]
      %v230 = vld [vmem:[%s210 + $0x8] sm:$0xff]
      %v231 = vld [vmem:[%s210 + $0x10] sm:$0xff]
      %v232 = vld [vmem:[%s210 + $0x18] sm:$0xff]
      %v233 = vld [vmem:[%s210 + $0x20] sm:$0xff]
      %v234 = vld [vmem:[%s210 + $0x28] sm:$0xff]
      %v235 = vld [vmem:[%s210 + $0x30] sm:$0xff]
      %v236 = vld [vmem:[%s210 + $0x38] sm:$0xff]
      %v237 = vld [vmem:[%s210 + $0x40] sm:$0xff]
      %v238 = vld [vmem:[%s210 + $0x48] sm:$0xff]
      %v239 = vld [vmem:[%s210 + $0x50] sm:$0xff]
      %v240 = vld [vmem:[%s210 + $0x58] sm:$0xff]
      %v241 = vld [vmem:[%s210 + $0x60] sm:$0xff]
      %v242 = vld [vmem:[%s210 + $0x68] sm:$0xff]
      %v243 = vld [vmem:[%s210 + $0x70] sm:$0xff]
      %v244 = vld [vmem:[%s210 + $0x78] sm:$0xff]
      %v245 = vld [vmem:[%s210 + $0x80] sm:$0xff]
      %v246 = vld [vmem:[%s210 + $0x88] sm:$0xff]
      %v247 = vld [vmem:[%s210 + $0x90] sm:$0xff]
      %v248 = vld [vmem:[%s210 + $0x98] sm:$0xff]
      %v249 = vld [vmem:[%s210 + $0xa0] sm:$0xff]
      %v250 = vld [vmem:[%s210 + $0xa8] sm:$0xff]
      %v251 = vld [vmem:[%s210 + $0xb0] sm:$0xff]
      %v252 = vld [vmem:[%s210 + $0xb8] sm:$0xff]
      %v253 = vld [vmem:[%s210 + $0xc0] sm:$0xff]
      %v254 = vld [vmem:[%s210 + $0xc8] sm:$0xff]
      %v255 = vld [vmem:[%s210 + $0xd0] sm:$0xff]
      %v256 = vld [vmem:[%s210 + $0xd8] sm:$0xff]
      %v257 = vld [vmem:[%s210 + $0xe0] sm:$0xff]
      %v258 = vld [vmem:[%s210 + $0xe8] sm:$0xff]
      %v259 = vld [vmem:[%s210 + $0xf0] sm:$0xff]
      %v260 = vld [vmem:[%s210 + $0xf8] sm:$0xff]
      %v261 = vld [vmem:[%s215] sm:$0xf]
      %v262 = vld [vmem:[%s215 + $0x4] sm:$0xf]
      %v263 = vld [vmem:[%s215 + $0x8] sm:$0xf]
      %v264 = vld [vmem:[%s215 + $0xc] sm:$0xf]
      %v265 = vld [vmem:[%s215 + $0x10] sm:$0xf]
      %v266 = vld [vmem:[%s215 + $0x14] sm:$0xf]
      %v267 = vld [vmem:[%s215 + $0x18] sm:$0xf]
      %v268 = vld [vmem:[%s215 + $0x1c] sm:$0xf]
      %v269 = vld [vmem:[%s215 + $0x20] sm:$0xf]
      %v270 = vld [vmem:[%s215 + $0x24] sm:$0xf]
      %v271 = vld [vmem:[%s215 + $0x28] sm:$0xf]
      %v272 = vld [vmem:[%s215 + $0x2c] sm:$0xf]
      %v273 = vld [vmem:[%s215 + $0x30] sm:$0xf]
      %v274 = vld [vmem:[%s215 + $0x34] sm:$0xf]
      %v275 = vld [vmem:[%s215 + $0x38] sm:$0xf]
      %v276 = vld [vmem:[%s215 + $0x3c] sm:$0xf]
      %v277 = vld [vmem:[%s215 + $0x40] sm:$0xf]
      %v278 = vld [vmem:[%s215 + $0x44] sm:$0xf]
      %v279 = vld [vmem:[%s215 + $0x48] sm:$0xf]
      %v280 = vld [vmem:[%s215 + $0x4c] sm:$0xf]
      %v281 = vld [vmem:[%s215 + $0x50] sm:$0xf]
      %v282 = vld [vmem:[%s215 + $0x54] sm:$0xf]
      %v283 = vld [vmem:[%s215 + $0x58] sm:$0xf]
      %v284 = vld [vmem:[%s215 + $0x5c] sm:$0xf]
      %v285 = vld [vmem:[%s215 + $0x60] sm:$0xf]
      %v286 = vld [vmem:[%s215 + $0x64] sm:$0xf]
      %v287 = vld [vmem:[%s215 + $0x68] sm:$0xf]
      %v288 = vld [vmem:[%s215 + $0x6c] sm:$0xf]
      %v289 = vld [vmem:[%s215 + $0x70] sm:$0xf]
      %v290 = vld [vmem:[%s215 + $0x74] sm:$0xf]
      %v291 = vld [vmem:[%s215 + $0x78] sm:$0xf]
      %v292 = vld [vmem:[%s215 + $0x7c] sm:$0xf]
      %v293 = vld [vmem:[%s218] sm:$0x1]
      %v295 = vlaneseq
      %v296 = vshrl.u32 %v295, 7
      %v297 = vsub.s32 0, %v296
      %v298 = vrot.slane %v293, %v297
      %v332 = vunpack.c.l.b16 %v229
      %v333 = vunpack.c.h.b16 %v229
      %v334 = vunpack.c.l.b16 %v230
      %v335 = vunpack.c.h.b16 %v230
      %v336 = vunpack.c.l.b16 %v231
      %v337 = vunpack.c.h.b16 %v231
      %v338 = vunpack.c.l.b16 %v232
      %v339 = vunpack.c.h.b16 %v232
      %v340 = vunpack.c.l.b16 %v233
      %v341 = vunpack.c.h.b16 %v233
      %v342 = vunpack.c.l.b16 %v234
      %v343 = vunpack.c.h.b16 %v234
      %v344 = vunpack.c.l.b16 %v235
      %v345 = vunpack.c.h.b16 %v235
      %v346 = vunpack.c.l.b16 %v236
      %v347 = vunpack.c.h.b16 %v236
      %v348 = vunpack.c.l.b16 %v237
      %v349 = vunpack.c.h.b16 %v237
      %v350 = vunpack.c.l.b16 %v238
      %v351 = vunpack.c.h.b16 %v238
      %v352 = vunpack.c.l.b16 %v239
      %v353 = vunpack.c.h.b16 %v239
      %v354 = vunpack.c.l.b16 %v240
      %v355 = vunpack.c.h.b16 %v240
      %v356 = vunpack.c.l.b16 %v241
      %v357 = vunpack.c.h.b16 %v241
      %v358 = vunpack.c.l.b16 %v242
      %v359 = vunpack.c.h.b16 %v242
      %v360 = vunpack.c.l.b16 %v243
      %v361 = vunpack.c.h.b16 %v243
      %v362 = vunpack.c.l.b16 %v244
      %v363 = vunpack.c.h.b16 %v244
      %v364 = vunpack.c.l.b16 %v245
      %v365 = vunpack.c.h.b16 %v245
      %v366 = vunpack.c.l.b16 %v246
      %v367 = vunpack.c.h.b16 %v246
      %v368 = vunpack.c.l.b16 %v247
      %v369 = vunpack.c.h.b16 %v247
      %v370 = vunpack.c.l.b16 %v248
      %v371 = vunpack.c.h.b16 %v248
      %v372 = vunpack.c.l.b16 %v249
      %v373 = vunpack.c.h.b16 %v249
      %v374 = vunpack.c.l.b16 %v250
      %v375 = vunpack.c.h.b16 %v250
      %v376 = vunpack.c.l.b16 %v251
      %v377 = vunpack.c.h.b16 %v251
      %v378 = vunpack.c.l.b16 %v252
      %v379 = vunpack.c.h.b16 %v252
      %v380 = vunpack.c.l.b16 %v253
      %v381 = vunpack.c.h.b16 %v253
      %v382 = vunpack.c.l.b16 %v254
      %v383 = vunpack.c.h.b16 %v254
      %v384 = vunpack.c.l.b16 %v255
      %v385 = vunpack.c.h.b16 %v255
      %v386 = vunpack.c.l.b16 %v256
      %v387 = vunpack.c.h.b16 %v256
      %v388 = vunpack.c.l.b16 %v257
      %v389 = vunpack.c.h.b16 %v257
      %v390 = vunpack.c.l.b16 %v258
      %v391 = vunpack.c.h.b16 %v258
      %v392 = vunpack.c.l.b16 %v259
      %v393 = vunpack.c.h.b16 %v259
      %v394 = vunpack.c.l.b16 %v260
      %v395 = vunpack.c.h.b16 %v260
      %v396 = vpack.c.b16 %v334, %v332
      %v397 = vpack.c.b16 %v335, %v333
      %v398 = vpack.c.b16 %v338, %v336
      %v399 = vpack.c.b16 %v339, %v337
      %v400 = vpack.c.b16 %v342, %v340
      %v401 = vpack.c.b16 %v343, %v341
      %v402 = vpack.c.b16 %v346, %v344
      %v403 = vpack.c.b16 %v347, %v345
      %v404 = vpack.c.b16 %v350, %v348
      %v405 = vpack.c.b16 %v351, %v349
      %v406 = vpack.c.b16 %v354, %v352
      %v407 = vpack.c.b16 %v355, %v353
      %v408 = vpack.c.b16 %v358, %v356
      %v409 = vpack.c.b16 %v359, %v357
      %v410 = vpack.c.b16 %v362, %v360
      %v411 = vpack.c.b16 %v363, %v361
      %v412 = vpack.c.b16 %v366, %v364
      %v413 = vpack.c.b16 %v367, %v365
      %v414 = vpack.c.b16 %v370, %v368
      %v415 = vpack.c.b16 %v371, %v369
      %v416 = vpack.c.b16 %v374, %v372
      %v417 = vpack.c.b16 %v375, %v373
      %v418 = vpack.c.b16 %v378, %v376
      %v419 = vpack.c.b16 %v379, %v377
      %v420 = vpack.c.b16 %v382, %v380
      %v421 = vpack.c.b16 %v383, %v381
      %v422 = vpack.c.b16 %v386, %v384
      %v423 = vpack.c.b16 %v387, %v385
      %v424 = vpack.c.b16 %v390, %v388
      %v425 = vpack.c.b16 %v391, %v389
      %v426 = vpack.c.b16 %v394, %v392
      %v427 = vpack.c.b16 %v395, %v393
      %v492 = vunpack.c.l.b16 %v261
      %v493 = vunpack.c.l.b16 %v262
      %v494 = vunpack.c.l.b16 %v263
      %v495 = vunpack.c.l.b16 %v264
      %v496 = vunpack.c.l.b16 %v265
      %v497 = vunpack.c.l.b16 %v266
      %v498 = vunpack.c.l.b16 %v267
      %v499 = vunpack.c.l.b16 %v268
      %v500 = vunpack.c.l.b16 %v269
      %v501 = vunpack.c.l.b16 %v270
      %v502 = vunpack.c.l.b16 %v271
      %v503 = vunpack.c.l.b16 %v272
      %v504 = vunpack.c.l.b16 %v273
      %v505 = vunpack.c.l.b16 %v274
      %v506 = vunpack.c.l.b16 %v275
      %v507 = vunpack.c.l.b16 %v276
      %v508 = vunpack.c.l.b16 %v277
      %v509 = vunpack.c.l.b16 %v278
      %v510 = vunpack.c.l.b16 %v279
      %v511 = vunpack.c.l.b16 %v280
      %v512 = vunpack.c.l.b16 %v281
      %v513 = vunpack.c.l.b16 %v282
      %v514 = vunpack.c.l.b16 %v283
      %v515 = vunpack.c.l.b16 %v284
      %v516 = vunpack.c.l.b16 %v285
      %v517 = vunpack.c.l.b16 %v286
      %v518 = vunpack.c.l.b16 %v287
      %v519 = vunpack.c.l.b16 %v288
      %v520 = vunpack.c.l.b16 %v289
      %v521 = vunpack.c.l.b16 %v290
      %v522 = vunpack.c.l.b16 %v291
      %v523 = vunpack.c.l.b16 %v292
      %v524 = vpack.c.b16 %v493, %v492
      %v525 = vpack.c.b16 %v495, %v494
      %v526 = vpack.c.b16 %v497, %v496
      %v527 = vpack.c.b16 %v499, %v498
      %v528 = vpack.c.b16 %v501, %v500
      %v529 = vpack.c.b16 %v503, %v502
      %v530 = vpack.c.b16 %v505, %v504
      %v531 = vpack.c.b16 %v507, %v506
      %v532 = vpack.c.b16 %v509, %v508
      %v533 = vpack.c.b16 %v511, %v510
      %v534 = vpack.c.b16 %v513, %v512
      %v535 = vpack.c.b16 %v515, %v514
      %v536 = vpack.c.b16 %v517, %v516
      %v537 = vpack.c.b16 %v519, %v518
      %v538 = vpack.c.b16 %v521, %v520
      %v539 = vpack.c.b16 %v523, %v522
      %556 = vmatprep.subr.bf16.mxu0 0
      %557 = vmatpush1.bf16.msra.mxu0 %v524
      %558 = vmatprep.subr.bf16.mxu0 0
      %559 = vmatpush1.bf16.msra.mxu0 %v525
      %560 = vmatprep.subr.bf16.mxu0 0
      %561 = vmatpush1.bf16.msra.mxu0 %v526
      %562 = vmatprep.subr.bf16.mxu0 0
      %563 = vmatpush1.bf16.msra.mxu0 %v527
      %564 = vmatprep.subr.bf16.mxu0 0
      %565 = vmatpush1.bf16.msra.mxu0 %v528
      %566 = vmatprep.subr.bf16.mxu0 0
      %567 = vmatpush1.bf16.msra.mxu0 %v529
      %568 = vmatprep.subr.bf16.mxu0 0
      %569 = vmatpush1.bf16.msra.mxu0 %v530
      %570 = vmatprep.subr.bf16.mxu0 0
      %571 = vmatpush1.bf16.msra.mxu0 %v531
      %572 = vmatprep.subr.bf16.mxu0 0
      %573 = vmatpush1.bf16.msra.mxu0 %v532
      %574 = vmatprep.subr.bf16.mxu0 0
      %575 = vmatpush1.bf16.msra.mxu0 %v533
      %576 = vmatprep.subr.bf16.mxu0 0
      %577 = vmatpush1.bf16.msra.mxu0 %v534
      %578 = vmatprep.subr.bf16.mxu0 0
      %579 = vmatpush1.bf16.msra.mxu0 %v535
      %580 = vmatprep.subr.bf16.mxu0 0
      %581 = vmatpush1.bf16.msra.mxu0 %v536
      %582 = vmatprep.subr.bf16.mxu0 0
      %583 = vmatpush1.bf16.msra.mxu0 %v537
      %584 = vmatprep.subr.bf16.mxu0 0
      %585 = vmatpush1.bf16.msra.mxu0 %v538
      %586 = vmatprep.subr.bf16.mxu0 0
      %587 = vmatpush1.bf16.msra.mxu0 %v539
      %588 = vmatprep.mubr.bf16.mxu0 %v397
      %589 = vmatmul.mubr.bf16.gmra.mrb[0].mxu0 %v396
      %v590 = vpop.f32.mrb[0].mxu0
      %v591 = vadd.f32 %v298, %v590
      %v592 = vpop.f32.mrb[0].mxu0
      %v593 = vpop.f32.mrb[0].mxu0
      %v594 = vadd.f32 %v298, %v593
      %v595 = vpop.f32.mrb[0].mxu0
      %596 = vmatprep.mubr.bf16.mxu0 %v399
      %597 = vmatmul.mubr.bf16.gmra.mrb[0].mxu0 %v398
      %v598 = vpop.f32.mrb[0].mxu0
      %v599 = vadd.f32 %v298, %v598
      %v600 = vpop.f32.mrb[0].mxu0
      %v601 = vpop.f32.mrb[0].mxu0
      %v602 = vadd.f32 %v298, %v601
      %v603 = vpop.f32.mrb[0].mxu0
      %604 = vmatprep.mubr.bf16.mxu0 %v401
      %605 = vmatmul.mubr.bf16.gmra.mrb[0].mxu0 %v400
      %v606 = vpop.f32.mrb[0].mxu0
      %v607 = vadd.f32 %v298, %v606
      %v608 = vpop.f32.mrb[0].mxu0
      %v609 = vpop.f32.mrb[0].mxu0
      %v610 = vadd.f32 %v298, %v609
      %v611 = vpop.f32.mrb[0].mxu0
      %612 = vmatprep.mubr.bf16.mxu0 %v403
      %613 = vmatmul.mubr.bf16.gmra.mrb[0].mxu0 %v402
      %v614 = vpop.f32.mrb[0].mxu0
      %v615 = vadd.f32 %v298, %v614
      %v616 = vpop.f32.mrb[0].mxu0
      %v617 = vpop.f32.mrb[0].mxu0
      %v618 = vadd.f32 %v298, %v617
      %v619 = vpop.f32.mrb[0].mxu0
      %620 = vmatprep.mubr.bf16.mxu0 %v405
      %621 = vmatmul.mubr.bf16.gmra.mrb[0].mxu0 %v404
      %v622 = vpop.f32.mrb[0].mxu0
      %v623 = vadd.f32 %v298, %v622
      %v624 = vpop.f32.mrb[0].mxu0
      %v625 = vpop.f32.mrb[0].mxu0
      %v626 = vadd.f32 %v298, %v625
      %v627 = vpop.f32.mrb[0].mxu0
      %628 = vmatprep.mubr.bf16.mxu0 %v407
      %629 = vmatmul.mubr.bf16.gmra.mrb[0].mxu0 %v406
      %v630 = vpop.f32.mrb[0].mxu0
      %v631 = vadd.f32 %v298, %v630
      %v632 = vpop.f32.mrb[0].mxu0
      %v633 = vpop.f32.mrb[0].mxu0
      %v634 = vadd.f32 %v298, %v633
      %v635 = vpop.f32.mrb[0].mxu0
      %636 = vmatprep.mubr.bf16.mxu0 %v409
      %637 = vmatmul.mubr.bf16.gmra.mrb[0].mxu0 %v408
      %v638 = vpop.f32.mrb[0].mxu0
      %v639 = vadd.f32 %v298, %v638
      %v640 = vpop.f32.mrb[0].mxu0
      %v641 = vpop.f32.mrb[0].mxu0
      %v642 = vadd.f32 %v298, %v641
      %v643 = vpop.f32.mrb[0].mxu0
      %644 = vmatprep.mubr.bf16.mxu0 %v411
      %645 = vmatmul.mubr.bf16.gmra.mrb[0].mxu0 %v410
      %v646 = vpop.f32.mrb[0].mxu0
      %v647 = vadd.f32 %v298, %v646
      %v648 = vpop.f32.mrb[0].mxu0
      %v649 = vpop.f32.mrb[0].mxu0
      %v650 = vadd.f32 %v298, %v649
      %v651 = vpop.f32.mrb[0].mxu0
      %652 = vmatprep.mubr.bf16.mxu0 %v413
      %653 = vmatmul.mubr.bf16.gmra.mrb[0].mxu0 %v412
      %v654 = vpop.f32.mrb[0].mxu0
      %v655 = vadd.f32 %v298, %v654
      %v656 = vpop.f32.mrb[0].mxu0
      %v657 = vpop.f32.mrb[0].mxu0
      %v658 = vadd.f32 %v298, %v657
      %v659 = vpop.f32.mrb[0].mxu0
      %660 = vmatprep.mubr.bf16.mxu0 %v415
      %661 = vmatmul.mubr.bf16.gmra.mrb[0].mxu0 %v414
      %v662 = vpop.f32.mrb[0].mxu0
      %v663 = vadd.f32 %v298, %v662
      %v664 = vpop.f32.mrb[0].mxu0
      %v665 = vpop.f32.mrb[0].mxu0
      %v666 = vadd.f32 %v298, %v665
      %v667 = vpop.f32.mrb[0].mxu0
      %668 = vmatprep.mubr.bf16.mxu0 %v417
      %669 = vmatmul.mubr.bf16.gmra.mrb[0].mxu0 %v416
      %v670 = vpop.f32.mrb[0].mxu0
      %v671 = vadd.f32 %v298, %v670
      %v672 = vpop.f32.mrb[0].mxu0
      %v673 = vpop.f32.mrb[0].mxu0
      %v674 = vadd.f32 %v298, %v673
      %v675 = vpop.f32.mrb[0].mxu0
      %676 = vmatprep.mubr.bf16.mxu0 %v419
      %677 = vmatmul.mubr.bf16.gmra.mrb[0].mxu0 %v418
      %v678 = vpop.f32.mrb[0].mxu0
      %v679 = vadd.f32 %v298, %v678
      %v680 = vpop.f32.mrb[0].mxu0
      %v681 = vpop.f32.mrb[0].mxu0
      %v682 = vadd.f32 %v298, %v681
      %v683 = vpop.f32.mrb[0].mxu0
      %684 = vmatprep.mubr.bf16.mxu0 %v421
      %685 = vmatmul.mubr.bf16.gmra.mrb[0].mxu0 %v420
      %v686 = vpop.f32.mrb[0].mxu0
      %v687 = vadd.f32 %v298, %v686
      %v688 = vpop.f32.mrb[0].mxu0
      %v689 = vpop.f32.mrb[0].mxu0
      %v690 = vadd.f32 %v298, %v689
      %v691 = vpop.f32.mrb[0].mxu0
      %692 = vmatprep.mubr.bf16.mxu0 %v423
      %693 = vmatmul.mubr.bf16.gmra.mrb[0].mxu0 %v422
      %v694 = vpop.f32.mrb[0].mxu0
      %v695 = vadd.f32 %v298, %v694
      %v696 = vpop.f32.mrb[0].mxu0
      %v697 = vpop.f32.mrb[0].mxu0
      %v698 = vadd.f32 %v298, %v697
      %v699 = vpop.f32.mrb[0].mxu0
      %700 = vmatprep.mubr.bf16.mxu0 %v425
      %701 = vmatmul.mubr.bf16.gmra.mrb[0].mxu0 %v424
      %v702 = vpop.f32.mrb[0].mxu0
      %v703 = vadd.f32 %v298, %v702
      %v704 = vpop.f32.mrb[0].mxu0
      %v705 = vpop.f32.mrb[0].mxu0
      %v706 = vadd.f32 %v298, %v705
      %v707 = vpop.f32.mrb[0].mxu0
      %708 = vmatprep.mubr.bf16.mxu0 %v427
      %709 = vmatmul.mubr.bf16.gmra.mrb[0].mxu0 %v426
      %v710 = vpop.f32.mrb[0].mxu0
      %v711 = vadd.f32 %v298, %v710
      %v712 = vpop.f32.mrb[0].mxu0
      %v713 = vpop.f32.mrb[0].mxu0
      %v714 = vadd.f32 %v298, %v713
      %v715 = vpop.f32.mrb[0].mxu0
      %716 = vdwg.mxu0
      %v717 = vmax.f32 %v591, 0.0
      %v718 = vmax.f32 %v594, 0.0
      %v719 = vmax.f32 %v599, 0.0
      %v720 = vmax.f32 %v602, 0.0
      %v721 = vmax.f32 %v607, 0.0
      %v722 = vmax.f32 %v610, 0.0
      %v723 = vmax.f32 %v615, 0.0
      %v724 = vmax.f32 %v618, 0.0
      %v725 = vmax.f32 %v623, 0.0
      %v726 = vmax.f32 %v626, 0.0
      %v727 = vmax.f32 %v631, 0.0
      %v728 = vmax.f32 %v634, 0.0
      %v729 = vmax.f32 %v639, 0.0
      %v730 = vmax.f32 %v642, 0.0
      %v731 = vmax.f32 %v647, 0.0
      %v732 = vmax.f32 %v650, 0.0
      %v733 = vmax.f32 %v655, 0.0
      %v734 = vmax.f32 %v658, 0.0
      %v735 = vmax.f32 %v663, 0.0
      %v736 = vmax.f32 %v666, 0.0
      %v737 = vmax.f32 %v671, 0.0
      %v738 = vmax.f32 %v674, 0.0
      %v739 = vmax.f32 %v679, 0.0
      %v740 = vmax.f32 %v682, 0.0
      %v741 = vmax.f32 %v687, 0.0
      %v742 = vmax.f32 %v690, 0.0
      %v743 = vmax.f32 %v695, 0.0
      %v744 = vmax.f32 %v698, 0.0
      %v745 = vmax.f32 %v703, 0.0
      %v746 = vmax.f32 %v706, 0.0
      %v747 = vmax.f32 %v711, 0.0
      %v748 = vmax.f32 %v714, 0.0
      %v749 = vpack.c.bf16 %v718, %v717
      %v750 = vpack.c.bf16 %v720, %v719
      %v751 = vpack.c.bf16 %v722, %v721
      %v752 = vpack.c.bf16 %v724, %v723
      %v753 = vpack.c.bf16 %v726, %v725
      %v754 = vpack.c.bf16 %v728, %v727
      %v755 = vpack.c.bf16 %v730, %v729
      %v756 = vpack.c.bf16 %v732, %v731
      %v757 = vpack.c.bf16 %v734, %v733
      %v758 = vpack.c.bf16 %v736, %v735
      %v759 = vpack.c.bf16 %v738, %v737
      %v760 = vpack.c.bf16 %v740, %v739
      %v761 = vpack.c.bf16 %v742, %v741
      %v762 = vpack.c.bf16 %v744, %v743
      %v763 = vpack.c.bf16 %v746, %v745
      %v764 = vpack.c.bf16 %v748, %v747
      %v781 = vunpack.c.l.b16 %v749
      %v782 = vunpack.c.h.b16 %v749
      %v783 = vunpack.c.l.b16 %v750
      %v784 = vunpack.c.h.b16 %v750
      %v785 = vunpack.c.l.b16 %v751
      %v786 = vunpack.c.h.b16 %v751
      %v787 = vunpack.c.l.b16 %v752
      %v788 = vunpack.c.h.b16 %v752
      %v789 = vunpack.c.l.b16 %v753
      %v790 = vunpack.c.h.b16 %v753
      %v791 = vunpack.c.l.b16 %v754
      %v792 = vunpack.c.h.b16 %v754
      %v793 = vunpack.c.l.b16 %v755
      %v794 = vunpack.c.h.b16 %v755
      %v795 = vunpack.c.l.b16 %v756
      %v796 = vunpack.c.h.b16 %v756
      %v797 = vunpack.c.l.b16 %v757
      %v798 = vunpack.c.h.b16 %v757
      %v799 = vunpack.c.l.b16 %v758
      %v800 = vunpack.c.h.b16 %v758
      %v801 = vunpack.c.l.b16 %v759
      %v802 = vunpack.c.h.b16 %v759
      %v803 = vunpack.c.l.b16 %v760
      %v804 = vunpack.c.h.b16 %v760
      %v805 = vunpack.c.l.b16 %v761
      %v806 = vunpack.c.h.b16 %v761
      %v807 = vunpack.c.l.b16 %v762
      %v808 = vunpack.c.h.b16 %v762
      %v809 = vunpack.c.l.b16 %v763
      %v810 = vunpack.c.h.b16 %v763
      %v811 = vunpack.c.l.b16 %v764
      %v812 = vunpack.c.h.b16 %v764
      %v813 = vpack.c.b16 %v781, %v781
      %v814 = vpack.c.b16 %v782, %v782
      %v815 = vpack.c.b16 %v783, %v783
      %v816 = vpack.c.b16 %v784, %v784
      %v817 = vpack.c.b16 %v785, %v785
      %v818 = vpack.c.b16 %v786, %v786
      %v819 = vpack.c.b16 %v787, %v787
      %v820 = vpack.c.b16 %v788, %v788
      %v821 = vpack.c.b16 %v789, %v789
      %v822 = vpack.c.b16 %v790, %v790
      %v823 = vpack.c.b16 %v791, %v791
      %v824 = vpack.c.b16 %v792, %v792
      %v825 = vpack.c.b16 %v793, %v793
      %v826 = vpack.c.b16 %v794, %v794
      %v827 = vpack.c.b16 %v795, %v795
      %v828 = vpack.c.b16 %v796, %v796
      %v829 = vpack.c.b16 %v797, %v797
      %v830 = vpack.c.b16 %v798, %v798
      %v831 = vpack.c.b16 %v799, %v799
      %v832 = vpack.c.b16 %v800, %v800
      %v833 = vpack.c.b16 %v801, %v801
      %v834 = vpack.c.b16 %v802, %v802
      %v835 = vpack.c.b16 %v803, %v803
      %v836 = vpack.c.b16 %v804, %v804
      %v837 = vpack.c.b16 %v805, %v805
      %v838 = vpack.c.b16 %v806, %v806
      %v839 = vpack.c.b16 %v807, %v807
      %v840 = vpack.c.b16 %v808, %v808
      %v841 = vpack.c.b16 %v809, %v809
      %v842 = vpack.c.b16 %v810, %v810
      %v843 = vpack.c.b16 %v811, %v811
      %v844 = vpack.c.b16 %v812, %v812
      %877 = vst [vmem:[%s226] sm:$0xf] %v813
      %878 = vst [vmem:[%s226 + $0x4] sm:$0xf] %v814
      %879 = vst [vmem:[%s226 + $0x8] sm:$0xf] %v815
      %880 = vst [vmem:[%s226 + $0xc] sm:$0xf] %v816
      %881 = vst [vmem:[%s226 + $0x10] sm:$0xf] %v817
      %882 = vst [vmem:[%s226 + $0x14] sm:$0xf] %v818
      %883 = vst [vmem:[%s226 + $0x18] sm:$0xf] %v819
      %884 = vst [vmem:[%s226 + $0x1c] sm:$0xf] %v820
      %885 = vst [vmem:[%s226 + $0x20] sm:$0xf] %v821
      %886 = vst [vmem:[%s226 + $0x24] sm:$0xf] %v822
      %887 = vst [vmem:[%s226 + $0x28] sm:$0xf] %v823
      %888 = vst [vmem:[%s226 + $0x2c] sm:$0xf] %v824
      %889 = vst [vmem:[%s226 + $0x30] sm:$0xf] %v825
      %890 = vst [vmem:[%s226 + $0x34] sm:$0xf] %v826
      %891 = vst [vmem:[%s226 + $0x38] sm:$0xf] %v827
      %892 = vst [vmem:[%s226 + $0x3c] sm:$0xf] %v828
      %893 = vst [vmem:[%s226 + $0x40] sm:$0xf] %v829
      %894 = vst [vmem:[%s226 + $0x44] sm:$0xf] %v830
      %895 = vst [vmem:[%s226 + $0x48] sm:$0xf] %v831
      %896 = vst [vmem:[%s226 + $0x4c] sm:$0xf] %v832
      %897 = vst [vmem:[%s226 + $0x50] sm:$0xf] %v833
      %898 = vst [vmem:[%s226 + $0x54] sm:$0xf] %v834
      %899 = vst [vmem:[%s226 + $0x58] sm:$0xf] %v835
      %900 = vst [vmem:[%s226 + $0x5c] sm:$0xf] %v836
      %901 = vst [vmem:[%s226 + $0x60] sm:$0xf] %v837
      %902 = vst [vmem:[%s226 + $0x64] sm:$0xf] %v838
      %903 = vst [vmem:[%s226 + $0x68] sm:$0xf] %v839
      %904 = vst [vmem:[%s226 + $0x6c] sm:$0xf] %v840
      %905 = vst [vmem:[%s226 + $0x70] sm:$0xf] %v841
      %906 = vst [vmem:[%s226 + $0x74] sm:$0xf] %v842
      %907 = vst [vmem:[%s226 + $0x78] sm:$0xf] %v843
      %908 = vst [vmem:[%s226 + $0x7c] sm:$0xf] %v844
      %s909 = smul.u32 32, %s18
      %p910 = scmp.lt.s32.totalorder %s909, 63
      %s911 = scalar_select %p910, %s909, 63
      %p912 = scmp.lt.s32.totalorder %s19, 0
      %s913 = scalar_select %p912, %s19, 0
      %s914 = sadd.s32 %s913, %s911
      %s915 = smul.addr %s914, 4
      %s916 = scalar_lea.vmem %s3, %s915
      // Predicated region
      $region33: #{fishnet201_cls_forward.5} parent=31 // pred_check
        %p917 = pneg %p124
      $region34: #{fishnet201_cls_forward.5} parent=31 // pred_check_branch
        %919 = sbr.rel (%p917) target = $region36
      $region35: #{fishnet201_cls_forward.5} parent=31 // pred_region
        %s920 = smul.u32 32, %s18
      $region36: #{fishnet201_cls_forward.5} parent=31 // pred_fallthru
        _
    $region32: #{fishnet201_cls_forward.5} parent=5 // pred_fallthru
      _
    %p921 = scmp.le.s32.totalorder 2, %s9
    // Predicated region
    $region37: #{fishnet201_cls_forward.5} parent=5 // pred_check
      %p922 = pneg %p921
    $region38: #{fishnet201_cls_forward.5} parent=5 // pred_check_branch
      %924 = sbr.rel (%p922) target = $region40
    $region39: #{fishnet201_cls_forward.5} parent=5 // pred_region
      %s925 = ssub.s32 %s9, 2
      // Predicated region
      $region41: #{fishnet201_cls_forward.5} parent=39 // pred_check
        %p926 = pneg %p130
      $region42: #{fishnet201_cls_forward.5} parent=39 // pred_check_branch
        %928 = sbr.rel (%p926) target = $region44
      $region43: #{fishnet201_cls_forward.5} parent=39 // pred_region
        %s929 = smul.u32 32, %s20
        %p930 = scmp.lt.s32.totalorder %s929, 63
        %s931 = scalar_select %p930, %s929, 63
        %p932 = scmp.lt.s32.totalorder %s21, 0
        %s933 = scalar_select %p932, %s21, 0
        %s934 = sadd.s32 %s933, %s931
        %s935 = smul.addr %s934, 4
        %s936 = scalar_lea.vmem %s3, %s935
      $region44: #{fishnet201_cls_forward.5} parent=39 // pred_fallthru
        _
    $region40: #{fishnet201_cls_forward.5} parent=5 // pred_fallthru
      _
  $region6: #{fishnet201_cls_forward.5} parent=0 // loop_footer
    %s13 = sadd.s32 1, %s9
  $region7: #{fishnet201_cls_forward.5} parent=0 // loop_footer_branch
    %8 = sbr.rel target = $region3
  $region8: #{fishnet201_cls_forward.5} parent=0 // loop_exit
    _

// kernel: fishnet201_cls_forward.6
$region0: #{fishnet201_cls_forward.6}
  #allocation0 [shape = 'u32[]', space=smem, size = 0x4, offset = 0x4, fixed_abs, tag = 'smem constant byte address 0x4 - core index']
  #allocation1 [shape = 'u32[144,128]{1,0:T(1,128)}', space=vmem, size = 0x12000, scoped, tag = 'internal scratch']
  %s0 = inlined_call_operand.vmem [shape: bf16[128,256], index: 0, kind: input, shape index: {}]
  %s1 = inlined_call_operand.vmem [shape: bf16[256,128], index: 1, kind: input, shape index: {}]
  %s2 = inlined_call_operand.vmem [shape: f32[1,128], index: 2, kind: input, shape index: {}]
  %s3 = inlined_call_operand.vmem [shape: bf16[128,128], index: 3, kind: output, shape index: {}]
  %s4 = sld [smem:[#allocation0]]
  $region45: #{fishnet201_cls_forward.6} parent=0
    _
  %s6 = ssub.s32 1, %s4
  %s7 = scalar_select 0, %s6, %s4
  loop: start=0, step=1, limit=4
  $region2: #{fishnet201_cls_forward.6} parent=0 // loop_pre_header
    _
  $region3: #{fishnet201_cls_forward.6} parent=0 // loop_header
    %s9 = sphi 0, %s13
    %p10 = scmp.ge.s32.totalorder %s9, 4
    %s16 = sphi 0, %s28
    %s17 = sphi 0, %s24
    %s18 = sphi 0, %s16
    %s19 = sphi 0, %s17
    %s20 = sphi 0, %s18
    %s21 = sphi 0, %s19
    %s31 = sphi 0, %s33
    %s34 = sphi 0, %s31
    %s35 = sphi 0, %s34
    %s51 = sphi 0, %s35
    %s57 = sphi 0, %s59
    %s60 = sphi 0, %s57
    %s61 = sphi 0, %s60
    %s77 = sphi 0, %s61
    %s83 = sphi 0, %s85
    %s86 = sphi 0, %s83
    %s87 = sphi 0, %s86
    %s103 = sphi 0, %s87
    %s111 = sphi 0, %s113
    %s114 = sphi 0, %s111
    %s115 = sphi 0, %s114
    %s131 = sphi 0, %s115
  $region4: #{fishnet201_cls_forward.6} parent=0 // loop_header_branch
    %12 = sbr.rel (%p10) target = $region8
  $region5: #{fishnet201_cls_forward.6} parent=0 // loop_body
    %s14 = ssub.s32 %s9, 1
    %s15 = ssub.s32 %s9, 2
    %s22 = sadd.s32 1, %s17
    %p23 = scmp.ge.s32.totalorder %s22, 1
    %s24 = scalar_select %p23, 0, %s22
    %s25 = sadd.s32 1, %s16
    %s26 = scalar_select %p23, %s25, %s16
    %p27 = scmp.ge.s32.totalorder %s26, 2
    %s28 = scalar_select %p27, 0, %s26
    %s29 = ssub.s32 %s16, %s28
    %p30 = scmp.eq.s32.totalorder %s29, 0
    %s32 = sadd.s32 %s31, 1
    %s33 = scalar_select %p30, %s31, %s32
    %p36 = pneg %p30
    %p37 = scmp.eq.s32.totalorder %s9, 1
    %p38 = por %p36, %p37
    %p39 = scmp.ne.s32.totalorder %s31, %s34
    %p40 = scmp.eq.s32.totalorder %s9, 0
    %p41 = por %p39, %p40
    %p42 = scmp.ne.s32.totalorder %s31, %s34
    %p43 = scmp.eq.s32.totalorder %s14, 1
    %p44 = por %p42, %p43
    %p45 = scmp.ne.s32.totalorder %s34, %s35
    %p46 = scmp.eq.s32.totalorder %s14, 0
    %p47 = por %p45, %p46
    %p48 = scmp.ne.s32.totalorder %s34, %s35
    %p49 = scmp.eq.s32.totalorder %s15, 1
    %p50 = por %p48, %p49
    %p52 = scmp.ne.s32.totalorder %s35, %s51
    %p53 = scmp.eq.s32.totalorder %s15, 0
    %p54 = por %p52, %p53
    %s55 = ssub.s32 %s17, %s24
    %p56 = scmp.eq.s32.totalorder %s55, 0
    %s58 = sadd.s32 %s57, 1
    %s59 = scalar_select %p56, %s57, %s58
    %p62 = pneg %p56
    %p63 = scmp.eq.s32.totalorder %s9, 1
    %p64 = por %p62, %p63
    %p65 = scmp.ne.s32.totalorder %s57, %s60
    %p66 = scmp.eq.s32.totalorder %s9, 0
    %p67 = por %p65, %p66
    %p68 = scmp.ne.s32.totalorder %s57, %s60
    %p69 = scmp.eq.s32.totalorder %s14, 1
    %p70 = por %p68, %p69
    %p71 = scmp.ne.s32.totalorder %s60, %s61
    %p72 = scmp.eq.s32.totalorder %s14, 0
    %p73 = por %p71, %p72
    %p74 = scmp.ne.s32.totalorder %s60, %s61
    %p75 = scmp.eq.s32.totalorder %s15, 1
    %p76 = por %p74, %p75
    %p78 = scmp.ne.s32.totalorder %s61, %s77
    %p79 = scmp.eq.s32.totalorder %s15, 0
    %p80 = por %p78, %p79
    %s81 = ssub.s32 %s17, %s24
    %p82 = scmp.eq.s32.totalorder %s81, 0
    %s84 = sadd.s32 %s83, 1
    %s85 = scalar_select %p82, %s83, %s84
    %p88 = pneg %p82
    %p89 = scmp.eq.s32.totalorder %s9, 1
    %p90 = por %p88, %p89
    %p91 = scmp.ne.s32.totalorder %s83, %s86
    %p92 = scmp.eq.s32.totalorder %s9, 0
    %p93 = por %p91, %p92
    %p94 = scmp.ne.s32.totalorder %s83, %s86
    %p95 = scmp.eq.s32.totalorder %s14, 1
    %p96 = por %p94, %p95
    %p97 = scmp.ne.s32.totalorder %s86, %s87
    %p98 = scmp.eq.s32.totalorder %s14, 0
    %p99 = por %p97, %p98
    %p100 = scmp.ne.s32.totalorder %s86, %s87
    %p101 = scmp.eq.s32.totalorder %s15, 1
    %p102 = por %p100, %p101
    %p104 = scmp.ne.s32.totalorder %s87, %s103
    %p105 = scmp.eq.s32.totalorder %s15, 0
    %p106 = por %p104, %p105
    %s107 = ssub.s32 %s16, %s28
    %s108 = ssub.s32 %s17, %s24
    %s109 = sor.u32 %s107, %s108
    %p110 = scmp.eq.s32.totalorder %s109, 0
    %s112 = sadd.s32 %s111, 1
    %s113 = scalar_select %p110, %s111, %s112
    %p116 = pneg %p110
    %p117 = scmp.eq.s32.totalorder %s9, 1
    %p118 = por %p116, %p117
    %p119 = scmp.ne.s32.totalorder %s111, %s114
    %p120 = scmp.eq.s32.totalorder %s9, 0
    %p121 = por %p119, %p120
    %p122 = scmp.ne.s32.totalorder %s111, %s114
    %p123 = scmp.eq.s32.totalorder %s14, 1
    %p124 = por %p122, %p123
    %p125 = scmp.ne.s32.totalorder %s114, %s115
    %p126 = scmp.eq.s32.totalorder %s14, 0
    %p127 = por %p125, %p126
    %p128 = scmp.ne.s32.totalorder %s114, %s115
    %p129 = scmp.eq.s32.totalorder %s15, 1
    %p130 = por %p128, %p129
    %p132 = scmp.ne.s32.totalorder %s115, %s131
    %p133 = scmp.eq.s32.totalorder %s15, 0
    %p134 = por %p132, %p133
    %p135 = scmp.le.s32.totalorder 1, %s9
    %p136 = scmp.lt.s32.totalorder %s9, 3
    %p137 = pnand %p135, %p136
    %p138 = pneg %p137
    // Predicated region
    $region9: #{fishnet201_cls_forward.6} parent=5 // pred_check
      _
    $region10: #{fishnet201_cls_forward.6} parent=5 // pred_check_branch
      %140 = sbr.rel (%p137) target = $region12
    $region11: #{fishnet201_cls_forward.6} parent=5 // pred_region
      %s141 = ssub.s32 %s9, 1
      // Predicated region
      $region13: #{fishnet201_cls_forward.6} parent=11 // pred_check
        %p142 = pneg %p73
      $region14: #{fishnet201_cls_forward.6} parent=11 // pred_check_branch
        %144 = sbr.rel (%p142) target = $region16
      $region15: #{fishnet201_cls_forward.6} parent=11 // pred_region
        %p145 = scmp.lt.s32.totalorder %s19, 0
        %s146 = scalar_select %p145, %s19, 0
        %s147 = smul.addr %s146, 4
        %s148 = scalar_lea.vmem %s1, %s147
      $region16: #{fishnet201_cls_forward.6} parent=11 // pred_fallthru
        _
      // Predicated region
      $region17: #{fishnet201_cls_forward.6} parent=11 // pred_check
        %p149 = pneg %p99
      $region18: #{fishnet201_cls_forward.6} parent=11 // pred_check_branch
        %151 = sbr.rel (%p149) target = $region20
      $region19: #{fishnet201_cls_forward.6} parent=11 // pred_region
        %p152 = scmp.lt.s32.totalorder %s19, 0
        %s153 = scalar_select %p152, %s19, 0
        %s154 = scalar_lea.vmem %s2, %s153
      $region20: #{fishnet201_cls_forward.6} parent=11 // pred_fallthru
        _
    $region12: #{fishnet201_cls_forward.6} parent=5 // pred_fallthru
      _
    %p155 = scmp.lt.s32.totalorder %s9, 2
    // Predicated region
    $region21: #{fishnet201_cls_forward.6} parent=5 // pred_check
      %p156 = pneg %p155
    $region22: #{fishnet201_cls_forward.6} parent=5 // pred_check_branch
      %158 = sbr.rel (%p156) target = $region24
    $region23: #{fishnet201_cls_forward.6} parent=5 // pred_region
      // Predicated region
      $region25: #{fishnet201_cls_forward.6} parent=23 // pred_check
        %p159 = pneg %p41
      $region26: #{fishnet201_cls_forward.6} parent=23 // pred_check_branch
        %161 = sbr.rel (%p159) target = $region28
      $region27: #{fishnet201_cls_forward.6} parent=23 // pred_region
        %s162 = smul.u32 8, %s16
        %p163 = scmp.lt.s32.totalorder %s162, 15
        %s164 = scalar_select %p163, %s162, 15
        %s165 = smul.addr %s164, 2
        %s166 = smul.addr %s165, 4
        %s167 = scalar_lea.vmem %s0, %s166
        %s168 = smul.u32 8, %s16
      $region28: #{fishnet201_cls_forward.6} parent=23 // pred_fallthru
        _
    $region24: #{fishnet201_cls_forward.6} parent=5 // pred_fallthru
      _
    %p169 = scmp.le.s32.totalorder 1, %s9
    %p170 = scmp.lt.s32.totalorder %s9, 3
    %p171 = pnand %p169, %p170
    %p172 = pneg %p171
    // Predicated region
    $region29: #{fishnet201_cls_forward.6} parent=5 // pred_check
      _
    $region30: #{fishnet201_cls_forward.6} parent=5 // pred_check_branch
      %174 = sbr.rel (%p171) target = $region32
    $region31: #{fishnet201_cls_forward.6} parent=5 // pred_region
      %s175 = ssub.s32 %s9, 1
      %s176 = smul.u32 8, %s18
      %p177 = scmp.lt.s32.totalorder %s176, 15
      %s178 = scalar_select %p177, %s176, 15
      %s179 = smul.addr %s178, 2
      %s180 = smul.addr %s179, 4
      %s181 = scalar_lea.vmem %s0, %s180
      %p182 = pneg %p47
      %p183 = pneg %p44
      %p184 = scmp.lt.s32.totalorder %s19, 0
      %s185 = scalar_select %p184, %s19, 0
      %s186 = smul.addr %s185, 4
      %s187 = scalar_lea.vmem %s1, %s186
      %p188 = pneg %p73
      %p189 = pneg %p70
      %p190 = scmp.lt.s32.totalorder %s19, 0
      %s191 = scalar_select %p190, %s19, 0
      %s192 = scalar_lea.vmem %s2, %s191
      %p193 = pneg %p99
      %p194 = pneg %p96
      %p195 = pneg %p127
      %p196 = pneg %p124
      %s197 = smul.u32 8, %s18
      %p198 = scmp.lt.s32.totalorder %s197, 15
      %s199 = scalar_select %p198, %s197, 15
      %p200 = scmp.lt.s32.totalorder %s19, 0
      %s201 = scalar_select %p200, %s19, 0
      %s202 = sadd.s32 %s201, %s199
      %s203 = smul.addr %s202, 4
      %s204 = scalar_lea.vmem %s3, %s203
      %s205 = smul.u32 8, %s18
      %p206 = scmp.lt.s32.totalorder %s205, 15
      %s207 = scalar_select %p206, %s205, 15
      %s208 = smul.addr %s207, 2
      %s209 = smul.addr %s208, 4
      %s210 = scalar_lea.vmem %s0, %s209
      %s211 = smul.u32 8, %s18
      %p212 = scmp.lt.s32.totalorder %s19, 0
      %s213 = scalar_select %p212, %s19, 0
      %s214 = smul.addr %s213, 4
      %s215 = scalar_lea.vmem %s1, %s214
      %p216 = scmp.lt.s32.totalorder %s19, 0
      %s217 = scalar_select %p216, %s19, 0
      %s218 = scalar_lea.vmem %s2, %s217
      %s219 = smul.u32 8, %s18
      %p220 = scmp.lt.s32.totalorder %s219, 15
      %s221 = scalar_select %p220, %s219, 15
      %p222 = scmp.lt.s32.totalorder %s19, 0
      %s223 = scalar_select %p222, %s19, 0
      %s224 = sadd.s32 %s223, %s221
      %s225 = smul.addr %s224, 4
      %s226 = scalar_lea.vmem %s3, %s225
      %s227 = smul.u32 8, %s18
      %v229 = vld [vmem:[%s210] sm:$0xff]
      %v230 = vld [vmem:[%s210 + $0x8] sm:$0xff]
      %v231 = vld [vmem:[%s210 + $0x10] sm:$0xff]
      %v232 = vld [vmem:[%s210 + $0x18] sm:$0xff]
      %v233 = vld [vmem:[%s210 + $0x20] sm:$0xff]
      %v234 = vld [vmem:[%s210 + $0x28] sm:$0xff]
      %v235 = vld [vmem:[%s210 + $0x30] sm:$0xff]
      %v236 = vld [vmem:[%s210 + $0x38] sm:$0xff]
      %v237 = vld [vmem:[%s215] sm:$0xf]
      %v238 = vld [vmem:[%s215 + $0x4] sm:$0xf]
      %v239 = vld [vmem:[%s215 + $0x8] sm:$0xf]
      %v240 = vld [vmem:[%s215 + $0xc] sm:$0xf]
      %v241 = vld [vmem:[%s215 + $0x10] sm:$0xf]
      %v242 = vld [vmem:[%s215 + $0x14] sm:$0xf]
      %v243 = vld [vmem:[%s215 + $0x18] sm:$0xf]
      %v244 = vld [vmem:[%s215 + $0x1c] sm:$0xf]
      %v245 = vld [vmem:[%s215 + $0x20] sm:$0xf]
      %v246 = vld [vmem:[%s215 + $0x24] sm:$0xf]
      %v247 = vld [vmem:[%s215 + $0x28] sm:$0xf]
      %v248 = vld [vmem:[%s215 + $0x2c] sm:$0xf]
      %v249 = vld [vmem:[%s215 + $0x30] sm:$0xf]
      %v250 = vld [vmem:[%s215 + $0x34] sm:$0xf]
      %v251 = vld [vmem:[%s215 + $0x38] sm:$0xf]
      %v252 = vld [vmem:[%s215 + $0x3c] sm:$0xf]
      %v253 = vld [vmem:[%s215 + $0x40] sm:$0xf]
      %v254 = vld [vmem:[%s215 + $0x44] sm:$0xf]
      %v255 = vld [vmem:[%s215 + $0x48] sm:$0xf]
      %v256 = vld [vmem:[%s215 + $0x4c] sm:$0xf]
      %v257 = vld [vmem:[%s215 + $0x50] sm:$0xf]
      %v258 = vld [vmem:[%s215 + $0x54] sm:$0xf]
      %v259 = vld [vmem:[%s215 + $0x58] sm:$0xf]
      %v260 = vld [vmem:[%s215 + $0x5c] sm:$0xf]
      %v261 = vld [vmem:[%s215 + $0x60] sm:$0xf]
      %v262 = vld [vmem:[%s215 + $0x64] sm:$0xf]
      %v263 = vld [vmem:[%s215 + $0x68] sm:$0xf]
      %v264 = vld [vmem:[%s215 + $0x6c] sm:$0xf]
      %v265 = vld [vmem:[%s215 + $0x70] sm:$0xf]
      %v266 = vld [vmem:[%s215 + $0x74] sm:$0xf]
      %v267 = vld [vmem:[%s215 + $0x78] sm:$0xf]
      %v268 = vld [vmem:[%s215 + $0x7c] sm:$0xf]
      %v269 = vld [vmem:[%s218] sm:$0x1]
      %v271 = vlaneseq
      %v272 = vshrl.u32 %v271, 7
      %v273 = vsub.s32 0, %v272
      %v274 = vrot.slane %v269, %v273
      %v284 = vunpack.c.l.b16 %v229
      %v285 = vunpack.c.h.b16 %v229
      %v286 = vunpack.c.l.b16 %v230
      %v287 = vunpack.c.h.b16 %v230
      %v288 = vunpack.c.l.b16 %v231
      %v289 = vunpack.c.h.b16 %v231
      %v290 = vunpack.c.l.b16 %v232
      %v291 = vunpack.c.h.b16 %v232
      %v292 = vunpack.c.l.b16 %v233
      %v293 = vunpack.c.h.b16 %v233
      %v294 = vunpack.c.l.b16 %v234
      %v295 = vunpack.c.h.b16 %v234
      %v296 = vunpack.c.l.b16 %v235
      %v297 = vunpack.c.h.b16 %v235
      %v298 = vunpack.c.l.b16 %v236
      %v299 = vunpack.c.h.b16 %v236
      %v300 = vpack.c.b16 %v286, %v284
      %v301 = vpack.c.b16 %v287, %v285
      %v302 = vpack.c.b16 %v290, %v288
      %v303 = vpack.c.b16 %v291, %v289
      %v304 = vpack.c.b16 %v294, %v292
      %v305 = vpack.c.b16 %v295, %v293
      %v306 = vpack.c.b16 %v298, %v296
      %v307 = vpack.c.b16 %v299, %v297
      %v348 = vunpack.c.l.b16 %v237
      %v349 = vunpack.c.l.b16 %v238
      %v350 = vunpack.c.l.b16 %v239
      %v351 = vunpack.c.l.b16 %v240
      %v352 = vunpack.c.l.b16 %v241
      %v353 = vunpack.c.l.b16 %v242
      %v354 = vunpack.c.l.b16 %v243
      %v355 = vunpack.c.l.b16 %v244
      %v356 = vunpack.c.l.b16 %v245
      %v357 = vunpack.c.l.b16 %v246
      %v358 = vunpack.c.l.b16 %v247
      %v359 = vunpack.c.l.b16 %v248
      %v360 = vunpack.c.l.b16 %v249
      %v361 = vunpack.c.l.b16 %v250
      %v362 = vunpack.c.l.b16 %v251
      %v363 = vunpack.c.l.b16 %v252
      %v364 = vunpack.c.l.b16 %v253
      %v365 = vunpack.c.l.b16 %v254
      %v366 = vunpack.c.l.b16 %v255
      %v367 = vunpack.c.l.b16 %v256
      %v368 = vunpack.c.l.b16 %v257
      %v369 = vunpack.c.l.b16 %v258
      %v370 = vunpack.c.l.b16 %v259
      %v371 = vunpack.c.l.b16 %v260
      %v372 = vunpack.c.l.b16 %v261
      %v373 = vunpack.c.l.b16 %v262
      %v374 = vunpack.c.l.b16 %v263
      %v375 = vunpack.c.l.b16 %v264
      %v376 = vunpack.c.l.b16 %v265
      %v377 = vunpack.c.l.b16 %v266
      %v378 = vunpack.c.l.b16 %v267
      %v379 = vunpack.c.l.b16 %v268
      %v380 = vpack.c.b16 %v349, %v348
      %v381 = vpack.c.b16 %v351, %v350
      %v382 = vpack.c.b16 %v353, %v352
      %v383 = vpack.c.b16 %v355, %v354
      %v384 = vpack.c.b16 %v357, %v356
      %v385 = vpack.c.b16 %v359, %v358
      %v386 = vpack.c.b16 %v361, %v360
      %v387 = vpack.c.b16 %v363, %v362
      %v388 = vpack.c.b16 %v365, %v364
      %v389 = vpack.c.b16 %v367, %v366
      %v390 = vpack.c.b16 %v369, %v368
      %v391 = vpack.c.b16 %v371, %v370
      %v392 = vpack.c.b16 %v373, %v372
      %v393 = vpack.c.b16 %v375, %v374
      %v394 = vpack.c.b16 %v377, %v376
      %v395 = vpack.c.b16 %v379, %v378
      %412 = vmatprep.subr.bf16.mxu0 0
      %413 = vmatpush1.bf16.msra.mxu0 %v380
      %414 = vmatprep.subr.bf16.mxu0 0
      %415 = vmatpush1.bf16.msra.mxu0 %v381
      %416 = vmatprep.subr.bf16.mxu0 0
      %417 = vmatpush1.bf16.msra.mxu0 %v382
      %418 = vmatprep.subr.bf16.mxu0 0
      %419 = vmatpush1.bf16.msra.mxu0 %v383
      %420 = vmatprep.subr.bf16.mxu0 0
      %421 = vmatpush1.bf16.msra.mxu0 %v384
      %422 = vmatprep.subr.bf16.mxu0 0
      %423 = vmatpush1.bf16.msra.mxu0 %v385
      %424 = vmatprep.subr.bf16.mxu0 0
      %425 = vmatpush1.bf16.msra.mxu0 %v386
      %426 = vmatprep.subr.bf16.mxu0 0
      %427 = vmatpush1.bf16.msra.mxu0 %v387
      %428 = vmatprep.subr.bf16.mxu0 0
      %429 = vmatpush1.bf16.msra.mxu0 %v388
      %430 = vmatprep.subr.bf16.mxu0 0
      %431 = vmatpush1.bf16.msra.mxu0 %v389
      %432 = vmatprep.subr.bf16.mxu0 0
      %433 = vmatpush1.bf16.msra.mxu0 %v390
      %434 = vmatprep.subr.bf16.mxu0 0
      %435 = vmatpush1.bf16.msra.mxu0 %v391
      %436 = vmatprep.subr.bf16.mxu0 0
      %437 = vmatpush1.bf16.msra.mxu0 %v392
      %438 = vmatprep.subr.bf16.mxu0 0
      %439 = vmatpush1.bf16.msra.mxu0 %v393
      %440 = vmatprep.subr.bf16.mxu0 0
      %441 = vmatpush1.bf16.msra.mxu0 %v394
      %442 = vmatprep.subr.bf16.mxu0 0
      %443 = vmatpush1.bf16.msra.mxu0 %v395
      %444 = vmatprep.mubr.bf16.mxu0 %v301
      %445 = vmatmul.mubr.bf16.gmra.mrb[0].mxu0 %v300
      %v446 = vpop.f32.mrb[0].mxu0
      %v447 = vadd.f32 %v274, %v446
      %v448 = vpop.f32.mrb[0].mxu0
      %v449 = vpop.f32.mrb[0].mxu0
      %v450 = vadd.f32 %v274, %v449
      %v451 = vpop.f32.mrb[0].mxu0
      %452 = vmatprep.mubr.bf16.mxu0 %v303
      %453 = vmatmul.mubr.bf16.gmra.mrb[0].mxu0 %v302
      %v454 = vpop.f32.mrb[0].mxu0
      %v455 = vadd.f32 %v274, %v454
      %v456 = vpop.f32.mrb[0].mxu0
      %v457 = vpop.f32.mrb[0].mxu0
      %v458 = vadd.f32 %v274, %v457
      %v459 = vpop.f32.mrb[0].mxu0
      %460 = vmatprep.mubr.bf16.mxu0 %v305
      %461 = vmatmul.mubr.bf16.gmra.mrb[0].mxu0 %v304
      %v462 = vpop.f32.mrb[0].mxu0
      %v463 = vadd.f32 %v274, %v462
      %v464 = vpop.f32.mrb[0].mxu0
      %v465 = vpop.f32.mrb[0].mxu0
      %v466 = vadd.f32 %v274, %v465
      %v467 = vpop.f32.mrb[0].mxu0
      %468 = vmatprep.mubr.bf16.mxu0 %v307
      %469 = vmatmul.mubr.bf16.gmra.mrb[0].mxu0 %v306
      %v470 = vpop.f32.mrb[0].mxu0
      %v471 = vadd.f32 %v274, %v470
      %v472 = vpop.f32.mrb[0].mxu0
      %v473 = vpop.f32.mrb[0].mxu0
      %v474 = vadd.f32 %v274, %v473
      %v475 = vpop.f32.mrb[0].mxu0
      %476 = vdwg.mxu0
      %v477 = vmax.f32 %v447, 0.0
      %v478 = vmax.f32 %v450, 0.0
      %v479 = vmax.f32 %v455, 0.0
      %v480 = vmax.f32 %v458, 0.0
      %v481 = vmax.f32 %v463, 0.0
      %v482 = vmax.f32 %v466, 0.0
      %v483 = vmax.f32 %v471, 0.0
      %v484 = vmax.f32 %v474, 0.0
      %v485 = vpack.c.bf16 %v478, %v477
      %v486 = vpack.c.bf16 %v480, %v479
      %v487 = vpack.c.bf16 %v482, %v481
      %v488 = vpack.c.bf16 %v484, %v483
      %v493 = vunpack.c.l.b16 %v485
      %v494 = vunpack.c.h.b16 %v485
      %v495 = vunpack.c.l.b16 %v486
      %v496 = vunpack.c.h.b16 %v486
      %v497 = vunpack.c.l.b16 %v487
      %v498 = vunpack.c.h.b16 %v487
      %v499 = vunpack.c.l.b16 %v488
      %v500 = vunpack.c.h.b16 %v488
      %v501 = vpack.c.b16 %v493, %v493
      %v502 = vpack.c.b16 %v494, %v494
      %v503 = vpack.c.b16 %v495, %v495
      %v504 = vpack.c.b16 %v496, %v496
      %v505 = vpack.c.b16 %v497, %v497
      %v506 = vpack.c.b16 %v498, %v498
      %v507 = vpack.c.b16 %v499, %v499
      %v508 = vpack.c.b16 %v500, %v500
      %517 = vst [vmem:[%s226] sm:$0xf] %v501
      %518 = vst [vmem:[%s226 + $0x4] sm:$0xf] %v502
      %519 = vst [vmem:[%s226 + $0x8] sm:$0xf] %v503
      %520 = vst [vmem:[%s226 + $0xc] sm:$0xf] %v504
      %521 = vst [vmem:[%s226 + $0x10] sm:$0xf] %v505
      %522 = vst [vmem:[%s226 + $0x14] sm:$0xf] %v506
      %523 = vst [vmem:[%s226 + $0x18] sm:$0xf] %v507
      %524 = vst [vmem:[%s226 + $0x1c] sm:$0xf] %v508
      %s525 = smul.u32 8, %s18
      %p526 = scmp.lt.s32.totalorder %s525, 15
      %s527 = scalar_select %p526, %s525, 15
      %p528 = scmp.lt.s32.totalorder %s19, 0
      %s529 = scalar_select %p528, %s19, 0
      %s530 = sadd.s32 %s529, %s527
      %s531 = smul.addr %s530, 4
      %s532 = scalar_lea.vmem %s3, %s531
      // Predicated region
      $region33: #{fishnet201_cls_forward.6} parent=31 // pred_check
        %p533 = pneg %p124
      $region34: #{fishnet201_cls_forward.6} parent=31 // pred_check_branch
        %535 = sbr.rel (%p533) target = $region36
      $region35: #{fishnet201_cls_forward.6} parent=31 // pred_region
        %s536 = smul.u32 8, %s18
      $region36: #{fishnet201_cls_forward.6} parent=31 // pred_fallthru
        _
    $region32: #{fishnet201_cls_forward.6} parent=5 // pred_fallthru
      _
    %p537 = scmp.le.s32.totalorder 2, %s9
    // Predicated region
    $region37: #{fishnet201_cls_forward.6} parent=5 // pred_check
      %p538 = pneg %p537
    $region38: #{fishnet201_cls_forward.6} parent=5 // pred_check_branch
      %540 = sbr.rel (%p538) target = $region40
    $region39: #{fishnet201_cls_forward.6} parent=5 // pred_region
      %s541 = ssub.s32 %s9, 2
      // Predicated region
      $region41: #{fishnet201_cls_forward.6} parent=39 // pred_check
        %p542 = pneg %p130
      $region42: #{fishnet201_cls_forward.6} parent=39 // pred_check_branch
        %544 = sbr.rel (%p542) target = $region44
      $region43: #{fishnet201_cls_forward.6} parent=39 // pred_region
        %s545 = smul.u32 8, %s20
        %p546 = scmp.lt.s32.totalorder %s545, 15
        %s547 = scalar_select %p546, %s545, 15
        %p548 = scmp.lt.s32.totalorder %s21, 0
        %s549 = scalar_select %p548, %s21, 0
        %s550 = sadd.s32 %s549, %s547
        %s551 = smul.addr %s550, 4
        %s552 = scalar_lea.vmem %s3, %s551
      $region44: #{fishnet201_cls_forward.6} parent=39 // pred_fallthru
        _
    $region40: #{fishnet201_cls_forward.6} parent=5 // pred_fallthru
      _
  $region6: #{fishnet201_cls_forward.6} parent=0 // loop_footer
    %s13 = sadd.s32 1, %s9
  $region7: #{fishnet201_cls_forward.6} parent=0 // loop_footer_branch
    %8 = sbr.rel target = $region3
  $region8: #{fishnet201_cls_forward.6} parent=0 // loop_exit
    _

// kernel: fishnet201_cls_forward.7
$region0: #{fishnet201_cls_forward.7}
  #allocation0 [shape = 'u32[]', space=smem, size = 0x4, offset = 0x4, fixed_abs, tag = 'smem constant byte address 0x4 - core index']
  #allocation1 [shape = 'u32[144,128]{1,0:T(1,128)}', space=vmem, size = 0x12000, scoped, tag = 'internal scratch']
  #allocation2 [shape = 'f32[1,1]{1,0:T(1,128)S(1)}', space=vmem, size = 0x200, scoped, tag = 'scoped memory for fishnet201_cls_forward.7']
  %s0 = inlined_call_operand.vmem [shape: bf16[128,128], index: 0, kind: input, shape index: {}]
  %s1 = inlined_call_operand.vmem [shape: bf16[9,128,128], index: 1, kind: input, shape index: {}]
  %s2 = inlined_call_operand.vmem [shape: bf16[9,128,128], index: 2, kind: input, shape index: {}]
  %s3 = inlined_call_operand.vmem [shape: f32[1,128], index: 3, kind: input, shape index: {}]
  %s4 = inlined_call_operand.vmem [shape: bf16[9,128,128], index: 4, kind: input, shape index: {}]
  %s5 = inlined_call_operand.vmem [shape: f32[1,128], index: 5, kind: input, shape index: {}]
  %s6 = inlined_call_operand.vmem [shape: f32[8,128], index: 6, kind: input, shape index: {}]
  %s7 = inlined_call_operand.vmem [shape: bf16[128,1024], index: 7, kind: input, shape index: {}]
  %s8 = inlined_call_operand.vmem [shape: f32[1,1024], index: 8, kind: input, shape index: {}]
  %s9 = inlined_call_operand.vmem [shape: f32[1,1024], index: 9, kind: input, shape index: {}]
  %s10 = inlined_call_operand.<no memory space> [shape: f32[1,1], index: 10, kind: input, shape index: {}]
  %s11 = inlined_call_operand.vmem [shape: f32[8,1], index: 11, kind: output, shape index: {}]
  %s12 = sld [smem:[#allocation0]]
  $region54: #{fishnet201_cls_forward.7} parent=0
    _
  %s14 = ssub.s32 1, %s12
  %s15 = scalar_select 0, %s14, %s12
  %v16 = vstv %s10
  %17 = vst [vmem:[#allocation2] sm:$0x1] %v16
  // Predicated region
  $region2: #{fishnet201_cls_forward.7} parent=0 // pred_check
    _
  $region3: #{fishnet201_cls_forward.7} parent=0 // pred_check_branch
    %19 = sbr.rel (0) target = $region5
  $region4: #{fishnet201_cls_forward.7} parent=0 // pred_region
    _
  $region5: #{fishnet201_cls_forward.7} parent=0 // pred_fallthru
    _
  // Predicated region
  $region6: #{fishnet201_cls_forward.7} parent=0 // pred_check
    _
  $region7: #{fishnet201_cls_forward.7} parent=0 // pred_check_branch
    %21 = sbr.rel (0) target = $region9
  $region8: #{fishnet201_cls_forward.7} parent=0 // pred_region
    _
  $region9: #{fishnet201_cls_forward.7} parent=0 // pred_fallthru
    _
  // Predicated region
  $region10: #{fishnet201_cls_forward.7} parent=0 // pred_check
    _
  $region11: #{fishnet201_cls_forward.7} parent=0 // pred_check_branch
    %23 = sbr.rel (0) target = $region13
  $region12: #{fishnet201_cls_forward.7} parent=0 // pred_region
    _
  $region13: #{fishnet201_cls_forward.7} parent=0 // pred_fallthru
    _
  // Predicated region
  $region14: #{fishnet201_cls_forward.7} parent=0 // pred_check
    _
  $region15: #{fishnet201_cls_forward.7} parent=0 // pred_check_branch
    %25 = sbr.rel (0) target = $region17
  $region16: #{fishnet201_cls_forward.7} parent=0 // pred_region
    _
  $region17: #{fishnet201_cls_forward.7} parent=0 // pred_fallthru
    _
  // Predicated region
  $region18: #{fishnet201_cls_forward.7} parent=0 // pred_check
    _
  $region19: #{fishnet201_cls_forward.7} parent=0 // pred_check_branch
    %27 = sbr.rel (0) target = $region21
  $region20: #{fishnet201_cls_forward.7} parent=0 // pred_region
    _
  $region21: #{fishnet201_cls_forward.7} parent=0 // pred_fallthru
    _
  // Predicated region
  $region22: #{fishnet201_cls_forward.7} parent=0 // pred_check
    _
  $region23: #{fishnet201_cls_forward.7} parent=0 // pred_check_branch
    %29 = sbr.rel (0) target = $region25
  $region24: #{fishnet201_cls_forward.7} parent=0 // pred_region
    _
  $region25: #{fishnet201_cls_forward.7} parent=0 // pred_fallthru
    _
  // Predicated region
  $region26: #{fishnet201_cls_forward.7} parent=0 // pred_check
    _
  $region27: #{fishnet201_cls_forward.7} parent=0 // pred_check_branch
    %31 = sbr.rel (0) target = $region29
  $region28: #{fishnet201_cls_forward.7} parent=0 // pred_region
    _
  $region29: #{fishnet201_cls_forward.7} parent=0 // pred_fallthru
    _
  // Predicated region
  $region30: #{fishnet201_cls_forward.7} parent=0 // pred_check
    _
  $region31: #{fishnet201_cls_forward.7} parent=0 // pred_check_branch
    %33 = sbr.rel (0) target = $region33
  $region32: #{fishnet201_cls_forward.7} parent=0 // pred_region
    _
  $region33: #{fishnet201_cls_forward.7} parent=0 // pred_fallthru
    _
  // Predicated region
  $region34: #{fishnet201_cls_forward.7} parent=0 // pred_check
    _
  $region35: #{fishnet201_cls_forward.7} parent=0 // pred_check_branch
    %35 = sbr.rel (0) target = $region37
  $region36: #{fishnet201_cls_forward.7} parent=0 // pred_region
    _
  $region37: #{fishnet201_cls_forward.7} parent=0 // pred_fallthru
    _
  // Predicated region
  $region38: #{fishnet201_cls_forward.7} parent=0 // pred_check
    _
  $region39: #{fishnet201_cls_forward.7} parent=0 // pred_check_branch
    %37 = sbr.rel (0) target = $region41
  $region40: #{fishnet201_cls_forward.7} parent=0 // pred_region
    _
  $region41: #{fishnet201_cls_forward.7} parent=0 // pred_fallthru
    _
  // Predicated region
  $region42: #{fishnet201_cls_forward.7} parent=0 // pred_check
    _
  $region43: #{fishnet201_cls_forward.7} parent=0 // pred_check_branch
    %39 = sbr.rel (0) target = $region45
  $region44: #{fishnet201_cls_forward.7} parent=0 // pred_region
    _
  $region45: #{fishnet201_cls_forward.7} parent=0 // pred_fallthru
    _
  %v41 = vld [vmem:[%s0] sm:$0xf]
  %v42 = vld [vmem:[%s0 + $0x4] sm:$0xf]
  %v43 = vld [vmem:[%s0 + $0x8] sm:$0xf]
  %v44 = vld [vmem:[%s0 + $0xc] sm:$0xf]
  %v45 = vld [vmem:[%s0 + $0x10] sm:$0xf]
  %v46 = vld [vmem:[%s0 + $0x14] sm:$0xf]
  %v47 = vld [vmem:[%s0 + $0x18] sm:$0xf]
  %v48 = vld [vmem:[%s0 + $0x1c] sm:$0xf]
  %v49 = vld [vmem:[%s0 + $0x20] sm:$0xf]
  %v50 = vld [vmem:[%s0 + $0x24] sm:$0xf]
  %v51 = vld [vmem:[%s0 + $0x28] sm:$0xf]
  %v52 = vld [vmem:[%s0 + $0x2c] sm:$0xf]
  %v53 = vld [vmem:[%s0 + $0x30] sm:$0xf]
  %v54 = vld [vmem:[%s0 + $0x34] sm:$0xf]
  %v55 = vld [vmem:[%s0 + $0x38] sm:$0xf]
  %v56 = vld [vmem:[%s0 + $0x3c] sm:$0xf]
  %v57 = vunpack.c.l.bf16 %v41
  %v58 = vunpack.c.l.bf16 %v42
  %v59 = vunpack.c.l.bf16 %v43
  %v60 = vunpack.c.l.bf16 %v44
  %v61 = vunpack.c.l.bf16 %v45
  %v62 = vunpack.c.l.bf16 %v46
  %v63 = vunpack.c.l.bf16 %v47
  %v64 = vunpack.c.l.bf16 %v48
  %v65 = vunpack.c.l.bf16 %v49
  %v66 = vunpack.c.l.bf16 %v50
  %v67 = vunpack.c.l.bf16 %v51
  %v68 = vunpack.c.l.bf16 %v52
  %v69 = vunpack.c.l.bf16 %v53
  %v70 = vunpack.c.l.bf16 %v54
  %v71 = vunpack.c.l.bf16 %v55
  %v72 = vunpack.c.l.bf16 %v56
  %v73 = vld [vmem:[%s1] sm:$0xf]
  %v74 = vld [vmem:[%s1 + $0x4] sm:$0xf]
  %v75 = vld [vmem:[%s1 + $0x8] sm:$0xf]
  %v76 = vld [vmem:[%s1 + $0xc] sm:$0xf]
  %v77 = vld [vmem:[%s1 + $0x10] sm:$0xf]
  %v78 = vld [vmem:[%s1 + $0x14] sm:$0xf]
  %v79 = vld [vmem:[%s1 + $0x18] sm:$0xf]
  %v80 = vld [vmem:[%s1 + $0x1c] sm:$0xf]
  %v81 = vld [vmem:[%s1 + $0x20] sm:$0xf]
  %v82 = vld [vmem:[%s1 + $0x24] sm:$0xf]
  %v83 = vld [vmem:[%s1 + $0x28] sm:$0xf]
  %v84 = vld [vmem:[%s1 + $0x2c] sm:$0xf]
  %v85 = vld [vmem:[%s1 + $0x30] sm:$0xf]
  %v86 = vld [vmem:[%s1 + $0x34] sm:$0xf]
  %v87 = vld [vmem:[%s1 + $0x38] sm:$0xf]
  %v88 = vld [vmem:[%s1 + $0x3c] sm:$0xf]
  %v105 = vunpack.c.l.b16 %v73
  %v106 = vunpack.c.l.b16 %v74
  %v107 = vunpack.c.l.b16 %v75
  %v108 = vunpack.c.l.b16 %v76
  %v109 = vunpack.c.l.b16 %v77
  %v110 = vunpack.c.l.b16 %v78
  %v111 = vunpack.c.l.b16 %v79
  %v112 = vunpack.c.l.b16 %v80
  %v113 = vunpack.c.l.b16 %v81
  %v114 = vunpack.c.l.b16 %v82
  %v115 = vunpack.c.l.b16 %v83
  %v116 = vunpack.c.l.b16 %v84
  %v117 = vunpack.c.l.b16 %v85
  %v118 = vunpack.c.l.b16 %v86
  %v119 = vunpack.c.l.b16 %v87
  %v120 = vunpack.c.l.b16 %v88
  %v121 = vpack.c.b16 %v106, %v105
  %v122 = vpack.c.b16 %v108, %v107
  %v123 = vpack.c.b16 %v110, %v109
  %v124 = vpack.c.b16 %v112, %v111
  %v125 = vpack.c.b16 %v114, %v113
  %v126 = vpack.c.b16 %v116, %v115
  %v127 = vpack.c.b16 %v118, %v117
  %v128 = vpack.c.b16 %v120, %v119
  %v153 = vunpack.c.l.b16 %v41
  %v154 = vunpack.c.l.b16 %v42
  %v155 = vunpack.c.l.b16 %v43
  %v156 = vunpack.c.l.b16 %v44
  %v157 = vunpack.c.l.b16 %v45
  %v158 = vunpack.c.l.b16 %v46
  %v159 = vunpack.c.l.b16 %v47
  %v160 = vunpack.c.l.b16 %v48
  %v161 = vunpack.c.l.b16 %v49
  %v162 = vunpack.c.l.b16 %v50
  %v163 = vunpack.c.l.b16 %v51
  %v164 = vunpack.c.l.b16 %v52
  %v165 = vunpack.c.l.b16 %v53
  %v166 = vunpack.c.l.b16 %v54
  %v167 = vunpack.c.l.b16 %v55
  %v168 = vunpack.c.l.b16 %v56
  %v169 = vpack.c.b16 %v154, %v153
  %v170 = vpack.c.b16 %v156, %v155
  %v171 = vpack.c.b16 %v158, %v157
  %v172 = vpack.c.b16 %v160, %v159
  %v173 = vpack.c.b16 %v162, %v161
  %v174 = vpack.c.b16 %v164, %v163
  %v175 = vpack.c.b16 %v166, %v165
  %v176 = vpack.c.b16 %v168, %v167
  %185 = vmatprep.subr.bf16.mxu0 0
  %186 = vmatpush1.bf16.msra.mxu0 %v169
  %187 = vmatprep.subr.bf16.mxu0 0
  %188 = vmatpush1.bf16.msra.mxu0 %v170
  %189 = vmatprep.subr.bf16.mxu0 0
  %190 = vmatpush1.bf16.msra.mxu0 %v171
  %191 = vmatprep.subr.bf16.mxu0 0
  %192 = vmatpush1.bf16.msra.mxu0 %v172
  %193 = vmatprep.subr.bf16.mxu0 0
  %194 = vmatpush1.bf16.msra.mxu0 %v173
  %195 = vmatprep.subr.bf16.mxu0 0
  %196 = vmatpush1.bf16.msra.mxu0 %v174
  %197 = vmatprep.subr.bf16.mxu0 0
  %198 = vmatpush1.bf16.msra.mxu0 %v175
  %199 = vmatprep.subr.bf16.mxu0 0
  %200 = vmatpush1.bf16.msra.mxu0 %v176
  %201 = vmatprep.subr.bf16.mxu0 0
  %202 = vmatpush1.bf16.msra.mxu0 0
  %203 = vmatprep.subr.bf16.mxu0 0
  %204 = vmatpush1.bf16.msra.mxu0 0
  %205 = vmatprep.subr.bf16.mxu0 0
  %206 = vmatpush1.bf16.msra.mxu0 0
  %207 = vmatprep.subr.bf16.mxu0 0
  %208 = vmatpush1.bf16.msra.mxu0 0
  %209 = vmatprep.subr.bf16.mxu0 0
  %210 = vmatpush1.bf16.msra.mxu0 0
  %211 = vmatprep.subr.bf16.mxu0 0
  %212 = vmatpush1.bf16.msra.mxu0 0
  %213 = vmatprep.subr.bf16.mxu0 0
  %214 = vmatpush1.bf16.msra.mxu0 0
  %215 = vmatprep.subr.bf16.mxu0 0
  %216 = vmatpush1.bf16.msra.mxu0 0
  %217 = vmatprep.mubr.bf16.mxu0 0
  %218 = vmatmul.mubr.bf16.gmra.mrb[0].mxu0 %v121
  %v219 = vpop.f32.mrb[0].mxu0
  %v220 = vadd.f32 0.0, %v219
  %v221 = vpop.f32.mrb[0].mxu0
  %v222 = vpop.f32.mrb[0].mxu0
  %v223 = vadd.f32 0.0, %v222
  %v224 = vpop.f32.mrb[0].mxu0
  %225 = vmatprep.mubr.bf16.mxu0 0
  %226 = vmatmul.mubr.bf16.gmra.mrb[0].mxu0 %v122
  %v227 = vpop.f32.mrb[0].mxu0
  %v228 = vadd.f32 0.0, %v227
  %v229 = vpop.f32.mrb[0].mxu0
  %v230 = vpop.f32.mrb[0].mxu0
  %v231 = vadd.f32 0.0, %v230
  %v232 = vpop.f32.mrb[0].mxu0
  %233 = vmatprep.mubr.bf16.mxu0 0
  %234 = vmatmul.mubr.bf16.gmra.mrb[0].mxu0 %v123
  %v235 = vpop.f32.mrb[0].mxu0
  %v236 = vadd.f32 0.0, %v235
  %v237 = vpop.f32.mrb[0].mxu0
  %v238 = vpop.f32.mrb[0].mxu0
  %v239 = vadd.f32 0.0, %v238
  %v240 = vpop.f32.mrb[0].mxu0
  %241 = vmatprep.mubr.bf16.mxu0 0
  %242 = vmatmul.mubr.bf16.gmra.mrb[0].mxu0 %v124
  %v243 = vpop.f32.mrb[0].mxu0
  %v244 = vadd.f32 0.0, %v243
  %v245 = vpop.f32.mrb[0].mxu0
  %v246 = vpop.f32.mrb[0].mxu0
  %v247 = vadd.f32 0.0, %v246
  %v248 = vpop.f32.mrb[0].mxu0
  %249 = vmatprep.mubr.bf16.mxu0 0
  %250 = vmatmul.mubr.bf16.gmra.mrb[0].mxu0 %v125
  %v251 = vpop.f32.mrb[0].mxu0
  %v252 = vadd.f32 0.0, %v251
  %v253 = vpop.f32.mrb[0].mxu0
  %v254 = vpop.f32.mrb[0].mxu0
  %v255 = vadd.f32 0.0, %v254
  %v256 = vpop.f32.mrb[0].mxu0
  %257 = vmatprep.mubr.bf16.mxu0 0
  %258 = vmatmul.mubr.bf16.gmra.mrb[0].mxu0 %v126
  %v259 = vpop.f32.mrb[0].mxu0
  %v260 = vadd.f32 0.0, %v259
  %v261 = vpop.f32.mrb[0].mxu0
  %v262 = vpop.f32.mrb[0].mxu0
  %v263 = vadd.f32 0.0, %v262
  %v264 = vpop.f32.mrb[0].mxu0
  %265 = vmatprep.mubr.bf16.mxu0 0
  %266 = vmatmul.mubr.bf16.gmra.mrb[0].mxu0 %v127
  %v267 = vpop.f32.mrb[0].mxu0
  %v268 = vadd.f32 0.0, %v267
  %v269 = vpop.f32.mrb[0].mxu0
  %v270 = vpop.f32.mrb[0].mxu0
  %v271 = vadd.f32 0.0, %v270
  %v272 = vpop.f32.mrb[0].mxu0
  %273 = vmatprep.mubr.bf16.mxu0 0
  %274 = vmatmul.mubr.bf16.gmra.mrb[0].mxu0 %v128
  %v275 = vpop.f32.mrb[0].mxu0
  %v276 = vadd.f32 0.0, %v275
  %v277 = vpop.f32.mrb[0].mxu0
  %v278 = vpop.f32.mrb[0].mxu0
  %v279 = vadd.f32 0.0, %v278
  %v280 = vpop.f32.mrb[0].mxu0
  %281 = vdwg.mxu0
  %v282 = vpack.c.bf16 %v223, %v220
  %v283 = vpack.c.bf16 %v231, %v228
  %v284 = vpack.c.bf16 %v239, %v236
  %v285 = vpack.c.bf16 %v247, %v244
  %v286 = vpack.c.bf16 %v255, %v252
  %v287 = vpack.c.bf16 %v263, %v260
  %v288 = vpack.c.bf16 %v271, %v268
  %v289 = vpack.c.bf16 %v279, %v276
  %v290 = vld [vmem:[%s2] sm:$0xf]
  %v291 = vld [vmem:[%s2 + $0x4] sm:$0xf]
  %v292 = vld [vmem:[%s2 + $0x8] sm:$0xf]
  %v293 = vld [vmem:[%s2 + $0xc] sm:$0xf]
  %v294 = vld [vmem:[%s2 + $0x10] sm:$0xf]
  %v295 = vld [vmem:[%s2 + $0x14] sm:$0xf]
  %v296 = vld [vmem:[%s2 + $0x18] sm:$0xf]
  %v297 = vld [vmem:[%s2 + $0x1c] sm:$0xf]
  %v298 = vld [vmem:[%s2 + $0x20] sm:$0xf]
  %v299 = vld [vmem:[%s2 + $0x24] sm:$0xf]
  %v300 = vld [vmem:[%s2 + $0x28] sm:$0xf]
  %v301 = vld [vmem:[%s2 + $0x2c] sm:$0xf]
  %v302 = vld [vmem:[%s2 + $0x30] sm:$0xf]
  %v303 = vld [vmem:[%s2 + $0x34] sm:$0xf]
  %v304 = vld [vmem:[%s2 + $0x38] sm:$0xf]
  %v305 = vld [vmem:[%s2 + $0x3c] sm:$0xf]
  %s306 = scalar_lea.vmem %s1, 64
  %v307 = vld [vmem:[%s306] sm:$0xf]
  %v308 = vld [vmem:[%s306 + $0x4] sm:$0xf]
  %v309 = vld [vmem:[%s306 + $0x8] sm:$0xf]
  %v310 = vld [vmem:[%s306 + $0xc] sm:$0xf]
  %v311 = vld [vmem:[%s306 + $0x10] sm:$0xf]
  %v312 = vld [vmem:[%s306 + $0x14] sm:$0xf]
  %v313 = vld [vmem:[%s306 + $0x18] sm:$0xf]
  %v314 = vld [vmem:[%s306 + $0x1c] sm:$0xf]
  %v315 = vld [vmem:[%s306 + $0x20] sm:$0xf]
  %v316 = vld [vmem:[%s306 + $0x24] sm:$0xf]
  %v317 = vld [vmem:[%s306 + $0x28] sm:$0xf]
  %v318 = vld [vmem:[%s306 + $0x2c] sm:$0xf]
  %v319 = vld [vmem:[%s306 + $0x30] sm:$0xf]
  %v320 = vld [vmem:[%s306 + $0x34] sm:$0xf]
  %v321 = vld [vmem:[%s306 + $0x38] sm:$0xf]
  %v322 = vld [vmem:[%s306 + $0x3c] sm:$0xf]
  %v339 = vunpack.c.l.b16 %v307
  %v340 = vunpack.c.l.b16 %v308
  %v341 = vunpack.c.l.b16 %v309
  %v342 = vunpack.c.l.b16 %v310
  %v343 = vunpack.c.l.b16 %v311
  %v344 = vunpack.c.l.b16 %v312
  %v345 = vunpack.c.l.b16 %v313
  %v346 = vunpack.c.l.b16 %v314
  %v347 = vunpack.c.l.b16 %v315
  %v348 = vunpack.c.l.b16 %v316
  %v349 = vunpack.c.l.b16 %v317
  %v350 = vunpack.c.l.b16 %v318
  %v351 = vunpack.c.l.b16 %v319
  %v352 = vunpack.c.l.b16 %v320
  %v353 = vunpack.c.l.b16 %v321
  %v354 = vunpack.c.l.b16 %v322
  %v355 = vpack.c.b16 %v340, %v339
  %v356 = vpack.c.b16 %v342, %v341
  %v357 = vpack.c.b16 %v344, %v343
  %v358 = vpack.c.b16 %v346, %v345
  %v359 = vpack.c.b16 %v348, %v347
  %v360 = vpack.c.b16 %v350, %v349
  %v361 = vpack.c.b16 %v352, %v351
  %v362 = vpack.c.b16 %v354, %v353
  %371 = vmatprep.subr.bf16.mxu0 0
  %372 = vmatpush1.bf16.msra.mxu0 %v169
  %373 = vmatprep.subr.bf16.mxu0 0
  %374 = vmatpush1.bf16.msra.mxu0 %v170
  %375 = vmatprep.subr.bf16.mxu0 0
  %376 = vmatpush1.bf16.msra.mxu0 %v171
  %377 = vmatprep.subr.bf16.mxu0 0
  %378 = vmatpush1.bf16.msra.mxu0 %v172
  %379 = vmatprep.subr.bf16.mxu0 0
  %380 = vmatpush1.bf16.msra.mxu0 %v173
  %381 = vmatprep.subr.bf16.mxu0 0
  %382 = vmatpush1.bf16.msra.mxu0 %v174
  %383 = vmatprep.subr.bf16.mxu0 0
  %384 = vmatpush1.bf16.msra.mxu0 %v175
  %385 = vmatprep.subr.bf16.mxu0 0
  %386 = vmatpush1.bf16.msra.mxu0 %v176
  %387 = vmatprep.subr.bf16.mxu0 0
  %388 = vmatpush1.bf16.msra.mxu0 0
  %389 = vmatprep.subr.bf16.mxu0 0
  %390 = vmatpush1.bf16.msra.mxu0 0
  %391 = vmatprep.subr.bf16.mxu0 0
  %392 = vmatpush1.bf16.msra.mxu0 0
  %393 = vmatprep.subr.bf16.mxu0 0
  %394 = vmatpush1.bf16.msra.mxu0 0
  %395 = vmatprep.subr.bf16.mxu0 0
  %396 = vmatpush1.bf16.msra.mxu0 0
  %397 = vmatprep.subr.bf16.mxu0 0
  %398 = vmatpush1.bf16.msra.mxu0 0
  %399 = vmatprep.subr.bf16.mxu0 0
  %400 = vmatpush1.bf16.msra.mxu0 0
  %401 = vmatprep.subr.bf16.mxu0 0
  %402 = vmatpush1.bf16.msra.mxu0 0
  %403 = vmatprep.mubr.bf16.mxu0 0
  %404 = vmatmul.mubr.bf16.gmra.mrb[0].mxu0 %v355
  %v405 = vpop.f32.mrb[0].mxu0
  %v406 = vadd.f32 0.0, %v405
  %v407 = vpop.f32.mrb[0].mxu0
  %v408 = vpop.f32.mrb[0].mxu0
  %v409 = vadd.f32 0.0, %v408
  %v410 = vpop.f32.mrb[0].mxu0
  %411 = vmatprep.mubr.bf16.mxu0 0
  %412 = vmatmul.mubr.bf16.gmra.mrb[0].mxu0 %v356
  %v413 = vpop.f32.mrb[0].mxu0
  %v414 = vadd.f32 0.0, %v413
  %v415 = vpop.f32.mrb[0].mxu0
  %v416 = vpop.f32.mrb[0].mxu0
  %v417 = vadd.f32 0.0, %v416
  %v418 = vpop.f32.mrb[0].mxu0
  %419 = vmatprep.mubr.bf16.mxu0 0
  %420 = vmatmul.mubr.bf16.gmra.mrb[0].mxu0 %v357
  %v421 = vpop.f32.mrb[0].mxu0
  %v422 = vadd.f32 0.0, %v421
  %v423 = vpop.f32.mrb[0].mxu0
  %v424 = vpop.f32.mrb[0].mxu0
  %v425 = vadd.f32 0.0, %v424
  %v426 = vpop.f32.mrb[0].mxu0
  %427 = vmatprep.mubr.bf16.mxu0 0
  %428 = vmatmul.mubr.bf16.gmra.mrb[0].mxu0 %v358
  %v429 = vpop.f32.mrb[0].mxu0
  %v430 = vadd.f32 0.0, %v429
  %v431 = vpop.f32.mrb[0].mxu0
  %v432 = vpop.f32.mrb[0].mxu0
  %v433 = vadd.f32 0.0, %v432
  %v434 = vpop.f32.mrb[0].mxu0
  %435 = vmatprep.mubr.bf16.mxu0 0
  %436 = vmatmul.mubr.bf16.gmra.mrb[0].mxu0 %v359
  %v437 = vpop.f32.mrb[0].mxu0
  %v438 = vadd.f32 0.0, %v437
  %v439 = vpop.f32.mrb[0].mxu0
  %v440 = vpop.f32.mrb[0].mxu0
  %v441 = vadd.f32 0.0, %v440
  %v442 = vpop.f32.mrb[0].mxu0
  %443 = vmatprep.mubr.bf16.mxu0 0
  %444 = vmatmul.mubr.bf16.gmra.mrb[0].mxu0 %v360
  %v445 = vpop.f32.mrb[0].mxu0
  %v446 = vadd.f32 0.0, %v445
  %v447 = vpop.f32.mrb[0].mxu0
  %v448 = vpop.f32.mrb[0].mxu0
  %v449 = vadd.f32 0.0, %v448
  %v450 = vpop.f32.mrb[0].mxu0
  %451 = vmatprep.mubr.bf16.mxu0 0
  %452 = vmatmul.mubr.bf16.gmra.mrb[0].mxu0 %v361
  %v453 = vpop.f32.mrb[0].mxu0
  %v454 = vadd.f32 0.0, %v453
  %v455 = vpop.f32.mrb[0].mxu0
  %v456 = vpop.f32.mrb[0].mxu0
  %v457 = vadd.f32 0.0, %v456
  %v458 = vpop.f32.mrb[0].mxu0
  %459 = vmatprep.mubr.bf16.mxu0 0
  %460 = vmatmul.mubr.bf16.gmra.mrb[0].mxu0 %v362
  %v461 = vpop.f32.mrb[0].mxu0
  %v462 = vadd.f32 0.0, %v461
  %v463 = vpop.f32.mrb[0].mxu0
  %v464 = vpop.f32.mrb[0].mxu0
  %v465 = vadd.f32 0.0, %v464
  %v466 = vpop.f32.mrb[0].mxu0
  %467 = vdwg.mxu0
  %v468 = vpack.c.bf16 %v409, %v406
  %v469 = vpack.c.bf16 %v417, %v414
  %v470 = vpack.c.bf16 %v425, %v422
  %v471 = vpack.c.bf16 %v433, %v430
  %v472 = vpack.c.bf16 %v441, %v438
  %v473 = vpack.c.bf16 %v449, %v446
  %v474 = vpack.c.bf16 %v457, %v454
  %v475 = vpack.c.bf16 %v465, %v462
  %s476 = scalar_lea.vmem %s2, 64
  %v477 = vld [vmem:[%s476] sm:$0xf]
  %v478 = vld [vmem:[%s476 + $0x4] sm:$0xf]
  %v479 = vld [vmem:[%s476 + $0x8] sm:$0xf]
  %v480 = vld [vmem:[%s476 + $0xc] sm:$0xf]
  %v481 = vld [vmem:[%s476 + $0x10] sm:$0xf]
  %v482 = vld [vmem:[%s476 + $0x14] sm:$0xf]
  %v483 = vld [vmem:[%s476 + $0x18] sm:$0xf]
  %v484 = vld [vmem:[%s476 + $0x1c] sm:$0xf]
  %v485 = vld [vmem:[%s476 + $0x20] sm:$0xf]
  %v486 = vld [vmem:[%s476 + $0x24] sm:$0xf]
  %v487 = vld [vmem:[%s476 + $0x28] sm:$0xf]
  %v488 = vld [vmem:[%s476 + $0x2c] sm:$0xf]
  %v489 = vld [vmem:[%s476 + $0x30] sm:$0xf]
  %v490 = vld [vmem:[%s476 + $0x34] sm:$0xf]
  %v491 = vld [vmem:[%s476 + $0x38] sm:$0xf]
  %v492 = vld [vmem:[%s476 + $0x3c] sm:$0xf]
  %v509 = vunpack.c.l.b16 %v477
  %v510 = vunpack.c.l.b16 %v478
  %v511 = vunpack.c.l.b16 %v479
  %v512 = vunpack.c.l.b16 %v480
  %v513 = vunpack.c.l.b16 %v481
  %v514 = vunpack.c.l.b16 %v482
  %v515 = vunpack.c.l.b16 %v483
  %v516 = vunpack.c.l.b16 %v484
  %v517 = vunpack.c.l.b16 %v485
  %v518 = vunpack.c.l.b16 %v486
  %v519 = vunpack.c.l.b16 %v487
  %v520 = vunpack.c.l.b16 %v488
  %v521 = vunpack.c.l.b16 %v489
  %v522 = vunpack.c.l.b16 %v490
  %v523 = vunpack.c.l.b16 %v491
  %v524 = vunpack.c.l.b16 %v492
  %v525 = vpack.c.b16 %v510, %v509
  %v526 = vpack.c.b16 %v512, %v511
  %v527 = vpack.c.b16 %v514, %v513
  %v528 = vpack.c.b16 %v516, %v515
  %v529 = vpack.c.b16 %v518, %v517
  %v530 = vpack.c.b16 %v520, %v519
  %v531 = vpack.c.b16 %v522, %v521
  %v532 = vpack.c.b16 %v524, %v523
  %541 = vmatprep.subr.bf16.mxu0 0
  %542 = vmatpush1.bf16.msra.mxu0 %v525
  %543 = vmatprep.subr.bf16.mxu0 0
  %544 = vmatpush1.bf16.msra.mxu0 %v526
  %545 = vmatprep.subr.bf16.mxu0 0
  %546 = vmatpush1.bf16.msra.mxu0 %v527
  %547 = vmatprep.subr.bf16.mxu0 0
  %548 = vmatpush1.bf16.msra.mxu0 %v528
  %549 = vmatprep.subr.bf16.mxu0 0
  %550 = vmatpush1.bf16.msra.mxu0 %v529
  %551 = vmatprep.subr.bf16.mxu0 0
  %552 = vmatpush1.bf16.msra.mxu0 %v530
  %553 = vmatprep.subr.bf16.mxu0 0
  %554 = vmatpush1.bf16.msra.mxu0 %v531
  %555 = vmatprep.subr.bf16.mxu0 0
  %556 = vmatpush1.bf16.msra.mxu0 %v532
  %557 = vmatprep.subr.bf16.mxu0 0
  %558 = vmatpush1.bf16.msra.mxu0 0
  %559 = vmatprep.subr.bf16.mxu0 0
  %560 = vmatpush1.bf16.msra.mxu0 0
  %561 = vmatprep.subr.bf16.mxu0 0
  %562 = vmatpush1.bf16.msra.mxu0 0
  %563 = vmatprep.subr.bf16.mxu0 0
  %564 = vmatpush1.bf16.msra.mxu0 0
  %565 = vmatprep.subr.bf16.mxu0 0
  %566 = vmatpush1.bf16.msra.mxu0 0
  %567 = vmatprep.subr.bf16.mxu0 0
  %568 = vmatpush1.bf16.msra.mxu0 0
  %569 = vmatprep.subr.bf16.mxu0 0
  %570 = vmatpush1.bf16.msra.mxu0 0
  %571 = vmatprep.subr.bf16.mxu0 0
  %572 = vmatpush1.bf16.msra.mxu0 0
  %573 = vmatprep.mubr.bf16.mxu0 0
  %574 = vmatmul.mubr.bf16.gmra.mrb[0].mxu0 %v468
  %v575 = vpop.f32.mrb[0].mxu0
  %v576 = vadd.f32 0.0, %v575
  %v577 = vpop.f32.mrb[0].mxu0
  %v578 = vpop.f32.mrb[0].mxu0
  %v579 = vadd.f32 0.0, %v578
  %v580 = vpop.f32.mrb[0].mxu0
  %581 = vmatprep.mubr.bf16.mxu0 0
  %582 = vmatmul.mubr.bf16.gmra.mrb[0].mxu0 %v469
  %v583 = vpop.f32.mrb[0].mxu0
  %v584 = vadd.f32 0.0, %v583
  %v585 = vpop.f32.mrb[0].mxu0
  %v586 = vpop.f32.mrb[0].mxu0
  %v587 = vadd.f32 0.0, %v586
  %v588 = vpop.f32.mrb[0].mxu0
  %589 = vmatprep.mubr.bf16.mxu0 0
  %590 = vmatmul.mubr.bf16.gmra.mrb[0].mxu0 %v470
  %v591 = vpop.f32.mrb[0].mxu0
  %v592 = vadd.f32 0.0, %v591
  %v593 = vpop.f32.mrb[0].mxu0
  %v594 = vpop.f32.mrb[0].mxu0
  %v595 = vadd.f32 0.0, %v594
  %v596 = vpop.f32.mrb[0].mxu0
  %597 = vmatprep.mubr.bf16.mxu0 0
  %598 = vmatmul.mubr.bf16.gmra.mrb[0].mxu0 %v471
  %v599 = vpop.f32.mrb[0].mxu0
  %v600 = vadd.f32 0.0, %v599
  %v601 = vpop.f32.mrb[0].mxu0
  %v602 = vpop.f32.mrb[0].mxu0
  %v603 = vadd.f32 0.0, %v602
  %v604 = vpop.f32.mrb[0].mxu0
  %605 = vmatprep.mubr.bf16.mxu0 0
  %606 = vmatmul.mubr.bf16.gmra.mrb[0].mxu0 %v472
  %v607 = vpop.f32.mrb[0].mxu0
  %v608 = vadd.f32 0.0, %v607
  %v609 = vpop.f32.mrb[0].mxu0
  %v610 = vpop.f32.mrb[0].mxu0
  %v611 = vadd.f32 0.0, %v610
  %v612 = vpop.f32.mrb[0].mxu0
  %613 = vmatprep.mubr.bf16.mxu0 0
  %614 = vmatmul.mubr.bf16.gmra.mrb[0].mxu0 %v473
  %v615 = vpop.f32.mrb[0].mxu0
  %v616 = vadd.f32 0.0, %v615
  %v617 = vpop.f32.mrb[0].mxu0
  %v618 = vpop.f32.mrb[0].mxu0
  %v619 = vadd.f32 0.0, %v618
  %v620 = vpop.f32.mrb[0].mxu0
  %621 = vmatprep.mubr.bf16.mxu0 0
  %622 = vmatmul.mubr.bf16.gmra.mrb[0].mxu0 %v474
  %v623 = vpop.f32.mrb[0].mxu0
  %v624 = vadd.f32 0.0, %v623
  %v625 = vpop.f32.mrb[0].mxu0
  %v626 = vpop.f32.mrb[0].mxu0
  %v627 = vadd.f32 0.0, %v626
  %v628 = vpop.f32.mrb[0].mxu0
  %629 = vmatprep.mubr.bf16.mxu0 0
  %630 = vmatmul.mubr.bf16.gmra.mrb[0].mxu0 %v475
  %v631 = vpop.f32.mrb[0].mxu0
  %v632 = vadd.f32 0.0, %v631
  %v633 = vpop.f32.mrb[0].mxu0
  %v634 = vpop.f32.mrb[0].mxu0
  %v635 = vadd.f32 0.0, %v634
  %v636 = vpop.f32.mrb[0].mxu0
  %637 = vdwg.mxu0
  %v654 = vunpack.c.l.b16 %v290
  %v655 = vunpack.c.l.b16 %v291
  %v656 = vunpack.c.l.b16 %v292
  %v657 = vunpack.c.l.b16 %v293
  %v658 = vunpack.c.l.b16 %v294
  %v659 = vunpack.c.l.b16 %v295
  %v660 = vunpack.c.l.b16 %v296
  %v661 = vunpack.c.l.b16 %v297
  %v662 = vunpack.c.l.b16 %v298
  %v663 = vunpack.c.l.b16 %v299
  %v664 = vunpack.c.l.b16 %v300
  %v665 = vunpack.c.l.b16 %v301
  %v666 = vunpack.c.l.b16 %v302
  %v667 = vunpack.c.l.b16 %v303
  %v668 = vunpack.c.l.b16 %v304
  %v669 = vunpack.c.l.b16 %v305
  %v670 = vpack.c.b16 %v655, %v654
  %v671 = vpack.c.b16 %v657, %v656
  %v672 = vpack.c.b16 %v659, %v658
  %v673 = vpack.c.b16 %v661, %v660
  %v674 = vpack.c.b16 %v663, %v662
  %v675 = vpack.c.b16 %v665, %v664
  %v676 = vpack.c.b16 %v667, %v666
  %v677 = vpack.c.b16 %v669, %v668
  %686 = vmatprep.subr.bf16.mxu0 0
  %687 = vmatpush1.bf16.msra.mxu0 %v670
  %688 = vmatprep.subr.bf16.mxu0 0
  %689 = vmatpush1.bf16.msra.mxu0 %v671
  %690 = vmatprep.subr.bf16.mxu0 0
  %691 = vmatpush1.bf16.msra.mxu0 %v672
  %692 = vmatprep.subr.bf16.mxu0 0
  %693 = vmatpush1.bf16.msra.mxu0 %v673
  %694 = vmatprep.subr.bf16.mxu0 0
  %695 = vmatpush1.bf16.msra.mxu0 %v674
  %696 = vmatprep.subr.bf16.mxu0 0
  %697 = vmatpush1.bf16.msra.mxu0 %v675
  %698 = vmatprep.subr.bf16.mxu0 0
  %699 = vmatpush1.bf16.msra.mxu0 %v676
  %700 = vmatprep.subr.bf16.mxu0 0
  %701 = vmatpush1.bf16.msra.mxu0 %v677
  %702 = vmatprep.subr.bf16.mxu0 0
  %703 = vmatpush1.bf16.msra.mxu0 0
  %704 = vmatprep.subr.bf16.mxu0 0
  %705 = vmatpush1.bf16.msra.mxu0 0
  %706 = vmatprep.subr.bf16.mxu0 0
  %707 = vmatpush1.bf16.msra.mxu0 0
  %708 = vmatprep.subr.bf16.mxu0 0
  %709 = vmatpush1.bf16.msra.mxu0 0
  %710 = vmatprep.subr.bf16.mxu0 0
  %711 = vmatpush1.bf16.msra.mxu0 0
  %712 = vmatprep.subr.bf16.mxu0 0
  %713 = vmatpush1.bf16.msra.mxu0 0
  %714 = vmatprep.subr.bf16.mxu0 0
  %715 = vmatpush1.bf16.msra.mxu0 0
  %716 = vmatprep.subr.bf16.mxu0 0
  %717 = vmatpush1.bf16.msra.mxu0 0
  %718 = vmatprep.mubr.bf16.mxu0 0
  %719 = vmatmul.mubr.bf16.gmra.mrb[0].mxu0 %v282
  %v720 = vpop.f32.mrb[0].mxu0
  %v721 = vadd.f32 %v576, %v720
  %v722 = vpop.f32.mrb[0].mxu0
  %v723 = vpop.f32.mrb[0].mxu0
  %v724 = vadd.f32 %v579, %v723
  %v725 = vpop.f32.mrb[0].mxu0
  %726 = vmatprep.mubr.bf16.mxu0 0
  %727 = vmatmul.mubr.bf16.gmra.mrb[0].mxu0 %v283
  %v728 = vpop.f32.mrb[0].mxu0
  %v729 = vadd.f32 %v584, %v728
  %v730 = vpop.f32.mrb[0].mxu0
  %v731 = vpop.f32.mrb[0].mxu0
  %v732 = vadd.f32 %v587, %v731
  %v733 = vpop.f32.mrb[0].mxu0
  %734 = vmatprep.mubr.bf16.mxu0 0
  %735 = vmatmul.mubr.bf16.gmra.mrb[0].mxu0 %v284
  %v736 = vpop.f32.mrb[0].mxu0
  %v737 = vadd.f32 %v592, %v736
  %v738 = vpop.f32.mrb[0].mxu0
  %v739 = vpop.f32.mrb[0].mxu0
  %v740 = vadd.f32 %v595, %v739
  %v741 = vpop.f32.mrb[0].mxu0
  %742 = vmatprep.mubr.bf16.mxu0 0
  %743 = vmatmul.mubr.bf16.gmra.mrb[0].mxu0 %v285
  %v744 = vpop.f32.mrb[0].mxu0
  %v745 = vadd.f32 %v600, %v744
  %v746 = vpop.f32.mrb[0].mxu0
  %v747 = vpop.f32.mrb[0].mxu0
  %v748 = vadd.f32 %v603, %v747
  %v749 = vpop.f32.mrb[0].mxu0
  %750 = vmatprep.mubr.bf16.mxu0 0
  %751 = vmatmul.mubr.bf16.gmra.mrb[0].mxu0 %v286
  %v752 = vpop.f32.mrb[0].mxu0
  %v753 = vadd.f32 %v608, %v752
  %v754 = vpop.f32.mrb[0].mxu0
  %v755 = vpop.f32.mrb[0].mxu0
  %v756 = vadd.f32 %v611, %v755
  %v757 = vpop.f32.mrb[0].mxu0
  %758 = vmatprep.mubr.bf16.mxu0 0
  %759 = vmatmul.mubr.bf16.gmra.mrb[0].mxu0 %v287
  %v760 = vpop.f32.mrb[0].mxu0
  %v761 = vadd.f32 %v616, %v760
  %v762 = vpop.f32.mrb[0].mxu0
  %v763 = vpop.f32.mrb[0].mxu0
  %v764 = vadd.f32 %v619, %v763
  %v765 = vpop.f32.mrb[0].mxu0
  %766 = vmatprep.mubr.bf16.mxu0 0
  %767 = vmatmul.mubr.bf16.gmra.mrb[0].mxu0 %v288
  %v768 = vpop.f32.mrb[0].mxu0
  %v769 = vadd.f32 %v624, %v768
  %v770 = vpop.f32.mrb[0].mxu0
  %v771 = vpop.f32.mrb[0].mxu0
  %v772 = vadd.f32 %v627, %v771
  %v773 = vpop.f32.mrb[0].mxu0
  %774 = vmatprep.mubr.bf16.mxu0 0
  %775 = vmatmul.mubr.bf16.gmra.mrb[0].mxu0 %v289
  %v776 = vpop.f32.mrb[0].mxu0
  %v777 = vadd.f32 %v632, %v776
  %v778 = vpop.f32.mrb[0].mxu0
  %v779 = vpop.f32.mrb[0].mxu0
  %v780 = vadd.f32 %v635, %v779
  %v781 = vpop.f32.mrb[0].mxu0
  %782 = vdwg.mxu0
  %s783 = scalar_lea.vmem %s1, 128
  %v784 = vld [vmem:[%s783] sm:$0xf]
  %v785 = vld [vmem:[%s783 + $0x4] sm:$0xf]
  %v786 = vld [vmem:[%s783 + $0x8] sm:$0xf]
  %v787 = vld [vmem:[%s783 + $0xc] sm:$0xf]
  %v788 = vld [vmem:[%s783 + $0x10] sm:$0xf]
  %v789 = vld [vmem:[%s783 + $0x14] sm:$0xf]
  %v790 = vld [vmem:[%s783 + $0x18] sm:$0xf]
  %v791 = vld [vmem:[%s783 + $0x1c] sm:$0xf]
  %v792 = vld [vmem:[%s783 + $0x20] sm:$0xf]
  %v793 = vld [vmem:[%s783 + $0x24] sm:$0xf]
  %v794 = vld [vmem:[%s783 + $0x28] sm:$0xf]
  %v795 = vld [vmem:[%s783 + $0x2c] sm:$0xf]
  %v796 = vld [vmem:[%s783 + $0x30] sm:$0xf]
  %v797 = vld [vmem:[%s783 + $0x34] sm:$0xf]
  %v798 = vld [vmem:[%s783 + $0x38] sm:$0xf]
  %v799 = vld [vmem:[%s783 + $0x3c] sm:$0xf]
  %v816 = vunpack.c.l.b16 %v784
  %v817 = vunpack.c.l.b16 %v785
  %v818 = vunpack.c.l.b16 %v786
  %v819 = vunpack.c.l.b16 %v787
  %v820 = vunpack.c.l.b16 %v788
  %v821 = vunpack.c.l.b16 %v789
  %v822 = vunpack.c.l.b16 %v790
  %v823 = vunpack.c.l.b16 %v791
  %v824 = vunpack.c.l.b16 %v792
  %v825 = vunpack.c.l.b16 %v793
  %v826 = vunpack.c.l.b16 %v794
  %v827 = vunpack.c.l.b16 %v795
  %v828 = vunpack.c.l.b16 %v796
  %v829 = vunpack.c.l.b16 %v797
  %v830 = vunpack.c.l.b16 %v798
  %v831 = vunpack.c.l.b16 %v799
  %v832 = vpack.c.b16 %v817, %v816
  %v833 = vpack.c.b16 %v819, %v818
  %v834 = vpack.c.b16 %v821, %v820
  %v835 = vpack.c.b16 %v823, %v822
  %v836 = vpack.c.b16 %v825, %v824
  %v837 = vpack.c.b16 %v827, %v826
  %v838 = vpack.c.b16 %v829, %v828
  %v839 = vpack.c.b16 %v831, %v830
  %848 = vmatprep.subr.bf16.mxu0 0
  %849 = vmatpush1.bf16.msra.mxu0 %v169
  %850 = vmatprep.subr.bf16.mxu0 0
  %851 = vmatpush1.bf16.msra.mxu0 %v170
  %852 = vmatprep.subr.bf16.mxu0 0
  %853 = vmatpush1.bf16.msra.mxu0 %v171
  %854 = vmatprep.subr.bf16.mxu0 0
  %855 = vmatpush1.bf16.msra.mxu0 %v172
  %856 = vmatprep.subr.bf16.mxu0 0
  %857 = vmatpush1.bf16.msra.mxu0 %v173
  %858 = vmatprep.subr.bf16.mxu0 0
  %859 = vmatpush1.bf16.msra.mxu0 %v174
  %860 = vmatprep.subr.bf16.mxu0 0
  %861 = vmatpush1.bf16.msra.mxu0 %v175
  %862 = vmatprep.subr.bf16.mxu0 0
  %863 = vmatpush1.bf16.msra.mxu0 %v176
  %864 = vmatprep.subr.bf16.mxu0 0
  %865 = vmatpush1.bf16.msra.mxu0 0
  %866 = vmatprep.subr.bf16.mxu0 0
  %867 = vmatpush1.bf16.msra.mxu0 0
  %868 = vmatprep.subr.bf16.mxu0 0
  %869 = vmatpush1.bf16.msra.mxu0 0
  %870 = vmatprep.subr.bf16.mxu0 0
  %871 = vmatpush1.bf16.msra.mxu0 0
  %872 = vmatprep.subr.bf16.mxu0 0
  %873 = vmatpush1.bf16.msra.mxu0 0
  %874 = vmatprep.subr.bf16.mxu0 0
  %875 = vmatpush1.bf16.msra.mxu0 0
  %876 = vmatprep.subr.bf16.mxu0 0
  %877 = vmatpush1.bf16.msra.mxu0 0
  %878 = vmatprep.subr.bf16.mxu0 0
  %879 = vmatpush1.bf16.msra.mxu0 0
  %880 = vmatprep.mubr.bf16.mxu0 0
  %881 = vmatmul.mubr.bf16.gmra.mrb[0].mxu0 %v832
  %v882 = vpop.f32.mrb[0].mxu0
  %v883 = vadd.f32 0.0, %v882
  %v884 = vpop.f32.mrb[0].mxu0
  %v885 = vpop.f32.mrb[0].mxu0
  %v886 = vadd.f32 0.0, %v885
  %v887 = vpop.f32.mrb[0].mxu0
  %888 = vmatprep.mubr.bf16.mxu0 0
  %889 = vmatmul.mubr.bf16.gmra.mrb[0].mxu0 %v833
  %v890 = vpop.f32.mrb[0].mxu0
  %v891 = vadd.f32 0.0, %v890
  %v892 = vpop.f32.mrb[0].mxu0
  %v893 = vpop.f32.mrb[0].mxu0
  %v894 = vadd.f32 0.0, %v893
  %v895 = vpop.f32.mrb[0].mxu0
  %896 = vmatprep.mubr.bf16.mxu0 0
  %897 = vmatmul.mubr.bf16.gmra.mrb[0].mxu0 %v834
  %v898 = vpop.f32.mrb[0].mxu0
  %v899 = vadd.f32 0.0, %v898
  %v900 = vpop.f32.mrb[0].mxu0
  %v901 = vpop.f32.mrb[0].mxu0
  %v902 = vadd.f32 0.0, %v901
  %v903 = vpop.f32.mrb[0].mxu0
  %904 = vmatprep.mubr.bf16.mxu0 0
  %905 = vmatmul.mubr.bf16.gmra.mrb[0].mxu0 %v835
  %v906 = vpop.f32.mrb[0].mxu0
  %v907 = vadd.f32 0.0, %v906
  %v908 = vpop.f32.mrb[0].mxu0
  %v909 = vpop.f32.mrb[0].mxu0
  %v910 = vadd.f32 0.0, %v909
  %v911 = vpop.f32.mrb[0].mxu0
  %912 = vmatprep.mubr.bf16.mxu0 0
  %913 = vmatmul.mubr.bf16.gmra.mrb[0].mxu0 %v836
  %v914 = vpop.f32.mrb[0].mxu0
  %v915 = vadd.f32 0.0, %v914
  %v916 = vpop.f32.mrb[0].mxu0
  %v917 = vpop.f32.mrb[0].mxu0
  %v918 = vadd.f32 0.0, %v917
  %v919 = vpop.f32.mrb[0].mxu0
  %920 = vmatprep.mubr.bf16.mxu0 0
  %921 = vmatmul.mubr.bf16.gmra.mrb[0].mxu0 %v837
  %v922 = vpop.f32.mrb[0].mxu0
  %v923 = vadd.f32 0.0, %v922
  %v924 = vpop.f32.mrb[0].mxu0
  %v925 = vpop.f32.mrb[0].mxu0
  %v926 = vadd.f32 0.0, %v925
  %v927 = vpop.f32.mrb[0].mxu0
  %928 = vmatprep.mubr.bf16.mxu0 0
  %929 = vmatmul.mubr.bf16.gmra.mrb[0].mxu0 %v838
  %v930 = vpop.f32.mrb[0].mxu0
  %v931 = vadd.f32 0.0, %v930
  %v932 = vpop.f32.mrb[0].mxu0
  %v933 = vpop.f32.mrb[0].mxu0
  %v934 = vadd.f32 0.0, %v933
  %v935 = vpop.f32.mrb[0].mxu0
  %936 = vmatprep.mubr.bf16.mxu0 0
  %937 = vmatmul.mubr.bf16.gmra.mrb[0].mxu0 %v839
  %v938 = vpop.f32.mrb[0].mxu0
  %v939 = vadd.f32 0.0, %v938
  %v940 = vpop.f32.mrb[0].mxu0
  %v941 = vpop.f32.mrb[0].mxu0
  %v942 = vadd.f32 0.0, %v941
  %v943 = vpop.f32.mrb[0].mxu0
  %944 = vdwg.mxu0
  %v945 = vpack.c.bf16 %v886, %v883
  %v946 = vpack.c.bf16 %v894, %v891
  %v947 = vpack.c.bf16 %v902, %v899
  %v948 = vpack.c.bf16 %v910, %v907
  %v949 = vpack.c.bf16 %v918, %v915
  %v950 = vpack.c.bf16 %v926, %v923
  %v951 = vpack.c.bf16 %v934, %v931
  %v952 = vpack.c.bf16 %v942, %v939
  %s953 = scalar_lea.vmem %s2, 128
  %v954 = vld [vmem:[%s953] sm:$0xf]
  %v955 = vld [vmem:[%s953 + $0x4] sm:$0xf]
  %v956 = vld [vmem:[%s953 + $0x8] sm:$0xf]
  %v957 = vld [vmem:[%s953 + $0xc] sm:$0xf]
  %v958 = vld [vmem:[%s953 + $0x10] sm:$0xf]
  %v959 = vld [vmem:[%s953 + $0x14] sm:$0xf]
  %v960 = vld [vmem:[%s953 + $0x18] sm:$0xf]
  %v961 = vld [vmem:[%s953 + $0x1c] sm:$0xf]
  %v962 = vld [vmem:[%s953 + $0x20] sm:$0xf]
  %v963 = vld [vmem:[%s953 + $0x24] sm:$0xf]
  %v964 = vld [vmem:[%s953 + $0x28] sm:$0xf]
  %v965 = vld [vmem:[%s953 + $0x2c] sm:$0xf]
  %v966 = vld [vmem:[%s953 + $0x30] sm:$0xf]
  %v967 = vld [vmem:[%s953 + $0x34] sm:$0xf]
  %v968 = vld [vmem:[%s953 + $0x38] sm:$0xf]
  %v969 = vld [vmem:[%s953 + $0x3c] sm:$0xf]
  %v986 = vunpack.c.l.b16 %v954
  %v987 = vunpack.c.l.b16 %v955
  %v988 = vunpack.c.l.b16 %v956
  %v989 = vunpack.c.l.b16 %v957
  %v990 = vunpack.c.l.b16 %v958
  %v991 = vunpack.c.l.b16 %v959
  %v992 = vunpack.c.l.b16 %v960
  %v993 = vunpack.c.l.b16 %v961
  %v994 = vunpack.c.l.b16 %v962
  %v995 = vunpack.c.l.b16 %v963
  %v996 = vunpack.c.l.b16 %v964
  %v997 = vunpack.c.l.b16 %v965
  %v998 = vunpack.c.l.b16 %v966
  %v999 = vunpack.c.l.b16 %v967
  %v1000 = vunpack.c.l.b16 %v968
  %v1001 = vunpack.c.l.b16 %v969
  %v1002 = vpack.c.b16 %v987, %v986
  %v1003 = vpack.c.b16 %v989, %v988
  %v1004 = vpack.c.b16 %v991, %v990
  %v1005 = vpack.c.b16 %v993, %v992
  %v1006 = vpack.c.b16 %v995, %v994
  %v1007 = vpack.c.b16 %v997, %v996
  %v1008 = vpack.c.b16 %v999, %v998
  %v1009 = vpack.c.b16 %v1001, %v1000
  %1018 = vmatprep.subr.bf16.mxu0 0
  %1019 = vmatpush1.bf16.msra.mxu0 %v1002
  %1020 = vmatprep.subr.bf16.mxu0 0
  %1021 = vmatpush1.bf16.msra.mxu0 %v1003
  %1022 = vmatprep.subr.bf16.mxu0 0
  %1023 = vmatpush1.bf16.msra.mxu0 %v1004
  %1024 = vmatprep.subr.bf16.mxu0 0
  %1025 = vmatpush1.bf16.msra.mxu0 %v1005
  %1026 = vmatprep.subr.bf16.mxu0 0
  %1027 = vmatpush1.bf16.msra.mxu0 %v1006
  %1028 = vmatprep.subr.bf16.mxu0 0
  %1029 = vmatpush1.bf16.msra.mxu0 %v1007
  %1030 = vmatprep.subr.bf16.mxu0 0
  %1031 = vmatpush1.bf16.msra.mxu0 %v1008
  %1032 = vmatprep.subr.bf16.mxu0 0
  %1033 = vmatpush1.bf16.msra.mxu0 %v1009
  %1034 = vmatprep.subr.bf16.mxu0 0
  %1035 = vmatpush1.bf16.msra.mxu0 0
  %1036 = vmatprep.subr.bf16.mxu0 0
  %1037 = vmatpush1.bf16.msra.mxu0 0
  %1038 = vmatprep.subr.bf16.mxu0 0
  %1039 = vmatpush1.bf16.msra.mxu0 0
  %1040 = vmatprep.subr.bf16.mxu0 0
  %1041 = vmatpush1.bf16.msra.mxu0 0
  %1042 = vmatprep.subr.bf16.mxu0 0
  %1043 = vmatpush1.bf16.msra.mxu0 0
  %1044 = vmatprep.subr.bf16.mxu0 0
  %1045 = vmatpush1.bf16.msra.mxu0 0
  %1046 = vmatprep.subr.bf16.mxu0 0
  %1047 = vmatpush1.bf16.msra.mxu0 0
  %1048 = vmatprep.subr.bf16.mxu0 0
  %1049 = vmatpush1.bf16.msra.mxu0 0
  %1050 = vmatprep.mubr.bf16.mxu0 0
  %1051 = vmatmul.mubr.bf16.gmra.mrb[0].mxu0 %v945
  %v1052 = vpop.f32.mrb[0].mxu0
  %v1053 = vadd.f32 0.0, %v1052
  %v1054 = vpop.f32.mrb[0].mxu0
  %v1055 = vpop.f32.mrb[0].mxu0
  %v1056 = vadd.f32 0.0, %v1055
  %v1057 = vpop.f32.mrb[0].mxu0
  %1058 = vmatprep.mubr.bf16.mxu0 0
  %1059 = vmatmul.mubr.bf16.gmra.mrb[0].mxu0 %v946
  %v1060 = vpop.f32.mrb[0].mxu0
  %v1061 = vadd.f32 0.0, %v1060
  %v1062 = vpop.f32.mrb[0].mxu0
  %v1063 = vpop.f32.mrb[0].mxu0
  %v1064 = vadd.f32 0.0, %v1063
  %v1065 = vpop.f32.mrb[0].mxu0
  %1066 = vmatprep.mubr.bf16.mxu0 0
  %1067 = vmatmul.mubr.bf16.gmra.mrb[0].mxu0 %v947
  %v1068 = vpop.f32.mrb[0].mxu0
  %v1069 = vadd.f32 0.0, %v1068
  %v1070 = vpop.f32.mrb[0].mxu0
  %v1071 = vpop.f32.mrb[0].mxu0
  %v1072 = vadd.f32 0.0, %v1071
  %v1073 = vpop.f32.mrb[0].mxu0
  %1074 = vmatprep.mubr.bf16.mxu0 0
  %1075 = vmatmul.mubr.bf16.gmra.mrb[0].mxu0 %v948
  %v1076 = vpop.f32.mrb[0].mxu0
  %v1077 = vadd.f32 0.0, %v1076
  %v1078 = vpop.f32.mrb[0].mxu0
  %v1079 = vpop.f32.mrb[0].mxu0
  %v1080 = vadd.f32 0.0, %v1079
  %v1081 = vpop.f32.mrb[0].mxu0
  %1082 = vmatprep.mubr.bf16.mxu0 0
  %1083 = vmatmul.mubr.bf16.gmra.mrb[0].mxu0 %v949
  %v1084 = vpop.f32.mrb[0].mxu0
  %v1085 = vadd.f32 0.0, %v1084
  %v1086 = vpop.f32.mrb[0].mxu0
  %v1087 = vpop.f32.mrb[0].mxu0
  %v1088 = vadd.f32 0.0, %v1087
  %v1089 = vpop.f32.mrb[0].mxu0
  %1090 = vmatprep.mubr.bf16.mxu0 0
  %1091 = vmatmul.mubr.bf16.gmra.mrb[0].mxu0 %v950
  %v1092 = vpop.f32.mrb[0].mxu0
  %v1093 = vadd.f32 0.0, %v1092
  %v1094 = vpop.f32.mrb[0].mxu0
  %v1095 = vpop.f32.mrb[0].mxu0
  %v1096 = vadd.f32 0.0, %v1095
  %v1097 = vpop.f32.mrb[0].mxu0
  %1098 = vmatprep.mubr.bf16.mxu0 0
  %1099 = vmatmul.mubr.bf16.gmra.mrb[0].mxu0 %v951
  %v1100 = vpop.f32.mrb[0].mxu0
  %v1101 = vadd.f32 0.0, %v1100
  %v1102 = vpop.f32.mrb[0].mxu0
  %v1103 = vpop.f32.mrb[0].mxu0
  %v1104 = vadd.f32 0.0, %v1103
  %v1105 = vpop.f32.mrb[0].mxu0
  %1106 = vmatprep.mubr.bf16.mxu0 0
  %1107 = vmatmul.mubr.bf16.gmra.mrb[0].mxu0 %v952
  %v1108 = vpop.f32.mrb[0].mxu0
  %v1109 = vadd.f32 0.0, %v1108
  %v1110 = vpop.f32.mrb[0].mxu0
  %v1111 = vpop.f32.mrb[0].mxu0
  %v1112 = vadd.f32 0.0, %v1111
  %v1113 = vpop.f32.mrb[0].mxu0
  %1114 = vdwg.mxu0
  %v1115 = vadd.f32 %v721, %v1053
  %v1116 = vadd.f32 %v724, %v1056
  %v1117 = vadd.f32 %v729, %v1061
  %v1118 = vadd.f32 %v732, %v1064
  %v1119 = vadd.f32 %v737, %v1069
  %v1120 = vadd.f32 %v740, %v1072
  %v1121 = vadd.f32 %v745, %v1077
  %v1122 = vadd.f32 %v748, %v1080
  %v1123 = vadd.f32 %v753, %v1085
  %v1124 = vadd.f32 %v756, %v1088
  %v1125 = vadd.f32 %v761, %v1093
  %v1126 = vadd.f32 %v764, %v1096
  %v1127 = vadd.f32 %v769, %v1101
  %v1128 = vadd.f32 %v772, %v1104
  %v1129 = vadd.f32 %v777, %v1109
  %v1130 = vadd.f32 %v780, %v1112
  %s1131 = scalar_lea.vmem %s1, 192
  %v1132 = vld [vmem:[%s1131] sm:$0xf]
  %v1133 = vld [vmem:[%s1131 + $0x4] sm:$0xf]
  %v1134 = vld [vmem:[%s1131 + $0x8] sm:$0xf]
  %v1135 = vld [vmem:[%s1131 + $0xc] sm:$0xf]
  %v1136 = vld [vmem:[%s1131 + $0x10] sm:$0xf]
  %v1137 = vld [vmem:[%s1131 + $0x14] sm:$0xf]
  %v1138 = vld [vmem:[%s1131 + $0x18] sm:$0xf]
  %v1139 = vld [vmem:[%s1131 + $0x1c] sm:$0xf]
  %v1140 = vld [vmem:[%s1131 + $0x20] sm:$0xf]
  %v1141 = vld [vmem:[%s1131 + $0x24] sm:$0xf]
  %v1142 = vld [vmem:[%s1131 + $0x28] sm:$0xf]
  %v1143 = vld [vmem:[%s1131 + $0x2c] sm:$0xf]
  %v1144 = vld [vmem:[%s1131 + $0x30] sm:$0xf]
  %v1145 = vld [vmem:[%s1131 + $0x34] sm:$0xf]
  %v1146 = vld [vmem:[%s1131 + $0x38] sm:$0xf]
  %v1147 = vld [vmem:[%s1131 + $0x3c] sm:$0xf]
  %v1164 = vunpack.c.l.b16 %v1132
  %v1165 = vunpack.c.l.b16 %v1133
  %v1166 = vunpack.c.l.b16 %v1134
  %v1167 = vunpack.c.l.b16 %v1135
  %v1168 = vunpack.c.l.b16 %v1136
  %v1169 = vunpack.c.l.b16 %v1137
  %v1170 = vunpack.c.l.b16 %v1138
  %v1171 = vunpack.c.l.b16 %v1139
  %v1172 = vunpack.c.l.b16 %v1140
  %v1173 = vunpack.c.l.b16 %v1141
  %v1174 = vunpack.c.l.b16 %v1142
  %v1175 = vunpack.c.l.b16 %v1143
  %v1176 = vunpack.c.l.b16 %v1144
  %v1177 = vunpack.c.l.b16 %v1145
  %v1178 = vunpack.c.l.b16 %v1146
  %v1179 = vunpack.c.l.b16 %v1147
  %v1180 = vpack.c.b16 %v1165, %v1164
  %v1181 = vpack.c.b16 %v1167, %v1166
  %v1182 = vpack.c.b16 %v1169, %v1168
  %v1183 = vpack.c.b16 %v1171, %v1170
  %v1184 = vpack.c.b16 %v1173, %v1172
  %v1185 = vpack.c.b16 %v1175, %v1174
  %v1186 = vpack.c.b16 %v1177, %v1176
  %v1187 = vpack.c.b16 %v1179, %v1178
  %1196 = vmatprep.subr.bf16.mxu0 0
  %1197 = vmatpush1.bf16.msra.mxu0 %v169
  %1198 = vmatprep.subr.bf16.mxu0 0
  %1199 = vmatpush1.bf16.msra.mxu0 %v170
  %1200 = vmatprep.subr.bf16.mxu0 0
  %1201 = vmatpush1.bf16.msra.mxu0 %v171
  %1202 = vmatprep.subr.bf16.mxu0 0
  %1203 = vmatpush1.bf16.msra.mxu0 %v172
  %1204 = vmatprep.subr.bf16.mxu0 0
  %1205 = vmatpush1.bf16.msra.mxu0 %v173
  %1206 = vmatprep.subr.bf16.mxu0 0
  %1207 = vmatpush1.bf16.msra.mxu0 %v174
  %1208 = vmatprep.subr.bf16.mxu0 0
  %1209 = vmatpush1.bf16.msra.mxu0 %v175
  %1210 = vmatprep.subr.bf16.mxu0 0
  %1211 = vmatpush1.bf16.msra.mxu0 %v176
  %1212 = vmatprep.subr.bf16.mxu0 0
  %1213 = vmatpush1.bf16.msra.mxu0 0
  %1214 = vmatprep.subr.bf16.mxu0 0
  %1215 = vmatpush1.bf16.msra.mxu0 0
  %1216 = vmatprep.subr.bf16.mxu0 0
  %1217 = vmatpush1.bf16.msra.mxu0 0
  %1218 = vmatprep.subr.bf16.mxu0 0
  %1219 = vmatpush1.bf16.msra.mxu0 0
  %1220 = vmatprep.subr.bf16.mxu0 0
  %1221 = vmatpush1.bf16.msra.mxu0 0
  %1222 = vmatprep.subr.bf16.mxu0 0
  %1223 = vmatpush1.bf16.msra.mxu0 0
  %1224 = vmatprep.subr.bf16.mxu0 0
  %1225 = vmatpush1.bf16.msra.mxu0 0
  %1226 = vmatprep.subr.bf16.mxu0 0
  %1227 = vmatpush1.bf16.msra.mxu0 0
  %1228 = vmatprep.mubr.bf16.mxu0 0
  %1229 = vmatmul.mubr.bf16.gmra.mrb[0].mxu0 %v1180
  %v1230 = vpop.f32.mrb[0].mxu0
  %v1231 = vadd.f32 0.0, %v1230
  %v1232 = vpop.f32.mrb[0].mxu0
  %v1233 = vpop.f32.mrb[0].mxu0
  %v1234 = vadd.f32 0.0, %v1233
  %v1235 = vpop.f32.mrb[0].mxu0
  %1236 = vmatprep.mubr.bf16.mxu0 0
  %1237 = vmatmul.mubr.bf16.gmra.mrb[0].mxu0 %v1181
  %v1238 = vpop.f32.mrb[0].mxu0
  %v1239 = vadd.f32 0.0, %v1238
  %v1240 = vpop.f32.mrb[0].mxu0
  %v1241 = vpop.f32.mrb[0].mxu0
  %v1242 = vadd.f32 0.0, %v1241
  %v1243 = vpop.f32.mrb[0].mxu0
  %1244 = vmatprep.mubr.bf16.mxu0 0
  %1245 = vmatmul.mubr.bf16.gmra.mrb[0].mxu0 %v1182
  %v1246 = vpop.f32.mrb[0].mxu0
  %v1247 = vadd.f32 0.0, %v1246
  %v1248 = vpop.f32.mrb[0].mxu0
  %v1249 = vpop.f32.mrb[0].mxu0
  %v1250 = vadd.f32 0.0, %v1249
  %v1251 = vpop.f32.mrb[0].mxu0
  %1252 = vmatprep.mubr.bf16.mxu0 0
  %1253 = vmatmul.mubr.bf16.gmra.mrb[0].mxu0 %v1183
  %v1254 = vpop.f32.mrb[0].mxu0
  %v1255 = vadd.f32 0.0, %v1254
  %v1256 = vpop.f32.mrb[0].mxu0
  %v1257 = vpop.f32.mrb[0].mxu0
  %v1258 = vadd.f32 0.0, %v1257
  %v1259 = vpop.f32.mrb[0].mxu0
  %1260 = vmatprep.mubr.bf16.mxu0 0
  %1261 = vmatmul.mubr.bf16.gmra.mrb[0].mxu0 %v1184
  %v1262 = vpop.f32.mrb[0].mxu0
  %v1263 = vadd.f32 0.0, %v1262
  %v1264 = vpop.f32.mrb[0].mxu0
  %v1265 = vpop.f32.mrb[0].mxu0
  %v1266 = vadd.f32 0.0, %v1265
  %v1267 = vpop.f32.mrb[0].mxu0
  %1268 = vmatprep.mubr.bf16.mxu0 0
  %1269 = vmatmul.mubr.bf16.gmra.mrb[0].mxu0 %v1185
  %v1270 = vpop.f32.mrb[0].mxu0
  %v1271 = vadd.f32 0.0, %v1270
  %v1272 = vpop.f32.mrb[0].mxu0
  %v1273 = vpop.f32.mrb[0].mxu0
  %v1274 = vadd.f32 0.0, %v1273
  %v1275 = vpop.f32.mrb[0].mxu0
  %1276 = vmatprep.mubr.bf16.mxu0 0
  %1277 = vmatmul.mubr.bf16.gmra.mrb[0].mxu0 %v1186
  %v1278 = vpop.f32.mrb[0].mxu0
  %v1279 = vadd.f32 0.0, %v1278
  %v1280 = vpop.f32.mrb[0].mxu0
  %v1281 = vpop.f32.mrb[0].mxu0
  %v1282 = vadd.f32 0.0, %v1281
  %v1283 = vpop.f32.mrb[0].mxu0
  %1284 = vmatprep.mubr.bf16.mxu0 0
  %1285 = vmatmul.mubr.bf16.gmra.mrb[0].mxu0 %v1187
  %v1286 = vpop.f32.mrb[0].mxu0
  %v1287 = vadd.f32 0.0, %v1286
  %v1288 = vpop.f32.mrb[0].mxu0
  %v1289 = vpop.f32.mrb[0].mxu0
  %v1290 = vadd.f32 0.0, %v1289
  %v1291 = vpop.f32.mrb[0].mxu0
  %1292 = vdwg.mxu0
  %v1293 = vpack.c.bf16 %v1234, %v1231
  %v1294 = vpack.c.bf16 %v1242, %v1239
  %v1295 = vpack.c.bf16 %v1250, %v1247
  %v1296 = vpack.c.bf16 %v1258, %v1255
  %v1297 = vpack.c.bf16 %v1266, %v1263
  %v1298 = vpack.c.bf16 %v1274, %v1271
  %v1299 = vpack.c.bf16 %v1282, %v1279
  %v1300 = vpack.c.bf16 %v1290, %v1287
  %s1301 = scalar_lea.vmem %s2, 192
  %v1302 = vld [vmem:[%s1301] sm:$0xf]
  %v1303 = vld [vmem:[%s1301 + $0x4] sm:$0xf]
  %v1304 = vld [vmem:[%s1301 + $0x8] sm:$0xf]
  %v1305 = vld [vmem:[%s1301 + $0xc] sm:$0xf]
  %v1306 = vld [vmem:[%s1301 + $0x10] sm:$0xf]
  %v1307 = vld [vmem:[%s1301 + $0x14] sm:$0xf]
  %v1308 = vld [vmem:[%s1301 + $0x18] sm:$0xf]
  %v1309 = vld [vmem:[%s1301 + $0x1c] sm:$0xf]
  %v1310 = vld [vmem:[%s1301 + $0x20] sm:$0xf]
  %v1311 = vld [vmem:[%s1301 + $0x24] sm:$0xf]
  %v1312 = vld [vmem:[%s1301 + $0x28] sm:$0xf]
  %v1313 = vld [vmem:[%s1301 + $0x2c] sm:$0xf]
  %v1314 = vld [vmem:[%s1301 + $0x30] sm:$0xf]
  %v1315 = vld [vmem:[%s1301 + $0x34] sm:$0xf]
  %v1316 = vld [vmem:[%s1301 + $0x38] sm:$0xf]
  %v1317 = vld [vmem:[%s1301 + $0x3c] sm:$0xf]
  %v1334 = vunpack.c.l.b16 %v1302
  %v1335 = vunpack.c.l.b16 %v1303
  %v1336 = vunpack.c.l.b16 %v1304
  %v1337 = vunpack.c.l.b16 %v1305
  %v1338 = vunpack.c.l.b16 %v1306
  %v1339 = vunpack.c.l.b16 %v1307
  %v1340 = vunpack.c.l.b16 %v1308
  %v1341 = vunpack.c.l.b16 %v1309
  %v1342 = vunpack.c.l.b16 %v1310
  %v1343 = vunpack.c.l.b16 %v1311
  %v1344 = vunpack.c.l.b16 %v1312
  %v1345 = vunpack.c.l.b16 %v1313
  %v1346 = vunpack.c.l.b16 %v1314
  %v1347 = vunpack.c.l.b16 %v1315
  %v1348 = vunpack.c.l.b16 %v1316
  %v1349 = vunpack.c.l.b16 %v1317
  %v1350 = vpack.c.b16 %v1335, %v1334
  %v1351 = vpack.c.b16 %v1337, %v1336
  %v1352 = vpack.c.b16 %v1339, %v1338
  %v1353 = vpack.c.b16 %v1341, %v1340
  %v1354 = vpack.c.b16 %v1343, %v1342
  %v1355 = vpack.c.b16 %v1345, %v1344
  %v1356 = vpack.c.b16 %v1347, %v1346
  %v1357 = vpack.c.b16 %v1349, %v1348
  %1366 = vmatprep.subr.bf16.mxu0 0
  %1367 = vmatpush1.bf16.msra.mxu0 %v1350
  %1368 = vmatprep.subr.bf16.mxu0 0
  %1369 = vmatpush1.bf16.msra.mxu0 %v1351
  %1370 = vmatprep.subr.bf16.mxu0 0
  %1371 = vmatpush1.bf16.msra.mxu0 %v1352
  %1372 = vmatprep.subr.bf16.mxu0 0
  %1373 = vmatpush1.bf16.msra.mxu0 %v1353
  %1374 = vmatprep.subr.bf16.mxu0 0
  %1375 = vmatpush1.bf16.msra.mxu0 %v1354
  %1376 = vmatprep.subr.bf16.mxu0 0
  %1377 = vmatpush1.bf16.msra.mxu0 %v1355
  %1378 = vmatprep.subr.bf16.mxu0 0
  %1379 = vmatpush1.bf16.msra.mxu0 %v1356
  %1380 = vmatprep.subr.bf16.mxu0 0
  %1381 = vmatpush1.bf16.msra.mxu0 %v1357
  %1382 = vmatprep.subr.bf16.mxu0 0
  %1383 = vmatpush1.bf16.msra.mxu0 0
  %1384 = vmatprep.subr.bf16.mxu0 0
  %1385 = vmatpush1.bf16.msra.mxu0 0
  %1386 = vmatprep.subr.bf16.mxu0 0
  %1387 = vmatpush1.bf16.msra.mxu0 0
  %1388 = vmatprep.subr.bf16.mxu0 0
  %1389 = vmatpush1.bf16.msra.mxu0 0
  %1390 = vmatprep.subr.bf16.mxu0 0
  %1391 = vmatpush1.bf16.msra.mxu0 0
  %1392 = vmatprep.subr.bf16.mxu0 0
  %1393 = vmatpush1.bf16.msra.mxu0 0
  %1394 = vmatprep.subr.bf16.mxu0 0
  %1395 = vmatpush1.bf16.msra.mxu0 0
  %1396 = vmatprep.subr.bf16.mxu0 0
  %1397 = vmatpush1.bf16.msra.mxu0 0
  %1398 = vmatprep.mubr.bf16.mxu0 0
  %1399 = vmatmul.mubr.bf16.gmra.mrb[0].mxu0 %v1293
  %v1400 = vpop.f32.mrb[0].mxu0
  %v1401 = vadd.f32 0.0, %v1400
  %v1402 = vpop.f32.mrb[0].mxu0
  %v1403 = vpop.f32.mrb[0].mxu0
  %v1404 = vadd.f32 0.0, %v1403
  %v1405 = vpop.f32.mrb[0].mxu0
  %1406 = vmatprep.mubr.bf16.mxu0 0
  %1407 = vmatmul.mubr.bf16.gmra.mrb[0].mxu0 %v1294
  %v1408 = vpop.f32.mrb[0].mxu0
  %v1409 = vadd.f32 0.0, %v1408
  %v1410 = vpop.f32.mrb[0].mxu0
  %v1411 = vpop.f32.mrb[0].mxu0
  %v1412 = vadd.f32 0.0, %v1411
  %v1413 = vpop.f32.mrb[0].mxu0
  %1414 = vmatprep.mubr.bf16.mxu0 0
  %1415 = vmatmul.mubr.bf16.gmra.mrb[0].mxu0 %v1295
  %v1416 = vpop.f32.mrb[0].mxu0
  %v1417 = vadd.f32 0.0, %v1416
  %v1418 = vpop.f32.mrb[0].mxu0
  %v1419 = vpop.f32.mrb[0].mxu0
  %v1420 = vadd.f32 0.0, %v1419
  %v1421 = vpop.f32.mrb[0].mxu0
  %1422 = vmatprep.mubr.bf16.mxu0 0
  %1423 = vmatmul.mubr.bf16.gmra.mrb[0].mxu0 %v1296
  %v1424 = vpop.f32.mrb[0].mxu0
  %v1425 = vadd.f32 0.0, %v1424
  %v1426 = vpop.f32.mrb[0].mxu0
  %v1427 = vpop.f32.mrb[0].mxu0
  %v1428 = vadd.f32 0.0, %v1427
  %v1429 = vpop.f32.mrb[0].mxu0
  %1430 = vmatprep.mubr.bf16.mxu0 0
  %1431 = vmatmul.mubr.bf16.gmra.mrb[0].mxu0 %v1297
  %v1432 = vpop.f32.mrb[0].mxu0
  %v1433 = vadd.f32 0.0, %v1432
  %v1434 = vpop.f32.mrb[0].mxu0
  %v1435 = vpop.f32.mrb[0].mxu0
  %v1436 = vadd.f32 0.0, %v1435
  %v1437 = vpop.f32.mrb[0].mxu0
  %1438 = vmatprep.mubr.bf16.mxu0 0
  %1439 = vmatmul.mubr.bf16.gmra.mrb[0].mxu0 %v1298
  %v1440 = vpop.f32.mrb[0].mxu0
  %v1441 = vadd.f32 0.0, %v1440
  %v1442 = vpop.f32.mrb[0].mxu0
  %v1443 = vpop.f32.mrb[0].mxu0
  %v1444 = vadd.f32 0.0, %v1443
  %v1445 = vpop.f32.mrb[0].mxu0
  %1446 = vmatprep.mubr.bf16.mxu0 0
  %1447 = vmatmul.mubr.bf16.gmra.mrb[0].mxu0 %v1299
  %v1448 = vpop.f32.mrb[0].mxu0
  %v1449 = vadd.f32 0.0, %v1448
  %v1450 = vpop.f32.mrb[0].mxu0
  %v1451 = vpop.f32.mrb[0].mxu0
  %v1452 = vadd.f32 0.0, %v1451
  %v1453 = vpop.f32.mrb[0].mxu0
  %1454 = vmatprep.mubr.bf16.mxu0 0
  %1455 = vmatmul.mubr.bf16.gmra.mrb[0].mxu0 %v1300
  %v1456 = vpop.f32.mrb[0].mxu0
  %v1457 = vadd.f32 0.0, %v1456
  %v1458 = vpop.f32.mrb[0].mxu0
  %v1459 = vpop.f32.mrb[0].mxu0
  %v1460 = vadd.f32 0.0, %v1459
  %v1461 = vpop.f32.mrb[0].mxu0
  %1462 = vdwg.mxu0
  %v1463 = vadd.f32 %v1115, %v1401
  %v1464 = vadd.f32 %v1116, %v1404
  %v1465 = vadd.f32 %v1117, %v1409
  %v1466 = vadd.f32 %v1118, %v1412
  %v1467 = vadd.f32 %v1119, %v1417
  %v1468 = vadd.f32 %v1120, %v1420
  %v1469 = vadd.f32 %v1121, %v1425
  %v1470 = vadd.f32 %v1122, %v1428
  %v1471 = vadd.f32 %v1123, %v1433
  %v1472 = vadd.f32 %v1124, %v1436
  %v1473 = vadd.f32 %v1125, %v1441
  %v1474 = vadd.f32 %v1126, %v1444
  %v1475 = vadd.f32 %v1127, %v1449
  %v1476 = vadd.f32 %v1128, %v1452
  %v1477 = vadd.f32 %v1129, %v1457
  %v1478 = vadd.f32 %v1130, %v1460
  %s1479 = scalar_lea.vmem %s1, 256
  %v1480 = vld [vmem:[%s1479] sm:$0xf]
  %v1481 = vld [vmem:[%s1479 + $0x4] sm:$0xf]
  %v1482 = vld [vmem:[%s1479 + $0x8] sm:$0xf]
  %v1483 = vld [vmem:[%s1479 + $0xc] sm:$0xf]
  %v1484 = vld [vmem:[%s1479 + $0x10] sm:$0xf]
  %v1485 = vld [vmem:[%s1479 + $0x14] sm:$0xf]
  %v1486 = vld [vmem:[%s1479 + $0x18] sm:$0xf]
  %v1487 = vld [vmem:[%s1479 + $0x1c] sm:$0xf]
  %v1488 = vld [vmem:[%s1479 + $0x20] sm:$0xf]
  %v1489 = vld [vmem:[%s1479 + $0x24] sm:$0xf]
  %v1490 = vld [vmem:[%s1479 + $0x28] sm:$0xf]
  %v1491 = vld [vmem:[%s1479 + $0x2c] sm:$0xf]
  %v1492 = vld [vmem:[%s1479 + $0x30] sm:$0xf]
  %v1493 = vld [vmem:[%s1479 + $0x34] sm:$0xf]
  %v1494 = vld [vmem:[%s1479 + $0x38] sm:$0xf]
  %v1495 = vld [vmem:[%s1479 + $0x3c] sm:$0xf]
  %v1512 = vunpack.c.l.b16 %v1480
  %v1513 = vunpack.c.l.b16 %v1481
  %v1514 = vunpack.c.l.b16 %v1482
  %v1515 = vunpack.c.l.b16 %v1483
  %v1516 = vunpack.c.l.b16 %v1484
  %v1517 = vunpack.c.l.b16 %v1485
  %v1518 = vunpack.c.l.b16 %v1486
  %v1519 = vunpack.c.l.b16 %v1487
  %v1520 = vunpack.c.l.b16 %v1488
  %v1521 = vunpack.c.l.b16 %v1489
  %v1522 = vunpack.c.l.b16 %v1490
  %v1523 = vunpack.c.l.b16 %v1491
  %v1524 = vunpack.c.l.b16 %v1492
  %v1525 = vunpack.c.l.b16 %v1493
  %v1526 = vunpack.c.l.b16 %v1494
  %v1527 = vunpack.c.l.b16 %v1495
  %v1528 = vpack.c.b16 %v1513, %v1512
  %v1529 = vpack.c.b16 %v1515, %v1514
  %v1530 = vpack.c.b16 %v1517, %v1516
  %v1531 = vpack.c.b16 %v1519, %v1518
  %v1532 = vpack.c.b16 %v1521, %v1520
  %v1533 = vpack.c.b16 %v1523, %v1522
  %v1534 = vpack.c.b16 %v1525, %v1524
  %v1535 = vpack.c.b16 %v1527, %v1526
  %1544 = vmatprep.subr.bf16.mxu0 0
  %1545 = vmatpush1.bf16.msra.mxu0 %v169
  %1546 = vmatprep.subr.bf16.mxu0 0
  %1547 = vmatpush1.bf16.msra.mxu0 %v170
  %1548 = vmatprep.subr.bf16.mxu0 0
  %1549 = vmatpush1.bf16.msra.mxu0 %v171
  %1550 = vmatprep.subr.bf16.mxu0 0
  %1551 = vmatpush1.bf16.msra.mxu0 %v172
  %1552 = vmatprep.subr.bf16.mxu0 0
  %1553 = vmatpush1.bf16.msra.mxu0 %v173
  %1554 = vmatprep.subr.bf16.mxu0 0
  %1555 = vmatpush1.bf16.msra.mxu0 %v174
  %1556 = vmatprep.subr.bf16.mxu0 0
  %1557 = vmatpush1.bf16.msra.mxu0 %v175
  %1558 = vmatprep.subr.bf16.mxu0 0
  %1559 = vmatpush1.bf16.msra.mxu0 %v176
  %1560 = vmatprep.subr.bf16.mxu0 0
  %1561 = vmatpush1.bf16.msra.mxu0 0
  %1562 = vmatprep.subr.bf16.mxu0 0
  %1563 = vmatpush1.bf16.msra.mxu0 0
  %1564 = vmatprep.subr.bf16.mxu0 0
  %1565 = vmatpush1.bf16.msra.mxu0 0
  %1566 = vmatprep.subr.bf16.mxu0 0
  %1567 = vmatpush1.bf16.msra.mxu0 0
  %1568 = vmatprep.subr.bf16.mxu0 0
  %1569 = vmatpush1.bf16.msra.mxu0 0
  %1570 = vmatprep.subr.bf16.mxu0 0
  %1571 = vmatpush1.bf16.msra.mxu0 0
  %1572 = vmatprep.subr.bf16.mxu0 0
  %1573 = vmatpush1.bf16.msra.mxu0 0
  %1574 = vmatprep.subr.bf16.mxu0 0
  %1575 = vmatpush1.bf16.msra.mxu0 0
  %1576 = vmatprep.mubr.bf16.mxu0 0
  %1577 = vmatmul.mubr.bf16.gmra.mrb[0].mxu0 %v1528
  %v1578 = vpop.f32.mrb[0].mxu0
  %v1579 = vadd.f32 0.0, %v1578
  %v1580 = vpop.f32.mrb[0].mxu0
  %v1581 = vpop.f32.mrb[0].mxu0
  %v1582 = vadd.f32 0.0, %v1581
  %v1583 = vpop.f32.mrb[0].mxu0
  %1584 = vmatprep.mubr.bf16.mxu0 0
  %1585 = vmatmul.mubr.bf16.gmra.mrb[0].mxu0 %v1529
  %v1586 = vpop.f32.mrb[0].mxu0
  %v1587 = vadd.f32 0.0, %v1586
  %v1588 = vpop.f32.mrb[0].mxu0
  %v1589 = vpop.f32.mrb[0].mxu0
  %v1590 = vadd.f32 0.0, %v1589
  %v1591 = vpop.f32.mrb[0].mxu0
  %1592 = vmatprep.mubr.bf16.mxu0 0
  %1593 = vmatmul.mubr.bf16.gmra.mrb[0].mxu0 %v1530
  %v1594 = vpop.f32.mrb[0].mxu0
  %v1595 = vadd.f32 0.0, %v1594
  %v1596 = vpop.f32.mrb[0].mxu0
  %v1597 = vpop.f32.mrb[0].mxu0
  %v1598 = vadd.f32 0.0, %v1597
  %v1599 = vpop.f32.mrb[0].mxu0
  %1600 = vmatprep.mubr.bf16.mxu0 0
  %1601 = vmatmul.mubr.bf16.gmra.mrb[0].mxu0 %v1531
  %v1602 = vpop.f32.mrb[0].mxu0
  %v1603 = vadd.f32 0.0, %v1602
  %v1604 = vpop.f32.mrb[0].mxu0
  %v1605 = vpop.f32.mrb[0].mxu0
  %v1606 = vadd.f32 0.0, %v1605
  %v1607 = vpop.f32.mrb[0].mxu0
  %1608 = vmatprep.mubr.bf16.mxu0 0
  %1609 = vmatmul.mubr.bf16.gmra.mrb[0].mxu0 %v1532
  %v1610 = vpop.f32.mrb[0].mxu0
  %v1611 = vadd.f32 0.0, %v1610
  %v1612 = vpop.f32.mrb[0].mxu0
  %v1613 = vpop.f32.mrb[0].mxu0
  %v1614 = vadd.f32 0.0, %v1613
  %v1615 = vpop.f32.mrb[0].mxu0
  %1616 = vmatprep.mubr.bf16.mxu0 0
  %1617 = vmatmul.mubr.bf16.gmra.mrb[0].mxu0 %v1533
  %v1618 = vpop.f32.mrb[0].mxu0
  %v1619 = vadd.f32 0.0, %v1618
  %v1620 = vpop.f32.mrb[0].mxu0
  %v1621 = vpop.f32.mrb[0].mxu0
  %v1622 = vadd.f32 0.0, %v1621
  %v1623 = vpop.f32.mrb[0].mxu0
  %1624 = vmatprep.mubr.bf16.mxu0 0
  %1625 = vmatmul.mubr.bf16.gmra.mrb[0].mxu0 %v1534
  %v1626 = vpop.f32.mrb[0].mxu0
  %v1627 = vadd.f32 0.0, %v1626
  %v1628 = vpop.f32.mrb[0].mxu0
  %v1629 = vpop.f32.mrb[0].mxu0
  %v1630 = vadd.f32 0.0, %v1629
  %v1631 = vpop.f32.mrb[0].mxu0
  %1632 = vmatprep.mubr.bf16.mxu0 0
  %1633 = vmatmul.mubr.bf16.gmra.mrb[0].mxu0 %v1535
  %v1634 = vpop.f32.mrb[0].mxu0
  %v1635 = vadd.f32 0.0, %v1634
  %v1636 = vpop.f32.mrb[0].mxu0
  %v1637 = vpop.f32.mrb[0].mxu0
  %v1638 = vadd.f32 0.0, %v1637
  %v1639 = vpop.f32.mrb[0].mxu0
  %1640 = vdwg.mxu0
  %v1641 = vpack.c.bf16 %v1582, %v1579
  %v1642 = vpack.c.bf16 %v1590, %v1587
  %v1643 = vpack.c.bf16 %v1598, %v1595
  %v1644 = vpack.c.bf16 %v1606, %v1603
  %v1645 = vpack.c.bf16 %v1614, %v1611
  %v1646 = vpack.c.bf16 %v1622, %v1619
  %v1647 = vpack.c.bf16 %v1630, %v1627
  %v1648 = vpack.c.bf16 %v1638, %v1635
  %s1649 = scalar_lea.vmem %s2, 256
  %v1650 = vld [vmem:[%s1649] sm:$0xf]
  %v1651 = vld [vmem:[%s1649 + $0x4] sm:$0xf]
  %v1652 = vld [vmem:[%s1649 + $0x8] sm:$0xf]
  %v1653 = vld [vmem:[%s1649 + $0xc] sm:$0xf]
  %v1654 = vld [vmem:[%s1649 + $0x10] sm:$0xf]
  %v1655 = vld [vmem:[%s1649 + $0x14] sm:$0xf]
  %v1656 = vld [vmem:[%s1649 + $0x18] sm:$0xf]
  %v1657 = vld [vmem:[%s1649 + $0x1c] sm:$0xf]
  %v1658 = vld [vmem:[%s1649 + $0x20] sm:$0xf]
  %v1659 = vld [vmem:[%s1649 + $0x24] sm:$0xf]
  %v1660 = vld [vmem:[%s1649 + $0x28] sm:$0xf]
  %v1661 = vld [vmem:[%s1649 + $0x2c] sm:$0xf]
  %v1662 = vld [vmem:[%s1649 + $0x30] sm:$0xf]
  %v1663 = vld [vmem:[%s1649 + $0x34] sm:$0xf]
  %v1664 = vld [vmem:[%s1649 + $0x38] sm:$0xf]
  %v1665 = vld [vmem:[%s1649 + $0x3c] sm:$0xf]
  %v1682 = vunpack.c.l.b16 %v1650
  %v1683 = vunpack.c.l.b16 %v1651
  %v1684 = vunpack.c.l.b16 %v1652
  %v1685 = vunpack.c.l.b16 %v1653
  %v1686 = vunpack.c.l.b16 %v1654
  %v1687 = vunpack.c.l.b16 %v1655
  %v1688 = vunpack.c.l.b16 %v1656
  %v1689 = vunpack.c.l.b16 %v1657
  %v1690 = vunpack.c.l.b16 %v1658
  %v1691 = vunpack.c.l.b16 %v1659
  %v1692 = vunpack.c.l.b16 %v1660
  %v1693 = vunpack.c.l.b16 %v1661
  %v1694 = vunpack.c.l.b16 %v1662
  %v1695 = vunpack.c.l.b16 %v1663
  %v1696 = vunpack.c.l.b16 %v1664
  %v1697 = vunpack.c.l.b16 %v1665
  %v1698 = vpack.c.b16 %v1683, %v1682
  %v1699 = vpack.c.b16 %v1685, %v1684
  %v1700 = vpack.c.b16 %v1687, %v1686
  %v1701 = vpack.c.b16 %v1689, %v1688
  %v1702 = vpack.c.b16 %v1691, %v1690
  %v1703 = vpack.c.b16 %v1693, %v1692
  %v1704 = vpack.c.b16 %v1695, %v1694
  %v1705 = vpack.c.b16 %v1697, %v1696
  %1714 = vmatprep.subr.bf16.mxu0 0
  %1715 = vmatpush1.bf16.msra.mxu0 %v1698
  %1716 = vmatprep.subr.bf16.mxu0 0
  %1717 = vmatpush1.bf16.msra.mxu0 %v1699
  %1718 = vmatprep.subr.bf16.mxu0 0
  %1719 = vmatpush1.bf16.msra.mxu0 %v1700
  %1720 = vmatprep.subr.bf16.mxu0 0
  %1721 = vmatpush1.bf16.msra.mxu0 %v1701
  %1722 = vmatprep.subr.bf16.mxu0 0
  %1723 = vmatpush1.bf16.msra.mxu0 %v1702
  %1724 = vmatprep.subr.bf16.mxu0 0
  %1725 = vmatpush1.bf16.msra.mxu0 %v1703
  %1726 = vmatprep.subr.bf16.mxu0 0
  %1727 = vmatpush1.bf16.msra.mxu0 %v1704
  %1728 = vmatprep.subr.bf16.mxu0 0
  %1729 = vmatpush1.bf16.msra.mxu0 %v1705
  %1730 = vmatprep.subr.bf16.mxu0 0
  %1731 = vmatpush1.bf16.msra.mxu0 0
  %1732 = vmatprep.subr.bf16.mxu0 0
  %1733 = vmatpush1.bf16.msra.mxu0 0
  %1734 = vmatprep.subr.bf16.mxu0 0
  %1735 = vmatpush1.bf16.msra.mxu0 0
  %1736 = vmatprep.subr.bf16.mxu0 0
  %1737 = vmatpush1.bf16.msra.mxu0 0
  %1738 = vmatprep.subr.bf16.mxu0 0
  %1739 = vmatpush1.bf16.msra.mxu0 0
  %1740 = vmatprep.subr.bf16.mxu0 0
  %1741 = vmatpush1.bf16.msra.mxu0 0
  %1742 = vmatprep.subr.bf16.mxu0 0
  %1743 = vmatpush1.bf16.msra.mxu0 0
  %1744 = vmatprep.subr.bf16.mxu0 0
  %1745 = vmatpush1.bf16.msra.mxu0 0
  %1746 = vmatprep.mubr.bf16.mxu0 0
  %1747 = vmatmul.mubr.bf16.gmra.mrb[0].mxu0 %v1641
  %v1748 = vpop.f32.mrb[0].mxu0
  %v1749 = vadd.f32 0.0, %v1748
  %v1750 = vpop.f32.mrb[0].mxu0
  %v1751 = vpop.f32.mrb[0].mxu0
  %v1752 = vadd.f32 0.0, %v1751
  %v1753 = vpop.f32.mrb[0].mxu0
  %1754 = vmatprep.mubr.bf16.mxu0 0
  %1755 = vmatmul.mubr.bf16.gmra.mrb[0].mxu0 %v1642
  %v1756 = vpop.f32.mrb[0].mxu0
  %v1757 = vadd.f32 0.0, %v1756
  %v1758 = vpop.f32.mrb[0].mxu0
  %v1759 = vpop.f32.mrb[0].mxu0
  %v1760 = vadd.f32 0.0, %v1759
  %v1761 = vpop.f32.mrb[0].mxu0
  %1762 = vmatprep.mubr.bf16.mxu0 0
  %1763 = vmatmul.mubr.bf16.gmra.mrb[0].mxu0 %v1643
  %v1764 = vpop.f32.mrb[0].mxu0
  %v1765 = vadd.f32 0.0, %v1764
  %v1766 = vpop.f32.mrb[0].mxu0
  %v1767 = vpop.f32.mrb[0].mxu0
  %v1768 = vadd.f32 0.0, %v1767
  %v1769 = vpop.f32.mrb[0].mxu0
  %1770 = vmatprep.mubr.bf16.mxu0 0
  %1771 = vmatmul.mubr.bf16.gmra.mrb[0].mxu0 %v1644
  %v1772 = vpop.f32.mrb[0].mxu0
  %v1773 = vadd.f32 0.0, %v1772
  %v1774 = vpop.f32.mrb[0].mxu0
  %v1775 = vpop.f32.mrb[0].mxu0
  %v1776 = vadd.f32 0.0, %v1775
  %v1777 = vpop.f32.mrb[0].mxu0
  %1778 = vmatprep.mubr.bf16.mxu0 0
  %1779 = vmatmul.mubr.bf16.gmra.mrb[0].mxu0 %v1645
  %v1780 = vpop.f32.mrb[0].mxu0
  %v1781 = vadd.f32 0.0, %v1780
  %v1782 = vpop.f32.mrb[0].mxu0
  %v1783 = vpop.f32.mrb[0].mxu0
  %v1784 = vadd.f32 0.0, %v1783
  %v1785 = vpop.f32.mrb[0].mxu0
  %1786 = vmatprep.mubr.bf16.mxu0 0
  %1787 = vmatmul.mubr.bf16.gmra.mrb[0].mxu0 %v1646
  %v1788 = vpop.f32.mrb[0].mxu0
  %v1789 = vadd.f32 0.0, %v1788
  %v1790 = vpop.f32.mrb[0].mxu0
  %v1791 = vpop.f32.mrb[0].mxu0
  %v1792 = vadd.f32 0.0, %v1791
  %v1793 = vpop.f32.mrb[0].mxu0
  %1794 = vmatprep.mubr.bf16.mxu0 0
  %1795 = vmatmul.mubr.bf16.gmra.mrb[0].mxu0 %v1647
  %v1796 = vpop.f32.mrb[0].mxu0
  %v1797 = vadd.f32 0.0, %v1796
  %v1798 = vpop.f32.mrb[0].mxu0
  %v1799 = vpop.f32.mrb[0].mxu0
  %v1800 = vadd.f32 0.0, %v1799
  %v1801 = vpop.f32.mrb[0].mxu0
  %1802 = vmatprep.mubr.bf16.mxu0 0
  %1803 = vmatmul.mubr.bf16.gmra.mrb[0].mxu0 %v1648
  %v1804 = vpop.f32.mrb[0].mxu0
  %v1805 = vadd.f32 0.0, %v1804
  %v1806 = vpop.f32.mrb[0].mxu0
  %v1807 = vpop.f32.mrb[0].mxu0
  %v1808 = vadd.f32 0.0, %v1807
  %v1809 = vpop.f32.mrb[0].mxu0
  %1810 = vdwg.mxu0
  %v1811 = vadd.f32 %v1463, %v1749
  %v1812 = vadd.f32 %v1464, %v1752
  %v1813 = vadd.f32 %v1465, %v1757
  %v1814 = vadd.f32 %v1466, %v1760
  %v1815 = vadd.f32 %v1467, %v1765
  %v1816 = vadd.f32 %v1468, %v1768
  %v1817 = vadd.f32 %v1469, %v1773
  %v1818 = vadd.f32 %v1470, %v1776
  %v1819 = vadd.f32 %v1471, %v1781
  %v1820 = vadd.f32 %v1472, %v1784
  %v1821 = vadd.f32 %v1473, %v1789
  %v1822 = vadd.f32 %v1474, %v1792
  %v1823 = vadd.f32 %v1475, %v1797
  %v1824 = vadd.f32 %v1476, %v1800
  %v1825 = vadd.f32 %v1477, %v1805
  %v1826 = vadd.f32 %v1478, %v1808
  %s1827 = scalar_lea.vmem %s1, 320
  %v1828 = vld [vmem:[%s1827] sm:$0xf]
  %v1829 = vld [vmem:[%s1827 + $0x4] sm:$0xf]
  %v1830 = vld [vmem:[%s1827 + $0x8] sm:$0xf]
  %v1831 = vld [vmem:[%s1827 + $0xc] sm:$0xf]
  %v1832 = vld [vmem:[%s1827 + $0x10] sm:$0xf]
  %v1833 = vld [vmem:[%s1827 + $0x14] sm:$0xf]
  %v1834 = vld [vmem:[%s1827 + $0x18] sm:$0xf]
  %v1835 = vld [vmem:[%s1827 + $0x1c] sm:$0xf]
  %v1836 = vld [vmem:[%s1827 + $0x20] sm:$0xf]
  %v1837 = vld [vmem:[%s1827 + $0x24] sm:$0xf]
  %v1838 = vld [vmem:[%s1827 + $0x28] sm:$0xf]
  %v1839 = vld [vmem:[%s1827 + $0x2c] sm:$0xf]
  %v1840 = vld [vmem:[%s1827 + $0x30] sm:$0xf]
  %v1841 = vld [vmem:[%s1827 + $0x34] sm:$0xf]
  %v1842 = vld [vmem:[%s1827 + $0x38] sm:$0xf]
  %v1843 = vld [vmem:[%s1827 + $0x3c] sm:$0xf]
  %v1860 = vunpack.c.l.b16 %v1828
  %v1861 = vunpack.c.l.b16 %v1829
  %v1862 = vunpack.c.l.b16 %v1830
  %v1863 = vunpack.c.l.b16 %v1831
  %v1864 = vunpack.c.l.b16 %v1832
  %v1865 = vunpack.c.l.b16 %v1833
  %v1866 = vunpack.c.l.b16 %v1834
  %v1867 = vunpack.c.l.b16 %v1835
  %v1868 = vunpack.c.l.b16 %v1836
  %v1869 = vunpack.c.l.b16 %v1837
  %v1870 = vunpack.c.l.b16 %v1838
  %v1871 = vunpack.c.l.b16 %v1839
  %v1872 = vunpack.c.l.b16 %v1840
  %v1873 = vunpack.c.l.b16 %v1841
  %v1874 = vunpack.c.l.b16 %v1842
  %v1875 = vunpack.c.l.b16 %v1843
  %v1876 = vpack.c.b16 %v1861, %v1860
  %v1877 = vpack.c.b16 %v1863, %v1862
  %v1878 = vpack.c.b16 %v1865, %v1864
  %v1879 = vpack.c.b16 %v1867, %v1866
  %v1880 = vpack.c.b16 %v1869, %v1868
  %v1881 = vpack.c.b16 %v1871, %v1870
  %v1882 = vpack.c.b16 %v1873, %v1872
  %v1883 = vpack.c.b16 %v1875, %v1874
  %1892 = vmatprep.subr.bf16.mxu0 0
  %1893 = vmatpush1.bf16.msra.mxu0 %v169
  %1894 = vmatprep.subr.bf16.mxu0 0
  %1895 = vmatpush1.bf16.msra.mxu0 %v170
  %1896 = vmatprep.subr.bf16.mxu0 0
  %1897 = vmatpush1.bf16.msra.mxu0 %v171
  %1898 = vmatprep.subr.bf16.mxu0 0
  %1899 = vmatpush1.bf16.msra.mxu0 %v172
  %1900 = vmatprep.subr.bf16.mxu0 0
  %1901 = vmatpush1.bf16.msra.mxu0 %v173
  %1902 = vmatprep.subr.bf16.mxu0 0
  %1903 = vmatpush1.bf16.msra.mxu0 %v174
  %1904 = vmatprep.subr.bf16.mxu0 0
  %1905 = vmatpush1.bf16.msra.mxu0 %v175
  %1906 = vmatprep.subr.bf16.mxu0 0
  %1907 = vmatpush1.bf16.msra.mxu0 %v176
  %1908 = vmatprep.subr.bf16.mxu0 0
  %1909 = vmatpush1.bf16.msra.mxu0 0
  %1910 = vmatprep.subr.bf16.mxu0 0
  %1911 = vmatpush1.bf16.msra.mxu0 0
  %1912 = vmatprep.subr.bf16.mxu0 0
  %1913 = vmatpush1.bf16.msra.mxu0 0
  %1914 = vmatprep.subr.bf16.mxu0 0
  %1915 = vmatpush1.bf16.msra.mxu0 0
  %1916 = vmatprep.subr.bf16.mxu0 0
  %1917 = vmatpush1.bf16.msra.mxu0 0
  %1918 = vmatprep.subr.bf16.mxu0 0
  %1919 = vmatpush1.bf16.msra.mxu0 0
  %1920 = vmatprep.subr.bf16.mxu0 0
  %1921 = vmatpush1.bf16.msra.mxu0 0
  %1922 = vmatprep.subr.bf16.mxu0 0
  %1923 = vmatpush1.bf16.msra.mxu0 0
  %1924 = vmatprep.mubr.bf16.mxu0 0
  %1925 = vmatmul.mubr.bf16.gmra.mrb[0].mxu0 %v1876
  %v1926 = vpop.f32.mrb[0].mxu0
  %v1927 = vadd.f32 0.0, %v1926
  %v1928 = vpop.f32.mrb[0].mxu0
  %v1929 = vpop.f32.mrb[0].mxu0
  %v1930 = vadd.f32 0.0, %v1929
  %v1931 = vpop.f32.mrb[0].mxu0
  %1932 = vmatprep.mubr.bf16.mxu0 0
  %1933 = vmatmul.mubr.bf16.gmra.mrb[0].mxu0 %v1877
  %v1934 = vpop.f32.mrb[0].mxu0
  %v1935 = vadd.f32 0.0, %v1934
  %v1936 = vpop.f32.mrb[0].mxu0
  %v1937 = vpop.f32.mrb[0].mxu0
  %v1938 = vadd.f32 0.0, %v1937
  %v1939 = vpop.f32.mrb[0].mxu0
  %1940 = vmatprep.mubr.bf16.mxu0 0
  %1941 = vmatmul.mubr.bf16.gmra.mrb[0].mxu0 %v1878
  %v1942 = vpop.f32.mrb[0].mxu0
  %v1943 = vadd.f32 0.0, %v1942
  %v1944 = vpop.f32.mrb[0].mxu0
  %v1945 = vpop.f32.mrb[0].mxu0
  %v1946 = vadd.f32 0.0, %v1945
  %v1947 = vpop.f32.mrb[0].mxu0
  %1948 = vmatprep.mubr.bf16.mxu0 0
  %1949 = vmatmul.mubr.bf16.gmra.mrb[0].mxu0 %v1879
  %v1950 = vpop.f32.mrb[0].mxu0
  %v1951 = vadd.f32 0.0, %v1950
  %v1952 = vpop.f32.mrb[0].mxu0
  %v1953 = vpop.f32.mrb[0].mxu0
  %v1954 = vadd.f32 0.0, %v1953
  %v1955 = vpop.f32.mrb[0].mxu0
  %1956 = vmatprep.mubr.bf16.mxu0 0
  %1957 = vmatmul.mubr.bf16.gmra.mrb[0].mxu0 %v1880
  %v1958 = vpop.f32.mrb[0].mxu0
  %v1959 = vadd.f32 0.0, %v1958
  %v1960 = vpop.f32.mrb[0].mxu0
  %v1961 = vpop.f32.mrb[0].mxu0
  %v1962 = vadd.f32 0.0, %v1961
  %v1963 = vpop.f32.mrb[0].mxu0
  %1964 = vmatprep.mubr.bf16.mxu0 0
  %1965 = vmatmul.mubr.bf16.gmra.mrb[0].mxu0 %v1881
  %v1966 = vpop.f32.mrb[0].mxu0
  %v1967 = vadd.f32 0.0, %v1966
  %v1968 = vpop.f32.mrb[0].mxu0
  %v1969 = vpop.f32.mrb[0].mxu0
  %v1970 = vadd.f32 0.0, %v1969
  %v1971 = vpop.f32.mrb[0].mxu0
  %1972 = vmatprep.mubr.bf16.mxu0 0
  %1973 = vmatmul.mubr.bf16.gmra.mrb[0].mxu0 %v1882
  %v1974 = vpop.f32.mrb[0].mxu0
  %v1975 = vadd.f32 0.0, %v1974
  %v1976 = vpop.f32.mrb[0].mxu0
  %v1977 = vpop.f32.mrb[0].mxu0
  %v1978 = vadd.f32 0.0, %v1977
  %v1979 = vpop.f32.mrb[0].mxu0
  %1980 = vmatprep.mubr.bf16.mxu0 0
  %1981 = vmatmul.mubr.bf16.gmra.mrb[0].mxu0 %v1883
  %v1982 = vpop.f32.mrb[0].mxu0
  %v1983 = vadd.f32 0.0, %v1982
  %v1984 = vpop.f32.mrb[0].mxu0
  %v1985 = vpop.f32.mrb[0].mxu0
  %v1986 = vadd.f32 0.0, %v1985
  %v1987 = vpop.f32.mrb[0].mxu0
  %1988 = vdwg.mxu0
  %v1989 = vpack.c.bf16 %v1930, %v1927
  %v1990 = vpack.c.bf16 %v1938, %v1935
  %v1991 = vpack.c.bf16 %v1946, %v1943
  %v1992 = vpack.c.bf16 %v1954, %v1951
  %v1993 = vpack.c.bf16 %v1962, %v1959
  %v1994 = vpack.c.bf16 %v1970, %v1967
  %v1995 = vpack.c.bf16 %v1978, %v1975
  %v1996 = vpack.c.bf16 %v1986, %v1983
  %s1997 = scalar_lea.vmem %s2, 320
  %v1998 = vld [vmem:[%s1997] sm:$0xf]
  %v1999 = vld [vmem:[%s1997 + $0x4] sm:$0xf]
  %v2000 = vld [vmem:[%s1997 + $0x8] sm:$0xf]
  %v2001 = vld [vmem:[%s1997 + $0xc] sm:$0xf]
  %v2002 = vld [vmem:[%s1997 + $0x10] sm:$0xf]
  %v2003 = vld [vmem:[%s1997 + $0x14] sm:$0xf]
  %v2004 = vld [vmem:[%s1997 + $0x18] sm:$0xf]
  %v2005 = vld [vmem:[%s1997 + $0x1c] sm:$0xf]
  %v2006 = vld [vmem:[%s1997 + $0x20] sm:$0xf]
  %v2007 = vld [vmem:[%s1997 + $0x24] sm:$0xf]
  %v2008 = vld [vmem:[%s1997 + $0x28] sm:$0xf]
  %v2009 = vld [vmem:[%s1997 + $0x2c] sm:$0xf]
  %v2010 = vld [vmem:[%s1997 + $0x30] sm:$0xf]
  %v2011 = vld [vmem:[%s1997 + $0x34] sm:$0xf]
  %v2012 = vld [vmem:[%s1997 + $0x38] sm:$0xf]
  %v2013 = vld [vmem:[%s1997 + $0x3c] sm:$0xf]
  %v2030 = vunpack.c.l.b16 %v1998
  %v2031 = vunpack.c.l.b16 %v1999
  %v2032 = vunpack.c.l.b16 %v2000
  %v2033 = vunpack.c.l.b16 %v2001
  %v2034 = vunpack.c.l.b16 %v2002
  %v2035 = vunpack.c.l.b16 %v2003
  %v2036 = vunpack.c.l.b16 %v2004
  %v2037 = vunpack.c.l.b16 %v2005
  %v2038 = vunpack.c.l.b16 %v2006
  %v2039 = vunpack.c.l.b16 %v2007
  %v2040 = vunpack.c.l.b16 %v2008
  %v2041 = vunpack.c.l.b16 %v2009
  %v2042 = vunpack.c.l.b16 %v2010
  %v2043 = vunpack.c.l.b16 %v2011
  %v2044 = vunpack.c.l.b16 %v2012
  %v2045 = vunpack.c.l.b16 %v2013
  %v2046 = vpack.c.b16 %v2031, %v2030
  %v2047 = vpack.c.b16 %v2033, %v2032
  %v2048 = vpack.c.b16 %v2035, %v2034
  %v2049 = vpack.c.b16 %v2037, %v2036
  %v2050 = vpack.c.b16 %v2039, %v2038
  %v2051 = vpack.c.b16 %v2041, %v2040
  %v2052 = vpack.c.b16 %v2043, %v2042
  %v2053 = vpack.c.b16 %v2045, %v2044
  %2062 = vmatprep.subr.bf16.mxu0 0
  %2063 = vmatpush1.bf16.msra.mxu0 %v2046
  %2064 = vmatprep.subr.bf16.mxu0 0
  %2065 = vmatpush1.bf16.msra.mxu0 %v2047
  %2066 = vmatprep.subr.bf16.mxu0 0
  %2067 = vmatpush1.bf16.msra.mxu0 %v2048
  %2068 = vmatprep.subr.bf16.mxu0 0
  %2069 = vmatpush1.bf16.msra.mxu0 %v2049
  %2070 = vmatprep.subr.bf16.mxu0 0
  %2071 = vmatpush1.bf16.msra.mxu0 %v2050
  %2072 = vmatprep.subr.bf16.mxu0 0
  %2073 = vmatpush1.bf16.msra.mxu0 %v2051
  %2074 = vmatprep.subr.bf16.mxu0 0
  %2075 = vmatpush1.bf16.msra.mxu0 %v2052
  %2076 = vmatprep.subr.bf16.mxu0 0
  %2077 = vmatpush1.bf16.msra.mxu0 %v2053
  %2078 = vmatprep.subr.bf16.mxu0 0
  %2079 = vmatpush1.bf16.msra.mxu0 0
  %2080 = vmatprep.subr.bf16.mxu0 0
  %2081 = vmatpush1.bf16.msra.mxu0 0
  %2082 = vmatprep.subr.bf16.mxu0 0
  %2083 = vmatpush1.bf16.msra.mxu0 0
  %2084 = vmatprep.subr.bf16.mxu0 0
  %2085 = vmatpush1.bf16.msra.mxu0 0
  %2086 = vmatprep.subr.bf16.mxu0 0
  %2087 = vmatpush1.bf16.msra.mxu0 0
  %2088 = vmatprep.subr.bf16.mxu0 0
  %2089 = vmatpush1.bf16.msra.mxu0 0
  %2090 = vmatprep.subr.bf16.mxu0 0
  %2091 = vmatpush1.bf16.msra.mxu0 0
  %2092 = vmatprep.subr.bf16.mxu0 0
  %2093 = vmatpush1.bf16.msra.mxu0 0
  %2094 = vmatprep.mubr.bf16.mxu0 0
  %2095 = vmatmul.mubr.bf16.gmra.mrb[0].mxu0 %v1989
  %v2096 = vpop.f32.mrb[0].mxu0
  %v2097 = vadd.f32 0.0, %v2096
  %v2098 = vpop.f32.mrb[0].mxu0
  %v2099 = vpop.f32.mrb[0].mxu0
  %v2100 = vadd.f32 0.0, %v2099
  %v2101 = vpop.f32.mrb[0].mxu0
  %2102 = vmatprep.mubr.bf16.mxu0 0
  %2103 = vmatmul.mubr.bf16.gmra.mrb[0].mxu0 %v1990
  %v2104 = vpop.f32.mrb[0].mxu0
  %v2105 = vadd.f32 0.0, %v2104
  %v2106 = vpop.f32.mrb[0].mxu0
  %v2107 = vpop.f32.mrb[0].mxu0
  %v2108 = vadd.f32 0.0, %v2107
  %v2109 = vpop.f32.mrb[0].mxu0
  %2110 = vmatprep.mubr.bf16.mxu0 0
  %2111 = vmatmul.mubr.bf16.gmra.mrb[0].mxu0 %v1991
  %v2112 = vpop.f32.mrb[0].mxu0
  %v2113 = vadd.f32 0.0, %v2112
  %v2114 = vpop.f32.mrb[0].mxu0
  %v2115 = vpop.f32.mrb[0].mxu0
  %v2116 = vadd.f32 0.0, %v2115
  %v2117 = vpop.f32.mrb[0].mxu0
  %2118 = vmatprep.mubr.bf16.mxu0 0
  %2119 = vmatmul.mubr.bf16.gmra.mrb[0].mxu0 %v1992
  %v2120 = vpop.f32.mrb[0].mxu0
  %v2121 = vadd.f32 0.0, %v2120
  %v2122 = vpop.f32.mrb[0].mxu0
  %v2123 = vpop.f32.mrb[0].mxu0
  %v2124 = vadd.f32 0.0, %v2123
  %v2125 = vpop.f32.mrb[0].mxu0
  %2126 = vmatprep.mubr.bf16.mxu0 0
  %2127 = vmatmul.mubr.bf16.gmra.mrb[0].mxu0 %v1993
  %v2128 = vpop.f32.mrb[0].mxu0
  %v2129 = vadd.f32 0.0, %v2128
  %v2130 = vpop.f32.mrb[0].mxu0
  %v2131 = vpop.f32.mrb[0].mxu0
  %v2132 = vadd.f32 0.0, %v2131
  %v2133 = vpop.f32.mrb[0].mxu0
  %2134 = vmatprep.mubr.bf16.mxu0 0
  %2135 = vmatmul.mubr.bf16.gmra.mrb[0].mxu0 %v1994
  %v2136 = vpop.f32.mrb[0].mxu0
  %v2137 = vadd.f32 0.0, %v2136
  %v2138 = vpop.f32.mrb[0].mxu0
  %v2139 = vpop.f32.mrb[0].mxu0
  %v2140 = vadd.f32 0.0, %v2139
  %v2141 = vpop.f32.mrb[0].mxu0
  %2142 = vmatprep.mubr.bf16.mxu0 0
  %2143 = vmatmul.mubr.bf16.gmra.mrb[0].mxu0 %v1995
  %v2144 = vpop.f32.mrb[0].mxu0
  %v2145 = vadd.f32 0.0, %v2144
  %v2146 = vpop.f32.mrb[0].mxu0
  %v2147 = vpop.f32.mrb[0].mxu0
  %v2148 = vadd.f32 0.0, %v2147
  %v2149 = vpop.f32.mrb[0].mxu0
  %2150 = vmatprep.mubr.bf16.mxu0 0
  %2151 = vmatmul.mubr.bf16.gmra.mrb[0].mxu0 %v1996
  %v2152 = vpop.f32.mrb[0].mxu0
  %v2153 = vadd.f32 0.0, %v2152
  %v2154 = vpop.f32.mrb[0].mxu0
  %v2155 = vpop.f32.mrb[0].mxu0
  %v2156 = vadd.f32 0.0, %v2155
  %v2157 = vpop.f32.mrb[0].mxu0
  %2158 = vdwg.mxu0
  %v2159 = vadd.f32 %v1811, %v2097
  %v2160 = vadd.f32 %v1812, %v2100
  %v2161 = vadd.f32 %v1813, %v2105
  %v2162 = vadd.f32 %v1814, %v2108
  %v2163 = vadd.f32 %v1815, %v2113
  %v2164 = vadd.f32 %v1816, %v2116
  %v2165 = vadd.f32 %v1817, %v2121
  %v2166 = vadd.f32 %v1818, %v2124
  %v2167 = vadd.f32 %v1819, %v2129
  %v2168 = vadd.f32 %v1820, %v2132
  %v2169 = vadd.f32 %v1821, %v2137
  %v2170 = vadd.f32 %v1822, %v2140
  %v2171 = vadd.f32 %v1823, %v2145
  %v2172 = vadd.f32 %v1824, %v2148
  %v2173 = vadd.f32 %v1825, %v2153
  %v2174 = vadd.f32 %v1826, %v2156
  %s2175 = scalar_lea.vmem %s1, 384
  %v2176 = vld [vmem:[%s2175] sm:$0xf]
  %v2177 = vld [vmem:[%s2175 + $0x4] sm:$0xf]
  %v2178 = vld [vmem:[%s2175 + $0x8] sm:$0xf]
  %v2179 = vld [vmem:[%s2175 + $0xc] sm:$0xf]
  %v2180 = vld [vmem:[%s2175 + $0x10] sm:$0xf]
  %v2181 = vld [vmem:[%s2175 + $0x14] sm:$0xf]
  %v2182 = vld [vmem:[%s2175 + $0x18] sm:$0xf]
  %v2183 = vld [vmem:[%s2175 + $0x1c] sm:$0xf]
  %v2184 = vld [vmem:[%s2175 + $0x20] sm:$0xf]
  %v2185 = vld [vmem:[%s2175 + $0x24] sm:$0xf]
  %v2186 = vld [vmem:[%s2175 + $0x28] sm:$0xf]
  %v2187 = vld [vmem:[%s2175 + $0x2c] sm:$0xf]
  %v2188 = vld [vmem:[%s2175 + $0x30] sm:$0xf]
  %v2189 = vld [vmem:[%s2175 + $0x34] sm:$0xf]
  %v2190 = vld [vmem:[%s2175 + $0x38] sm:$0xf]
  %v2191 = vld [vmem:[%s2175 + $0x3c] sm:$0xf]
  %v2208 = vunpack.c.l.b16 %v2176
  %v2209 = vunpack.c.l.b16 %v2177
  %v2210 = vunpack.c.l.b16 %v2178
  %v2211 = vunpack.c.l.b16 %v2179
  %v2212 = vunpack.c.l.b16 %v2180
  %v2213 = vunpack.c.l.b16 %v2181
  %v2214 = vunpack.c.l.b16 %v2182
  %v2215 = vunpack.c.l.b16 %v2183
  %v2216 = vunpack.c.l.b16 %v2184
  %v2217 = vunpack.c.l.b16 %v2185
  %v2218 = vunpack.c.l.b16 %v2186
  %v2219 = vunpack.c.l.b16 %v2187
  %v2220 = vunpack.c.l.b16 %v2188
  %v2221 = vunpack.c.l.b16 %v2189
  %v2222 = vunpack.c.l.b16 %v2190
  %v2223 = vunpack.c.l.b16 %v2191
  %v2224 = vpack.c.b16 %v2209, %v2208
  %v2225 = vpack.c.b16 %v2211, %v2210
  %v2226 = vpack.c.b16 %v2213, %v2212
  %v2227 = vpack.c.b16 %v2215, %v2214
  %v2228 = vpack.c.b16 %v2217, %v2216
  %v2229 = vpack.c.b16 %v2219, %v2218
  %v2230 = vpack.c.b16 %v2221, %v2220
  %v2231 = vpack.c.b16 %v2223, %v2222
  %2240 = vmatprep.subr.bf16.mxu0 0
  %2241 = vmatpush1.bf16.msra.mxu0 %v169
  %2242 = vmatprep.subr.bf16.mxu0 0
  %2243 = vmatpush1.bf16.msra.mxu0 %v170
  %2244 = vmatprep.subr.bf16.mxu0 0
  %2245 = vmatpush1.bf16.msra.mxu0 %v171
  %2246 = vmatprep.subr.bf16.mxu0 0
  %2247 = vmatpush1.bf16.msra.mxu0 %v172
  %2248 = vmatprep.subr.bf16.mxu0 0
  %2249 = vmatpush1.bf16.msra.mxu0 %v173
  %2250 = vmatprep.subr.bf16.mxu0 0
  %2251 = vmatpush1.bf16.msra.mxu0 %v174
  %2252 = vmatprep.subr.bf16.mxu0 0
  %2253 = vmatpush1.bf16.msra.mxu0 %v175
  %2254 = vmatprep.subr.bf16.mxu0 0
  %2255 = vmatpush1.bf16.msra.mxu0 %v176
  %2256 = vmatprep.subr.bf16.mxu0 0
  %2257 = vmatpush1.bf16.msra.mxu0 0
  %2258 = vmatprep.subr.bf16.mxu0 0
  %2259 = vmatpush1.bf16.msra.mxu0 0
  %2260 = vmatprep.subr.bf16.mxu0 0
  %2261 = vmatpush1.bf16.msra.mxu0 0
  %2262 = vmatprep.subr.bf16.mxu0 0
  %2263 = vmatpush1.bf16.msra.mxu0 0
  %2264 = vmatprep.subr.bf16.mxu0 0
  %2265 = vmatpush1.bf16.msra.mxu0 0
  %2266 = vmatprep.subr.bf16.mxu0 0
  %2267 = vmatpush1.bf16.msra.mxu0 0
  %2268 = vmatprep.subr.bf16.mxu0 0
  %2269 = vmatpush1.bf16.msra.mxu0 0
  %2270 = vmatprep.subr.bf16.mxu0 0
  %2271 = vmatpush1.bf16.msra.mxu0 0
  %2272 = vmatprep.mubr.bf16.mxu0 0
  %2273 = vmatmul.mubr.bf16.gmra.mrb[0].mxu0 %v2224
  %v2274 = vpop.f32.mrb[0].mxu0
  %v2275 = vadd.f32 0.0, %v2274
  %v2276 = vpop.f32.mrb[0].mxu0
  %v2277 = vpop.f32.mrb[0].mxu0
  %v2278 = vadd.f32 0.0, %v2277
  %v2279 = vpop.f32.mrb[0].mxu0
  %2280 = vmatprep.mubr.bf16.mxu0 0
  %2281 = vmatmul.mubr.bf16.gmra.mrb[0].mxu0 %v2225
  %v2282 = vpop.f32.mrb[0].mxu0
  %v2283 = vadd.f32 0.0, %v2282
  %v2284 = vpop.f32.mrb[0].mxu0
  %v2285 = vpop.f32.mrb[0].mxu0
  %v2286 = vadd.f32 0.0, %v2285
  %v2287 = vpop.f32.mrb[0].mxu0
  %2288 = vmatprep.mubr.bf16.mxu0 0
  %2289 = vmatmul.mubr.bf16.gmra.mrb[0].mxu0 %v2226
  %v2290 = vpop.f32.mrb[0].mxu0
  %v2291 = vadd.f32 0.0, %v2290
  %v2292 = vpop.f32.mrb[0].mxu0
  %v2293 = vpop.f32.mrb[0].mxu0
  %v2294 = vadd.f32 0.0, %v2293
  %v2295 = vpop.f32.mrb[0].mxu0
  %2296 = vmatprep.mubr.bf16.mxu0 0
  %2297 = vmatmul.mubr.bf16.gmra.mrb[0].mxu0 %v2227
  %v2298 = vpop.f32.mrb[0].mxu0
  %v2299 = vadd.f32 0.0, %v2298
  %v2300 = vpop.f32.mrb[0].mxu0
  %v2301 = vpop.f32.mrb[0].mxu0
  %v2302 = vadd.f32 0.0, %v2301
  %v2303 = vpop.f32.mrb[0].mxu0
  %2304 = vmatprep.mubr.bf16.mxu0 0
  %2305 = vmatmul.mubr.bf16.gmra.mrb[0].mxu0 %v2228
  %v2306 = vpop.f32.mrb[0].mxu0
  %v2307 = vadd.f32 0.0, %v2306
  %v2308 = vpop.f32.mrb[0].mxu0
  %v2309 = vpop.f32.mrb[0].mxu0
  %v2310 = vadd.f32 0.0, %v2309
  %v2311 = vpop.f32.mrb[0].mxu0
  %2312 = vmatprep.mubr.bf16.mxu0 0
  %2313 = vmatmul.mubr.bf16.gmra.mrb[0].mxu0 %v2229
  %v2314 = vpop.f32.mrb[0].mxu0
  %v2315 = vadd.f32 0.0, %v2314
  %v2316 = vpop.f32.mrb[0].mxu0
  %v2317 = vpop.f32.mrb[0].mxu0
  %v2318 = vadd.f32 0.0, %v2317
  %v2319 = vpop.f32.mrb[0].mxu0
  %2320 = vmatprep.mubr.bf16.mxu0 0
  %2321 = vmatmul.mubr.bf16.gmra.mrb[0].mxu0 %v2230
  %v2322 = vpop.f32.mrb[0].mxu0
  %v2323 = vadd.f32 0.0, %v2322
  %v2324 = vpop.f32.mrb[0].mxu0
  %v2325 = vpop.f32.mrb[0].mxu0
  %v2326 = vadd.f32 0.0, %v2325
  %v2327 = vpop.f32.mrb[0].mxu0
  %2328 = vmatprep.mubr.bf16.mxu0 0
  %2329 = vmatmul.mubr.bf16.gmra.mrb[0].mxu0 %v2231
  %v2330 = vpop.f32.mrb[0].mxu0
  %v2331 = vadd.f32 0.0, %v2330
  %v2332 = vpop.f32.mrb[0].mxu0
  %v2333 = vpop.f32.mrb[0].mxu0
  %v2334 = vadd.f32 0.0, %v2333
  %v2335 = vpop.f32.mrb[0].mxu0
  %2336 = vdwg.mxu0
  %v2337 = vpack.c.bf16 %v2278, %v2275
  %v2338 = vpack.c.bf16 %v2286, %v2283
  %v2339 = vpack.c.bf16 %v2294, %v2291
  %v2340 = vpack.c.bf16 %v2302, %v2299
  %v2341 = vpack.c.bf16 %v2310, %v2307
  %v2342 = vpack.c.bf16 %v2318, %v2315
  %v2343 = vpack.c.bf16 %v2326, %v2323
  %v2344 = vpack.c.bf16 %v2334, %v2331
  %s2345 = scalar_lea.vmem %s2, 384
  %v2346 = vld [vmem:[%s2345] sm:$0xf]
  %v2347 = vld [vmem:[%s2345 + $0x4] sm:$0xf]
  %v2348 = vld [vmem:[%s2345 + $0x8] sm:$0xf]
  %v2349 = vld [vmem:[%s2345 + $0xc] sm:$0xf]
  %v2350 = vld [vmem:[%s2345 + $0x10] sm:$0xf]
  %v2351 = vld [vmem:[%s2345 + $0x14] sm:$0xf]
  %v2352 = vld [vmem:[%s2345 + $0x18] sm:$0xf]
  %v2353 = vld [vmem:[%s2345 + $0x1c] sm:$0xf]
  %v2354 = vld [vmem:[%s2345 + $0x20] sm:$0xf]
  %v2355 = vld [vmem:[%s2345 + $0x24] sm:$0xf]
  %v2356 = vld [vmem:[%s2345 + $0x28] sm:$0xf]
  %v2357 = vld [vmem:[%s2345 + $0x2c] sm:$0xf]
  %v2358 = vld [vmem:[%s2345 + $0x30] sm:$0xf]
  %v2359 = vld [vmem:[%s2345 + $0x34] sm:$0xf]
  %v2360 = vld [vmem:[%s2345 + $0x38] sm:$0xf]
  %v2361 = vld [vmem:[%s2345 + $0x3c] sm:$0xf]
  %v2378 = vunpack.c.l.b16 %v2346
  %v2379 = vunpack.c.l.b16 %v2347
  %v2380 = vunpack.c.l.b16 %v2348
  %v2381 = vunpack.c.l.b16 %v2349
  %v2382 = vunpack.c.l.b16 %v2350
  %v2383 = vunpack.c.l.b16 %v2351
  %v2384 = vunpack.c.l.b16 %v2352
  %v2385 = vunpack.c.l.b16 %v2353
  %v2386 = vunpack.c.l.b16 %v2354
  %v2387 = vunpack.c.l.b16 %v2355
  %v2388 = vunpack.c.l.b16 %v2356
  %v2389 = vunpack.c.l.b16 %v2357
  %v2390 = vunpack.c.l.b16 %v2358
  %v2391 = vunpack.c.l.b16 %v2359
  %v2392 = vunpack.c.l.b16 %v2360
  %v2393 = vunpack.c.l.b16 %v2361
  %v2394 = vpack.c.b16 %v2379, %v2378
  %v2395 = vpack.c.b16 %v2381, %v2380
  %v2396 = vpack.c.b16 %v2383, %v2382
  %v2397 = vpack.c.b16 %v2385, %v2384
  %v2398 = vpack.c.b16 %v2387, %v2386
  %v2399 = vpack.c.b16 %v2389, %v2388
  %v2400 = vpack.c.b16 %v2391, %v2390
  %v2401 = vpack.c.b16 %v2393, %v2392
  %2410 = vmatprep.subr.bf16.mxu0 0
  %2411 = vmatpush1.bf16.msra.mxu0 %v2394
  %2412 = vmatprep.subr.bf16.mxu0 0
  %2413 = vmatpush1.bf16.msra.mxu0 %v2395
  %2414 = vmatprep.subr.bf16.mxu0 0
  %2415 = vmatpush1.bf16.msra.mxu0 %v2396
  %2416 = vmatprep.subr.bf16.mxu0 0
  %2417 = vmatpush1.bf16.msra.mxu0 %v2397
  %2418 = vmatprep.subr.bf16.mxu0 0
  %2419 = vmatpush1.bf16.msra.mxu0 %v2398
  %2420 = vmatprep.subr.bf16.mxu0 0
  %2421 = vmatpush1.bf16.msra.mxu0 %v2399
  %2422 = vmatprep.subr.bf16.mxu0 0
  %2423 = vmatpush1.bf16.msra.mxu0 %v2400
  %2424 = vmatprep.subr.bf16.mxu0 0
  %2425 = vmatpush1.bf16.msra.mxu0 %v2401
  %2426 = vmatprep.subr.bf16.mxu0 0
  %2427 = vmatpush1.bf16.msra.mxu0 0
  %2428 = vmatprep.subr.bf16.mxu0 0
  %2429 = vmatpush1.bf16.msra.mxu0 0
  %2430 = vmatprep.subr.bf16.mxu0 0
  %2431 = vmatpush1.bf16.msra.mxu0 0
  %2432 = vmatprep.subr.bf16.mxu0 0
  %2433 = vmatpush1.bf16.msra.mxu0 0
  %2434 = vmatprep.subr.bf16.mxu0 0
  %2435 = vmatpush1.bf16.msra.mxu0 0
  %2436 = vmatprep.subr.bf16.mxu0 0
  %2437 = vmatpush1.bf16.msra.mxu0 0
  %2438 = vmatprep.subr.bf16.mxu0 0
  %2439 = vmatpush1.bf16.msra.mxu0 0
  %2440 = vmatprep.subr.bf16.mxu0 0
  %2441 = vmatpush1.bf16.msra.mxu0 0
  %2442 = vmatprep.mubr.bf16.mxu0 0
  %2443 = vmatmul.mubr.bf16.gmra.mrb[0].mxu0 %v2337
  %v2444 = vpop.f32.mrb[0].mxu0
  %v2445 = vadd.f32 0.0, %v2444
  %v2446 = vpop.f32.mrb[0].mxu0
  %v2447 = vpop.f32.mrb[0].mxu0
  %v2448 = vadd.f32 0.0, %v2447
  %v2449 = vpop.f32.mrb[0].mxu0
  %2450 = vmatprep.mubr.bf16.mxu0 0
  %2451 = vmatmul.mubr.bf16.gmra.mrb[0].mxu0 %v2338
  %v2452 = vpop.f32.mrb[0].mxu0
  %v2453 = vadd.f32 0.0, %v2452
  %v2454 = vpop.f32.mrb[0].mxu0
  %v2455 = vpop.f32.mrb[0].mxu0
  %v2456 = vadd.f32 0.0, %v2455
  %v2457 = vpop.f32.mrb[0].mxu0
  %2458 = vmatprep.mubr.bf16.mxu0 0
  %2459 = vmatmul.mubr.bf16.gmra.mrb[0].mxu0 %v2339
  %v2460 = vpop.f32.mrb[0].mxu0
  %v2461 = vadd.f32 0.0, %v2460
  %v2462 = vpop.f32.mrb[0].mxu0
  %v2463 = vpop.f32.mrb[0].mxu0
  %v2464 = vadd.f32 0.0, %v2463
  %v2465 = vpop.f32.mrb[0].mxu0
  %2466 = vmatprep.mubr.bf16.mxu0 0
  %2467 = vmatmul.mubr.bf16.gmra.mrb[0].mxu0 %v2340
  %v2468 = vpop.f32.mrb[0].mxu0
  %v2469 = vadd.f32 0.0, %v2468
  %v2470 = vpop.f32.mrb[0].mxu0
  %v2471 = vpop.f32.mrb[0].mxu0
  %v2472 = vadd.f32 0.0, %v2471
  %v2473 = vpop.f32.mrb[0].mxu0
  %2474 = vmatprep.mubr.bf16.mxu0 0
  %2475 = vmatmul.mubr.bf16.gmra.mrb[0].mxu0 %v2341
  %v2476 = vpop.f32.mrb[0].mxu0
  %v2477 = vadd.f32 0.0, %v2476
  %v2478 = vpop.f32.mrb[0].mxu0
  %v2479 = vpop.f32.mrb[0].mxu0
  %v2480 = vadd.f32 0.0, %v2479
  %v2481 = vpop.f32.mrb[0].mxu0
  %2482 = vmatprep.mubr.bf16.mxu0 0
  %2483 = vmatmul.mubr.bf16.gmra.mrb[0].mxu0 %v2342
  %v2484 = vpop.f32.mrb[0].mxu0
  %v2485 = vadd.f32 0.0, %v2484
  %v2486 = vpop.f32.mrb[0].mxu0
  %v2487 = vpop.f32.mrb[0].mxu0
  %v2488 = vadd.f32 0.0, %v2487
  %v2489 = vpop.f32.mrb[0].mxu0
  %2490 = vmatprep.mubr.bf16.mxu0 0
  %2491 = vmatmul.mubr.bf16.gmra.mrb[0].mxu0 %v2343
  %v2492 = vpop.f32.mrb[0].mxu0
  %v2493 = vadd.f32 0.0, %v2492
  %v2494 = vpop.f32.mrb[0].mxu0
  %v2495 = vpop.f32.mrb[0].mxu0
  %v2496 = vadd.f32 0.0, %v2495
  %v2497 = vpop.f32.mrb[0].mxu0
  %2498 = vmatprep.mubr.bf16.mxu0 0
  %2499 = vmatmul.mubr.bf16.gmra.mrb[0].mxu0 %v2344
  %v2500 = vpop.f32.mrb[0].mxu0
  %v2501 = vadd.f32 0.0, %v2500
  %v2502 = vpop.f32.mrb[0].mxu0
  %v2503 = vpop.f32.mrb[0].mxu0
  %v2504 = vadd.f32 0.0, %v2503
  %v2505 = vpop.f32.mrb[0].mxu0
  %2506 = vdwg.mxu0
  %v2507 = vadd.f32 %v2159, %v2445
  %v2508 = vadd.f32 %v2160, %v2448
  %v2509 = vadd.f32 %v2161, %v2453
  %v2510 = vadd.f32 %v2162, %v2456
  %v2511 = vadd.f32 %v2163, %v2461
  %v2512 = vadd.f32 %v2164, %v2464
  %v2513 = vadd.f32 %v2165, %v2469
  %v2514 = vadd.f32 %v2166, %v2472
  %v2515 = vadd.f32 %v2167, %v2477
  %v2516 = vadd.f32 %v2168, %v2480
  %v2517 = vadd.f32 %v2169, %v2485
  %v2518 = vadd.f32 %v2170, %v2488
  %v2519 = vadd.f32 %v2171, %v2493
  %v2520 = vadd.f32 %v2172, %v2496
  %v2521 = vadd.f32 %v2173, %v2501
  %v2522 = vadd.f32 %v2174, %v2504
  %s2523 = scalar_lea.vmem %s1, 448
  %v2524 = vld [vmem:[%s2523] sm:$0xf]
  %v2525 = vld [vmem:[%s2523 + $0x4] sm:$0xf]
  %v2526 = vld [vmem:[%s2523 + $0x8] sm:$0xf]
  %v2527 = vld [vmem:[%s2523 + $0xc] sm:$0xf]
  %v2528 = vld [vmem:[%s2523 + $0x10] sm:$0xf]
  %v2529 = vld [vmem:[%s2523 + $0x14] sm:$0xf]
  %v2530 = vld [vmem:[%s2523 + $0x18] sm:$0xf]
  %v2531 = vld [vmem:[%s2523 + $0x1c] sm:$0xf]
  %v2532 = vld [vmem:[%s2523 + $0x20] sm:$0xf]
  %v2533 = vld [vmem:[%s2523 + $0x24] sm:$0xf]
  %v2534 = vld [vmem:[%s2523 + $0x28] sm:$0xf]
  %v2535 = vld [vmem:[%s2523 + $0x2c] sm:$0xf]
  %v2536 = vld [vmem:[%s2523 + $0x30] sm:$0xf]
  %v2537 = vld [vmem:[%s2523 + $0x34] sm:$0xf]
  %v2538 = vld [vmem:[%s2523 + $0x38] sm:$0xf]
  %v2539 = vld [vmem:[%s2523 + $0x3c] sm:$0xf]
  %v2556 = vunpack.c.l.b16 %v2524
  %v2557 = vunpack.c.l.b16 %v2525
  %v2558 = vunpack.c.l.b16 %v2526
  %v2559 = vunpack.c.l.b16 %v2527
  %v2560 = vunpack.c.l.b16 %v2528
  %v2561 = vunpack.c.l.b16 %v2529
  %v2562 = vunpack.c.l.b16 %v2530
  %v2563 = vunpack.c.l.b16 %v2531
  %v2564 = vunpack.c.l.b16 %v2532
  %v2565 = vunpack.c.l.b16 %v2533
  %v2566 = vunpack.c.l.b16 %v2534
  %v2567 = vunpack.c.l.b16 %v2535
  %v2568 = vunpack.c.l.b16 %v2536
  %v2569 = vunpack.c.l.b16 %v2537
  %v2570 = vunpack.c.l.b16 %v2538
  %v2571 = vunpack.c.l.b16 %v2539
  %v2572 = vpack.c.b16 %v2557, %v2556
  %v2573 = vpack.c.b16 %v2559, %v2558
  %v2574 = vpack.c.b16 %v2561, %v2560
  %v2575 = vpack.c.b16 %v2563, %v2562
  %v2576 = vpack.c.b16 %v2565, %v2564
  %v2577 = vpack.c.b16 %v2567, %v2566
  %v2578 = vpack.c.b16 %v2569, %v2568
  %v2579 = vpack.c.b16 %v2571, %v2570
  %2588 = vmatprep.subr.bf16.mxu0 0
  %2589 = vmatpush1.bf16.msra.mxu0 %v169
  %2590 = vmatprep.subr.bf16.mxu0 0
  %2591 = vmatpush1.bf16.msra.mxu0 %v170
  %2592 = vmatprep.subr.bf16.mxu0 0
  %2593 = vmatpush1.bf16.msra.mxu0 %v171
  %2594 = vmatprep.subr.bf16.mxu0 0
  %2595 = vmatpush1.bf16.msra.mxu0 %v172
  %2596 = vmatprep.subr.bf16.mxu0 0
  %2597 = vmatpush1.bf16.msra.mxu0 %v173
  %2598 = vmatprep.subr.bf16.mxu0 0
  %2599 = vmatpush1.bf16.msra.mxu0 %v174
  %2600 = vmatprep.subr.bf16.mxu0 0
  %2601 = vmatpush1.bf16.msra.mxu0 %v175
  %2602 = vmatprep.subr.bf16.mxu0 0
  %2603 = vmatpush1.bf16.msra.mxu0 %v176
  %2604 = vmatprep.subr.bf16.mxu0 0
  %2605 = vmatpush1.bf16.msra.mxu0 0
  %2606 = vmatprep.subr.bf16.mxu0 0
  %2607 = vmatpush1.bf16.msra.mxu0 0
  %2608 = vmatprep.subr.bf16.mxu0 0
  %2609 = vmatpush1.bf16.msra.mxu0 0
  %2610 = vmatprep.subr.bf16.mxu0 0
  %2611 = vmatpush1.bf16.msra.mxu0 0
  %2612 = vmatprep.subr.bf16.mxu0 0
  %2613 = vmatpush1.bf16.msra.mxu0 0
  %2614 = vmatprep.subr.bf16.mxu0 0
  %2615 = vmatpush1.bf16.msra.mxu0 0
  %2616 = vmatprep.subr.bf16.mxu0 0
  %2617 = vmatpush1.bf16.msra.mxu0 0
  %2618 = vmatprep.subr.bf16.mxu0 0
  %2619 = vmatpush1.bf16.msra.mxu0 0
  %2620 = vmatprep.mubr.bf16.mxu0 0
  %2621 = vmatmul.mubr.bf16.gmra.mrb[0].mxu0 %v2572
  %v2622 = vpop.f32.mrb[0].mxu0
  %v2623 = vadd.f32 0.0, %v2622
  %v2624 = vpop.f32.mrb[0].mxu0
  %v2625 = vpop.f32.mrb[0].mxu0
  %v2626 = vadd.f32 0.0, %v2625
  %v2627 = vpop.f32.mrb[0].mxu0
  %2628 = vmatprep.mubr.bf16.mxu0 0
  %2629 = vmatmul.mubr.bf16.gmra.mrb[0].mxu0 %v2573
  %v2630 = vpop.f32.mrb[0].mxu0
  %v2631 = vadd.f32 0.0, %v2630
  %v2632 = vpop.f32.mrb[0].mxu0
  %v2633 = vpop.f32.mrb[0].mxu0
  %v2634 = vadd.f32 0.0, %v2633
  %v2635 = vpop.f32.mrb[0].mxu0
  %2636 = vmatprep.mubr.bf16.mxu0 0
  %2637 = vmatmul.mubr.bf16.gmra.mrb[0].mxu0 %v2574
  %v2638 = vpop.f32.mrb[0].mxu0
  %v2639 = vadd.f32 0.0, %v2638
  %v2640 = vpop.f32.mrb[0].mxu0
  %v2641 = vpop.f32.mrb[0].mxu0
  %v2642 = vadd.f32 0.0, %v2641
  %v2643 = vpop.f32.mrb[0].mxu0
  %2644 = vmatprep.mubr.bf16.mxu0 0
  %2645 = vmatmul.mubr.bf16.gmra.mrb[0].mxu0 %v2575
  %v2646 = vpop.f32.mrb[0].mxu0
  %v2647 = vadd.f32 0.0, %v2646
  %v2648 = vpop.f32.mrb[0].mxu0
  %v2649 = vpop.f32.mrb[0].mxu0
  %v2650 = vadd.f32 0.0, %v2649
  %v2651 = vpop.f32.mrb[0].mxu0
  %2652 = vmatprep.mubr.bf16.mxu0 0
  %2653 = vmatmul.mubr.bf16.gmra.mrb[0].mxu0 %v2576
  %v2654 = vpop.f32.mrb[0].mxu0
  %v2655 = vadd.f32 0.0, %v2654
  %v2656 = vpop.f32.mrb[0].mxu0
  %v2657 = vpop.f32.mrb[0].mxu0
  %v2658 = vadd.f32 0.0, %v2657
  %v2659 = vpop.f32.mrb[0].mxu0
  %2660 = vmatprep.mubr.bf16.mxu0 0
  %2661 = vmatmul.mubr.bf16.gmra.mrb[0].mxu0 %v2577
  %v2662 = vpop.f32.mrb[0].mxu0
  %v2663 = vadd.f32 0.0, %v2662
  %v2664 = vpop.f32.mrb[0].mxu0
  %v2665 = vpop.f32.mrb[0].mxu0
  %v2666 = vadd.f32 0.0, %v2665
  %v2667 = vpop.f32.mrb[0].mxu0
  %2668 = vmatprep.mubr.bf16.mxu0 0
  %2669 = vmatmul.mubr.bf16.gmra.mrb[0].mxu0 %v2578
  %v2670 = vpop.f32.mrb[0].mxu0
  %v2671 = vadd.f32 0.0, %v2670
  %v2672 = vpop.f32.mrb[0].mxu0
  %v2673 = vpop.f32.mrb[0].mxu0
  %v2674 = vadd.f32 0.0, %v2673
  %v2675 = vpop.f32.mrb[0].mxu0
  %2676 = vmatprep.mubr.bf16.mxu0 0
  %2677 = vmatmul.mubr.bf16.gmra.mrb[0].mxu0 %v2579
  %v2678 = vpop.f32.mrb[0].mxu0
  %v2679 = vadd.f32 0.0, %v2678
  %v2680 = vpop.f32.mrb[0].mxu0
  %v2681 = vpop.f32.mrb[0].mxu0
  %v2682 = vadd.f32 0.0, %v2681
  %v2683 = vpop.f32.mrb[0].mxu0
  %2684 = vdwg.mxu0
  %v2685 = vpack.c.bf16 %v2626, %v2623
  %v2686 = vpack.c.bf16 %v2634, %v2631
  %v2687 = vpack.c.bf16 %v2642, %v2639
  %v2688 = vpack.c.bf16 %v2650, %v2647
  %v2689 = vpack.c.bf16 %v2658, %v2655
  %v2690 = vpack.c.bf16 %v2666, %v2663
  %v2691 = vpack.c.bf16 %v2674, %v2671
  %v2692 = vpack.c.bf16 %v2682, %v2679
  %s2693 = scalar_lea.vmem %s2, 448
  %v2694 = vld [vmem:[%s2693] sm:$0xf]
  %v2695 = vld [vmem:[%s2693 + $0x4] sm:$0xf]
  %v2696 = vld [vmem:[%s2693 + $0x8] sm:$0xf]
  %v2697 = vld [vmem:[%s2693 + $0xc] sm:$0xf]
  %v2698 = vld [vmem:[%s2693 + $0x10] sm:$0xf]
  %v2699 = vld [vmem:[%s2693 + $0x14] sm:$0xf]
  %v2700 = vld [vmem:[%s2693 + $0x18] sm:$0xf]
  %v2701 = vld [vmem:[%s2693 + $0x1c] sm:$0xf]
  %v2702 = vld [vmem:[%s2693 + $0x20] sm:$0xf]
  %v2703 = vld [vmem:[%s2693 + $0x24] sm:$0xf]
  %v2704 = vld [vmem:[%s2693 + $0x28] sm:$0xf]
  %v2705 = vld [vmem:[%s2693 + $0x2c] sm:$0xf]
  %v2706 = vld [vmem:[%s2693 + $0x30] sm:$0xf]
  %v2707 = vld [vmem:[%s2693 + $0x34] sm:$0xf]
  %v2708 = vld [vmem:[%s2693 + $0x38] sm:$0xf]
  %v2709 = vld [vmem:[%s2693 + $0x3c] sm:$0xf]
  %v2726 = vunpack.c.l.b16 %v2694
  %v2727 = vunpack.c.l.b16 %v2695
  %v2728 = vunpack.c.l.b16 %v2696
  %v2729 = vunpack.c.l.b16 %v2697
  %v2730 = vunpack.c.l.b16 %v2698
  %v2731 = vunpack.c.l.b16 %v2699
  %v2732 = vunpack.c.l.b16 %v2700
  %v2733 = vunpack.c.l.b16 %v2701
  %v2734 = vunpack.c.l.b16 %v2702
  %v2735 = vunpack.c.l.b16 %v2703
  %v2736 = vunpack.c.l.b16 %v2704
  %v2737 = vunpack.c.l.b16 %v2705
  %v2738 = vunpack.c.l.b16 %v2706
  %v2739 = vunpack.c.l.b16 %v2707
  %v2740 = vunpack.c.l.b16 %v2708
  %v2741 = vunpack.c.l.b16 %v2709
  %v2742 = vpack.c.b16 %v2727, %v2726
  %v2743 = vpack.c.b16 %v2729, %v2728
  %v2744 = vpack.c.b16 %v2731, %v2730
  %v2745 = vpack.c.b16 %v2733, %v2732
  %v2746 = vpack.c.b16 %v2735, %v2734
  %v2747 = vpack.c.b16 %v2737, %v2736
  %v2748 = vpack.c.b16 %v2739, %v2738
  %v2749 = vpack.c.b16 %v2741, %v2740
  %2758 = vmatprep.subr.bf16.mxu0 0
  %2759 = vmatpush1.bf16.msra.mxu0 %v2742
  %2760 = vmatprep.subr.bf16.mxu0 0
  %2761 = vmatpush1.bf16.msra.mxu0 %v2743
  %2762 = vmatprep.subr.bf16.mxu0 0
  %2763 = vmatpush1.bf16.msra.mxu0 %v2744
  %2764 = vmatprep.subr.bf16.mxu0 0
  %2765 = vmatpush1.bf16.msra.mxu0 %v2745
  %2766 = vmatprep.subr.bf16.mxu0 0
  %2767 = vmatpush1.bf16.msra.mxu0 %v2746
  %2768 = vmatprep.subr.bf16.mxu0 0
  %2769 = vmatpush1.bf16.msra.mxu0 %v2747
  %2770 = vmatprep.subr.bf16.mxu0 0
  %2771 = vmatpush1.bf16.msra.mxu0 %v2748
  %2772 = vmatprep.subr.bf16.mxu0 0
  %2773 = vmatpush1.bf16.msra.mxu0 %v2749
  %2774 = vmatprep.subr.bf16.mxu0 0
  %2775 = vmatpush1.bf16.msra.mxu0 0
  %2776 = vmatprep.subr.bf16.mxu0 0
  %2777 = vmatpush1.bf16.msra.mxu0 0
  %2778 = vmatprep.subr.bf16.mxu0 0
  %2779 = vmatpush1.bf16.msra.mxu0 0
  %2780 = vmatprep.subr.bf16.mxu0 0
  %2781 = vmatpush1.bf16.msra.mxu0 0
  %2782 = vmatprep.subr.bf16.mxu0 0
  %2783 = vmatpush1.bf16.msra.mxu0 0
  %2784 = vmatprep.subr.bf16.mxu0 0
  %2785 = vmatpush1.bf16.msra.mxu0 0
  %2786 = vmatprep.subr.bf16.mxu0 0
  %2787 = vmatpush1.bf16.msra.mxu0 0
  %2788 = vmatprep.subr.bf16.mxu0 0
  %2789 = vmatpush1.bf16.msra.mxu0 0
  %2790 = vmatprep.mubr.bf16.mxu0 0
  %2791 = vmatmul.mubr.bf16.gmra.mrb[0].mxu0 %v2685
  %v2792 = vpop.f32.mrb[0].mxu0
  %v2793 = vadd.f32 0.0, %v2792
  %v2794 = vpop.f32.mrb[0].mxu0
  %v2795 = vpop.f32.mrb[0].mxu0
  %v2796 = vadd.f32 0.0, %v2795
  %v2797 = vpop.f32.mrb[0].mxu0
  %2798 = vmatprep.mubr.bf16.mxu0 0
  %2799 = vmatmul.mubr.bf16.gmra.mrb[0].mxu0 %v2686
  %v2800 = vpop.f32.mrb[0].mxu0
  %v2801 = vadd.f32 0.0, %v2800
  %v2802 = vpop.f32.mrb[0].mxu0
  %v2803 = vpop.f32.mrb[0].mxu0
  %v2804 = vadd.f32 0.0, %v2803
  %v2805 = vpop.f32.mrb[0].mxu0
  %2806 = vmatprep.mubr.bf16.mxu0 0
  %2807 = vmatmul.mubr.bf16.gmra.mrb[0].mxu0 %v2687
  %v2808 = vpop.f32.mrb[0].mxu0
  %v2809 = vadd.f32 0.0, %v2808
  %v2810 = vpop.f32.mrb[0].mxu0
  %v2811 = vpop.f32.mrb[0].mxu0
  %v2812 = vadd.f32 0.0, %v2811
  %v2813 = vpop.f32.mrb[0].mxu0
  %2814 = vmatprep.mubr.bf16.mxu0 0
  %2815 = vmatmul.mubr.bf16.gmra.mrb[0].mxu0 %v2688
  %v2816 = vpop.f32.mrb[0].mxu0
  %v2817 = vadd.f32 0.0, %v2816
  %v2818 = vpop.f32.mrb[0].mxu0
  %v2819 = vpop.f32.mrb[0].mxu0
  %v2820 = vadd.f32 0.0, %v2819
  %v2821 = vpop.f32.mrb[0].mxu0
  %2822 = vmatprep.mubr.bf16.mxu0 0
  %2823 = vmatmul.mubr.bf16.gmra.mrb[0].mxu0 %v2689
  %v2824 = vpop.f32.mrb[0].mxu0
  %v2825 = vadd.f32 0.0, %v2824
  %v2826 = vpop.f32.mrb[0].mxu0
  %v2827 = vpop.f32.mrb[0].mxu0
  %v2828 = vadd.f32 0.0, %v2827
  %v2829 = vpop.f32.mrb[0].mxu0
  %2830 = vmatprep.mubr.bf16.mxu0 0
  %2831 = vmatmul.mubr.bf16.gmra.mrb[0].mxu0 %v2690
  %v2832 = vpop.f32.mrb[0].mxu0
  %v2833 = vadd.f32 0.0, %v2832
  %v2834 = vpop.f32.mrb[0].mxu0
  %v2835 = vpop.f32.mrb[0].mxu0
  %v2836 = vadd.f32 0.0, %v2835
  %v2837 = vpop.f32.mrb[0].mxu0
  %2838 = vmatprep.mubr.bf16.mxu0 0
  %2839 = vmatmul.mubr.bf16.gmra.mrb[0].mxu0 %v2691
  %v2840 = vpop.f32.mrb[0].mxu0
  %v2841 = vadd.f32 0.0, %v2840
  %v2842 = vpop.f32.mrb[0].mxu0
  %v2843 = vpop.f32.mrb[0].mxu0
  %v2844 = vadd.f32 0.0, %v2843
  %v2845 = vpop.f32.mrb[0].mxu0
  %2846 = vmatprep.mubr.bf16.mxu0 0
  %2847 = vmatmul.mubr.bf16.gmra.mrb[0].mxu0 %v2692
  %v2848 = vpop.f32.mrb[0].mxu0
  %v2849 = vadd.f32 0.0, %v2848
  %v2850 = vpop.f32.mrb[0].mxu0
  %v2851 = vpop.f32.mrb[0].mxu0
  %v2852 = vadd.f32 0.0, %v2851
  %v2853 = vpop.f32.mrb[0].mxu0
  %2854 = vdwg.mxu0
  %v2855 = vadd.f32 %v2507, %v2793
  %v2856 = vadd.f32 %v2508, %v2796
  %v2857 = vadd.f32 %v2509, %v2801
  %v2858 = vadd.f32 %v2510, %v2804
  %v2859 = vadd.f32 %v2511, %v2809
  %v2860 = vadd.f32 %v2512, %v2812
  %v2861 = vadd.f32 %v2513, %v2817
  %v2862 = vadd.f32 %v2514, %v2820
  %v2863 = vadd.f32 %v2515, %v2825
  %v2864 = vadd.f32 %v2516, %v2828
  %v2865 = vadd.f32 %v2517, %v2833
  %v2866 = vadd.f32 %v2518, %v2836
  %v2867 = vadd.f32 %v2519, %v2841
  %v2868 = vadd.f32 %v2520, %v2844
  %v2869 = vadd.f32 %v2521, %v2849
  %v2870 = vadd.f32 %v2522, %v2852
  %s2871 = scalar_lea.vmem %s1, 512
  %v2872 = vld [vmem:[%s2871] sm:$0xf]
  %v2873 = vld [vmem:[%s2871 + $0x4] sm:$0xf]
  %v2874 = vld [vmem:[%s2871 + $0x8] sm:$0xf]
  %v2875 = vld [vmem:[%s2871 + $0xc] sm:$0xf]
  %v2876 = vld [vmem:[%s2871 + $0x10] sm:$0xf]
  %v2877 = vld [vmem:[%s2871 + $0x14] sm:$0xf]
  %v2878 = vld [vmem:[%s2871 + $0x18] sm:$0xf]
  %v2879 = vld [vmem:[%s2871 + $0x1c] sm:$0xf]
  %v2880 = vld [vmem:[%s2871 + $0x20] sm:$0xf]
  %v2881 = vld [vmem:[%s2871 + $0x24] sm:$0xf]
  %v2882 = vld [vmem:[%s2871 + $0x28] sm:$0xf]
  %v2883 = vld [vmem:[%s2871 + $0x2c] sm:$0xf]
  %v2884 = vld [vmem:[%s2871 + $0x30] sm:$0xf]
  %v2885 = vld [vmem:[%s2871 + $0x34] sm:$0xf]
  %v2886 = vld [vmem:[%s2871 + $0x38] sm:$0xf]
  %v2887 = vld [vmem:[%s2871 + $0x3c] sm:$0xf]
  %v2904 = vunpack.c.l.b16 %v2872
  %v2905 = vunpack.c.l.b16 %v2873
  %v2906 = vunpack.c.l.b16 %v2874
  %v2907 = vunpack.c.l.b16 %v2875
  %v2908 = vunpack.c.l.b16 %v2876
  %v2909 = vunpack.c.l.b16 %v2877
  %v2910 = vunpack.c.l.b16 %v2878
  %v2911 = vunpack.c.l.b16 %v2879
  %v2912 = vunpack.c.l.b16 %v2880
  %v2913 = vunpack.c.l.b16 %v2881
  %v2914 = vunpack.c.l.b16 %v2882
  %v2915 = vunpack.c.l.b16 %v2883
  %v2916 = vunpack.c.l.b16 %v2884
  %v2917 = vunpack.c.l.b16 %v2885
  %v2918 = vunpack.c.l.b16 %v2886
  %v2919 = vunpack.c.l.b16 %v2887
  %v2920 = vpack.c.b16 %v2905, %v2904
  %v2921 = vpack.c.b16 %v2907, %v2906
  %v2922 = vpack.c.b16 %v2909, %v2908
  %v2923 = vpack.c.b16 %v2911, %v2910
  %v2924 = vpack.c.b16 %v2913, %v2912
  %v2925 = vpack.c.b16 %v2915, %v2914
  %v2926 = vpack.c.b16 %v2917, %v2916
  %v2927 = vpack.c.b16 %v2919, %v2918
  %2936 = vmatprep.subr.bf16.mxu0 0
  %2937 = vmatpush1.bf16.msra.mxu0 %v169
  %2938 = vmatprep.subr.bf16.mxu0 0
  %2939 = vmatpush1.bf16.msra.mxu0 %v170
  %2940 = vmatprep.subr.bf16.mxu0 0
  %2941 = vmatpush1.bf16.msra.mxu0 %v171
  %2942 = vmatprep.subr.bf16.mxu0 0
  %2943 = vmatpush1.bf16.msra.mxu0 %v172
  %2944 = vmatprep.subr.bf16.mxu0 0
  %2945 = vmatpush1.bf16.msra.mxu0 %v173
  %2946 = vmatprep.subr.bf16.mxu0 0
  %2947 = vmatpush1.bf16.msra.mxu0 %v174
  %2948 = vmatprep.subr.bf16.mxu0 0
  %2949 = vmatpush1.bf16.msra.mxu0 %v175
  %2950 = vmatprep.subr.bf16.mxu0 0
  %2951 = vmatpush1.bf16.msra.mxu0 %v176
  %2952 = vmatprep.subr.bf16.mxu0 0
  %2953 = vmatpush1.bf16.msra.mxu0 0
  %2954 = vmatprep.subr.bf16.mxu0 0
  %2955 = vmatpush1.bf16.msra.mxu0 0
  %2956 = vmatprep.subr.bf16.mxu0 0
  %2957 = vmatpush1.bf16.msra.mxu0 0
  %2958 = vmatprep.subr.bf16.mxu0 0
  %2959 = vmatpush1.bf16.msra.mxu0 0
  %2960 = vmatprep.subr.bf16.mxu0 0
  %2961 = vmatpush1.bf16.msra.mxu0 0
  %2962 = vmatprep.subr.bf16.mxu0 0
  %2963 = vmatpush1.bf16.msra.mxu0 0
  %2964 = vmatprep.subr.bf16.mxu0 0
  %2965 = vmatpush1.bf16.msra.mxu0 0
  %2966 = vmatprep.subr.bf16.mxu0 0
  %2967 = vmatpush1.bf16.msra.mxu0 0
  %2968 = vmatprep.mubr.bf16.mxu0 0
  %2969 = vmatmul.mubr.bf16.gmra.mrb[0].mxu0 %v2920
  %v2970 = vpop.f32.mrb[0].mxu0
  %v2971 = vadd.f32 0.0, %v2970
  %v2972 = vpop.f32.mrb[0].mxu0
  %v2973 = vpop.f32.mrb[0].mxu0
  %v2974 = vadd.f32 0.0, %v2973
  %v2975 = vpop.f32.mrb[0].mxu0
  %2976 = vmatprep.mubr.bf16.mxu0 0
  %2977 = vmatmul.mubr.bf16.gmra.mrb[0].mxu0 %v2921
  %v2978 = vpop.f32.mrb[0].mxu0
  %v2979 = vadd.f32 0.0, %v2978
  %v2980 = vpop.f32.mrb[0].mxu0
  %v2981 = vpop.f32.mrb[0].mxu0
  %v2982 = vadd.f32 0.0, %v2981
  %v2983 = vpop.f32.mrb[0].mxu0
  %2984 = vmatprep.mubr.bf16.mxu0 0
  %2985 = vmatmul.mubr.bf16.gmra.mrb[0].mxu0 %v2922
  %v2986 = vpop.f32.mrb[0].mxu0
  %v2987 = vadd.f32 0.0, %v2986
  %v2988 = vpop.f32.mrb[0].mxu0
  %v2989 = vpop.f32.mrb[0].mxu0
  %v2990 = vadd.f32 0.0, %v2989
  %v2991 = vpop.f32.mrb[0].mxu0
  %2992 = vmatprep.mubr.bf16.mxu0 0
  %2993 = vmatmul.mubr.bf16.gmra.mrb[0].mxu0 %v2923
  %v2994 = vpop.f32.mrb[0].mxu0
  %v2995 = vadd.f32 0.0, %v2994
  %v2996 = vpop.f32.mrb[0].mxu0
  %v2997 = vpop.f32.mrb[0].mxu0
  %v2998 = vadd.f32 0.0, %v2997
  %v2999 = vpop.f32.mrb[0].mxu0
  %3000 = vmatprep.mubr.bf16.mxu0 0
  %3001 = vmatmul.mubr.bf16.gmra.mrb[0].mxu0 %v2924
  %v3002 = vpop.f32.mrb[0].mxu0
  %v3003 = vadd.f32 0.0, %v3002
  %v3004 = vpop.f32.mrb[0].mxu0
  %v3005 = vpop.f32.mrb[0].mxu0
  %v3006 = vadd.f32 0.0, %v3005
  %v3007 = vpop.f32.mrb[0].mxu0
  %3008 = vmatprep.mubr.bf16.mxu0 0
  %3009 = vmatmul.mubr.bf16.gmra.mrb[0].mxu0 %v2925
  %v3010 = vpop.f32.mrb[0].mxu0
  %v3011 = vadd.f32 0.0, %v3010
  %v3012 = vpop.f32.mrb[0].mxu0
  %v3013 = vpop.f32.mrb[0].mxu0
  %v3014 = vadd.f32 0.0, %v3013
  %v3015 = vpop.f32.mrb[0].mxu0
  %3016 = vmatprep.mubr.bf16.mxu0 0
  %3017 = vmatmul.mubr.bf16.gmra.mrb[0].mxu0 %v2926
  %v3018 = vpop.f32.mrb[0].mxu0
  %v3019 = vadd.f32 0.0, %v3018
  %v3020 = vpop.f32.mrb[0].mxu0
  %v3021 = vpop.f32.mrb[0].mxu0
  %v3022 = vadd.f32 0.0, %v3021
  %v3023 = vpop.f32.mrb[0].mxu0
  %3024 = vmatprep.mubr.bf16.mxu0 0
  %3025 = vmatmul.mubr.bf16.gmra.mrb[0].mxu0 %v2927
  %v3026 = vpop.f32.mrb[0].mxu0
  %v3027 = vadd.f32 0.0, %v3026
  %v3028 = vpop.f32.mrb[0].mxu0
  %v3029 = vpop.f32.mrb[0].mxu0
  %v3030 = vadd.f32 0.0, %v3029
  %v3031 = vpop.f32.mrb[0].mxu0
  %3032 = vdwg.mxu0
  %v3033 = vpack.c.bf16 %v2974, %v2971
  %v3034 = vpack.c.bf16 %v2982, %v2979
  %v3035 = vpack.c.bf16 %v2990, %v2987
  %v3036 = vpack.c.bf16 %v2998, %v2995
  %v3037 = vpack.c.bf16 %v3006, %v3003
  %v3038 = vpack.c.bf16 %v3014, %v3011
  %v3039 = vpack.c.bf16 %v3022, %v3019
  %v3040 = vpack.c.bf16 %v3030, %v3027
  %s3041 = scalar_lea.vmem %s2, 512
  %v3042 = vld [vmem:[%s3041] sm:$0xf]
  %v3043 = vld [vmem:[%s3041 + $0x4] sm:$0xf]
  %v3044 = vld [vmem:[%s3041 + $0x8] sm:$0xf]
  %v3045 = vld [vmem:[%s3041 + $0xc] sm:$0xf]
  %v3046 = vld [vmem:[%s3041 + $0x10] sm:$0xf]
  %v3047 = vld [vmem:[%s3041 + $0x14] sm:$0xf]
  %v3048 = vld [vmem:[%s3041 + $0x18] sm:$0xf]
  %v3049 = vld [vmem:[%s3041 + $0x1c] sm:$0xf]
  %v3050 = vld [vmem:[%s3041 + $0x20] sm:$0xf]
  %v3051 = vld [vmem:[%s3041 + $0x24] sm:$0xf]
  %v3052 = vld [vmem:[%s3041 + $0x28] sm:$0xf]
  %v3053 = vld [vmem:[%s3041 + $0x2c] sm:$0xf]
  %v3054 = vld [vmem:[%s3041 + $0x30] sm:$0xf]
  %v3055 = vld [vmem:[%s3041 + $0x34] sm:$0xf]
  %v3056 = vld [vmem:[%s3041 + $0x38] sm:$0xf]
  %v3057 = vld [vmem:[%s3041 + $0x3c] sm:$0xf]
  %v3074 = vunpack.c.l.b16 %v3042
  %v3075 = vunpack.c.l.b16 %v3043
  %v3076 = vunpack.c.l.b16 %v3044
  %v3077 = vunpack.c.l.b16 %v3045
  %v3078 = vunpack.c.l.b16 %v3046
  %v3079 = vunpack.c.l.b16 %v3047
  %v3080 = vunpack.c.l.b16 %v3048
  %v3081 = vunpack.c.l.b16 %v3049
  %v3082 = vunpack.c.l.b16 %v3050
  %v3083 = vunpack.c.l.b16 %v3051
  %v3084 = vunpack.c.l.b16 %v3052
  %v3085 = vunpack.c.l.b16 %v3053
  %v3086 = vunpack.c.l.b16 %v3054
  %v3087 = vunpack.c.l.b16 %v3055
  %v3088 = vunpack.c.l.b16 %v3056
  %v3089 = vunpack.c.l.b16 %v3057
  %v3090 = vpack.c.b16 %v3075, %v3074
  %v3091 = vpack.c.b16 %v3077, %v3076
  %v3092 = vpack.c.b16 %v3079, %v3078
  %v3093 = vpack.c.b16 %v3081, %v3080
  %v3094 = vpack.c.b16 %v3083, %v3082
  %v3095 = vpack.c.b16 %v3085, %v3084
  %v3096 = vpack.c.b16 %v3087, %v3086
  %v3097 = vpack.c.b16 %v3089, %v3088
  %3106 = vmatprep.subr.bf16.mxu0 0
  %3107 = vmatpush1.bf16.msra.mxu0 %v3090
  %3108 = vmatprep.subr.bf16.mxu0 0
  %3109 = vmatpush1.bf16.msra.mxu0 %v3091
  %3110 = vmatprep.subr.bf16.mxu0 0
  %3111 = vmatpush1.bf16.msra.mxu0 %v3092
  %3112 = vmatprep.subr.bf16.mxu0 0
  %3113 = vmatpush1.bf16.msra.mxu0 %v3093
  %3114 = vmatprep.subr.bf16.mxu0 0
  %3115 = vmatpush1.bf16.msra.mxu0 %v3094
  %3116 = vmatprep.subr.bf16.mxu0 0
  %3117 = vmatpush1.bf16.msra.mxu0 %v3095
  %3118 = vmatprep.subr.bf16.mxu0 0
  %3119 = vmatpush1.bf16.msra.mxu0 %v3096
  %3120 = vmatprep.subr.bf16.mxu0 0
  %3121 = vmatpush1.bf16.msra.mxu0 %v3097
  %3122 = vmatprep.subr.bf16.mxu0 0
  %3123 = vmatpush1.bf16.msra.mxu0 0
  %3124 = vmatprep.subr.bf16.mxu0 0
  %3125 = vmatpush1.bf16.msra.mxu0 0
  %3126 = vmatprep.subr.bf16.mxu0 0
  %3127 = vmatpush1.bf16.msra.mxu0 0
  %3128 = vmatprep.subr.bf16.mxu0 0
  %3129 = vmatpush1.bf16.msra.mxu0 0
  %3130 = vmatprep.subr.bf16.mxu0 0
  %3131 = vmatpush1.bf16.msra.mxu0 0
  %3132 = vmatprep.subr.bf16.mxu0 0
  %3133 = vmatpush1.bf16.msra.mxu0 0
  %3134 = vmatprep.subr.bf16.mxu0 0
  %3135 = vmatpush1.bf16.msra.mxu0 0
  %3136 = vmatprep.subr.bf16.mxu0 0
  %3137 = vmatpush1.bf16.msra.mxu0 0
  %3138 = vmatprep.mubr.bf16.mxu0 0
  %3139 = vmatmul.mubr.bf16.gmra.mrb[0].mxu0 %v3033
  %v3140 = vpop.f32.mrb[0].mxu0
  %v3141 = vadd.f32 0.0, %v3140
  %v3142 = vpop.f32.mrb[0].mxu0
  %v3143 = vpop.f32.mrb[0].mxu0
  %v3144 = vadd.f32 0.0, %v3143
  %v3145 = vpop.f32.mrb[0].mxu0
  %3146 = vmatprep.mubr.bf16.mxu0 0
  %3147 = vmatmul.mubr.bf16.gmra.mrb[0].mxu0 %v3034
  %v3148 = vpop.f32.mrb[0].mxu0
  %v3149 = vadd.f32 0.0, %v3148
  %v3150 = vpop.f32.mrb[0].mxu0
  %v3151 = vpop.f32.mrb[0].mxu0
  %v3152 = vadd.f32 0.0, %v3151
  %v3153 = vpop.f32.mrb[0].mxu0
  %3154 = vmatprep.mubr.bf16.mxu0 0
  %3155 = vmatmul.mubr.bf16.gmra.mrb[0].mxu0 %v3035
  %v3156 = vpop.f32.mrb[0].mxu0
  %v3157 = vadd.f32 0.0, %v3156
  %v3158 = vpop.f32.mrb[0].mxu0
  %v3159 = vpop.f32.mrb[0].mxu0
  %v3160 = vadd.f32 0.0, %v3159
  %v3161 = vpop.f32.mrb[0].mxu0
  %3162 = vmatprep.mubr.bf16.mxu0 0
  %3163 = vmatmul.mubr.bf16.gmra.mrb[0].mxu0 %v3036
  %v3164 = vpop.f32.mrb[0].mxu0
  %v3165 = vadd.f32 0.0, %v3164
  %v3166 = vpop.f32.mrb[0].mxu0
  %v3167 = vpop.f32.mrb[0].mxu0
  %v3168 = vadd.f32 0.0, %v3167
  %v3169 = vpop.f32.mrb[0].mxu0
  %3170 = vmatprep.mubr.bf16.mxu0 0
  %3171 = vmatmul.mubr.bf16.gmra.mrb[0].mxu0 %v3037
  %v3172 = vpop.f32.mrb[0].mxu0
  %v3173 = vadd.f32 0.0, %v3172
  %v3174 = vpop.f32.mrb[0].mxu0
  %v3175 = vpop.f32.mrb[0].mxu0
  %v3176 = vadd.f32 0.0, %v3175
  %v3177 = vpop.f32.mrb[0].mxu0
  %3178 = vmatprep.mubr.bf16.mxu0 0
  %3179 = vmatmul.mubr.bf16.gmra.mrb[0].mxu0 %v3038
  %v3180 = vpop.f32.mrb[0].mxu0
  %v3181 = vadd.f32 0.0, %v3180
  %v3182 = vpop.f32.mrb[0].mxu0
  %v3183 = vpop.f32.mrb[0].mxu0
  %v3184 = vadd.f32 0.0, %v3183
  %v3185 = vpop.f32.mrb[0].mxu0
  %3186 = vmatprep.mubr.bf16.mxu0 0
  %3187 = vmatmul.mubr.bf16.gmra.mrb[0].mxu0 %v3039
  %v3188 = vpop.f32.mrb[0].mxu0
  %v3189 = vadd.f32 0.0, %v3188
  %v3190 = vpop.f32.mrb[0].mxu0
  %v3191 = vpop.f32.mrb[0].mxu0
  %v3192 = vadd.f32 0.0, %v3191
  %v3193 = vpop.f32.mrb[0].mxu0
  %3194 = vmatprep.mubr.bf16.mxu0 0
  %3195 = vmatmul.mubr.bf16.gmra.mrb[0].mxu0 %v3040
  %v3196 = vpop.f32.mrb[0].mxu0
  %v3197 = vadd.f32 0.0, %v3196
  %v3198 = vpop.f32.mrb[0].mxu0
  %v3199 = vpop.f32.mrb[0].mxu0
  %v3200 = vadd.f32 0.0, %v3199
  %v3201 = vpop.f32.mrb[0].mxu0
  %3202 = vdwg.mxu0
  %v3203 = vadd.f32 %v2855, %v3141
  %v3204 = vadd.f32 %v2856, %v3144
  %v3205 = vadd.f32 %v2857, %v3149
  %v3206 = vadd.f32 %v2858, %v3152
  %v3207 = vadd.f32 %v2859, %v3157
  %v3208 = vadd.f32 %v2860, %v3160
  %v3209 = vadd.f32 %v2861, %v3165
  %v3210 = vadd.f32 %v2862, %v3168
  %v3211 = vadd.f32 %v2863, %v3173
  %v3212 = vadd.f32 %v2864, %v3176
  %v3213 = vadd.f32 %v2865, %v3181
  %v3214 = vadd.f32 %v2866, %v3184
  %v3215 = vadd.f32 %v2867, %v3189
  %v3216 = vadd.f32 %v2868, %v3192
  %v3217 = vadd.f32 %v2869, %v3197
  %v3218 = vadd.f32 %v2870, %v3200
  %v3219 = vld [vmem:[%s3] sm:$0x1]
  %v3221 = vlaneseq
  %v3222 = vshrl.u32 %v3221, 7
  %v3223 = vsub.s32 0, %v3222
  %v3224 = vrot.slane %v3219, %v3223
  %v3226 = vadd.f32 %v3203, %v3224
  %v3227 = vadd.f32 %v3204, %v3224
  %v3228 = vadd.f32 %v3205, %v3224
  %v3229 = vadd.f32 %v3206, %v3224
  %v3230 = vadd.f32 %v3207, %v3224
  %v3231 = vadd.f32 %v3208, %v3224
  %v3232 = vadd.f32 %v3209, %v3224
  %v3233 = vadd.f32 %v3210, %v3224
  %v3234 = vadd.f32 %v3211, %v3224
  %v3235 = vadd.f32 %v3212, %v3224
  %v3236 = vadd.f32 %v3213, %v3224
  %v3237 = vadd.f32 %v3214, %v3224
  %v3238 = vadd.f32 %v3215, %v3224
  %v3239 = vadd.f32 %v3216, %v3224
  %v3240 = vadd.f32 %v3217, %v3224
  %v3241 = vadd.f32 %v3218, %v3224
  %v3242 = vmax.f32 %v3226, 0.0
  %v3243 = vmax.f32 %v3227, 0.0
  %v3244 = vmax.f32 %v3228, 0.0
  %v3245 = vmax.f32 %v3229, 0.0
  %v3246 = vmax.f32 %v3230, 0.0
  %v3247 = vmax.f32 %v3231, 0.0
  %v3248 = vmax.f32 %v3232, 0.0
  %v3249 = vmax.f32 %v3233, 0.0
  %v3250 = vmax.f32 %v3234, 0.0
  %v3251 = vmax.f32 %v3235, 0.0
  %v3252 = vmax.f32 %v3236, 0.0
  %v3253 = vmax.f32 %v3237, 0.0
  %v3254 = vmax.f32 %v3238, 0.0
  %v3255 = vmax.f32 %v3239, 0.0
  %v3256 = vmax.f32 %v3240, 0.0
  %v3257 = vmax.f32 %v3241, 0.0
  %v3258 = vpack.c.bf16 %v3243, %v3242
  %v3259 = vpack.c.bf16 %v3245, %v3244
  %v3260 = vpack.c.bf16 %v3247, %v3246
  %v3261 = vpack.c.bf16 %v3249, %v3248
  %v3262 = vpack.c.bf16 %v3251, %v3250
  %v3263 = vpack.c.bf16 %v3253, %v3252
  %v3264 = vpack.c.bf16 %v3255, %v3254
  %v3265 = vpack.c.bf16 %v3257, %v3256
  %3266 = vmatprep.subr.bf16.mxu0 0
  %3267 = vmatpush1.bf16.msra.mxu0 %v3258
  %3268 = vmatprep.subr.bf16.mxu0 0
  %3269 = vmatpush1.bf16.msra.mxu0 %v3259
  %3270 = vmatprep.subr.bf16.mxu0 0
  %3271 = vmatpush1.bf16.msra.mxu0 %v3260
  %3272 = vmatprep.subr.bf16.mxu0 0
  %3273 = vmatpush1.bf16.msra.mxu0 %v3261
  %3274 = vmatprep.subr.bf16.mxu0 0
  %3275 = vmatpush1.bf16.msra.mxu0 %v3262
  %3276 = vmatprep.subr.bf16.mxu0 0
  %3277 = vmatpush1.bf16.msra.mxu0 %v3263
  %3278 = vmatprep.subr.bf16.mxu0 0
  %3279 = vmatpush1.bf16.msra.mxu0 %v3264
  %3280 = vmatprep.subr.bf16.mxu0 0
  %3281 = vmatpush1.bf16.msra.mxu0 %v3265
  %3282 = vmatprep.subr.bf16.mxu0 0
  %3283 = vmatpush1.bf16.msra.mxu0 0
  %3284 = vmatprep.subr.bf16.mxu0 0
  %3285 = vmatpush1.bf16.msra.mxu0 0
  %3286 = vmatprep.subr.bf16.mxu0 0
  %3287 = vmatpush1.bf16.msra.mxu0 0
  %3288 = vmatprep.subr.bf16.mxu0 0
  %3289 = vmatpush1.bf16.msra.mxu0 0
  %3290 = vmatprep.subr.bf16.mxu0 0
  %3291 = vmatpush1.bf16.msra.mxu0 0
  %3292 = vmatprep.subr.bf16.mxu0 0
  %3293 = vmatpush1.bf16.msra.mxu0 0
  %3294 = vmatprep.subr.bf16.mxu0 0
  %3295 = vmatpush1.bf16.msra.mxu0 0
  %3296 = vmatprep.subr.bf16.mxu0 0
  %3297 = vmatpush1.bf16.msra.mxu0 0
  %3298 = vmatprep.mubr.bf16.mxu0 0
  %3299 = vmatmul.mubr.bf16.gmra.mrb[0].mxu0 %v121
  %v3300 = vpop.f32.mrb[0].mxu0
  %v3301 = vadd.f32 0.0, %v3300
  %v3302 = vpop.f32.mrb[0].mxu0
  %v3303 = vpop.f32.mrb[0].mxu0
  %v3304 = vadd.f32 0.0, %v3303
  %v3305 = vpop.f32.mrb[0].mxu0
  %3306 = vmatprep.mubr.bf16.mxu0 0
  %3307 = vmatmul.mubr.bf16.gmra.mrb[0].mxu0 %v122
  %v3308 = vpop.f32.mrb[0].mxu0
  %v3309 = vadd.f32 0.0, %v3308
  %v3310 = vpop.f32.mrb[0].mxu0
  %v3311 = vpop.f32.mrb[0].mxu0
  %v3312 = vadd.f32 0.0, %v3311
  %v3313 = vpop.f32.mrb[0].mxu0
  %3314 = vmatprep.mubr.bf16.mxu0 0
  %3315 = vmatmul.mubr.bf16.gmra.mrb[0].mxu0 %v123
  %v3316 = vpop.f32.mrb[0].mxu0
  %v3317 = vadd.f32 0.0, %v3316
  %v3318 = vpop.f32.mrb[0].mxu0
  %v3319 = vpop.f32.mrb[0].mxu0
  %v3320 = vadd.f32 0.0, %v3319
  %v3321 = vpop.f32.mrb[0].mxu0
  %3322 = vmatprep.mubr.bf16.mxu0 0
  %3323 = vmatmul.mubr.bf16.gmra.mrb[0].mxu0 %v124
  %v3324 = vpop.f32.mrb[0].mxu0
  %v3325 = vadd.f32 0.0, %v3324
  %v3326 = vpop.f32.mrb[0].mxu0
  %v3327 = vpop.f32.mrb[0].mxu0
  %v3328 = vadd.f32 0.0, %v3327
  %v3329 = vpop.f32.mrb[0].mxu0
  %3330 = vmatprep.mubr.bf16.mxu0 0
  %3331 = vmatmul.mubr.bf16.gmra.mrb[0].mxu0 %v125
  %v3332 = vpop.f32.mrb[0].mxu0
  %v3333 = vadd.f32 0.0, %v3332
  %v3334 = vpop.f32.mrb[0].mxu0
  %v3335 = vpop.f32.mrb[0].mxu0
  %v3336 = vadd.f32 0.0, %v3335
  %v3337 = vpop.f32.mrb[0].mxu0
  %3338 = vmatprep.mubr.bf16.mxu0 0
  %3339 = vmatmul.mubr.bf16.gmra.mrb[0].mxu0 %v126
  %v3340 = vpop.f32.mrb[0].mxu0
  %v3341 = vadd.f32 0.0, %v3340
  %v3342 = vpop.f32.mrb[0].mxu0
  %v3343 = vpop.f32.mrb[0].mxu0
  %v3344 = vadd.f32 0.0, %v3343
  %v3345 = vpop.f32.mrb[0].mxu0
  %3346 = vmatprep.mubr.bf16.mxu0 0
  %3347 = vmatmul.mubr.bf16.gmra.mrb[0].mxu0 %v127
  %v3348 = vpop.f32.mrb[0].mxu0
  %v3349 = vadd.f32 0.0, %v3348
  %v3350 = vpop.f32.mrb[0].mxu0
  %v3351 = vpop.f32.mrb[0].mxu0
  %v3352 = vadd.f32 0.0, %v3351
  %v3353 = vpop.f32.mrb[0].mxu0
  %3354 = vmatprep.mubr.bf16.mxu0 0
  %3355 = vmatmul.mubr.bf16.gmra.mrb[0].mxu0 %v128
  %v3356 = vpop.f32.mrb[0].mxu0
  %v3357 = vadd.f32 0.0, %v3356
  %v3358 = vpop.f32.mrb[0].mxu0
  %v3359 = vpop.f32.mrb[0].mxu0
  %v3360 = vadd.f32 0.0, %v3359
  %v3361 = vpop.f32.mrb[0].mxu0
  %3362 = vdwg.mxu0
  %v3363 = vpack.c.bf16 %v3304, %v3301
  %v3364 = vpack.c.bf16 %v3312, %v3309
  %v3365 = vpack.c.bf16 %v3320, %v3317
  %v3366 = vpack.c.bf16 %v3328, %v3325
  %v3367 = vpack.c.bf16 %v3336, %v3333
  %v3368 = vpack.c.bf16 %v3344, %v3341
  %v3369 = vpack.c.bf16 %v3352, %v3349
  %v3370 = vpack.c.bf16 %v3360, %v3357
  %v3371 = vld [vmem:[%s4] sm:$0xf]
  %v3372 = vld [vmem:[%s4 + $0x4] sm:$0xf]
  %v3373 = vld [vmem:[%s4 + $0x8] sm:$0xf]
  %v3374 = vld [vmem:[%s4 + $0xc] sm:$0xf]
  %v3375 = vld [vmem:[%s4 + $0x10] sm:$0xf]
  %v3376 = vld [vmem:[%s4 + $0x14] sm:$0xf]
  %v3377 = vld [vmem:[%s4 + $0x18] sm:$0xf]
  %v3378 = vld [vmem:[%s4 + $0x1c] sm:$0xf]
  %v3379 = vld [vmem:[%s4 + $0x20] sm:$0xf]
  %v3380 = vld [vmem:[%s4 + $0x24] sm:$0xf]
  %v3381 = vld [vmem:[%s4 + $0x28] sm:$0xf]
  %v3382 = vld [vmem:[%s4 + $0x2c] sm:$0xf]
  %v3383 = vld [vmem:[%s4 + $0x30] sm:$0xf]
  %v3384 = vld [vmem:[%s4 + $0x34] sm:$0xf]
  %v3385 = vld [vmem:[%s4 + $0x38] sm:$0xf]
  %v3386 = vld [vmem:[%s4 + $0x3c] sm:$0xf]
  %3387 = vmatprep.subr.bf16.mxu0 0
  %3388 = vmatpush1.bf16.msra.mxu0 %v3258
  %3389 = vmatprep.subr.bf16.mxu0 0
  %3390 = vmatpush1.bf16.msra.mxu0 %v3259
  %3391 = vmatprep.subr.bf16.mxu0 0
  %3392 = vmatpush1.bf16.msra.mxu0 %v3260
  %3393 = vmatprep.subr.bf16.mxu0 0
  %3394 = vmatpush1.bf16.msra.mxu0 %v3261
  %3395 = vmatprep.subr.bf16.mxu0 0
  %3396 = vmatpush1.bf16.msra.mxu0 %v3262
  %3397 = vmatprep.subr.bf16.mxu0 0
  %3398 = vmatpush1.bf16.msra.mxu0 %v3263
  %3399 = vmatprep.subr.bf16.mxu0 0
  %3400 = vmatpush1.bf16.msra.mxu0 %v3264
  %3401 = vmatprep.subr.bf16.mxu0 0
  %3402 = vmatpush1.bf16.msra.mxu0 %v3265
  %3403 = vmatprep.subr.bf16.mxu0 0
  %3404 = vmatpush1.bf16.msra.mxu0 0
  %3405 = vmatprep.subr.bf16.mxu0 0
  %3406 = vmatpush1.bf16.msra.mxu0 0
  %3407 = vmatprep.subr.bf16.mxu0 0
  %3408 = vmatpush1.bf16.msra.mxu0 0
  %3409 = vmatprep.subr.bf16.mxu0 0
  %3410 = vmatpush1.bf16.msra.mxu0 0
  %3411 = vmatprep.subr.bf16.mxu0 0
  %3412 = vmatpush1.bf16.msra.mxu0 0
  %3413 = vmatprep.subr.bf16.mxu0 0
  %3414 = vmatpush1.bf16.msra.mxu0 0
  %3415 = vmatprep.subr.bf16.mxu0 0
  %3416 = vmatpush1.bf16.msra.mxu0 0
  %3417 = vmatprep.subr.bf16.mxu0 0
  %3418 = vmatpush1.bf16.msra.mxu0 0
  %3419 = vmatprep.mubr.bf16.mxu0 0
  %3420 = vmatmul.mubr.bf16.gmra.mrb[0].mxu0 %v355
  %v3421 = vpop.f32.mrb[0].mxu0
  %v3422 = vadd.f32 0.0, %v3421
  %v3423 = vpop.f32.mrb[0].mxu0
  %v3424 = vpop.f32.mrb[0].mxu0
  %v3425 = vadd.f32 0.0, %v3424
  %v3426 = vpop.f32.mrb[0].mxu0
  %3427 = vmatprep.mubr.bf16.mxu0 0
  %3428 = vmatmul.mubr.bf16.gmra.mrb[0].mxu0 %v356
  %v3429 = vpop.f32.mrb[0].mxu0
  %v3430 = vadd.f32 0.0, %v3429
  %v3431 = vpop.f32.mrb[0].mxu0
  %v3432 = vpop.f32.mrb[0].mxu0
  %v3433 = vadd.f32 0.0, %v3432
  %v3434 = vpop.f32.mrb[0].mxu0
  %3435 = vmatprep.mubr.bf16.mxu0 0
  %3436 = vmatmul.mubr.bf16.gmra.mrb[0].mxu0 %v357
  %v3437 = vpop.f32.mrb[0].mxu0
  %v3438 = vadd.f32 0.0, %v3437
  %v3439 = vpop.f32.mrb[0].mxu0
  %v3440 = vpop.f32.mrb[0].mxu0
  %v3441 = vadd.f32 0.0, %v3440
  %v3442 = vpop.f32.mrb[0].mxu0
  %3443 = vmatprep.mubr.bf16.mxu0 0
  %3444 = vmatmul.mubr.bf16.gmra.mrb[0].mxu0 %v358
  %v3445 = vpop.f32.mrb[0].mxu0
  %v3446 = vadd.f32 0.0, %v3445
  %v3447 = vpop.f32.mrb[0].mxu0
  %v3448 = vpop.f32.mrb[0].mxu0
  %v3449 = vadd.f32 0.0, %v3448
  %v3450 = vpop.f32.mrb[0].mxu0
  %3451 = vmatprep.mubr.bf16.mxu0 0
  %3452 = vmatmul.mubr.bf16.gmra.mrb[0].mxu0 %v359
  %v3453 = vpop.f32.mrb[0].mxu0
  %v3454 = vadd.f32 0.0, %v3453
  %v3455 = vpop.f32.mrb[0].mxu0
  %v3456 = vpop.f32.mrb[0].mxu0
  %v3457 = vadd.f32 0.0, %v3456
  %v3458 = vpop.f32.mrb[0].mxu0
  %3459 = vmatprep.mubr.bf16.mxu0 0
  %3460 = vmatmul.mubr.bf16.gmra.mrb[0].mxu0 %v360
  %v3461 = vpop.f32.mrb[0].mxu0
  %v3462 = vadd.f32 0.0, %v3461
  %v3463 = vpop.f32.mrb[0].mxu0
  %v3464 = vpop.f32.mrb[0].mxu0
  %v3465 = vadd.f32 0.0, %v3464
  %v3466 = vpop.f32.mrb[0].mxu0
  %3467 = vmatprep.mubr.bf16.mxu0 0
  %3468 = vmatmul.mubr.bf16.gmra.mrb[0].mxu0 %v361
  %v3469 = vpop.f32.mrb[0].mxu0
  %v3470 = vadd.f32 0.0, %v3469
  %v3471 = vpop.f32.mrb[0].mxu0
  %v3472 = vpop.f32.mrb[0].mxu0
  %v3473 = vadd.f32 0.0, %v3472
  %v3474 = vpop.f32.mrb[0].mxu0
  %3475 = vmatprep.mubr.bf16.mxu0 0
  %3476 = vmatmul.mubr.bf16.gmra.mrb[0].mxu0 %v362
  %v3477 = vpop.f32.mrb[0].mxu0
  %v3478 = vadd.f32 0.0, %v3477
  %v3479 = vpop.f32.mrb[0].mxu0
  %v3480 = vpop.f32.mrb[0].mxu0
  %v3481 = vadd.f32 0.0, %v3480
  %v3482 = vpop.f32.mrb[0].mxu0
  %3483 = vdwg.mxu0
  %v3484 = vpack.c.bf16 %v3425, %v3422
  %v3485 = vpack.c.bf16 %v3433, %v3430
  %v3486 = vpack.c.bf16 %v3441, %v3438
  %v3487 = vpack.c.bf16 %v3449, %v3446
  %v3488 = vpack.c.bf16 %v3457, %v3454
  %v3489 = vpack.c.bf16 %v3465, %v3462
  %v3490 = vpack.c.bf16 %v3473, %v3470
  %v3491 = vpack.c.bf16 %v3481, %v3478
  %s3492 = scalar_lea.vmem %s4, 64
  %v3493 = vld [vmem:[%s3492] sm:$0xf]
  %v3494 = vld [vmem:[%s3492 + $0x4] sm:$0xf]
  %v3495 = vld [vmem:[%s3492 + $0x8] sm:$0xf]
  %v3496 = vld [vmem:[%s3492 + $0xc] sm:$0xf]
  %v3497 = vld [vmem:[%s3492 + $0x10] sm:$0xf]
  %v3498 = vld [vmem:[%s3492 + $0x14] sm:$0xf]
  %v3499 = vld [vmem:[%s3492 + $0x18] sm:$0xf]
  %v3500 = vld [vmem:[%s3492 + $0x1c] sm:$0xf]
  %v3501 = vld [vmem:[%s3492 + $0x20] sm:$0xf]
  %v3502 = vld [vmem:[%s3492 + $0x24] sm:$0xf]
  %v3503 = vld [vmem:[%s3492 + $0x28] sm:$0xf]
  %v3504 = vld [vmem:[%s3492 + $0x2c] sm:$0xf]
  %v3505 = vld [vmem:[%s3492 + $0x30] sm:$0xf]
  %v3506 = vld [vmem:[%s3492 + $0x34] sm:$0xf]
  %v3507 = vld [vmem:[%s3492 + $0x38] sm:$0xf]
  %v3508 = vld [vmem:[%s3492 + $0x3c] sm:$0xf]
  %v3525 = vunpack.c.l.b16 %v3493
  %v3526 = vunpack.c.l.b16 %v3494
  %v3527 = vunpack.c.l.b16 %v3495
  %v3528 = vunpack.c.l.b16 %v3496
  %v3529 = vunpack.c.l.b16 %v3497
  %v3530 = vunpack.c.l.b16 %v3498
  %v3531 = vunpack.c.l.b16 %v3499
  %v3532 = vunpack.c.l.b16 %v3500
  %v3533 = vunpack.c.l.b16 %v3501
  %v3534 = vunpack.c.l.b16 %v3502
  %v3535 = vunpack.c.l.b16 %v3503
  %v3536 = vunpack.c.l.b16 %v3504
  %v3537 = vunpack.c.l.b16 %v3505
  %v3538 = vunpack.c.l.b16 %v3506
  %v3539 = vunpack.c.l.b16 %v3507
  %v3540 = vunpack.c.l.b16 %v3508
  %v3541 = vpack.c.b16 %v3526, %v3525
  %v3542 = vpack.c.b16 %v3528, %v3527
  %v3543 = vpack.c.b16 %v3530, %v3529
  %v3544 = vpack.c.b16 %v3532, %v3531
  %v3545 = vpack.c.b16 %v3534, %v3533
  %v3546 = vpack.c.b16 %v3536, %v3535
  %v3547 = vpack.c.b16 %v3538, %v3537
  %v3548 = vpack.c.b16 %v3540, %v3539
  %3557 = vmatprep.subr.bf16.mxu0 0
  %3558 = vmatpush1.bf16.msra.mxu0 %v3541
  %3559 = vmatprep.subr.bf16.mxu0 0
  %3560 = vmatpush1.bf16.msra.mxu0 %v3542
  %3561 = vmatprep.subr.bf16.mxu0 0
  %3562 = vmatpush1.bf16.msra.mxu0 %v3543
  %3563 = vmatprep.subr.bf16.mxu0 0
  %3564 = vmatpush1.bf16.msra.mxu0 %v3544
  %3565 = vmatprep.subr.bf16.mxu0 0
  %3566 = vmatpush1.bf16.msra.mxu0 %v3545
  %3567 = vmatprep.subr.bf16.mxu0 0
  %3568 = vmatpush1.bf16.msra.mxu0 %v3546
  %3569 = vmatprep.subr.bf16.mxu0 0
  %3570 = vmatpush1.bf16.msra.mxu0 %v3547
  %3571 = vmatprep.subr.bf16.mxu0 0
  %3572 = vmatpush1.bf16.msra.mxu0 %v3548
  %3573 = vmatprep.subr.bf16.mxu0 0
  %3574 = vmatpush1.bf16.msra.mxu0 0
  %3575 = vmatprep.subr.bf16.mxu0 0
  %3576 = vmatpush1.bf16.msra.mxu0 0
  %3577 = vmatprep.subr.bf16.mxu0 0
  %3578 = vmatpush1.bf16.msra.mxu0 0
  %3579 = vmatprep.subr.bf16.mxu0 0
  %3580 = vmatpush1.bf16.msra.mxu0 0
  %3581 = vmatprep.subr.bf16.mxu0 0
  %3582 = vmatpush1.bf16.msra.mxu0 0
  %3583 = vmatprep.subr.bf16.mxu0 0
  %3584 = vmatpush1.bf16.msra.mxu0 0
  %3585 = vmatprep.subr.bf16.mxu0 0
  %3586 = vmatpush1.bf16.msra.mxu0 0
  %3587 = vmatprep.subr.bf16.mxu0 0
  %3588 = vmatpush1.bf16.msra.mxu0 0
  %3589 = vmatprep.mubr.bf16.mxu0 0
  %3590 = vmatmul.mubr.bf16.gmra.mrb[0].mxu0 %v3484
  %v3591 = vpop.f32.mrb[0].mxu0
  %v3592 = vadd.f32 0.0, %v3591
  %v3593 = vpop.f32.mrb[0].mxu0
  %v3594 = vpop.f32.mrb[0].mxu0
  %v3595 = vadd.f32 0.0, %v3594
  %v3596 = vpop.f32.mrb[0].mxu0
  %3597 = vmatprep.mubr.bf16.mxu0 0
  %3598 = vmatmul.mubr.bf16.gmra.mrb[0].mxu0 %v3485
  %v3599 = vpop.f32.mrb[0].mxu0
  %v3600 = vadd.f32 0.0, %v3599
  %v3601 = vpop.f32.mrb[0].mxu0
  %v3602 = vpop.f32.mrb[0].mxu0
  %v3603 = vadd.f32 0.0, %v3602
  %v3604 = vpop.f32.mrb[0].mxu0
  %3605 = vmatprep.mubr.bf16.mxu0 0
  %3606 = vmatmul.mubr.bf16.gmra.mrb[0].mxu0 %v3486
  %v3607 = vpop.f32.mrb[0].mxu0
  %v3608 = vadd.f32 0.0, %v3607
  %v3609 = vpop.f32.mrb[0].mxu0
  %v3610 = vpop.f32.mrb[0].mxu0
  %v3611 = vadd.f32 0.0, %v3610
  %v3612 = vpop.f32.mrb[0].mxu0
  %3613 = vmatprep.mubr.bf16.mxu0 0
  %3614 = vmatmul.mubr.bf16.gmra.mrb[0].mxu0 %v3487
  %v3615 = vpop.f32.mrb[0].mxu0
  %v3616 = vadd.f32 0.0, %v3615
  %v3617 = vpop.f32.mrb[0].mxu0
  %v3618 = vpop.f32.mrb[0].mxu0
  %v3619 = vadd.f32 0.0, %v3618
  %v3620 = vpop.f32.mrb[0].mxu0
  %3621 = vmatprep.mubr.bf16.mxu0 0
  %3622 = vmatmul.mubr.bf16.gmra.mrb[0].mxu0 %v3488
  %v3623 = vpop.f32.mrb[0].mxu0
  %v3624 = vadd.f32 0.0, %v3623
  %v3625 = vpop.f32.mrb[0].mxu0
  %v3626 = vpop.f32.mrb[0].mxu0
  %v3627 = vadd.f32 0.0, %v3626
  %v3628 = vpop.f32.mrb[0].mxu0
  %3629 = vmatprep.mubr.bf16.mxu0 0
  %3630 = vmatmul.mubr.bf16.gmra.mrb[0].mxu0 %v3489
  %v3631 = vpop.f32.mrb[0].mxu0
  %v3632 = vadd.f32 0.0, %v3631
  %v3633 = vpop.f32.mrb[0].mxu0
  %v3634 = vpop.f32.mrb[0].mxu0
  %v3635 = vadd.f32 0.0, %v3634
  %v3636 = vpop.f32.mrb[0].mxu0
  %3637 = vmatprep.mubr.bf16.mxu0 0
  %3638 = vmatmul.mubr.bf16.gmra.mrb[0].mxu0 %v3490
  %v3639 = vpop.f32.mrb[0].mxu0
  %v3640 = vadd.f32 0.0, %v3639
  %v3641 = vpop.f32.mrb[0].mxu0
  %v3642 = vpop.f32.mrb[0].mxu0
  %v3643 = vadd.f32 0.0, %v3642
  %v3644 = vpop.f32.mrb[0].mxu0
  %3645 = vmatprep.mubr.bf16.mxu0 0
  %3646 = vmatmul.mubr.bf16.gmra.mrb[0].mxu0 %v3491
  %v3647 = vpop.f32.mrb[0].mxu0
  %v3648 = vadd.f32 0.0, %v3647
  %v3649 = vpop.f32.mrb[0].mxu0
  %v3650 = vpop.f32.mrb[0].mxu0
  %v3651 = vadd.f32 0.0, %v3650
  %v3652 = vpop.f32.mrb[0].mxu0
  %3653 = vdwg.mxu0
  %v3670 = vunpack.c.l.b16 %v3371
  %v3671 = vunpack.c.l.b16 %v3372
  %v3672 = vunpack.c.l.b16 %v3373
  %v3673 = vunpack.c.l.b16 %v3374
  %v3674 = vunpack.c.l.b16 %v3375
  %v3675 = vunpack.c.l.b16 %v3376
  %v3676 = vunpack.c.l.b16 %v3377
  %v3677 = vunpack.c.l.b16 %v3378
  %v3678 = vunpack.c.l.b16 %v3379
  %v3679 = vunpack.c.l.b16 %v3380
  %v3680 = vunpack.c.l.b16 %v3381
  %v3681 = vunpack.c.l.b16 %v3382
  %v3682 = vunpack.c.l.b16 %v3383
  %v3683 = vunpack.c.l.b16 %v3384
  %v3684 = vunpack.c.l.b16 %v3385
  %v3685 = vunpack.c.l.b16 %v3386
  %v3686 = vpack.c.b16 %v3671, %v3670
  %v3687 = vpack.c.b16 %v3673, %v3672
  %v3688 = vpack.c.b16 %v3675, %v3674
  %v3689 = vpack.c.b16 %v3677, %v3676
  %v3690 = vpack.c.b16 %v3679, %v3678
  %v3691 = vpack.c.b16 %v3681, %v3680
  %v3692 = vpack.c.b16 %v3683, %v3682
  %v3693 = vpack.c.b16 %v3685, %v3684
  %3702 = vmatprep.subr.bf16.mxu0 0
  %3703 = vmatpush1.bf16.msra.mxu0 %v3686
  %3704 = vmatprep.subr.bf16.mxu0 0
  %3705 = vmatpush1.bf16.msra.mxu0 %v3687
  %3706 = vmatprep.subr.bf16.mxu0 0
  %3707 = vmatpush1.bf16.msra.mxu0 %v3688
  %3708 = vmatprep.subr.bf16.mxu0 0
  %3709 = vmatpush1.bf16.msra.mxu0 %v3689
  %3710 = vmatprep.subr.bf16.mxu0 0
  %3711 = vmatpush1.bf16.msra.mxu0 %v3690
  %3712 = vmatprep.subr.bf16.mxu0 0
  %3713 = vmatpush1.bf16.msra.mxu0 %v3691
  %3714 = vmatprep.subr.bf16.mxu0 0
  %3715 = vmatpush1.bf16.msra.mxu0 %v3692
  %3716 = vmatprep.subr.bf16.mxu0 0
  %3717 = vmatpush1.bf16.msra.mxu0 %v3693
  %3718 = vmatprep.subr.bf16.mxu0 0
  %3719 = vmatpush1.bf16.msra.mxu0 0
  %3720 = vmatprep.subr.bf16.mxu0 0
  %3721 = vmatpush1.bf16.msra.mxu0 0
  %3722 = vmatprep.subr.bf16.mxu0 0
  %3723 = vmatpush1.bf16.msra.mxu0 0
  %3724 = vmatprep.subr.bf16.mxu0 0
  %3725 = vmatpush1.bf16.msra.mxu0 0
  %3726 = vmatprep.subr.bf16.mxu0 0
  %3727 = vmatpush1.bf16.msra.mxu0 0
  %3728 = vmatprep.subr.bf16.mxu0 0
  %3729 = vmatpush1.bf16.msra.mxu0 0
  %3730 = vmatprep.subr.bf16.mxu0 0
  %3731 = vmatpush1.bf16.msra.mxu0 0
  %3732 = vmatprep.subr.bf16.mxu0 0
  %3733 = vmatpush1.bf16.msra.mxu0 0
  %3734 = vmatprep.mubr.bf16.mxu0 0
  %3735 = vmatmul.mubr.bf16.gmra.mrb[0].mxu0 %v3363
  %v3736 = vpop.f32.mrb[0].mxu0
  %v3737 = vadd.f32 %v3592, %v3736
  %v3738 = vpop.f32.mrb[0].mxu0
  %v3739 = vpop.f32.mrb[0].mxu0
  %v3740 = vadd.f32 %v3595, %v3739
  %v3741 = vpop.f32.mrb[0].mxu0
  %3742 = vmatprep.mubr.bf16.mxu0 0
  %3743 = vmatmul.mubr.bf16.gmra.mrb[0].mxu0 %v3364
  %v3744 = vpop.f32.mrb[0].mxu0
  %v3745 = vadd.f32 %v3600, %v3744
  %v3746 = vpop.f32.mrb[0].mxu0
  %v3747 = vpop.f32.mrb[0].mxu0
  %v3748 = vadd.f32 %v3603, %v3747
  %v3749 = vpop.f32.mrb[0].mxu0
  %3750 = vmatprep.mubr.bf16.mxu0 0
  %3751 = vmatmul.mubr.bf16.gmra.mrb[0].mxu0 %v3365
  %v3752 = vpop.f32.mrb[0].mxu0
  %v3753 = vadd.f32 %v3608, %v3752
  %v3754 = vpop.f32.mrb[0].mxu0
  %v3755 = vpop.f32.mrb[0].mxu0
  %v3756 = vadd.f32 %v3611, %v3755
  %v3757 = vpop.f32.mrb[0].mxu0
  %3758 = vmatprep.mubr.bf16.mxu0 0
  %3759 = vmatmul.mubr.bf16.gmra.mrb[0].mxu0 %v3366
  %v3760 = vpop.f32.mrb[0].mxu0
  %v3761 = vadd.f32 %v3616, %v3760
  %v3762 = vpop.f32.mrb[0].mxu0
  %v3763 = vpop.f32.mrb[0].mxu0
  %v3764 = vadd.f32 %v3619, %v3763
  %v3765 = vpop.f32.mrb[0].mxu0
  %3766 = vmatprep.mubr.bf16.mxu0 0
  %3767 = vmatmul.mubr.bf16.gmra.mrb[0].mxu0 %v3367
  %v3768 = vpop.f32.mrb[0].mxu0
  %v3769 = vadd.f32 %v3624, %v3768
  %v3770 = vpop.f32.mrb[0].mxu0
  %v3771 = vpop.f32.mrb[0].mxu0
  %v3772 = vadd.f32 %v3627, %v3771
  %v3773 = vpop.f32.mrb[0].mxu0
  %3774 = vmatprep.mubr.bf16.mxu0 0
  %3775 = vmatmul.mubr.bf16.gmra.mrb[0].mxu0 %v3368
  %v3776 = vpop.f32.mrb[0].mxu0
  %v3777 = vadd.f32 %v3632, %v3776
  %v3778 = vpop.f32.mrb[0].mxu0
  %v3779 = vpop.f32.mrb[0].mxu0
  %v3780 = vadd.f32 %v3635, %v3779
  %v3781 = vpop.f32.mrb[0].mxu0
  %3782 = vmatprep.mubr.bf16.mxu0 0
  %3783 = vmatmul.mubr.bf16.gmra.mrb[0].mxu0 %v3369
  %v3784 = vpop.f32.mrb[0].mxu0
  %v3785 = vadd.f32 %v3640, %v3784
  %v3786 = vpop.f32.mrb[0].mxu0
  %v3787 = vpop.f32.mrb[0].mxu0
  %v3788 = vadd.f32 %v3643, %v3787
  %v3789 = vpop.f32.mrb[0].mxu0
  %3790 = vmatprep.mubr.bf16.mxu0 0
  %3791 = vmatmul.mubr.bf16.gmra.mrb[0].mxu0 %v3370
  %v3792 = vpop.f32.mrb[0].mxu0
  %v3793 = vadd.f32 %v3648, %v3792
  %v3794 = vpop.f32.mrb[0].mxu0
  %v3795 = vpop.f32.mrb[0].mxu0
  %v3796 = vadd.f32 %v3651, %v3795
  %v3797 = vpop.f32.mrb[0].mxu0
  %3798 = vdwg.mxu0
  %3799 = vmatprep.subr.bf16.mxu0 0
  %3800 = vmatpush1.bf16.msra.mxu0 %v3258
  %3801 = vmatprep.subr.bf16.mxu0 0
  %3802 = vmatpush1.bf16.msra.mxu0 %v3259
  %3803 = vmatprep.subr.bf16.mxu0 0
  %3804 = vmatpush1.bf16.msra.mxu0 %v3260
  %3805 = vmatprep.subr.bf16.mxu0 0
  %3806 = vmatpush1.bf16.msra.mxu0 %v3261
  %3807 = vmatprep.subr.bf16.mxu0 0
  %3808 = vmatpush1.bf16.msra.mxu0 %v3262
  %3809 = vmatprep.subr.bf16.mxu0 0
  %3810 = vmatpush1.bf16.msra.mxu0 %v3263
  %3811 = vmatprep.subr.bf16.mxu0 0
  %3812 = vmatpush1.bf16.msra.mxu0 %v3264
  %3813 = vmatprep.subr.bf16.mxu0 0
  %3814 = vmatpush1.bf16.msra.mxu0 %v3265
  %3815 = vmatprep.subr.bf16.mxu0 0
  %3816 = vmatpush1.bf16.msra.mxu0 0
  %3817 = vmatprep.subr.bf16.mxu0 0
  %3818 = vmatpush1.bf16.msra.mxu0 0
  %3819 = vmatprep.subr.bf16.mxu0 0
  %3820 = vmatpush1.bf16.msra.mxu0 0
  %3821 = vmatprep.subr.bf16.mxu0 0
  %3822 = vmatpush1.bf16.msra.mxu0 0
  %3823 = vmatprep.subr.bf16.mxu0 0
  %3824 = vmatpush1.bf16.msra.mxu0 0
  %3825 = vmatprep.subr.bf16.mxu0 0
  %3826 = vmatpush1.bf16.msra.mxu0 0
  %3827 = vmatprep.subr.bf16.mxu0 0
  %3828 = vmatpush1.bf16.msra.mxu0 0
  %3829 = vmatprep.subr.bf16.mxu0 0
  %3830 = vmatpush1.bf16.msra.mxu0 0
  %3831 = vmatprep.mubr.bf16.mxu0 0
  %3832 = vmatmul.mubr.bf16.gmra.mrb[0].mxu0 %v832
  %v3833 = vpop.f32.mrb[0].mxu0
  %v3834 = vadd.f32 0.0, %v3833
  %v3835 = vpop.f32.mrb[0].mxu0
  %v3836 = vpop.f32.mrb[0].mxu0
  %v3837 = vadd.f32 0.0, %v3836
  %v3838 = vpop.f32.mrb[0].mxu0
  %3839 = vmatprep.mubr.bf16.mxu0 0
  %3840 = vmatmul.mubr.bf16.gmra.mrb[0].mxu0 %v833
  %v3841 = vpop.f32.mrb[0].mxu0
  %v3842 = vadd.f32 0.0, %v3841
  %v3843 = vpop.f32.mrb[0].mxu0
  %v3844 = vpop.f32.mrb[0].mxu0
  %v3845 = vadd.f32 0.0, %v3844
  %v3846 = vpop.f32.mrb[0].mxu0
  %3847 = vmatprep.mubr.bf16.mxu0 0
  %3848 = vmatmul.mubr.bf16.gmra.mrb[0].mxu0 %v834
  %v3849 = vpop.f32.mrb[0].mxu0
  %v3850 = vadd.f32 0.0, %v3849
  %v3851 = vpop.f32.mrb[0].mxu0
  %v3852 = vpop.f32.mrb[0].mxu0
  %v3853 = vadd.f32 0.0, %v3852
  %v3854 = vpop.f32.mrb[0].mxu0
  %3855 = vmatprep.mubr.bf16.mxu0 0
  %3856 = vmatmul.mubr.bf16.gmra.mrb[0].mxu0 %v835
  %v3857 = vpop.f32.mrb[0].mxu0
  %v3858 = vadd.f32 0.0, %v3857
  %v3859 = vpop.f32.mrb[0].mxu0
  %v3860 = vpop.f32.mrb[0].mxu0
  %v3861 = vadd.f32 0.0, %v3860
  %v3862 = vpop.f32.mrb[0].mxu0
  %3863 = vmatprep.mubr.bf16.mxu0 0
  %3864 = vmatmul.mubr.bf16.gmra.mrb[0].mxu0 %v836
  %v3865 = vpop.f32.mrb[0].mxu0
  %v3866 = vadd.f32 0.0, %v3865
  %v3867 = vpop.f32.mrb[0].mxu0
  %v3868 = vpop.f32.mrb[0].mxu0
  %v3869 = vadd.f32 0.0, %v3868
  %v3870 = vpop.f32.mrb[0].mxu0
  %3871 = vmatprep.mubr.bf16.mxu0 0
  %3872 = vmatmul.mubr.bf16.gmra.mrb[0].mxu0 %v837
  %v3873 = vpop.f32.mrb[0].mxu0
  %v3874 = vadd.f32 0.0, %v3873
  %v3875 = vpop.f32.mrb[0].mxu0
  %v3876 = vpop.f32.mrb[0].mxu0
  %v3877 = vadd.f32 0.0, %v3876
  %v3878 = vpop.f32.mrb[0].mxu0
  %3879 = vmatprep.mubr.bf16.mxu0 0
  %3880 = vmatmul.mubr.bf16.gmra.mrb[0].mxu0 %v838
  %v3881 = vpop.f32.mrb[0].mxu0
  %v3882 = vadd.f32 0.0, %v3881
  %v3883 = vpop.f32.mrb[0].mxu0
  %v3884 = vpop.f32.mrb[0].mxu0
  %v3885 = vadd.f32 0.0, %v3884
  %v3886 = vpop.f32.mrb[0].mxu0
  %3887 = vmatprep.mubr.bf16.mxu0 0
  %3888 = vmatmul.mubr.bf16.gmra.mrb[0].mxu0 %v839
  %v3889 = vpop.f32.mrb[0].mxu0
  %v3890 = vadd.f32 0.0, %v3889
  %v3891 = vpop.f32.mrb[0].mxu0
  %v3892 = vpop.f32.mrb[0].mxu0
  %v3893 = vadd.f32 0.0, %v3892
  %v3894 = vpop.f32.mrb[0].mxu0
  %3895 = vdwg.mxu0
  %v3896 = vpack.c.bf16 %v3837, %v3834
  %v3897 = vpack.c.bf16 %v3845, %v3842
  %v3898 = vpack.c.bf16 %v3853, %v3850
  %v3899 = vpack.c.bf16 %v3861, %v3858
  %v3900 = vpack.c.bf16 %v3869, %v3866
  %v3901 = vpack.c.bf16 %v3877, %v3874
  %v3902 = vpack.c.bf16 %v3885, %v3882
  %v3903 = vpack.c.bf16 %v3893, %v3890
  %s3904 = scalar_lea.vmem %s4, 128
  %v3905 = vld [vmem:[%s3904] sm:$0xf]
  %v3906 = vld [vmem:[%s3904 + $0x4] sm:$0xf]
  %v3907 = vld [vmem:[%s3904 + $0x8] sm:$0xf]
  %v3908 = vld [vmem:[%s3904 + $0xc] sm:$0xf]
  %v3909 = vld [vmem:[%s3904 + $0x10] sm:$0xf]
  %v3910 = vld [vmem:[%s3904 + $0x14] sm:$0xf]
  %v3911 = vld [vmem:[%s3904 + $0x18] sm:$0xf]
  %v3912 = vld [vmem:[%s3904 + $0x1c] sm:$0xf]
  %v3913 = vld [vmem:[%s3904 + $0x20] sm:$0xf]
  %v3914 = vld [vmem:[%s3904 + $0x24] sm:$0xf]
  %v3915 = vld [vmem:[%s3904 + $0x28] sm:$0xf]
  %v3916 = vld [vmem:[%s3904 + $0x2c] sm:$0xf]
  %v3917 = vld [vmem:[%s3904 + $0x30] sm:$0xf]
  %v3918 = vld [vmem:[%s3904 + $0x34] sm:$0xf]
  %v3919 = vld [vmem:[%s3904 + $0x38] sm:$0xf]
  %v3920 = vld [vmem:[%s3904 + $0x3c] sm:$0xf]
  %v3937 = vunpack.c.l.b16 %v3905
  %v3938 = vunpack.c.l.b16 %v3906
  %v3939 = vunpack.c.l.b16 %v3907
  %v3940 = vunpack.c.l.b16 %v3908
  %v3941 = vunpack.c.l.b16 %v3909
  %v3942 = vunpack.c.l.b16 %v3910
  %v3943 = vunpack.c.l.b16 %v3911
  %v3944 = vunpack.c.l.b16 %v3912
  %v3945 = vunpack.c.l.b16 %v3913
  %v3946 = vunpack.c.l.b16 %v3914
  %v3947 = vunpack.c.l.b16 %v3915
  %v3948 = vunpack.c.l.b16 %v3916
  %v3949 = vunpack.c.l.b16 %v3917
  %v3950 = vunpack.c.l.b16 %v3918
  %v3951 = vunpack.c.l.b16 %v3919
  %v3952 = vunpack.c.l.b16 %v3920
  %v3953 = vpack.c.b16 %v3938, %v3937
  %v3954 = vpack.c.b16 %v3940, %v3939
  %v3955 = vpack.c.b16 %v3942, %v3941
  %v3956 = vpack.c.b16 %v3944, %v3943
  %v3957 = vpack.c.b16 %v3946, %v3945
  %v3958 = vpack.c.b16 %v3948, %v3947
  %v3959 = vpack.c.b16 %v3950, %v3949
  %v3960 = vpack.c.b16 %v3952, %v3951
  %3969 = vmatprep.subr.bf16.mxu0 0
  %3970 = vmatpush1.bf16.msra.mxu0 %v3953
  %3971 = vmatprep.subr.bf16.mxu0 0
  %3972 = vmatpush1.bf16.msra.mxu0 %v3954
  %3973 = vmatprep.subr.bf16.mxu0 0
  %3974 = vmatpush1.bf16.msra.mxu0 %v3955
  %3975 = vmatprep.subr.bf16.mxu0 0
  %3976 = vmatpush1.bf16.msra.mxu0 %v3956
  %3977 = vmatprep.subr.bf16.mxu0 0
  %3978 = vmatpush1.bf16.msra.mxu0 %v3957
  %3979 = vmatprep.subr.bf16.mxu0 0
  %3980 = vmatpush1.bf16.msra.mxu0 %v3958
  %3981 = vmatprep.subr.bf16.mxu0 0
  %3982 = vmatpush1.bf16.msra.mxu0 %v3959
  %3983 = vmatprep.subr.bf16.mxu0 0
  %3984 = vmatpush1.bf16.msra.mxu0 %v3960
  %3985 = vmatprep.subr.bf16.mxu0 0
  %3986 = vmatpush1.bf16.msra.mxu0 0
  %3987 = vmatprep.subr.bf16.mxu0 0
  %3988 = vmatpush1.bf16.msra.mxu0 0
  %3989 = vmatprep.subr.bf16.mxu0 0
  %3990 = vmatpush1.bf16.msra.mxu0 0
  %3991 = vmatprep.subr.bf16.mxu0 0
  %3992 = vmatpush1.bf16.msra.mxu0 0
  %3993 = vmatprep.subr.bf16.mxu0 0
  %3994 = vmatpush1.bf16.msra.mxu0 0
  %3995 = vmatprep.subr.bf16.mxu0 0
  %3996 = vmatpush1.bf16.msra.mxu0 0
  %3997 = vmatprep.subr.bf16.mxu0 0
  %3998 = vmatpush1.bf16.msra.mxu0 0
  %3999 = vmatprep.subr.bf16.mxu0 0
  %4000 = vmatpush1.bf16.msra.mxu0 0
  %4001 = vmatprep.mubr.bf16.mxu0 0
  %4002 = vmatmul.mubr.bf16.gmra.mrb[0].mxu0 %v3896
  %v4003 = vpop.f32.mrb[0].mxu0
  %v4004 = vadd.f32 0.0, %v4003
  %v4005 = vpop.f32.mrb[0].mxu0
  %v4006 = vpop.f32.mrb[0].mxu0
  %v4007 = vadd.f32 0.0, %v4006
  %v4008 = vpop.f32.mrb[0].mxu0
  %4009 = vmatprep.mubr.bf16.mxu0 0
  %4010 = vmatmul.mubr.bf16.gmra.mrb[0].mxu0 %v3897
  %v4011 = vpop.f32.mrb[0].mxu0
  %v4012 = vadd.f32 0.0, %v4011
  %v4013 = vpop.f32.mrb[0].mxu0
  %v4014 = vpop.f32.mrb[0].mxu0
  %v4015 = vadd.f32 0.0, %v4014
  %v4016 = vpop.f32.mrb[0].mxu0
  %4017 = vmatprep.mubr.bf16.mxu0 0
  %4018 = vmatmul.mubr.bf16.gmra.mrb[0].mxu0 %v3898
  %v4019 = vpop.f32.mrb[0].mxu0
  %v4020 = vadd.f32 0.0, %v4019
  %v4021 = vpop.f32.mrb[0].mxu0
  %v4022 = vpop.f32.mrb[0].mxu0
  %v4023 = vadd.f32 0.0, %v4022
  %v4024 = vpop.f32.mrb[0].mxu0
  %4025 = vmatprep.mubr.bf16.mxu0 0
  %4026 = vmatmul.mubr.bf16.gmra.mrb[0].mxu0 %v3899
  %v4027 = vpop.f32.mrb[0].mxu0
  %v4028 = vadd.f32 0.0, %v4027
  %v4029 = vpop.f32.mrb[0].mxu0
  %v4030 = vpop.f32.mrb[0].mxu0
  %v4031 = vadd.f32 0.0, %v4030
  %v4032 = vpop.f32.mrb[0].mxu0
  %4033 = vmatprep.mubr.bf16.mxu0 0
  %4034 = vmatmul.mubr.bf16.gmra.mrb[0].mxu0 %v3900
  %v4035 = vpop.f32.mrb[0].mxu0
  %v4036 = vadd.f32 0.0, %v4035
  %v4037 = vpop.f32.mrb[0].mxu0
  %v4038 = vpop.f32.mrb[0].mxu0
  %v4039 = vadd.f32 0.0, %v4038
  %v4040 = vpop.f32.mrb[0].mxu0
  %4041 = vmatprep.mubr.bf16.mxu0 0
  %4042 = vmatmul.mubr.bf16.gmra.mrb[0].mxu0 %v3901
  %v4043 = vpop.f32.mrb[0].mxu0
  %v4044 = vadd.f32 0.0, %v4043
  %v4045 = vpop.f32.mrb[0].mxu0
  %v4046 = vpop.f32.mrb[0].mxu0
  %v4047 = vadd.f32 0.0, %v4046
  %v4048 = vpop.f32.mrb[0].mxu0
  %4049 = vmatprep.mubr.bf16.mxu0 0
  %4050 = vmatmul.mubr.bf16.gmra.mrb[0].mxu0 %v3902
  %v4051 = vpop.f32.mrb[0].mxu0
  %v4052 = vadd.f32 0.0, %v4051
  %v4053 = vpop.f32.mrb[0].mxu0
  %v4054 = vpop.f32.mrb[0].mxu0
  %v4055 = vadd.f32 0.0, %v4054
  %v4056 = vpop.f32.mrb[0].mxu0
  %4057 = vmatprep.mubr.bf16.mxu0 0
  %4058 = vmatmul.mubr.bf16.gmra.mrb[0].mxu0 %v3903
  %v4059 = vpop.f32.mrb[0].mxu0
  %v4060 = vadd.f32 0.0, %v4059
  %v4061 = vpop.f32.mrb[0].mxu0
  %v4062 = vpop.f32.mrb[0].mxu0
  %v4063 = vadd.f32 0.0, %v4062
  %v4064 = vpop.f32.mrb[0].mxu0
  %4065 = vdwg.mxu0
  %v4066 = vadd.f32 %v3737, %v4004
  %v4067 = vadd.f32 %v3740, %v4007
  %v4068 = vadd.f32 %v3745, %v4012
  %v4069 = vadd.f32 %v3748, %v4015
  %v4070 = vadd.f32 %v3753, %v4020
  %v4071 = vadd.f32 %v3756, %v4023
  %v4072 = vadd.f32 %v3761, %v4028
  %v4073 = vadd.f32 %v3764, %v4031
  %v4074 = vadd.f32 %v3769, %v4036
  %v4075 = vadd.f32 %v3772, %v4039
  %v4076 = vadd.f32 %v3777, %v4044
  %v4077 = vadd.f32 %v3780, %v4047
  %v4078 = vadd.f32 %v3785, %v4052
  %v4079 = vadd.f32 %v3788, %v4055
  %v4080 = vadd.f32 %v3793, %v4060
  %v4081 = vadd.f32 %v3796, %v4063
  %4082 = vmatprep.subr.bf16.mxu0 0
  %4083 = vmatpush1.bf16.msra.mxu0 %v3258
  %4084 = vmatprep.subr.bf16.mxu0 0
  %4085 = vmatpush1.bf16.msra.mxu0 %v3259
  %4086 = vmatprep.subr.bf16.mxu0 0
  %4087 = vmatpush1.bf16.msra.mxu0 %v3260
  %4088 = vmatprep.subr.bf16.mxu0 0
  %4089 = vmatpush1.bf16.msra.mxu0 %v3261
  %4090 = vmatprep.subr.bf16.mxu0 0
  %4091 = vmatpush1.bf16.msra.mxu0 %v3262
  %4092 = vmatprep.subr.bf16.mxu0 0
  %4093 = vmatpush1.bf16.msra.mxu0 %v3263
  %4094 = vmatprep.subr.bf16.mxu0 0
  %4095 = vmatpush1.bf16.msra.mxu0 %v3264
  %4096 = vmatprep.subr.bf16.mxu0 0
  %4097 = vmatpush1.bf16.msra.mxu0 %v3265
  %4098 = vmatprep.subr.bf16.mxu0 0
  %4099 = vmatpush1.bf16.msra.mxu0 0
  %4100 = vmatprep.subr.bf16.mxu0 0
  %4101 = vmatpush1.bf16.msra.mxu0 0
  %4102 = vmatprep.subr.bf16.mxu0 0
  %4103 = vmatpush1.bf16.msra.mxu0 0
  %4104 = vmatprep.subr.bf16.mxu0 0
  %4105 = vmatpush1.bf16.msra.mxu0 0
  %4106 = vmatprep.subr.bf16.mxu0 0
  %4107 = vmatpush1.bf16.msra.mxu0 0
  %4108 = vmatprep.subr.bf16.mxu0 0
  %4109 = vmatpush1.bf16.msra.mxu0 0
  %4110 = vmatprep.subr.bf16.mxu0 0
  %4111 = vmatpush1.bf16.msra.mxu0 0
  %4112 = vmatprep.subr.bf16.mxu0 0
  %4113 = vmatpush1.bf16.msra.mxu0 0
  %4114 = vmatprep.mubr.bf16.mxu0 0
  %4115 = vmatmul.mubr.bf16.gmra.mrb[0].mxu0 %v1180
  %v4116 = vpop.f32.mrb[0].mxu0
  %v4117 = vadd.f32 0.0, %v4116
  %v4118 = vpop.f32.mrb[0].mxu0
  %v4119 = vpop.f32.mrb[0].mxu0
  %v4120 = vadd.f32 0.0, %v4119
  %v4121 = vpop.f32.mrb[0].mxu0
  %4122 = vmatprep.mubr.bf16.mxu0 0
  %4123 = vmatmul.mubr.bf16.gmra.mrb[0].mxu0 %v1181
  %v4124 = vpop.f32.mrb[0].mxu0
  %v4125 = vadd.f32 0.0, %v4124
  %v4126 = vpop.f32.mrb[0].mxu0
  %v4127 = vpop.f32.mrb[0].mxu0
  %v4128 = vadd.f32 0.0, %v4127
  %v4129 = vpop.f32.mrb[0].mxu0
  %4130 = vmatprep.mubr.bf16.mxu0 0
  %4131 = vmatmul.mubr.bf16.gmra.mrb[0].mxu0 %v1182
  %v4132 = vpop.f32.mrb[0].mxu0
  %v4133 = vadd.f32 0.0, %v4132
  %v4134 = vpop.f32.mrb[0].mxu0
  %v4135 = vpop.f32.mrb[0].mxu0
  %v4136 = vadd.f32 0.0, %v4135
  %v4137 = vpop.f32.mrb[0].mxu0
  %4138 = vmatprep.mubr.bf16.mxu0 0
  %4139 = vmatmul.mubr.bf16.gmra.mrb[0].mxu0 %v1183
  %v4140 = vpop.f32.mrb[0].mxu0
  %v4141 = vadd.f32 0.0, %v4140
  %v4142 = vpop.f32.mrb[0].mxu0
  %v4143 = vpop.f32.mrb[0].mxu0
  %v4144 = vadd.f32 0.0, %v4143
  %v4145 = vpop.f32.mrb[0].mxu0
  %4146 = vmatprep.mubr.bf16.mxu0 0
  %4147 = vmatmul.mubr.bf16.gmra.mrb[0].mxu0 %v1184
  %v4148 = vpop.f32.mrb[0].mxu0
  %v4149 = vadd.f32 0.0, %v4148
  %v4150 = vpop.f32.mrb[0].mxu0
  %v4151 = vpop.f32.mrb[0].mxu0
  %v4152 = vadd.f32 0.0, %v4151
  %v4153 = vpop.f32.mrb[0].mxu0
  %4154 = vmatprep.mubr.bf16.mxu0 0
  %4155 = vmatmul.mubr.bf16.gmra.mrb[0].mxu0 %v1185
  %v4156 = vpop.f32.mrb[0].mxu0
  %v4157 = vadd.f32 0.0, %v4156
  %v4158 = vpop.f32.mrb[0].mxu0
  %v4159 = vpop.f32.mrb[0].mxu0
  %v4160 = vadd.f32 0.0, %v4159
  %v4161 = vpop.f32.mrb[0].mxu0
  %4162 = vmatprep.mubr.bf16.mxu0 0
  %4163 = vmatmul.mubr.bf16.gmra.mrb[0].mxu0 %v1186
  %v4164 = vpop.f32.mrb[0].mxu0
  %v4165 = vadd.f32 0.0, %v4164
  %v4166 = vpop.f32.mrb[0].mxu0
  %v4167 = vpop.f32.mrb[0].mxu0
  %v4168 = vadd.f32 0.0, %v4167
  %v4169 = vpop.f32.mrb[0].mxu0
  %4170 = vmatprep.mubr.bf16.mxu0 0
  %4171 = vmatmul.mubr.bf16.gmra.mrb[0].mxu0 %v1187
  %v4172 = vpop.f32.mrb[0].mxu0
  %v4173 = vadd.f32 0.0, %v4172
  %v4174 = vpop.f32.mrb[0].mxu0
  %v4175 = vpop.f32.mrb[0].mxu0
  %v4176 = vadd.f32 0.0, %v4175
  %v4177 = vpop.f32.mrb[0].mxu0
  %4178 = vdwg.mxu0
  %v4179 = vpack.c.bf16 %v4120, %v4117
  %v4180 = vpack.c.bf16 %v4128, %v4125
  %v4181 = vpack.c.bf16 %v4136, %v4133
  %v4182 = vpack.c.bf16 %v4144, %v4141
  %v4183 = vpack.c.bf16 %v4152, %v4149
  %v4184 = vpack.c.bf16 %v4160, %v4157
  %v4185 = vpack.c.bf16 %v4168, %v4165
  %v4186 = vpack.c.bf16 %v4176, %v4173
  %s4187 = scalar_lea.vmem %s4, 192
  %v4188 = vld [vmem:[%s4187] sm:$0xf]
  %v4189 = vld [vmem:[%s4187 + $0x4] sm:$0xf]
  %v4190 = vld [vmem:[%s4187 + $0x8] sm:$0xf]
  %v4191 = vld [vmem:[%s4187 + $0xc] sm:$0xf]
  %v4192 = vld [vmem:[%s4187 + $0x10] sm:$0xf]
  %v4193 = vld [vmem:[%s4187 + $0x14] sm:$0xf]
  %v4194 = vld [vmem:[%s4187 + $0x18] sm:$0xf]
  %v4195 = vld [vmem:[%s4187 + $0x1c] sm:$0xf]
  %v4196 = vld [vmem:[%s4187 + $0x20] sm:$0xf]
  %v4197 = vld [vmem:[%s4187 + $0x24] sm:$0xf]
  %v4198 = vld [vmem:[%s4187 + $0x28] sm:$0xf]
  %v4199 = vld [vmem:[%s4187 + $0x2c] sm:$0xf]
  %v4200 = vld [vmem:[%s4187 + $0x30] sm:$0xf]
  %v4201 = vld [vmem:[%s4187 + $0x34] sm:$0xf]
  %v4202 = vld [vmem:[%s4187 + $0x38] sm:$0xf]
  %v4203 = vld [vmem:[%s4187 + $0x3c] sm:$0xf]
  %v4220 = vunpack.c.l.b16 %v4188
  %v4221 = vunpack.c.l.b16 %v4189
  %v4222 = vunpack.c.l.b16 %v4190
  %v4223 = vunpack.c.l.b16 %v4191
  %v4224 = vunpack.c.l.b16 %v4192
  %v4225 = vunpack.c.l.b16 %v4193
  %v4226 = vunpack.c.l.b16 %v4194
  %v4227 = vunpack.c.l.b16 %v4195
  %v4228 = vunpack.c.l.b16 %v4196
  %v4229 = vunpack.c.l.b16 %v4197
  %v4230 = vunpack.c.l.b16 %v4198
  %v4231 = vunpack.c.l.b16 %v4199
  %v4232 = vunpack.c.l.b16 %v4200
  %v4233 = vunpack.c.l.b16 %v4201
  %v4234 = vunpack.c.l.b16 %v4202
  %v4235 = vunpack.c.l.b16 %v4203
  %v4236 = vpack.c.b16 %v4221, %v4220
  %v4237 = vpack.c.b16 %v4223, %v4222
  %v4238 = vpack.c.b16 %v4225, %v4224
  %v4239 = vpack.c.b16 %v4227, %v4226
  %v4240 = vpack.c.b16 %v4229, %v4228
  %v4241 = vpack.c.b16 %v4231, %v4230
  %v4242 = vpack.c.b16 %v4233, %v4232
  %v4243 = vpack.c.b16 %v4235, %v4234
  %4252 = vmatprep.subr.bf16.mxu0 0
  %4253 = vmatpush1.bf16.msra.mxu0 %v4236
  %4254 = vmatprep.subr.bf16.mxu0 0
  %4255 = vmatpush1.bf16.msra.mxu0 %v4237
  %4256 = vmatprep.subr.bf16.mxu0 0
  %4257 = vmatpush1.bf16.msra.mxu0 %v4238
  %4258 = vmatprep.subr.bf16.mxu0 0
  %4259 = vmatpush1.bf16.msra.mxu0 %v4239
  %4260 = vmatprep.subr.bf16.mxu0 0
  %4261 = vmatpush1.bf16.msra.mxu0 %v4240
  %4262 = vmatprep.subr.bf16.mxu0 0
  %4263 = vmatpush1.bf16.msra.mxu0 %v4241
  %4264 = vmatprep.subr.bf16.mxu0 0
  %4265 = vmatpush1.bf16.msra.mxu0 %v4242
  %4266 = vmatprep.subr.bf16.mxu0 0
  %4267 = vmatpush1.bf16.msra.mxu0 %v4243
  %4268 = vmatprep.subr.bf16.mxu0 0
  %4269 = vmatpush1.bf16.msra.mxu0 0
  %4270 = vmatprep.subr.bf16.mxu0 0
  %4271 = vmatpush1.bf16.msra.mxu0 0
  %4272 = vmatprep.subr.bf16.mxu0 0
  %4273 = vmatpush1.bf16.msra.mxu0 0
  %4274 = vmatprep.subr.bf16.mxu0 0
  %4275 = vmatpush1.bf16.msra.mxu0 0
  %4276 = vmatprep.subr.bf16.mxu0 0
  %4277 = vmatpush1.bf16.msra.mxu0 0
  %4278 = vmatprep.subr.bf16.mxu0 0
  %4279 = vmatpush1.bf16.msra.mxu0 0
  %4280 = vmatprep.subr.bf16.mxu0 0
  %4281 = vmatpush1.bf16.msra.mxu0 0
  %4282 = vmatprep.subr.bf16.mxu0 0
  %4283 = vmatpush1.bf16.msra.mxu0 0
  %4284 = vmatprep.mubr.bf16.mxu0 0
  %4285 = vmatmul.mubr.bf16.gmra.mrb[0].mxu0 %v4179
  %v4286 = vpop.f32.mrb[0].mxu0
  %v4287 = vadd.f32 0.0, %v4286
  %v4288 = vpop.f32.mrb[0].mxu0
  %v4289 = vpop.f32.mrb[0].mxu0
  %v4290 = vadd.f32 0.0, %v4289
  %v4291 = vpop.f32.mrb[0].mxu0
  %4292 = vmatprep.mubr.bf16.mxu0 0
  %4293 = vmatmul.mubr.bf16.gmra.mrb[0].mxu0 %v4180
  %v4294 = vpop.f32.mrb[0].mxu0
  %v4295 = vadd.f32 0.0, %v4294
  %v4296 = vpop.f32.mrb[0].mxu0
  %v4297 = vpop.f32.mrb[0].mxu0
  %v4298 = vadd.f32 0.0, %v4297
  %v4299 = vpop.f32.mrb[0].mxu0
  %4300 = vmatprep.mubr.bf16.mxu0 0
  %4301 = vmatmul.mubr.bf16.gmra.mrb[0].mxu0 %v4181
  %v4302 = vpop.f32.mrb[0].mxu0
  %v4303 = vadd.f32 0.0, %v4302
  %v4304 = vpop.f32.mrb[0].mxu0
  %v4305 = vpop.f32.mrb[0].mxu0
  %v4306 = vadd.f32 0.0, %v4305
  %v4307 = vpop.f32.mrb[0].mxu0
  %4308 = vmatprep.mubr.bf16.mxu0 0
  %4309 = vmatmul.mubr.bf16.gmra.mrb[0].mxu0 %v4182
  %v4310 = vpop.f32.mrb[0].mxu0
  %v4311 = vadd.f32 0.0, %v4310
  %v4312 = vpop.f32.mrb[0].mxu0
  %v4313 = vpop.f32.mrb[0].mxu0
  %v4314 = vadd.f32 0.0, %v4313
  %v4315 = vpop.f32.mrb[0].mxu0
  %4316 = vmatprep.mubr.bf16.mxu0 0
  %4317 = vmatmul.mubr.bf16.gmra.mrb[0].mxu0 %v4183
  %v4318 = vpop.f32.mrb[0].mxu0
  %v4319 = vadd.f32 0.0, %v4318
  %v4320 = vpop.f32.mrb[0].mxu0
  %v4321 = vpop.f32.mrb[0].mxu0
  %v4322 = vadd.f32 0.0, %v4321
  %v4323 = vpop.f32.mrb[0].mxu0
  %4324 = vmatprep.mubr.bf16.mxu0 0
  %4325 = vmatmul.mubr.bf16.gmra.mrb[0].mxu0 %v4184
  %v4326 = vpop.f32.mrb[0].mxu0
  %v4327 = vadd.f32 0.0, %v4326
  %v4328 = vpop.f32.mrb[0].mxu0
  %v4329 = vpop.f32.mrb[0].mxu0
  %v4330 = vadd.f32 0.0, %v4329
  %v4331 = vpop.f32.mrb[0].mxu0
  %4332 = vmatprep.mubr.bf16.mxu0 0
  %4333 = vmatmul.mubr.bf16.gmra.mrb[0].mxu0 %v4185
  %v4334 = vpop.f32.mrb[0].mxu0
  %v4335 = vadd.f32 0.0, %v4334
  %v4336 = vpop.f32.mrb[0].mxu0
  %v4337 = vpop.f32.mrb[0].mxu0
  %v4338 = vadd.f32 0.0, %v4337
  %v4339 = vpop.f32.mrb[0].mxu0
  %4340 = vmatprep.mubr.bf16.mxu0 0
  %4341 = vmatmul.mubr.bf16.gmra.mrb[0].mxu0 %v4186
  %v4342 = vpop.f32.mrb[0].mxu0
  %v4343 = vadd.f32 0.0, %v4342
  %v4344 = vpop.f32.mrb[0].mxu0
  %v4345 = vpop.f32.mrb[0].mxu0
  %v4346 = vadd.f32 0.0, %v4345
  %v4347 = vpop.f32.mrb[0].mxu0
  %4348 = vdwg.mxu0
  %v4349 = vadd.f32 %v4066, %v4287
  %v4350 = vadd.f32 %v4067, %v4290
  %v4351 = vadd.f32 %v4068, %v4295
  %v4352 = vadd.f32 %v4069, %v4298
  %v4353 = vadd.f32 %v4070, %v4303
  %v4354 = vadd.f32 %v4071, %v4306
  %v4355 = vadd.f32 %v4072, %v4311
  %v4356 = vadd.f32 %v4073, %v4314
  %v4357 = vadd.f32 %v4074, %v4319
  %v4358 = vadd.f32 %v4075, %v4322
  %v4359 = vadd.f32 %v4076, %v4327
  %v4360 = vadd.f32 %v4077, %v4330
  %v4361 = vadd.f32 %v4078, %v4335
  %v4362 = vadd.f32 %v4079, %v4338
  %v4363 = vadd.f32 %v4080, %v4343
  %v4364 = vadd.f32 %v4081, %v4346
  %4365 = vmatprep.subr.bf16.mxu0 0
  %4366 = vmatpush1.bf16.msra.mxu0 %v3258
  %4367 = vmatprep.subr.bf16.mxu0 0
  %4368 = vmatpush1.bf16.msra.mxu0 %v3259
  %4369 = vmatprep.subr.bf16.mxu0 0
  %4370 = vmatpush1.bf16.msra.mxu0 %v3260
  %4371 = vmatprep.subr.bf16.mxu0 0
  %4372 = vmatpush1.bf16.msra.mxu0 %v3261
  %4373 = vmatprep.subr.bf16.mxu0 0
  %4374 = vmatpush1.bf16.msra.mxu0 %v3262
  %4375 = vmatprep.subr.bf16.mxu0 0
  %4376 = vmatpush1.bf16.msra.mxu0 %v3263
  %4377 = vmatprep.subr.bf16.mxu0 0
  %4378 = vmatpush1.bf16.msra.mxu0 %v3264
  %4379 = vmatprep.subr.bf16.mxu0 0
  %4380 = vmatpush1.bf16.msra.mxu0 %v3265
  %4381 = vmatprep.subr.bf16.mxu0 0
  %4382 = vmatpush1.bf16.msra.mxu0 0
  %4383 = vmatprep.subr.bf16.mxu0 0
  %4384 = vmatpush1.bf16.msra.mxu0 0
  %4385 = vmatprep.subr.bf16.mxu0 0
  %4386 = vmatpush1.bf16.msra.mxu0 0
  %4387 = vmatprep.subr.bf16.mxu0 0
  %4388 = vmatpush1.bf16.msra.mxu0 0
  %4389 = vmatprep.subr.bf16.mxu0 0
  %4390 = vmatpush1.bf16.msra.mxu0 0
  %4391 = vmatprep.subr.bf16.mxu0 0
  %4392 = vmatpush1.bf16.msra.mxu0 0
  %4393 = vmatprep.subr.bf16.mxu0 0
  %4394 = vmatpush1.bf16.msra.mxu0 0
  %4395 = vmatprep.subr.bf16.mxu0 0
  %4396 = vmatpush1.bf16.msra.mxu0 0
  %4397 = vmatprep.mubr.bf16.mxu0 0
  %4398 = vmatmul.mubr.bf16.gmra.mrb[0].mxu0 %v1528
  %v4399 = vpop.f32.mrb[0].mxu0
  %v4400 = vadd.f32 0.0, %v4399
  %v4401 = vpop.f32.mrb[0].mxu0
  %v4402 = vpop.f32.mrb[0].mxu0
  %v4403 = vadd.f32 0.0, %v4402
  %v4404 = vpop.f32.mrb[0].mxu0
  %4405 = vmatprep.mubr.bf16.mxu0 0
  %4406 = vmatmul.mubr.bf16.gmra.mrb[0].mxu0 %v1529
  %v4407 = vpop.f32.mrb[0].mxu0
  %v4408 = vadd.f32 0.0, %v4407
  %v4409 = vpop.f32.mrb[0].mxu0
  %v4410 = vpop.f32.mrb[0].mxu0
  %v4411 = vadd.f32 0.0, %v4410
  %v4412 = vpop.f32.mrb[0].mxu0
  %4413 = vmatprep.mubr.bf16.mxu0 0
  %4414 = vmatmul.mubr.bf16.gmra.mrb[0].mxu0 %v1530
  %v4415 = vpop.f32.mrb[0].mxu0
  %v4416 = vadd.f32 0.0, %v4415
  %v4417 = vpop.f32.mrb[0].mxu0
  %v4418 = vpop.f32.mrb[0].mxu0
  %v4419 = vadd.f32 0.0, %v4418
  %v4420 = vpop.f32.mrb[0].mxu0
  %4421 = vmatprep.mubr.bf16.mxu0 0
  %4422 = vmatmul.mubr.bf16.gmra.mrb[0].mxu0 %v1531
  %v4423 = vpop.f32.mrb[0].mxu0
  %v4424 = vadd.f32 0.0, %v4423
  %v4425 = vpop.f32.mrb[0].mxu0
  %v4426 = vpop.f32.mrb[0].mxu0
  %v4427 = vadd.f32 0.0, %v4426
  %v4428 = vpop.f32.mrb[0].mxu0
  %4429 = vmatprep.mubr.bf16.mxu0 0
  %4430 = vmatmul.mubr.bf16.gmra.mrb[0].mxu0 %v1532
  %v4431 = vpop.f32.mrb[0].mxu0
  %v4432 = vadd.f32 0.0, %v4431
  %v4433 = vpop.f32.mrb[0].mxu0
  %v4434 = vpop.f32.mrb[0].mxu0
  %v4435 = vadd.f32 0.0, %v4434
  %v4436 = vpop.f32.mrb[0].mxu0
  %4437 = vmatprep.mubr.bf16.mxu0 0
  %4438 = vmatmul.mubr.bf16.gmra.mrb[0].mxu0 %v1533
  %v4439 = vpop.f32.mrb[0].mxu0
  %v4440 = vadd.f32 0.0, %v4439
  %v4441 = vpop.f32.mrb[0].mxu0
  %v4442 = vpop.f32.mrb[0].mxu0
  %v4443 = vadd.f32 0.0, %v4442
  %v4444 = vpop.f32.mrb[0].mxu0
  %4445 = vmatprep.mubr.bf16.mxu0 0
  %4446 = vmatmul.mubr.bf16.gmra.mrb[0].mxu0 %v1534
  %v4447 = vpop.f32.mrb[0].mxu0
  %v4448 = vadd.f32 0.0, %v4447
  %v4449 = vpop.f32.mrb[0].mxu0
  %v4450 = vpop.f32.mrb[0].mxu0
  %v4451 = vadd.f32 0.0, %v4450
  %v4452 = vpop.f32.mrb[0].mxu0
  %4453 = vmatprep.mubr.bf16.mxu0 0
  %4454 = vmatmul.mubr.bf16.gmra.mrb[0].mxu0 %v1535
  %v4455 = vpop.f32.mrb[0].mxu0
  %v4456 = vadd.f32 0.0, %v4455
  %v4457 = vpop.f32.mrb[0].mxu0
  %v4458 = vpop.f32.mrb[0].mxu0
  %v4459 = vadd.f32 0.0, %v4458
  %v4460 = vpop.f32.mrb[0].mxu0
  %4461 = vdwg.mxu0
  %v4462 = vpack.c.bf16 %v4403, %v4400
  %v4463 = vpack.c.bf16 %v4411, %v4408
  %v4464 = vpack.c.bf16 %v4419, %v4416
  %v4465 = vpack.c.bf16 %v4427, %v4424
  %v4466 = vpack.c.bf16 %v4435, %v4432
  %v4467 = vpack.c.bf16 %v4443, %v4440
  %v4468 = vpack.c.bf16 %v4451, %v4448
  %v4469 = vpack.c.bf16 %v4459, %v4456
  %s4470 = scalar_lea.vmem %s4, 256
  %v4471 = vld [vmem:[%s4470] sm:$0xf]
  %v4472 = vld [vmem:[%s4470 + $0x4] sm:$0xf]
  %v4473 = vld [vmem:[%s4470 + $0x8] sm:$0xf]
  %v4474 = vld [vmem:[%s4470 + $0xc] sm:$0xf]
  %v4475 = vld [vmem:[%s4470 + $0x10] sm:$0xf]
  %v4476 = vld [vmem:[%s4470 + $0x14] sm:$0xf]
  %v4477 = vld [vmem:[%s4470 + $0x18] sm:$0xf]
  %v4478 = vld [vmem:[%s4470 + $0x1c] sm:$0xf]
  %v4479 = vld [vmem:[%s4470 + $0x20] sm:$0xf]
  %v4480 = vld [vmem:[%s4470 + $0x24] sm:$0xf]
  %v4481 = vld [vmem:[%s4470 + $0x28] sm:$0xf]
  %v4482 = vld [vmem:[%s4470 + $0x2c] sm:$0xf]
  %v4483 = vld [vmem:[%s4470 + $0x30] sm:$0xf]
  %v4484 = vld [vmem:[%s4470 + $0x34] sm:$0xf]
  %v4485 = vld [vmem:[%s4470 + $0x38] sm:$0xf]
  %v4486 = vld [vmem:[%s4470 + $0x3c] sm:$0xf]
  %v4503 = vunpack.c.l.b16 %v4471
  %v4504 = vunpack.c.l.b16 %v4472
  %v4505 = vunpack.c.l.b16 %v4473
  %v4506 = vunpack.c.l.b16 %v4474
  %v4507 = vunpack.c.l.b16 %v4475
  %v4508 = vunpack.c.l.b16 %v4476
  %v4509 = vunpack.c.l.b16 %v4477
  %v4510 = vunpack.c.l.b16 %v4478
  %v4511 = vunpack.c.l.b16 %v4479
  %v4512 = vunpack.c.l.b16 %v4480
  %v4513 = vunpack.c.l.b16 %v4481
  %v4514 = vunpack.c.l.b16 %v4482
  %v4515 = vunpack.c.l.b16 %v4483
  %v4516 = vunpack.c.l.b16 %v4484
  %v4517 = vunpack.c.l.b16 %v4485
  %v4518 = vunpack.c.l.b16 %v4486
  %v4519 = vpack.c.b16 %v4504, %v4503
  %v4520 = vpack.c.b16 %v4506, %v4505
  %v4521 = vpack.c.b16 %v4508, %v4507
  %v4522 = vpack.c.b16 %v4510, %v4509
  %v4523 = vpack.c.b16 %v4512, %v4511
  %v4524 = vpack.c.b16 %v4514, %v4513
  %v4525 = vpack.c.b16 %v4516, %v4515
  %v4526 = vpack.c.b16 %v4518, %v4517
  %4535 = vmatprep.subr.bf16.mxu0 0
  %4536 = vmatpush1.bf16.msra.mxu0 %v4519
  %4537 = vmatprep.subr.bf16.mxu0 0
  %4538 = vmatpush1.bf16.msra.mxu0 %v4520
  %4539 = vmatprep.subr.bf16.mxu0 0
  %4540 = vmatpush1.bf16.msra.mxu0 %v4521
  %4541 = vmatprep.subr.bf16.mxu0 0
  %4542 = vmatpush1.bf16.msra.mxu0 %v4522
  %4543 = vmatprep.subr.bf16.mxu0 0
  %4544 = vmatpush1.bf16.msra.mxu0 %v4523
  %4545 = vmatprep.subr.bf16.mxu0 0
  %4546 = vmatpush1.bf16.msra.mxu0 %v4524
  %4547 = vmatprep.subr.bf16.mxu0 0
  %4548 = vmatpush1.bf16.msra.mxu0 %v4525
  %4549 = vmatprep.subr.bf16.mxu0 0
  %4550 = vmatpush1.bf16.msra.mxu0 %v4526
  %4551 = vmatprep.subr.bf16.mxu0 0
  %4552 = vmatpush1.bf16.msra.mxu0 0
  %4553 = vmatprep.subr.bf16.mxu0 0
  %4554 = vmatpush1.bf16.msra.mxu0 0
  %4555 = vmatprep.subr.bf16.mxu0 0
  %4556 = vmatpush1.bf16.msra.mxu0 0
  %4557 = vmatprep.subr.bf16.mxu0 0
  %4558 = vmatpush1.bf16.msra.mxu0 0
  %4559 = vmatprep.subr.bf16.mxu0 0
  %4560 = vmatpush1.bf16.msra.mxu0 0
  %4561 = vmatprep.subr.bf16.mxu0 0
  %4562 = vmatpush1.bf16.msra.mxu0 0
  %4563 = vmatprep.subr.bf16.mxu0 0
  %4564 = vmatpush1.bf16.msra.mxu0 0
  %4565 = vmatprep.subr.bf16.mxu0 0
  %4566 = vmatpush1.bf16.msra.mxu0 0
  %4567 = vmatprep.mubr.bf16.mxu0 0
  %4568 = vmatmul.mubr.bf16.gmra.mrb[0].mxu0 %v4462
  %v4569 = vpop.f32.mrb[0].mxu0
  %v4570 = vadd.f32 0.0, %v4569
  %v4571 = vpop.f32.mrb[0].mxu0
  %v4572 = vpop.f32.mrb[0].mxu0
  %v4573 = vadd.f32 0.0, %v4572
  %v4574 = vpop.f32.mrb[0].mxu0
  %4575 = vmatprep.mubr.bf16.mxu0 0
  %4576 = vmatmul.mubr.bf16.gmra.mrb[0].mxu0 %v4463
  %v4577 = vpop.f32.mrb[0].mxu0
  %v4578 = vadd.f32 0.0, %v4577
  %v4579 = vpop.f32.mrb[0].mxu0
  %v4580 = vpop.f32.mrb[0].mxu0
  %v4581 = vadd.f32 0.0, %v4580
  %v4582 = vpop.f32.mrb[0].mxu0
  %4583 = vmatprep.mubr.bf16.mxu0 0
  %4584 = vmatmul.mubr.bf16.gmra.mrb[0].mxu0 %v4464
  %v4585 = vpop.f32.mrb[0].mxu0
  %v4586 = vadd.f32 0.0, %v4585
  %v4587 = vpop.f32.mrb[0].mxu0
  %v4588 = vpop.f32.mrb[0].mxu0
  %v4589 = vadd.f32 0.0, %v4588
  %v4590 = vpop.f32.mrb[0].mxu0
  %4591 = vmatprep.mubr.bf16.mxu0 0
  %4592 = vmatmul.mubr.bf16.gmra.mrb[0].mxu0 %v4465
  %v4593 = vpop.f32.mrb[0].mxu0
  %v4594 = vadd.f32 0.0, %v4593
  %v4595 = vpop.f32.mrb[0].mxu0
  %v4596 = vpop.f32.mrb[0].mxu0
  %v4597 = vadd.f32 0.0, %v4596
  %v4598 = vpop.f32.mrb[0].mxu0
  %4599 = vmatprep.mubr.bf16.mxu0 0
  %4600 = vmatmul.mubr.bf16.gmra.mrb[0].mxu0 %v4466
  %v4601 = vpop.f32.mrb[0].mxu0
  %v4602 = vadd.f32 0.0, %v4601
  %v4603 = vpop.f32.mrb[0].mxu0
  %v4604 = vpop.f32.mrb[0].mxu0
  %v4605 = vadd.f32 0.0, %v4604
  %v4606 = vpop.f32.mrb[0].mxu0
  %4607 = vmatprep.mubr.bf16.mxu0 0
  %4608 = vmatmul.mubr.bf16.gmra.mrb[0].mxu0 %v4467
  %v4609 = vpop.f32.mrb[0].mxu0
  %v4610 = vadd.f32 0.0, %v4609
  %v4611 = vpop.f32.mrb[0].mxu0
  %v4612 = vpop.f32.mrb[0].mxu0
  %v4613 = vadd.f32 0.0, %v4612
  %v4614 = vpop.f32.mrb[0].mxu0
  %4615 = vmatprep.mubr.bf16.mxu0 0
  %4616 = vmatmul.mubr.bf16.gmra.mrb[0].mxu0 %v4468
  %v4617 = vpop.f32.mrb[0].mxu0
  %v4618 = vadd.f32 0.0, %v4617
  %v4619 = vpop.f32.mrb[0].mxu0
  %v4620 = vpop.f32.mrb[0].mxu0
  %v4621 = vadd.f32 0.0, %v4620
  %v4622 = vpop.f32.mrb[0].mxu0
  %4623 = vmatprep.mubr.bf16.mxu0 0
  %4624 = vmatmul.mubr.bf16.gmra.mrb[0].mxu0 %v4469
  %v4625 = vpop.f32.mrb[0].mxu0
  %v4626 = vadd.f32 0.0, %v4625
  %v4627 = vpop.f32.mrb[0].mxu0
  %v4628 = vpop.f32.mrb[0].mxu0
  %v4629 = vadd.f32 0.0, %v4628
  %v4630 = vpop.f32.mrb[0].mxu0
  %4631 = vdwg.mxu0
  %v4632 = vadd.f32 %v4349, %v4570
  %v4633 = vadd.f32 %v4350, %v4573
  %v4634 = vadd.f32 %v4351, %v4578
  %v4635 = vadd.f32 %v4352, %v4581
  %v4636 = vadd.f32 %v4353, %v4586
  %v4637 = vadd.f32 %v4354, %v4589
  %v4638 = vadd.f32 %v4355, %v4594
  %v4639 = vadd.f32 %v4356, %v4597
  %v4640 = vadd.f32 %v4357, %v4602
  %v4641 = vadd.f32 %v4358, %v4605
  %v4642 = vadd.f32 %v4359, %v4610
  %v4643 = vadd.f32 %v4360, %v4613
  %v4644 = vadd.f32 %v4361, %v4618
  %v4645 = vadd.f32 %v4362, %v4621
  %v4646 = vadd.f32 %v4363, %v4626
  %v4647 = vadd.f32 %v4364, %v4629
  %4648 = vmatprep.subr.bf16.mxu0 0
  %4649 = vmatpush1.bf16.msra.mxu0 %v3258
  %4650 = vmatprep.subr.bf16.mxu0 0
  %4651 = vmatpush1.bf16.msra.mxu0 %v3259
  %4652 = vmatprep.subr.bf16.mxu0 0
  %4653 = vmatpush1.bf16.msra.mxu0 %v3260
  %4654 = vmatprep.subr.bf16.mxu0 0
  %4655 = vmatpush1.bf16.msra.mxu0 %v3261
  %4656 = vmatprep.subr.bf16.mxu0 0
  %4657 = vmatpush1.bf16.msra.mxu0 %v3262
  %4658 = vmatprep.subr.bf16.mxu0 0
  %4659 = vmatpush1.bf16.msra.mxu0 %v3263
  %4660 = vmatprep.subr.bf16.mxu0 0
  %4661 = vmatpush1.bf16.msra.mxu0 %v3264
  %4662 = vmatprep.subr.bf16.mxu0 0
  %4663 = vmatpush1.bf16.msra.mxu0 %v3265
  %4664 = vmatprep.subr.bf16.mxu0 0
  %4665 = vmatpush1.bf16.msra.mxu0 0
  %4666 = vmatprep.subr.bf16.mxu0 0
  %4667 = vmatpush1.bf16.msra.mxu0 0
  %4668 = vmatprep.subr.bf16.mxu0 0
  %4669 = vmatpush1.bf16.msra.mxu0 0
  %4670 = vmatprep.subr.bf16.mxu0 0
  %4671 = vmatpush1.bf16.msra.mxu0 0
  %4672 = vmatprep.subr.bf16.mxu0 0
  %4673 = vmatpush1.bf16.msra.mxu0 0
  %4674 = vmatprep.subr.bf16.mxu0 0
  %4675 = vmatpush1.bf16.msra.mxu0 0
  %4676 = vmatprep.subr.bf16.mxu0 0
  %4677 = vmatpush1.bf16.msra.mxu0 0
  %4678 = vmatprep.subr.bf16.mxu0 0
  %4679 = vmatpush1.bf16.msra.mxu0 0
  %4680 = vmatprep.mubr.bf16.mxu0 0
  %4681 = vmatmul.mubr.bf16.gmra.mrb[0].mxu0 %v1876
  %v4682 = vpop.f32.mrb[0].mxu0
  %v4683 = vadd.f32 0.0, %v4682
  %v4684 = vpop.f32.mrb[0].mxu0
  %v4685 = vpop.f32.mrb[0].mxu0
  %v4686 = vadd.f32 0.0, %v4685
  %v4687 = vpop.f32.mrb[0].mxu0
  %4688 = vmatprep.mubr.bf16.mxu0 0
  %4689 = vmatmul.mubr.bf16.gmra.mrb[0].mxu0 %v1877
  %v4690 = vpop.f32.mrb[0].mxu0
  %v4691 = vadd.f32 0.0, %v4690
  %v4692 = vpop.f32.mrb[0].mxu0
  %v4693 = vpop.f32.mrb[0].mxu0
  %v4694 = vadd.f32 0.0, %v4693
  %v4695 = vpop.f32.mrb[0].mxu0
  %4696 = vmatprep.mubr.bf16.mxu0 0
  %4697 = vmatmul.mubr.bf16.gmra.mrb[0].mxu0 %v1878
  %v4698 = vpop.f32.mrb[0].mxu0
  %v4699 = vadd.f32 0.0, %v4698
  %v4700 = vpop.f32.mrb[0].mxu0
  %v4701 = vpop.f32.mrb[0].mxu0
  %v4702 = vadd.f32 0.0, %v4701
  %v4703 = vpop.f32.mrb[0].mxu0
  %4704 = vmatprep.mubr.bf16.mxu0 0
  %4705 = vmatmul.mubr.bf16.gmra.mrb[0].mxu0 %v1879
  %v4706 = vpop.f32.mrb[0].mxu0
  %v4707 = vadd.f32 0.0, %v4706
  %v4708 = vpop.f32.mrb[0].mxu0
  %v4709 = vpop.f32.mrb[0].mxu0
  %v4710 = vadd.f32 0.0, %v4709
  %v4711 = vpop.f32.mrb[0].mxu0
  %4712 = vmatprep.mubr.bf16.mxu0 0
  %4713 = vmatmul.mubr.bf16.gmra.mrb[0].mxu0 %v1880
  %v4714 = vpop.f32.mrb[0].mxu0
  %v4715 = vadd.f32 0.0, %v4714
  %v4716 = vpop.f32.mrb[0].mxu0
  %v4717 = vpop.f32.mrb[0].mxu0
  %v4718 = vadd.f32 0.0, %v4717
  %v4719 = vpop.f32.mrb[0].mxu0
  %4720 = vmatprep.mubr.bf16.mxu0 0
  %4721 = vmatmul.mubr.bf16.gmra.mrb[0].mxu0 %v1881
  %v4722 = vpop.f32.mrb[0].mxu0
  %v4723 = vadd.f32 0.0, %v4722
  %v4724 = vpop.f32.mrb[0].mxu0
  %v4725 = vpop.f32.mrb[0].mxu0
  %v4726 = vadd.f32 0.0, %v4725
  %v4727 = vpop.f32.mrb[0].mxu0
  %4728 = vmatprep.mubr.bf16.mxu0 0
  %4729 = vmatmul.mubr.bf16.gmra.mrb[0].mxu0 %v1882
  %v4730 = vpop.f32.mrb[0].mxu0
  %v4731 = vadd.f32 0.0, %v4730
  %v4732 = vpop.f32.mrb[0].mxu0
  %v4733 = vpop.f32.mrb[0].mxu0
  %v4734 = vadd.f32 0.0, %v4733
  %v4735 = vpop.f32.mrb[0].mxu0
  %4736 = vmatprep.mubr.bf16.mxu0 0
  %4737 = vmatmul.mubr.bf16.gmra.mrb[0].mxu0 %v1883
  %v4738 = vpop.f32.mrb[0].mxu0
  %v4739 = vadd.f32 0.0, %v4738
  %v4740 = vpop.f32.mrb[0].mxu0
  %v4741 = vpop.f32.mrb[0].mxu0
  %v4742 = vadd.f32 0.0, %v4741
  %v4743 = vpop.f32.mrb[0].mxu0
  %4744 = vdwg.mxu0
  %v4745 = vpack.c.bf16 %v4686, %v4683
  %v4746 = vpack.c.bf16 %v4694, %v4691
  %v4747 = vpack.c.bf16 %v4702, %v4699
  %v4748 = vpack.c.bf16 %v4710, %v4707
  %v4749 = vpack.c.bf16 %v4718, %v4715
  %v4750 = vpack.c.bf16 %v4726, %v4723
  %v4751 = vpack.c.bf16 %v4734, %v4731
  %v4752 = vpack.c.bf16 %v4742, %v4739
  %s4753 = scalar_lea.vmem %s4, 320
  %v4754 = vld [vmem:[%s4753] sm:$0xf]
  %v4755 = vld [vmem:[%s4753 + $0x4] sm:$0xf]
  %v4756 = vld [vmem:[%s4753 + $0x8] sm:$0xf]
  %v4757 = vld [vmem:[%s4753 + $0xc] sm:$0xf]
  %v4758 = vld [vmem:[%s4753 + $0x10] sm:$0xf]
  %v4759 = vld [vmem:[%s4753 + $0x14] sm:$0xf]
  %v4760 = vld [vmem:[%s4753 + $0x18] sm:$0xf]
  %v4761 = vld [vmem:[%s4753 + $0x1c] sm:$0xf]
  %v4762 = vld [vmem:[%s4753 + $0x20] sm:$0xf]
  %v4763 = vld [vmem:[%s4753 + $0x24] sm:$0xf]
  %v4764 = vld [vmem:[%s4753 + $0x28] sm:$0xf]
  %v4765 = vld [vmem:[%s4753 + $0x2c] sm:$0xf]
  %v4766 = vld [vmem:[%s4753 + $0x30] sm:$0xf]
  %v4767 = vld [vmem:[%s4753 + $0x34] sm:$0xf]
  %v4768 = vld [vmem:[%s4753 + $0x38] sm:$0xf]
  %v4769 = vld [vmem:[%s4753 + $0x3c] sm:$0xf]
  %v4786 = vunpack.c.l.b16 %v4754
  %v4787 = vunpack.c.l.b16 %v4755
  %v4788 = vunpack.c.l.b16 %v4756
  %v4789 = vunpack.c.l.b16 %v4757
  %v4790 = vunpack.c.l.b16 %v4758
  %v4791 = vunpack.c.l.b16 %v4759
  %v4792 = vunpack.c.l.b16 %v4760
  %v4793 = vunpack.c.l.b16 %v4761
  %v4794 = vunpack.c.l.b16 %v4762
  %v4795 = vunpack.c.l.b16 %v4763
  %v4796 = vunpack.c.l.b16 %v4764
  %v4797 = vunpack.c.l.b16 %v4765
  %v4798 = vunpack.c.l.b16 %v4766
  %v4799 = vunpack.c.l.b16 %v4767
  %v4800 = vunpack.c.l.b16 %v4768
  %v4801 = vunpack.c.l.b16 %v4769
  %v4802 = vpack.c.b16 %v4787, %v4786
  %v4803 = vpack.c.b16 %v4789, %v4788
  %v4804 = vpack.c.b16 %v4791, %v4790
  %v4805 = vpack.c.b16 %v4793, %v4792
  %v4806 = vpack.c.b16 %v4795, %v4794
  %v4807 = vpack.c.b16 %v4797, %v4796
  %v4808 = vpack.c.b16 %v4799, %v4798
  %v4809 = vpack.c.b16 %v4801, %v4800
  %4818 = vmatprep.subr.bf16.mxu0 0
  %4819 = vmatpush1.bf16.msra.mxu0 %v4802
  %4820 = vmatprep.subr.bf16.mxu0 0
  %4821 = vmatpush1.bf16.msra.mxu0 %v4803
  %4822 = vmatprep.subr.bf16.mxu0 0
  %4823 = vmatpush1.bf16.msra.mxu0 %v4804
  %4824 = vmatprep.subr.bf16.mxu0 0
  %4825 = vmatpush1.bf16.msra.mxu0 %v4805
  %4826 = vmatprep.subr.bf16.mxu0 0
  %4827 = vmatpush1.bf16.msra.mxu0 %v4806
  %4828 = vmatprep.subr.bf16.mxu0 0
  %4829 = vmatpush1.bf16.msra.mxu0 %v4807
  %4830 = vmatprep.subr.bf16.mxu0 0
  %4831 = vmatpush1.bf16.msra.mxu0 %v4808
  %4832 = vmatprep.subr.bf16.mxu0 0
  %4833 = vmatpush1.bf16.msra.mxu0 %v4809
  %4834 = vmatprep.subr.bf16.mxu0 0
  %4835 = vmatpush1.bf16.msra.mxu0 0
  %4836 = vmatprep.subr.bf16.mxu0 0
  %4837 = vmatpush1.bf16.msra.mxu0 0
  %4838 = vmatprep.subr.bf16.mxu0 0
  %4839 = vmatpush1.bf16.msra.mxu0 0
  %4840 = vmatprep.subr.bf16.mxu0 0
  %4841 = vmatpush1.bf16.msra.mxu0 0
  %4842 = vmatprep.subr.bf16.mxu0 0
  %4843 = vmatpush1.bf16.msra.mxu0 0
  %4844 = vmatprep.subr.bf16.mxu0 0
  %4845 = vmatpush1.bf16.msra.mxu0 0
  %4846 = vmatprep.subr.bf16.mxu0 0
  %4847 = vmatpush1.bf16.msra.mxu0 0
  %4848 = vmatprep.subr.bf16.mxu0 0
  %4849 = vmatpush1.bf16.msra.mxu0 0
  %4850 = vmatprep.mubr.bf16.mxu0 0
  %4851 = vmatmul.mubr.bf16.gmra.mrb[0].mxu0 %v4745
  %v4852 = vpop.f32.mrb[0].mxu0
  %v4853 = vadd.f32 0.0, %v4852
  %v4854 = vpop.f32.mrb[0].mxu0
  %v4855 = vpop.f32.mrb[0].mxu0
  %v4856 = vadd.f32 0.0, %v4855
  %v4857 = vpop.f32.mrb[0].mxu0
  %4858 = vmatprep.mubr.bf16.mxu0 0
  %4859 = vmatmul.mubr.bf16.gmra.mrb[0].mxu0 %v4746
  %v4860 = vpop.f32.mrb[0].mxu0
  %v4861 = vadd.f32 0.0, %v4860
  %v4862 = vpop.f32.mrb[0].mxu0
  %v4863 = vpop.f32.mrb[0].mxu0
  %v4864 = vadd.f32 0.0, %v4863
  %v4865 = vpop.f32.mrb[0].mxu0
  %4866 = vmatprep.mubr.bf16.mxu0 0
  %4867 = vmatmul.mubr.bf16.gmra.mrb[0].mxu0 %v4747
  %v4868 = vpop.f32.mrb[0].mxu0
  %v4869 = vadd.f32 0.0, %v4868
  %v4870 = vpop.f32.mrb[0].mxu0
  %v4871 = vpop.f32.mrb[0].mxu0
  %v4872 = vadd.f32 0.0, %v4871
  %v4873 = vpop.f32.mrb[0].mxu0
  %4874 = vmatprep.mubr.bf16.mxu0 0
  %4875 = vmatmul.mubr.bf16.gmra.mrb[0].mxu0 %v4748
  %v4876 = vpop.f32.mrb[0].mxu0
  %v4877 = vadd.f32 0.0, %v4876
  %v4878 = vpop.f32.mrb[0].mxu0
  %v4879 = vpop.f32.mrb[0].mxu0
  %v4880 = vadd.f32 0.0, %v4879
  %v4881 = vpop.f32.mrb[0].mxu0
  %4882 = vmatprep.mubr.bf16.mxu0 0
  %4883 = vmatmul.mubr.bf16.gmra.mrb[0].mxu0 %v4749
  %v4884 = vpop.f32.mrb[0].mxu0
  %v4885 = vadd.f32 0.0, %v4884
  %v4886 = vpop.f32.mrb[0].mxu0
  %v4887 = vpop.f32.mrb[0].mxu0
  %v4888 = vadd.f32 0.0, %v4887
  %v4889 = vpop.f32.mrb[0].mxu0
  %4890 = vmatprep.mubr.bf16.mxu0 0
  %4891 = vmatmul.mubr.bf16.gmra.mrb[0].mxu0 %v4750
  %v4892 = vpop.f32.mrb[0].mxu0
  %v4893 = vadd.f32 0.0, %v4892
  %v4894 = vpop.f32.mrb[0].mxu0
  %v4895 = vpop.f32.mrb[0].mxu0
  %v4896 = vadd.f32 0.0, %v4895
  %v4897 = vpop.f32.mrb[0].mxu0
  %4898 = vmatprep.mubr.bf16.mxu0 0
  %4899 = vmatmul.mubr.bf16.gmra.mrb[0].mxu0 %v4751
  %v4900 = vpop.f32.mrb[0].mxu0
  %v4901 = vadd.f32 0.0, %v4900
  %v4902 = vpop.f32.mrb[0].mxu0
  %v4903 = vpop.f32.mrb[0].mxu0
  %v4904 = vadd.f32 0.0, %v4903
  %v4905 = vpop.f32.mrb[0].mxu0
  %4906 = vmatprep.mubr.bf16.mxu0 0
  %4907 = vmatmul.mubr.bf16.gmra.mrb[0].mxu0 %v4752
  %v4908 = vpop.f32.mrb[0].mxu0
  %v4909 = vadd.f32 0.0, %v4908
  %v4910 = vpop.f32.mrb[0].mxu0
  %v4911 = vpop.f32.mrb[0].mxu0
  %v4912 = vadd.f32 0.0, %v4911
  %v4913 = vpop.f32.mrb[0].mxu0
  %4914 = vdwg.mxu0
  %v4915 = vadd.f32 %v4632, %v4853
  %v4916 = vadd.f32 %v4633, %v4856
  %v4917 = vadd.f32 %v4634, %v4861
  %v4918 = vadd.f32 %v4635, %v4864
  %v4919 = vadd.f32 %v4636, %v4869
  %v4920 = vadd.f32 %v4637, %v4872
  %v4921 = vadd.f32 %v4638, %v4877
  %v4922 = vadd.f32 %v4639, %v4880
  %v4923 = vadd.f32 %v4640, %v4885
  %v4924 = vadd.f32 %v4641, %v4888
  %v4925 = vadd.f32 %v4642, %v4893
  %v4926 = vadd.f32 %v4643, %v4896
  %v4927 = vadd.f32 %v4644, %v4901
  %v4928 = vadd.f32 %v4645, %v4904
  %v4929 = vadd.f32 %v4646, %v4909
  %v4930 = vadd.f32 %v4647, %v4912
  %4931 = vmatprep.subr.bf16.mxu0 0
  %4932 = vmatpush1.bf16.msra.mxu0 %v3258
  %4933 = vmatprep.subr.bf16.mxu0 0
  %4934 = vmatpush1.bf16.msra.mxu0 %v3259
  %4935 = vmatprep.subr.bf16.mxu0 0
  %4936 = vmatpush1.bf16.msra.mxu0 %v3260
  %4937 = vmatprep.subr.bf16.mxu0 0
  %4938 = vmatpush1.bf16.msra.mxu0 %v3261
  %4939 = vmatprep.subr.bf16.mxu0 0
  %4940 = vmatpush1.bf16.msra.mxu0 %v3262
  %4941 = vmatprep.subr.bf16.mxu0 0
  %4942 = vmatpush1.bf16.msra.mxu0 %v3263
  %4943 = vmatprep.subr.bf16.mxu0 0
  %4944 = vmatpush1.bf16.msra.mxu0 %v3264
  %4945 = vmatprep.subr.bf16.mxu0 0
  %4946 = vmatpush1.bf16.msra.mxu0 %v3265
  %4947 = vmatprep.subr.bf16.mxu0 0
  %4948 = vmatpush1.bf16.msra.mxu0 0
  %4949 = vmatprep.subr.bf16.mxu0 0
  %4950 = vmatpush1.bf16.msra.mxu0 0
  %4951 = vmatprep.subr.bf16.mxu0 0
  %4952 = vmatpush1.bf16.msra.mxu0 0
  %4953 = vmatprep.subr.bf16.mxu0 0
  %4954 = vmatpush1.bf16.msra.mxu0 0
  %4955 = vmatprep.subr.bf16.mxu0 0
  %4956 = vmatpush1.bf16.msra.mxu0 0
  %4957 = vmatprep.subr.bf16.mxu0 0
  %4958 = vmatpush1.bf16.msra.mxu0 0
  %4959 = vmatprep.subr.bf16.mxu0 0
  %4960 = vmatpush1.bf16.msra.mxu0 0
  %4961 = vmatprep.subr.bf16.mxu0 0
  %4962 = vmatpush1.bf16.msra.mxu0 0
  %4963 = vmatprep.mubr.bf16.mxu0 0
  %4964 = vmatmul.mubr.bf16.gmra.mrb[0].mxu0 %v2224
  %v4965 = vpop.f32.mrb[0].mxu0
  %v4966 = vadd.f32 0.0, %v4965
  %v4967 = vpop.f32.mrb[0].mxu0
  %v4968 = vpop.f32.mrb[0].mxu0
  %v4969 = vadd.f32 0.0, %v4968
  %v4970 = vpop.f32.mrb[0].mxu0
  %4971 = vmatprep.mubr.bf16.mxu0 0
  %4972 = vmatmul.mubr.bf16.gmra.mrb[0].mxu0 %v2225
  %v4973 = vpop.f32.mrb[0].mxu0
  %v4974 = vadd.f32 0.0, %v4973
  %v4975 = vpop.f32.mrb[0].mxu0
  %v4976 = vpop.f32.mrb[0].mxu0
  %v4977 = vadd.f32 0.0, %v4976
  %v4978 = vpop.f32.mrb[0].mxu0
  %4979 = vmatprep.mubr.bf16.mxu0 0
  %4980 = vmatmul.mubr.bf16.gmra.mrb[0].mxu0 %v2226
  %v4981 = vpop.f32.mrb[0].mxu0
  %v4982 = vadd.f32 0.0, %v4981
  %v4983 = vpop.f32.mrb[0].mxu0
  %v4984 = vpop.f32.mrb[0].mxu0
  %v4985 = vadd.f32 0.0, %v4984
  %v4986 = vpop.f32.mrb[0].mxu0
  %4987 = vmatprep.mubr.bf16.mxu0 0
  %4988 = vmatmul.mubr.bf16.gmra.mrb[0].mxu0 %v2227
  %v4989 = vpop.f32.mrb[0].mxu0
  %v4990 = vadd.f32 0.0, %v4989
  %v4991 = vpop.f32.mrb[0].mxu0
  %v4992 = vpop.f32.mrb[0].mxu0
  %v4993 = vadd.f32 0.0, %v4992
  %v4994 = vpop.f32.mrb[0].mxu0
  %4995 = vmatprep.mubr.bf16.mxu0 0
  %4996 = vmatmul.mubr.bf16.gmra.mrb[0].mxu0 %v2228
  %v4997 = vpop.f32.mrb[0].mxu0
  %v4998 = vadd.f32 0.0, %v4997
  %v4999 = vpop.f32.mrb[0].mxu0
  %v5000 = vpop.f32.mrb[0].mxu0
  %v5001 = vadd.f32 0.0, %v5000
  %v5002 = vpop.f32.mrb[0].mxu0
  %5003 = vmatprep.mubr.bf16.mxu0 0
  %5004 = vmatmul.mubr.bf16.gmra.mrb[0].mxu0 %v2229
  %v5005 = vpop.f32.mrb[0].mxu0
  %v5006 = vadd.f32 0.0, %v5005
  %v5007 = vpop.f32.mrb[0].mxu0
  %v5008 = vpop.f32.mrb[0].mxu0
  %v5009 = vadd.f32 0.0, %v5008
  %v5010 = vpop.f32.mrb[0].mxu0
  %5011 = vmatprep.mubr.bf16.mxu0 0
  %5012 = vmatmul.mubr.bf16.gmra.mrb[0].mxu0 %v2230
  %v5013 = vpop.f32.mrb[0].mxu0
  %v5014 = vadd.f32 0.0, %v5013
  %v5015 = vpop.f32.mrb[0].mxu0
  %v5016 = vpop.f32.mrb[0].mxu0
  %v5017 = vadd.f32 0.0, %v5016
  %v5018 = vpop.f32.mrb[0].mxu0
  %5019 = vmatprep.mubr.bf16.mxu0 0
  %5020 = vmatmul.mubr.bf16.gmra.mrb[0].mxu0 %v2231
  %v5021 = vpop.f32.mrb[0].mxu0
  %v5022 = vadd.f32 0.0, %v5021
  %v5023 = vpop.f32.mrb[0].mxu0
  %v5024 = vpop.f32.mrb[0].mxu0
  %v5025 = vadd.f32 0.0, %v5024
  %v5026 = vpop.f32.mrb[0].mxu0
  %5027 = vdwg.mxu0
  %v5028 = vpack.c.bf16 %v4969, %v4966
  %v5029 = vpack.c.bf16 %v4977, %v4974
  %v5030 = vpack.c.bf16 %v4985, %v4982
  %v5031 = vpack.c.bf16 %v4993, %v4990
  %v5032 = vpack.c.bf16 %v5001, %v4998
  %v5033 = vpack.c.bf16 %v5009, %v5006
  %v5034 = vpack.c.bf16 %v5017, %v5014
  %v5035 = vpack.c.bf16 %v5025, %v5022
  %s5036 = scalar_lea.vmem %s4, 384
  %v5037 = vld [vmem:[%s5036] sm:$0xf]
  %v5038 = vld [vmem:[%s5036 + $0x4] sm:$0xf]
  %v5039 = vld [vmem:[%s5036 + $0x8] sm:$0xf]
  %v5040 = vld [vmem:[%s5036 + $0xc] sm:$0xf]
  %v5041 = vld [vmem:[%s5036 + $0x10] sm:$0xf]
  %v5042 = vld [vmem:[%s5036 + $0x14] sm:$0xf]
  %v5043 = vld [vmem:[%s5036 + $0x18] sm:$0xf]
  %v5044 = vld [vmem:[%s5036 + $0x1c] sm:$0xf]
  %v5045 = vld [vmem:[%s5036 + $0x20] sm:$0xf]
  %v5046 = vld [vmem:[%s5036 + $0x24] sm:$0xf]
  %v5047 = vld [vmem:[%s5036 + $0x28] sm:$0xf]
  %v5048 = vld [vmem:[%s5036 + $0x2c] sm:$0xf]
  %v5049 = vld [vmem:[%s5036 + $0x30] sm:$0xf]
  %v5050 = vld [vmem:[%s5036 + $0x34] sm:$0xf]
  %v5051 = vld [vmem:[%s5036 + $0x38] sm:$0xf]
  %v5052 = vld [vmem:[%s5036 + $0x3c] sm:$0xf]
  %v5069 = vunpack.c.l.b16 %v5037
  %v5070 = vunpack.c.l.b16 %v5038
  %v5071 = vunpack.c.l.b16 %v5039
  %v5072 = vunpack.c.l.b16 %v5040
  %v5073 = vunpack.c.l.b16 %v5041
  %v5074 = vunpack.c.l.b16 %v5042
  %v5075 = vunpack.c.l.b16 %v5043
  %v5076 = vunpack.c.l.b16 %v5044
  %v5077 = vunpack.c.l.b16 %v5045
  %v5078 = vunpack.c.l.b16 %v5046
  %v5079 = vunpack.c.l.b16 %v5047
  %v5080 = vunpack.c.l.b16 %v5048
  %v5081 = vunpack.c.l.b16 %v5049
  %v5082 = vunpack.c.l.b16 %v5050
  %v5083 = vunpack.c.l.b16 %v5051
  %v5084 = vunpack.c.l.b16 %v5052
  %v5085 = vpack.c.b16 %v5070, %v5069
  %v5086 = vpack.c.b16 %v5072, %v5071
  %v5087 = vpack.c.b16 %v5074, %v5073
  %v5088 = vpack.c.b16 %v5076, %v5075
  %v5089 = vpack.c.b16 %v5078, %v5077
  %v5090 = vpack.c.b16 %v5080, %v5079
  %v5091 = vpack.c.b16 %v5082, %v5081
  %v5092 = vpack.c.b16 %v5084, %v5083
  %5101 = vmatprep.subr.bf16.mxu0 0
  %5102 = vmatpush1.bf16.msra.mxu0 %v5085
  %5103 = vmatprep.subr.bf16.mxu0 0
  %5104 = vmatpush1.bf16.msra.mxu0 %v5086
  %5105 = vmatprep.subr.bf16.mxu0 0
  %5106 = vmatpush1.bf16.msra.mxu0 %v5087
  %5107 = vmatprep.subr.bf16.mxu0 0
  %5108 = vmatpush1.bf16.msra.mxu0 %v5088
  %5109 = vmatprep.subr.bf16.mxu0 0
  %5110 = vmatpush1.bf16.msra.mxu0 %v5089
  %5111 = vmatprep.subr.bf16.mxu0 0
  %5112 = vmatpush1.bf16.msra.mxu0 %v5090
  %5113 = vmatprep.subr.bf16.mxu0 0
  %5114 = vmatpush1.bf16.msra.mxu0 %v5091
  %5115 = vmatprep.subr.bf16.mxu0 0
  %5116 = vmatpush1.bf16.msra.mxu0 %v5092
  %5117 = vmatprep.subr.bf16.mxu0 0
  %5118 = vmatpush1.bf16.msra.mxu0 0
  %5119 = vmatprep.subr.bf16.mxu0 0
  %5120 = vmatpush1.bf16.msra.mxu0 0
  %5121 = vmatprep.subr.bf16.mxu0 0
  %5122 = vmatpush1.bf16.msra.mxu0 0
  %5123 = vmatprep.subr.bf16.mxu0 0
  %5124 = vmatpush1.bf16.msra.mxu0 0
  %5125 = vmatprep.subr.bf16.mxu0 0
  %5126 = vmatpush1.bf16.msra.mxu0 0
  %5127 = vmatprep.subr.bf16.mxu0 0
  %5128 = vmatpush1.bf16.msra.mxu0 0
  %5129 = vmatprep.subr.bf16.mxu0 0
  %5130 = vmatpush1.bf16.msra.mxu0 0
  %5131 = vmatprep.subr.bf16.mxu0 0
  %5132 = vmatpush1.bf16.msra.mxu0 0
  %5133 = vmatprep.mubr.bf16.mxu0 0
  %5134 = vmatmul.mubr.bf16.gmra.mrb[0].mxu0 %v5028
  %v5135 = vpop.f32.mrb[0].mxu0
  %v5136 = vadd.f32 0.0, %v5135
  %v5137 = vpop.f32.mrb[0].mxu0
  %v5138 = vpop.f32.mrb[0].mxu0
  %v5139 = vadd.f32 0.0, %v5138
  %v5140 = vpop.f32.mrb[0].mxu0
  %5141 = vmatprep.mubr.bf16.mxu0 0
  %5142 = vmatmul.mubr.bf16.gmra.mrb[0].mxu0 %v5029
  %v5143 = vpop.f32.mrb[0].mxu0
  %v5144 = vadd.f32 0.0, %v5143
  %v5145 = vpop.f32.mrb[0].mxu0
  %v5146 = vpop.f32.mrb[0].mxu0
  %v5147 = vadd.f32 0.0, %v5146
  %v5148 = vpop.f32.mrb[0].mxu0
  %5149 = vmatprep.mubr.bf16.mxu0 0
  %5150 = vmatmul.mubr.bf16.gmra.mrb[0].mxu0 %v5030
  %v5151 = vpop.f32.mrb[0].mxu0
  %v5152 = vadd.f32 0.0, %v5151
  %v5153 = vpop.f32.mrb[0].mxu0
  %v5154 = vpop.f32.mrb[0].mxu0
  %v5155 = vadd.f32 0.0, %v5154
  %v5156 = vpop.f32.mrb[0].mxu0
  %5157 = vmatprep.mubr.bf16.mxu0 0
  %5158 = vmatmul.mubr.bf16.gmra.mrb[0].mxu0 %v5031
  %v5159 = vpop.f32.mrb[0].mxu0
  %v5160 = vadd.f32 0.0, %v5159
  %v5161 = vpop.f32.mrb[0].mxu0
  %v5162 = vpop.f32.mrb[0].mxu0
  %v5163 = vadd.f32 0.0, %v5162
  %v5164 = vpop.f32.mrb[0].mxu0
  %5165 = vmatprep.mubr.bf16.mxu0 0
  %5166 = vmatmul.mubr.bf16.gmra.mrb[0].mxu0 %v5032
  %v5167 = vpop.f32.mrb[0].mxu0
  %v5168 = vadd.f32 0.0, %v5167
  %v5169 = vpop.f32.mrb[0].mxu0
  %v5170 = vpop.f32.mrb[0].mxu0
  %v5171 = vadd.f32 0.0, %v5170
  %v5172 = vpop.f32.mrb[0].mxu0
  %5173 = vmatprep.mubr.bf16.mxu0 0
  %5174 = vmatmul.mubr.bf16.gmra.mrb[0].mxu0 %v5033
  %v5175 = vpop.f32.mrb[0].mxu0
  %v5176 = vadd.f32 0.0, %v5175
  %v5177 = vpop.f32.mrb[0].mxu0
  %v5178 = vpop.f32.mrb[0].mxu0
  %v5179 = vadd.f32 0.0, %v5178
  %v5180 = vpop.f32.mrb[0].mxu0
  %5181 = vmatprep.mubr.bf16.mxu0 0
  %5182 = vmatmul.mubr.bf16.gmra.mrb[0].mxu0 %v5034
  %v5183 = vpop.f32.mrb[0].mxu0
  %v5184 = vadd.f32 0.0, %v5183
  %v5185 = vpop.f32.mrb[0].mxu0
  %v5186 = vpop.f32.mrb[0].mxu0
  %v5187 = vadd.f32 0.0, %v5186
  %v5188 = vpop.f32.mrb[0].mxu0
  %5189 = vmatprep.mubr.bf16.mxu0 0
  %5190 = vmatmul.mubr.bf16.gmra.mrb[0].mxu0 %v5035
  %v5191 = vpop.f32.mrb[0].mxu0
  %v5192 = vadd.f32 0.0, %v5191
  %v5193 = vpop.f32.mrb[0].mxu0
  %v5194 = vpop.f32.mrb[0].mxu0
  %v5195 = vadd.f32 0.0, %v5194
  %v5196 = vpop.f32.mrb[0].mxu0
  %5197 = vdwg.mxu0
  %v5198 = vadd.f32 %v4915, %v5136
  %v5199 = vadd.f32 %v4916, %v5139
  %v5200 = vadd.f32 %v4917, %v5144
  %v5201 = vadd.f32 %v4918, %v5147
  %v5202 = vadd.f32 %v4919, %v5152
  %v5203 = vadd.f32 %v4920, %v5155
  %v5204 = vadd.f32 %v4921, %v5160
  %v5205 = vadd.f32 %v4922, %v5163
  %v5206 = vadd.f32 %v4923, %v5168
  %v5207 = vadd.f32 %v4924, %v5171
  %v5208 = vadd.f32 %v4925, %v5176
  %v5209 = vadd.f32 %v4926, %v5179
  %v5210 = vadd.f32 %v4927, %v5184
  %v5211 = vadd.f32 %v4928, %v5187
  %v5212 = vadd.f32 %v4929, %v5192
  %v5213 = vadd.f32 %v4930, %v5195
  %5214 = vmatprep.subr.bf16.mxu0 0
  %5215 = vmatpush1.bf16.msra.mxu0 %v3258
  %5216 = vmatprep.subr.bf16.mxu0 0
  %5217 = vmatpush1.bf16.msra.mxu0 %v3259
  %5218 = vmatprep.subr.bf16.mxu0 0
  %5219 = vmatpush1.bf16.msra.mxu0 %v3260
  %5220 = vmatprep.subr.bf16.mxu0 0
  %5221 = vmatpush1.bf16.msra.mxu0 %v3261
  %5222 = vmatprep.subr.bf16.mxu0 0
  %5223 = vmatpush1.bf16.msra.mxu0 %v3262
  %5224 = vmatprep.subr.bf16.mxu0 0
  %5225 = vmatpush1.bf16.msra.mxu0 %v3263
  %5226 = vmatprep.subr.bf16.mxu0 0
  %5227 = vmatpush1.bf16.msra.mxu0 %v3264
  %5228 = vmatprep.subr.bf16.mxu0 0
  %5229 = vmatpush1.bf16.msra.mxu0 %v3265
  %5230 = vmatprep.subr.bf16.mxu0 0
  %5231 = vmatpush1.bf16.msra.mxu0 0
  %5232 = vmatprep.subr.bf16.mxu0 0
  %5233 = vmatpush1.bf16.msra.mxu0 0
  %5234 = vmatprep.subr.bf16.mxu0 0
  %5235 = vmatpush1.bf16.msra.mxu0 0
  %5236 = vmatprep.subr.bf16.mxu0 0
  %5237 = vmatpush1.bf16.msra.mxu0 0
  %5238 = vmatprep.subr.bf16.mxu0 0
  %5239 = vmatpush1.bf16.msra.mxu0 0
  %5240 = vmatprep.subr.bf16.mxu0 0
  %5241 = vmatpush1.bf16.msra.mxu0 0
  %5242 = vmatprep.subr.bf16.mxu0 0
  %5243 = vmatpush1.bf16.msra.mxu0 0
  %5244 = vmatprep.subr.bf16.mxu0 0
  %5245 = vmatpush1.bf16.msra.mxu0 0
  %5246 = vmatprep.mubr.bf16.mxu0 0
  %5247 = vmatmul.mubr.bf16.gmra.mrb[0].mxu0 %v2572
  %v5248 = vpop.f32.mrb[0].mxu0
  %v5249 = vadd.f32 0.0, %v5248
  %v5250 = vpop.f32.mrb[0].mxu0
  %v5251 = vpop.f32.mrb[0].mxu0
  %v5252 = vadd.f32 0.0, %v5251
  %v5253 = vpop.f32.mrb[0].mxu0
  %5254 = vmatprep.mubr.bf16.mxu0 0
  %5255 = vmatmul.mubr.bf16.gmra.mrb[0].mxu0 %v2573
  %v5256 = vpop.f32.mrb[0].mxu0
  %v5257 = vadd.f32 0.0, %v5256
  %v5258 = vpop.f32.mrb[0].mxu0
  %v5259 = vpop.f32.mrb[0].mxu0
  %v5260 = vadd.f32 0.0, %v5259
  %v5261 = vpop.f32.mrb[0].mxu0
  %5262 = vmatprep.mubr.bf16.mxu0 0
  %5263 = vmatmul.mubr.bf16.gmra.mrb[0].mxu0 %v2574
  %v5264 = vpop.f32.mrb[0].mxu0
  %v5265 = vadd.f32 0.0, %v5264
  %v5266 = vpop.f32.mrb[0].mxu0
  %v5267 = vpop.f32.mrb[0].mxu0
  %v5268 = vadd.f32 0.0, %v5267
  %v5269 = vpop.f32.mrb[0].mxu0
  %5270 = vmatprep.mubr.bf16.mxu0 0
  %5271 = vmatmul.mubr.bf16.gmra.mrb[0].mxu0 %v2575
  %v5272 = vpop.f32.mrb[0].mxu0
  %v5273 = vadd.f32 0.0, %v5272
  %v5274 = vpop.f32.mrb[0].mxu0
  %v5275 = vpop.f32.mrb[0].mxu0
  %v5276 = vadd.f32 0.0, %v5275
  %v5277 = vpop.f32.mrb[0].mxu0
  %5278 = vmatprep.mubr.bf16.mxu0 0
  %5279 = vmatmul.mubr.bf16.gmra.mrb[0].mxu0 %v2576
  %v5280 = vpop.f32.mrb[0].mxu0
  %v5281 = vadd.f32 0.0, %v5280
  %v5282 = vpop.f32.mrb[0].mxu0
  %v5283 = vpop.f32.mrb[0].mxu0
  %v5284 = vadd.f32 0.0, %v5283
  %v5285 = vpop.f32.mrb[0].mxu0
  %5286 = vmatprep.mubr.bf16.mxu0 0
  %5287 = vmatmul.mubr.bf16.gmra.mrb[0].mxu0 %v2577
  %v5288 = vpop.f32.mrb[0].mxu0
  %v5289 = vadd.f32 0.0, %v5288
  %v5290 = vpop.f32.mrb[0].mxu0
  %v5291 = vpop.f32.mrb[0].mxu0
  %v5292 = vadd.f32 0.0, %v5291
  %v5293 = vpop.f32.mrb[0].mxu0
  %5294 = vmatprep.mubr.bf16.mxu0 0
  %5295 = vmatmul.mubr.bf16.gmra.mrb[0].mxu0 %v2578
  %v5296 = vpop.f32.mrb[0].mxu0
  %v5297 = vadd.f32 0.0, %v5296
  %v5298 = vpop.f32.mrb[0].mxu0
  %v5299 = vpop.f32.mrb[0].mxu0
  %v5300 = vadd.f32 0.0, %v5299
  %v5301 = vpop.f32.mrb[0].mxu0
  %5302 = vmatprep.mubr.bf16.mxu0 0
  %5303 = vmatmul.mubr.bf16.gmra.mrb[0].mxu0 %v2579
  %v5304 = vpop.f32.mrb[0].mxu0
  %v5305 = vadd.f32 0.0, %v5304
  %v5306 = vpop.f32.mrb[0].mxu0
  %v5307 = vpop.f32.mrb[0].mxu0
  %v5308 = vadd.f32 0.0, %v5307
  %v5309 = vpop.f32.mrb[0].mxu0
  %5310 = vdwg.mxu0
  %v5311 = vpack.c.bf16 %v5252, %v5249
  %v5312 = vpack.c.bf16 %v5260, %v5257
  %v5313 = vpack.c.bf16 %v5268, %v5265
  %v5314 = vpack.c.bf16 %v5276, %v5273
  %v5315 = vpack.c.bf16 %v5284, %v5281
  %v5316 = vpack.c.bf16 %v5292, %v5289
  %v5317 = vpack.c.bf16 %v5300, %v5297
  %v5318 = vpack.c.bf16 %v5308, %v5305
  %s5319 = scalar_lea.vmem %s4, 448
  %v5320 = vld [vmem:[%s5319] sm:$0xf]
  %v5321 = vld [vmem:[%s5319 + $0x4] sm:$0xf]
  %v5322 = vld [vmem:[%s5319 + $0x8] sm:$0xf]
  %v5323 = vld [vmem:[%s5319 + $0xc] sm:$0xf]
  %v5324 = vld [vmem:[%s5319 + $0x10] sm:$0xf]
  %v5325 = vld [vmem:[%s5319 + $0x14] sm:$0xf]
  %v5326 = vld [vmem:[%s5319 + $0x18] sm:$0xf]
  %v5327 = vld [vmem:[%s5319 + $0x1c] sm:$0xf]
  %v5328 = vld [vmem:[%s5319 + $0x20] sm:$0xf]
  %v5329 = vld [vmem:[%s5319 + $0x24] sm:$0xf]
  %v5330 = vld [vmem:[%s5319 + $0x28] sm:$0xf]
  %v5331 = vld [vmem:[%s5319 + $0x2c] sm:$0xf]
  %v5332 = vld [vmem:[%s5319 + $0x30] sm:$0xf]
  %v5333 = vld [vmem:[%s5319 + $0x34] sm:$0xf]
  %v5334 = vld [vmem:[%s5319 + $0x38] sm:$0xf]
  %v5335 = vld [vmem:[%s5319 + $0x3c] sm:$0xf]
  %v5352 = vunpack.c.l.b16 %v5320
  %v5353 = vunpack.c.l.b16 %v5321
  %v5354 = vunpack.c.l.b16 %v5322
  %v5355 = vunpack.c.l.b16 %v5323
  %v5356 = vunpack.c.l.b16 %v5324
  %v5357 = vunpack.c.l.b16 %v5325
  %v5358 = vunpack.c.l.b16 %v5326
  %v5359 = vunpack.c.l.b16 %v5327
  %v5360 = vunpack.c.l.b16 %v5328
  %v5361 = vunpack.c.l.b16 %v5329
  %v5362 = vunpack.c.l.b16 %v5330
  %v5363 = vunpack.c.l.b16 %v5331
  %v5364 = vunpack.c.l.b16 %v5332
  %v5365 = vunpack.c.l.b16 %v5333
  %v5366 = vunpack.c.l.b16 %v5334
  %v5367 = vunpack.c.l.b16 %v5335
  %v5368 = vpack.c.b16 %v5353, %v5352
  %v5369 = vpack.c.b16 %v5355, %v5354
  %v5370 = vpack.c.b16 %v5357, %v5356
  %v5371 = vpack.c.b16 %v5359, %v5358
  %v5372 = vpack.c.b16 %v5361, %v5360
  %v5373 = vpack.c.b16 %v5363, %v5362
  %v5374 = vpack.c.b16 %v5365, %v5364
  %v5375 = vpack.c.b16 %v5367, %v5366
  %5384 = vmatprep.subr.bf16.mxu0 0
  %5385 = vmatpush1.bf16.msra.mxu0 %v5368
  %5386 = vmatprep.subr.bf16.mxu0 0
  %5387 = vmatpush1.bf16.msra.mxu0 %v5369
  %5388 = vmatprep.subr.bf16.mxu0 0
  %5389 = vmatpush1.bf16.msra.mxu0 %v5370
  %5390 = vmatprep.subr.bf16.mxu0 0
  %5391 = vmatpush1.bf16.msra.mxu0 %v5371
  %5392 = vmatprep.subr.bf16.mxu0 0
  %5393 = vmatpush1.bf16.msra.mxu0 %v5372
  %5394 = vmatprep.subr.bf16.mxu0 0
  %5395 = vmatpush1.bf16.msra.mxu0 %v5373
  %5396 = vmatprep.subr.bf16.mxu0 0
  %5397 = vmatpush1.bf16.msra.mxu0 %v5374
  %5398 = vmatprep.subr.bf16.mxu0 0
  %5399 = vmatpush1.bf16.msra.mxu0 %v5375
  %5400 = vmatprep.subr.bf16.mxu0 0
  %5401 = vmatpush1.bf16.msra.mxu0 0
  %5402 = vmatprep.subr.bf16.mxu0 0
  %5403 = vmatpush1.bf16.msra.mxu0 0
  %5404 = vmatprep.subr.bf16.mxu0 0
  %5405 = vmatpush1.bf16.msra.mxu0 0
  %5406 = vmatprep.subr.bf16.mxu0 0
  %5407 = vmatpush1.bf16.msra.mxu0 0
  %5408 = vmatprep.subr.bf16.mxu0 0
  %5409 = vmatpush1.bf16.msra.mxu0 0
  %5410 = vmatprep.subr.bf16.mxu0 0
  %5411 = vmatpush1.bf16.msra.mxu0 0
  %5412 = vmatprep.subr.bf16.mxu0 0
  %5413 = vmatpush1.bf16.msra.mxu0 0
  %5414 = vmatprep.subr.bf16.mxu0 0
  %5415 = vmatpush1.bf16.msra.mxu0 0
  %5416 = vmatprep.mubr.bf16.mxu0 0
  %5417 = vmatmul.mubr.bf16.gmra.mrb[0].mxu0 %v5311
  %v5418 = vpop.f32.mrb[0].mxu0
  %v5419 = vadd.f32 0.0, %v5418
  %v5420 = vpop.f32.mrb[0].mxu0
  %v5421 = vpop.f32.mrb[0].mxu0
  %v5422 = vadd.f32 0.0, %v5421
  %v5423 = vpop.f32.mrb[0].mxu0
  %5424 = vmatprep.mubr.bf16.mxu0 0
  %5425 = vmatmul.mubr.bf16.gmra.mrb[0].mxu0 %v5312
  %v5426 = vpop.f32.mrb[0].mxu0
  %v5427 = vadd.f32 0.0, %v5426
  %v5428 = vpop.f32.mrb[0].mxu0
  %v5429 = vpop.f32.mrb[0].mxu0
  %v5430 = vadd.f32 0.0, %v5429
  %v5431 = vpop.f32.mrb[0].mxu0
  %5432 = vmatprep.mubr.bf16.mxu0 0
  %5433 = vmatmul.mubr.bf16.gmra.mrb[0].mxu0 %v5313
  %v5434 = vpop.f32.mrb[0].mxu0
  %v5435 = vadd.f32 0.0, %v5434
  %v5436 = vpop.f32.mrb[0].mxu0
  %v5437 = vpop.f32.mrb[0].mxu0
  %v5438 = vadd.f32 0.0, %v5437
  %v5439 = vpop.f32.mrb[0].mxu0
  %5440 = vmatprep.mubr.bf16.mxu0 0
  %5441 = vmatmul.mubr.bf16.gmra.mrb[0].mxu0 %v5314
  %v5442 = vpop.f32.mrb[0].mxu0
  %v5443 = vadd.f32 0.0, %v5442
  %v5444 = vpop.f32.mrb[0].mxu0
  %v5445 = vpop.f32.mrb[0].mxu0
  %v5446 = vadd.f32 0.0, %v5445
  %v5447 = vpop.f32.mrb[0].mxu0
  %5448 = vmatprep.mubr.bf16.mxu0 0
  %5449 = vmatmul.mubr.bf16.gmra.mrb[0].mxu0 %v5315
  %v5450 = vpop.f32.mrb[0].mxu0
  %v5451 = vadd.f32 0.0, %v5450
  %v5452 = vpop.f32.mrb[0].mxu0
  %v5453 = vpop.f32.mrb[0].mxu0
  %v5454 = vadd.f32 0.0, %v5453
  %v5455 = vpop.f32.mrb[0].mxu0
  %5456 = vmatprep.mubr.bf16.mxu0 0
  %5457 = vmatmul.mubr.bf16.gmra.mrb[0].mxu0 %v5316
  %v5458 = vpop.f32.mrb[0].mxu0
  %v5459 = vadd.f32 0.0, %v5458
  %v5460 = vpop.f32.mrb[0].mxu0
  %v5461 = vpop.f32.mrb[0].mxu0
  %v5462 = vadd.f32 0.0, %v5461
  %v5463 = vpop.f32.mrb[0].mxu0
  %5464 = vmatprep.mubr.bf16.mxu0 0
  %5465 = vmatmul.mubr.bf16.gmra.mrb[0].mxu0 %v5317
  %v5466 = vpop.f32.mrb[0].mxu0
  %v5467 = vadd.f32 0.0, %v5466
  %v5468 = vpop.f32.mrb[0].mxu0
  %v5469 = vpop.f32.mrb[0].mxu0
  %v5470 = vadd.f32 0.0, %v5469
  %v5471 = vpop.f32.mrb[0].mxu0
  %5472 = vmatprep.mubr.bf16.mxu0 0
  %5473 = vmatmul.mubr.bf16.gmra.mrb[0].mxu0 %v5318
  %v5474 = vpop.f32.mrb[0].mxu0
  %v5475 = vadd.f32 0.0, %v5474
  %v5476 = vpop.f32.mrb[0].mxu0
  %v5477 = vpop.f32.mrb[0].mxu0
  %v5478 = vadd.f32 0.0, %v5477
  %v5479 = vpop.f32.mrb[0].mxu0
  %5480 = vdwg.mxu0
  %v5481 = vadd.f32 %v5198, %v5419
  %v5482 = vadd.f32 %v5199, %v5422
  %v5483 = vadd.f32 %v5200, %v5427
  %v5484 = vadd.f32 %v5201, %v5430
  %v5485 = vadd.f32 %v5202, %v5435
  %v5486 = vadd.f32 %v5203, %v5438
  %v5487 = vadd.f32 %v5204, %v5443
  %v5488 = vadd.f32 %v5205, %v5446
  %v5489 = vadd.f32 %v5206, %v5451
  %v5490 = vadd.f32 %v5207, %v5454
  %v5491 = vadd.f32 %v5208, %v5459
  %v5492 = vadd.f32 %v5209, %v5462
  %v5493 = vadd.f32 %v5210, %v5467
  %v5494 = vadd.f32 %v5211, %v5470
  %v5495 = vadd.f32 %v5212, %v5475
  %v5496 = vadd.f32 %v5213, %v5478
  %5497 = vmatprep.subr.bf16.mxu0 0
  %5498 = vmatpush1.bf16.msra.mxu0 %v3258
  %5499 = vmatprep.subr.bf16.mxu0 0
  %5500 = vmatpush1.bf16.msra.mxu0 %v3259
  %5501 = vmatprep.subr.bf16.mxu0 0
  %5502 = vmatpush1.bf16.msra.mxu0 %v3260
  %5503 = vmatprep.subr.bf16.mxu0 0
  %5504 = vmatpush1.bf16.msra.mxu0 %v3261
  %5505 = vmatprep.subr.bf16.mxu0 0
  %5506 = vmatpush1.bf16.msra.mxu0 %v3262
  %5507 = vmatprep.subr.bf16.mxu0 0
  %5508 = vmatpush1.bf16.msra.mxu0 %v3263
  %5509 = vmatprep.subr.bf16.mxu0 0
  %5510 = vmatpush1.bf16.msra.mxu0 %v3264
  %5511 = vmatprep.subr.bf16.mxu0 0
  %5512 = vmatpush1.bf16.msra.mxu0 %v3265
  %5513 = vmatprep.subr.bf16.mxu0 0
  %5514 = vmatpush1.bf16.msra.mxu0 0
  %5515 = vmatprep.subr.bf16.mxu0 0
  %5516 = vmatpush1.bf16.msra.mxu0 0
  %5517 = vmatprep.subr.bf16.mxu0 0
  %5518 = vmatpush1.bf16.msra.mxu0 0
  %5519 = vmatprep.subr.bf16.mxu0 0
  %5520 = vmatpush1.bf16.msra.mxu0 0
  %5521 = vmatprep.subr.bf16.mxu0 0
  %5522 = vmatpush1.bf16.msra.mxu0 0
  %5523 = vmatprep.subr.bf16.mxu0 0
  %5524 = vmatpush1.bf16.msra.mxu0 0
  %5525 = vmatprep.subr.bf16.mxu0 0
  %5526 = vmatpush1.bf16.msra.mxu0 0
  %5527 = vmatprep.subr.bf16.mxu0 0
  %5528 = vmatpush1.bf16.msra.mxu0 0
  %5529 = vmatprep.mubr.bf16.mxu0 0
  %5530 = vmatmul.mubr.bf16.gmra.mrb[0].mxu0 %v2920
  %v5531 = vpop.f32.mrb[0].mxu0
  %v5532 = vadd.f32 0.0, %v5531
  %v5533 = vpop.f32.mrb[0].mxu0
  %v5534 = vpop.f32.mrb[0].mxu0
  %v5535 = vadd.f32 0.0, %v5534
  %v5536 = vpop.f32.mrb[0].mxu0
  %5537 = vmatprep.mubr.bf16.mxu0 0
  %5538 = vmatmul.mubr.bf16.gmra.mrb[0].mxu0 %v2921
  %v5539 = vpop.f32.mrb[0].mxu0
  %v5540 = vadd.f32 0.0, %v5539
  %v5541 = vpop.f32.mrb[0].mxu0
  %v5542 = vpop.f32.mrb[0].mxu0
  %v5543 = vadd.f32 0.0, %v5542
  %v5544 = vpop.f32.mrb[0].mxu0
  %5545 = vmatprep.mubr.bf16.mxu0 0
  %5546 = vmatmul.mubr.bf16.gmra.mrb[0].mxu0 %v2922
  %v5547 = vpop.f32.mrb[0].mxu0
  %v5548 = vadd.f32 0.0, %v5547
  %v5549 = vpop.f32.mrb[0].mxu0
  %v5550 = vpop.f32.mrb[0].mxu0
  %v5551 = vadd.f32 0.0, %v5550
  %v5552 = vpop.f32.mrb[0].mxu0
  %5553 = vmatprep.mubr.bf16.mxu0 0
  %5554 = vmatmul.mubr.bf16.gmra.mrb[0].mxu0 %v2923
  %v5555 = vpop.f32.mrb[0].mxu0
  %v5556 = vadd.f32 0.0, %v5555
  %v5557 = vpop.f32.mrb[0].mxu0
  %v5558 = vpop.f32.mrb[0].mxu0
  %v5559 = vadd.f32 0.0, %v5558
  %v5560 = vpop.f32.mrb[0].mxu0
  %5561 = vmatprep.mubr.bf16.mxu0 0
  %5562 = vmatmul.mubr.bf16.gmra.mrb[0].mxu0 %v2924
  %v5563 = vpop.f32.mrb[0].mxu0
  %v5564 = vadd.f32 0.0, %v5563
  %v5565 = vpop.f32.mrb[0].mxu0
  %v5566 = vpop.f32.mrb[0].mxu0
  %v5567 = vadd.f32 0.0, %v5566
  %v5568 = vpop.f32.mrb[0].mxu0
  %5569 = vmatprep.mubr.bf16.mxu0 0
  %5570 = vmatmul.mubr.bf16.gmra.mrb[0].mxu0 %v2925
  %v5571 = vpop.f32.mrb[0].mxu0
  %v5572 = vadd.f32 0.0, %v5571
  %v5573 = vpop.f32.mrb[0].mxu0
  %v5574 = vpop.f32.mrb[0].mxu0
  %v5575 = vadd.f32 0.0, %v5574
  %v5576 = vpop.f32.mrb[0].mxu0
  %5577 = vmatprep.mubr.bf16.mxu0 0
  %5578 = vmatmul.mubr.bf16.gmra.mrb[0].mxu0 %v2926
  %v5579 = vpop.f32.mrb[0].mxu0
  %v5580 = vadd.f32 0.0, %v5579
  %v5581 = vpop.f32.mrb[0].mxu0
  %v5582 = vpop.f32.mrb[0].mxu0
  %v5583 = vadd.f32 0.0, %v5582
  %v5584 = vpop.f32.mrb[0].mxu0
  %5585 = vmatprep.mubr.bf16.mxu0 0
  %5586 = vmatmul.mubr.bf16.gmra.mrb[0].mxu0 %v2927
  %v5587 = vpop.f32.mrb[0].mxu0
  %v5588 = vadd.f32 0.0, %v5587
  %v5589 = vpop.f32.mrb[0].mxu0
  %v5590 = vpop.f32.mrb[0].mxu0
  %v5591 = vadd.f32 0.0, %v5590
  %v5592 = vpop.f32.mrb[0].mxu0
  %5593 = vdwg.mxu0
  %v5594 = vpack.c.bf16 %v5535, %v5532
  %v5595 = vpack.c.bf16 %v5543, %v5540
  %v5596 = vpack.c.bf16 %v5551, %v5548
  %v5597 = vpack.c.bf16 %v5559, %v5556
  %v5598 = vpack.c.bf16 %v5567, %v5564
  %v5599 = vpack.c.bf16 %v5575, %v5572
  %v5600 = vpack.c.bf16 %v5583, %v5580
  %v5601 = vpack.c.bf16 %v5591, %v5588
  %s5602 = scalar_lea.vmem %s4, 512
  %v5603 = vld [vmem:[%s5602] sm:$0xf]
  %v5604 = vld [vmem:[%s5602 + $0x4] sm:$0xf]
  %v5605 = vld [vmem:[%s5602 + $0x8] sm:$0xf]
  %v5606 = vld [vmem:[%s5602 + $0xc] sm:$0xf]
  %v5607 = vld [vmem:[%s5602 + $0x10] sm:$0xf]
  %v5608 = vld [vmem:[%s5602 + $0x14] sm:$0xf]
  %v5609 = vld [vmem:[%s5602 + $0x18] sm:$0xf]
  %v5610 = vld [vmem:[%s5602 + $0x1c] sm:$0xf]
  %v5611 = vld [vmem:[%s5602 + $0x20] sm:$0xf]
  %v5612 = vld [vmem:[%s5602 + $0x24] sm:$0xf]
  %v5613 = vld [vmem:[%s5602 + $0x28] sm:$0xf]
  %v5614 = vld [vmem:[%s5602 + $0x2c] sm:$0xf]
  %v5615 = vld [vmem:[%s5602 + $0x30] sm:$0xf]
  %v5616 = vld [vmem:[%s5602 + $0x34] sm:$0xf]
  %v5617 = vld [vmem:[%s5602 + $0x38] sm:$0xf]
  %v5618 = vld [vmem:[%s5602 + $0x3c] sm:$0xf]
  %v5635 = vunpack.c.l.b16 %v5603
  %v5636 = vunpack.c.l.b16 %v5604
  %v5637 = vunpack.c.l.b16 %v5605
  %v5638 = vunpack.c.l.b16 %v5606
  %v5639 = vunpack.c.l.b16 %v5607
  %v5640 = vunpack.c.l.b16 %v5608
  %v5641 = vunpack.c.l.b16 %v5609
  %v5642 = vunpack.c.l.b16 %v5610
  %v5643 = vunpack.c.l.b16 %v5611
  %v5644 = vunpack.c.l.b16 %v5612
  %v5645 = vunpack.c.l.b16 %v5613
  %v5646 = vunpack.c.l.b16 %v5614
  %v5647 = vunpack.c.l.b16 %v5615
  %v5648 = vunpack.c.l.b16 %v5616
  %v5649 = vunpack.c.l.b16 %v5617
  %v5650 = vunpack.c.l.b16 %v5618
  %v5651 = vpack.c.b16 %v5636, %v5635
  %v5652 = vpack.c.b16 %v5638, %v5637
  %v5653 = vpack.c.b16 %v5640, %v5639
  %v5654 = vpack.c.b16 %v5642, %v5641
  %v5655 = vpack.c.b16 %v5644, %v5643
  %v5656 = vpack.c.b16 %v5646, %v5645
  %v5657 = vpack.c.b16 %v5648, %v5647
  %v5658 = vpack.c.b16 %v5650, %v5649
  %5667 = vmatprep.subr.bf16.mxu0 0
  %5668 = vmatpush1.bf16.msra.mxu0 %v5651
  %5669 = vmatprep.subr.bf16.mxu0 0
  %5670 = vmatpush1.bf16.msra.mxu0 %v5652
  %5671 = vmatprep.subr.bf16.mxu0 0
  %5672 = vmatpush1.bf16.msra.mxu0 %v5653
  %5673 = vmatprep.subr.bf16.mxu0 0
  %5674 = vmatpush1.bf16.msra.mxu0 %v5654
  %5675 = vmatprep.subr.bf16.mxu0 0
  %5676 = vmatpush1.bf16.msra.mxu0 %v5655
  %5677 = vmatprep.subr.bf16.mxu0 0
  %5678 = vmatpush1.bf16.msra.mxu0 %v5656
  %5679 = vmatprep.subr.bf16.mxu0 0
  %5680 = vmatpush1.bf16.msra.mxu0 %v5657
  %5681 = vmatprep.subr.bf16.mxu0 0
  %5682 = vmatpush1.bf16.msra.mxu0 %v5658
  %5683 = vmatprep.subr.bf16.mxu0 0
  %5684 = vmatpush1.bf16.msra.mxu0 0
  %5685 = vmatprep.subr.bf16.mxu0 0
  %5686 = vmatpush1.bf16.msra.mxu0 0
  %5687 = vmatprep.subr.bf16.mxu0 0
  %5688 = vmatpush1.bf16.msra.mxu0 0
  %5689 = vmatprep.subr.bf16.mxu0 0
  %5690 = vmatpush1.bf16.msra.mxu0 0
  %5691 = vmatprep.subr.bf16.mxu0 0
  %5692 = vmatpush1.bf16.msra.mxu0 0
  %5693 = vmatprep.subr.bf16.mxu0 0
  %5694 = vmatpush1.bf16.msra.mxu0 0
  %5695 = vmatprep.subr.bf16.mxu0 0
  %5696 = vmatpush1.bf16.msra.mxu0 0
  %5697 = vmatprep.subr.bf16.mxu0 0
  %5698 = vmatpush1.bf16.msra.mxu0 0
  %5699 = vmatprep.mubr.bf16.mxu0 0
  %5700 = vmatmul.mubr.bf16.gmra.mrb[0].mxu0 %v5594
  %v5701 = vpop.f32.mrb[0].mxu0
  %v5702 = vadd.f32 0.0, %v5701
  %v5703 = vpop.f32.mrb[0].mxu0
  %v5704 = vpop.f32.mrb[0].mxu0
  %v5705 = vadd.f32 0.0, %v5704
  %v5706 = vpop.f32.mrb[0].mxu0
  %5707 = vmatprep.mubr.bf16.mxu0 0
  %5708 = vmatmul.mubr.bf16.gmra.mrb[0].mxu0 %v5595
  %v5709 = vpop.f32.mrb[0].mxu0
  %v5710 = vadd.f32 0.0, %v5709
  %v5711 = vpop.f32.mrb[0].mxu0
  %v5712 = vpop.f32.mrb[0].mxu0
  %v5713 = vadd.f32 0.0, %v5712
  %v5714 = vpop.f32.mrb[0].mxu0
  %5715 = vmatprep.mubr.bf16.mxu0 0
  %5716 = vmatmul.mubr.bf16.gmra.mrb[0].mxu0 %v5596
  %v5717 = vpop.f32.mrb[0].mxu0
  %v5718 = vadd.f32 0.0, %v5717
  %v5719 = vpop.f32.mrb[0].mxu0
  %v5720 = vpop.f32.mrb[0].mxu0
  %v5721 = vadd.f32 0.0, %v5720
  %v5722 = vpop.f32.mrb[0].mxu0
  %5723 = vmatprep.mubr.bf16.mxu0 0
  %5724 = vmatmul.mubr.bf16.gmra.mrb[0].mxu0 %v5597
  %v5725 = vpop.f32.mrb[0].mxu0
  %v5726 = vadd.f32 0.0, %v5725
  %v5727 = vpop.f32.mrb[0].mxu0
  %v5728 = vpop.f32.mrb[0].mxu0
  %v5729 = vadd.f32 0.0, %v5728
  %v5730 = vpop.f32.mrb[0].mxu0
  %5731 = vmatprep.mubr.bf16.mxu0 0
  %5732 = vmatmul.mubr.bf16.gmra.mrb[0].mxu0 %v5598
  %v5733 = vpop.f32.mrb[0].mxu0
  %v5734 = vadd.f32 0.0, %v5733
  %v5735 = vpop.f32.mrb[0].mxu0
  %v5736 = vpop.f32.mrb[0].mxu0
  %v5737 = vadd.f32 0.0, %v5736
  %v5738 = vpop.f32.mrb[0].mxu0
  %5739 = vmatprep.mubr.bf16.mxu0 0
  %5740 = vmatmul.mubr.bf16.gmra.mrb[0].mxu0 %v5599
  %v5741 = vpop.f32.mrb[0].mxu0
  %v5742 = vadd.f32 0.0, %v5741
  %v5743 = vpop.f32.mrb[0].mxu0
  %v5744 = vpop.f32.mrb[0].mxu0
  %v5745 = vadd.f32 0.0, %v5744
  %v5746 = vpop.f32.mrb[0].mxu0
  %5747 = vmatprep.mubr.bf16.mxu0 0
  %5748 = vmatmul.mubr.bf16.gmra.mrb[0].mxu0 %v5600
  %v5749 = vpop.f32.mrb[0].mxu0
  %v5750 = vadd.f32 0.0, %v5749
  %v5751 = vpop.f32.mrb[0].mxu0
  %v5752 = vpop.f32.mrb[0].mxu0
  %v5753 = vadd.f32 0.0, %v5752
  %v5754 = vpop.f32.mrb[0].mxu0
  %5755 = vmatprep.mubr.bf16.mxu0 0
  %5756 = vmatmul.mubr.bf16.gmra.mrb[0].mxu0 %v5601
  %v5757 = vpop.f32.mrb[0].mxu0
  %v5758 = vadd.f32 0.0, %v5757
  %v5759 = vpop.f32.mrb[0].mxu0
  %v5760 = vpop.f32.mrb[0].mxu0
  %v5761 = vadd.f32 0.0, %v5760
  %v5762 = vpop.f32.mrb[0].mxu0
  %5763 = vdwg.mxu0
  %v5764 = vadd.f32 %v5481, %v5702
  %v5765 = vadd.f32 %v5482, %v5705
  %v5766 = vadd.f32 %v5483, %v5710
  %v5767 = vadd.f32 %v5484, %v5713
  %v5768 = vadd.f32 %v5485, %v5718
  %v5769 = vadd.f32 %v5486, %v5721
  %v5770 = vadd.f32 %v5487, %v5726
  %v5771 = vadd.f32 %v5488, %v5729
  %v5772 = vadd.f32 %v5489, %v5734
  %v5773 = vadd.f32 %v5490, %v5737
  %v5774 = vadd.f32 %v5491, %v5742
  %v5775 = vadd.f32 %v5492, %v5745
  %v5776 = vadd.f32 %v5493, %v5750
  %v5777 = vadd.f32 %v5494, %v5753
  %v5778 = vadd.f32 %v5495, %v5758
  %v5779 = vadd.f32 %v5496, %v5761
  %v5780 = vld [vmem:[%s5] sm:$0x1]
  %v5782 = vlaneseq
  %v5783 = vshrl.u32 %v5782, 7
  %v5784 = vsub.s32 0, %v5783
  %v5785 = vrot.slane %v5780, %v5784
  %v5787 = vadd.f32 %v5764, %v5785
  %v5788 = vadd.f32 %v5765, %v5785
  %v5789 = vadd.f32 %v5766, %v5785
  %v5790 = vadd.f32 %v5767, %v5785
  %v5791 = vadd.f32 %v5768, %v5785
  %v5792 = vadd.f32 %v5769, %v5785
  %v5793 = vadd.f32 %v5770, %v5785
  %v5794 = vadd.f32 %v5771, %v5785
  %v5795 = vadd.f32 %v5772, %v5785
  %v5796 = vadd.f32 %v5773, %v5785
  %v5797 = vadd.f32 %v5774, %v5785
  %v5798 = vadd.f32 %v5775, %v5785
  %v5799 = vadd.f32 %v5776, %v5785
  %v5800 = vadd.f32 %v5777, %v5785
  %v5801 = vadd.f32 %v5778, %v5785
  %v5802 = vadd.f32 %v5779, %v5785
  %v5803 = vadd.f32 %v5787, %v57
  %v5804 = vadd.f32 %v5788, %v58
  %v5805 = vadd.f32 %v5789, %v59
  %v5806 = vadd.f32 %v5790, %v60
  %v5807 = vadd.f32 %v5791, %v61
  %v5808 = vadd.f32 %v5792, %v62
  %v5809 = vadd.f32 %v5793, %v63
  %v5810 = vadd.f32 %v5794, %v64
  %v5811 = vadd.f32 %v5795, %v65
  %v5812 = vadd.f32 %v5796, %v66
  %v5813 = vadd.f32 %v5797, %v67
  %v5814 = vadd.f32 %v5798, %v68
  %v5815 = vadd.f32 %v5799, %v69
  %v5816 = vadd.f32 %v5800, %v70
  %v5817 = vadd.f32 %v5801, %v71
  %v5818 = vadd.f32 %v5802, %v72
  %v5819 = vmax.f32 %v5803, 0.0
  %v5820 = vmax.f32 %v5804, 0.0
  %v5821 = vmax.f32 %v5805, 0.0
  %v5822 = vmax.f32 %v5806, 0.0
  %v5823 = vmax.f32 %v5807, 0.0
  %v5824 = vmax.f32 %v5808, 0.0
  %v5825 = vmax.f32 %v5809, 0.0
  %v5826 = vmax.f32 %v5810, 0.0
  %v5827 = vmax.f32 %v5811, 0.0
  %v5828 = vmax.f32 %v5812, 0.0
  %v5829 = vmax.f32 %v5813, 0.0
  %v5830 = vmax.f32 %v5814, 0.0
  %v5831 = vmax.f32 %v5815, 0.0
  %v5832 = vmax.f32 %v5816, 0.0
  %v5833 = vmax.f32 %v5817, 0.0
  %v5834 = vmax.f32 %v5818, 0.0
  %v5835 = vld [vmem:[%s6] sm:$0xff]
  %5836 = vmatprep.subr.mxu0 0.0
  %5837 = vmatpush1.msra.mxu0 %v5819
  %5838 = vmatprep.subr.mxu0 0.0
  %5839 = vmatpush1.msra.mxu0 %v5820
  %5840 = vmatprep.subr.mxu0 0.0
  %5841 = vmatpush1.msra.mxu0 %v5821
  %5842 = vmatprep.subr.mxu0 0.0
  %5843 = vmatpush1.msra.mxu0 %v5822
  %5844 = vmatprep.subr.mxu0 0.0
  %5845 = vmatpush1.msra.mxu0 %v5823
  %5846 = vmatprep.subr.mxu0 0.0
  %5847 = vmatpush1.msra.mxu0 %v5824
  %5848 = vmatprep.subr.mxu0 0.0
  %5849 = vmatpush1.msra.mxu0 %v5825
  %5850 = vmatprep.subr.mxu0 0.0
  %5851 = vmatpush1.msra.mxu0 %v5826
  %5852 = vmatprep.subr.mxu0 0.0
  %5853 = vmatpush1.msra.mxu0 %v5827
  %5854 = vmatprep.subr.mxu0 0.0
  %5855 = vmatpush1.msra.mxu0 %v5828
  %5856 = vmatprep.subr.mxu0 0.0
  %5857 = vmatpush1.msra.mxu0 %v5829
  %5858 = vmatprep.subr.mxu0 0.0
  %5859 = vmatpush1.msra.mxu0 %v5830
  %5860 = vmatprep.subr.mxu0 0.0
  %5861 = vmatpush1.msra.mxu0 %v5831
  %5862 = vmatprep.subr.mxu0 0.0
  %5863 = vmatpush1.msra.mxu0 %v5832
  %5864 = vmatprep.subr.mxu0 0.0
  %5865 = vmatpush1.msra.mxu0 %v5833
  %5866 = vmatprep.subr.mxu0 0.0
  %5867 = vmatpush1.msra.mxu0 %v5834
  %5868 = vmatprep.subr.mxu0 0.0
  %5869 = vmatpush1.msra.mxu0 0.0
  %5870 = vmatprep.subr.mxu0 0.0
  %5871 = vmatpush1.msra.mxu0 0.0
  %5872 = vmatprep.subr.mxu0 0.0
  %5873 = vmatpush1.msra.mxu0 0.0
  %5874 = vmatprep.subr.mxu0 0.0
  %5875 = vmatpush1.msra.mxu0 0.0
  %5876 = vmatprep.subr.mxu0 0.0
  %5877 = vmatpush1.msra.mxu0 0.0
  %5878 = vmatprep.subr.mxu0 0.0
  %5879 = vmatpush1.msra.mxu0 0.0
  %5880 = vmatprep.subr.mxu0 0.0
  %5881 = vmatpush1.msra.mxu0 0.0
  %5882 = vmatprep.subr.mxu0 0.0
  %5883 = vmatpush1.msra.mxu0 0.0
  %5884 = vmatprep.subr.mxu0 0.0
  %5885 = vmatpush1.msra.mxu0 0.0
  %5886 = vmatprep.subr.mxu0 0.0
  %5887 = vmatpush1.msra.mxu0 0.0
  %5888 = vmatprep.subr.mxu0 0.0
  %5889 = vmatpush1.msra.mxu0 0.0
  %5890 = vmatprep.subr.mxu0 0.0
  %5891 = vmatpush1.msra.mxu0 0.0
  %5892 = vmatprep.subr.mxu0 0.0
  %5893 = vmatpush1.msra.mxu0 0.0
  %5894 = vmatprep.subr.mxu0 0.0
  %5895 = vmatpush1.msra.mxu0 0.0
  %5896 = vmatprep.subr.mxu0 0.0
  %5897 = vmatpush1.msra.mxu0 0.0
  %5898 = vmatprep.subr.mxu0 0.0
  %5899 = vmatpush1.msra.mxu0 0.0
  %5900 = vmatprep.mubr.f32.mxu0 0.0
  %5901 = vmatmul.mubr.f32.gmra.mrb[0].mxu0 %v5835
  %v5902 = vpop.f32.mrb[0].mxu0
  %v5903 = vadd.f32 0.0, %v5902
  %v5904 = vpop.f32.mrb[0].mxu0
  %5905 = vdwg.mxu0
  %v5906 = vpack.c.bf16 %v5903, %v5903
  %v5907 = vld [vmem:[%s7] sm:$0xff]
  %v5908 = vld [vmem:[%s7 + $0x8] sm:$0xff]
  %v5909 = vld [vmem:[%s7 + $0x10] sm:$0xff]
  %v5910 = vld [vmem:[%s7 + $0x18] sm:$0xff]
  %v5911 = vld [vmem:[%s7 + $0x20] sm:$0xff]
  %v5912 = vld [vmem:[%s7 + $0x28] sm:$0xff]
  %v5913 = vld [vmem:[%s7 + $0x30] sm:$0xff]
  %v5914 = vld [vmem:[%s7 + $0x38] sm:$0xff]
  %v5915 = vld [vmem:[%s7 + $0x40] sm:$0xff]
  %v5916 = vld [vmem:[%s7 + $0x48] sm:$0xff]
  %v5917 = vld [vmem:[%s7 + $0x50] sm:$0xff]
  %v5918 = vld [vmem:[%s7 + $0x58] sm:$0xff]
  %v5919 = vld [vmem:[%s7 + $0x60] sm:$0xff]
  %v5920 = vld [vmem:[%s7 + $0x68] sm:$0xff]
  %v5921 = vld [vmem:[%s7 + $0x70] sm:$0xff]
  %v5922 = vld [vmem:[%s7 + $0x78] sm:$0xff]
  %v5923 = vld [vmem:[%s7 + $0x80] sm:$0xff]
  %v5924 = vld [vmem:[%s7 + $0x88] sm:$0xff]
  %v5925 = vld [vmem:[%s7 + $0x90] sm:$0xff]
  %v5926 = vld [vmem:[%s7 + $0x98] sm:$0xff]
  %v5927 = vld [vmem:[%s7 + $0xa0] sm:$0xff]
  %v5928 = vld [vmem:[%s7 + $0xa8] sm:$0xff]
  %v5929 = vld [vmem:[%s7 + $0xb0] sm:$0xff]
  %v5930 = vld [vmem:[%s7 + $0xb8] sm:$0xff]
  %v5931 = vld [vmem:[%s7 + $0xc0] sm:$0xff]
  %v5932 = vld [vmem:[%s7 + $0xc8] sm:$0xff]
  %v5933 = vld [vmem:[%s7 + $0xd0] sm:$0xff]
  %v5934 = vld [vmem:[%s7 + $0xd8] sm:$0xff]
  %v5935 = vld [vmem:[%s7 + $0xe0] sm:$0xff]
  %v5936 = vld [vmem:[%s7 + $0xe8] sm:$0xff]
  %v5937 = vld [vmem:[%s7 + $0xf0] sm:$0xff]
  %v5938 = vld [vmem:[%s7 + $0xf8] sm:$0xff]
  %v5939 = vld [vmem:[%s7 + $0x100] sm:$0xff]
  %v5940 = vld [vmem:[%s7 + $0x108] sm:$0xff]
  %v5941 = vld [vmem:[%s7 + $0x110] sm:$0xff]
  %v5942 = vld [vmem:[%s7 + $0x118] sm:$0xff]
  %v5943 = vld [vmem:[%s7 + $0x120] sm:$0xff]
  %v5944 = vld [vmem:[%s7 + $0x128] sm:$0xff]
  %v5945 = vld [vmem:[%s7 + $0x130] sm:$0xff]
  %v5946 = vld [vmem:[%s7 + $0x138] sm:$0xff]
  %v5947 = vld [vmem:[%s7 + $0x140] sm:$0xff]
  %v5948 = vld [vmem:[%s7 + $0x148] sm:$0xff]
  %v5949 = vld [vmem:[%s7 + $0x150] sm:$0xff]
  %v5950 = vld [vmem:[%s7 + $0x158] sm:$0xff]
  %v5951 = vld [vmem:[%s7 + $0x160] sm:$0xff]
  %v5952 = vld [vmem:[%s7 + $0x168] sm:$0xff]
  %v5953 = vld [vmem:[%s7 + $0x170] sm:$0xff]
  %v5954 = vld [vmem:[%s7 + $0x178] sm:$0xff]
  %v5955 = vld [vmem:[%s7 + $0x180] sm:$0xff]
  %v5956 = vld [vmem:[%s7 + $0x188] sm:$0xff]
  %v5957 = vld [vmem:[%s7 + $0x190] sm:$0xff]
  %v5958 = vld [vmem:[%s7 + $0x198] sm:$0xff]
  %v5959 = vld [vmem:[%s7 + $0x1a0] sm:$0xff]
  %v5960 = vld [vmem:[%s7 + $0x1a8] sm:$0xff]
  %v5961 = vld [vmem:[%s7 + $0x1b0] sm:$0xff]
  %v5962 = vld [vmem:[%s7 + $0x1b8] sm:$0xff]
  %v5963 = vld [vmem:[%s7 + $0x1c0] sm:$0xff]
  %v5964 = vld [vmem:[%s7 + $0x1c8] sm:$0xff]
  %v5965 = vld [vmem:[%s7 + $0x1d0] sm:$0xff]
  %v5966 = vld [vmem:[%s7 + $0x1d8] sm:$0xff]
  %v5967 = vld [vmem:[%s7 + $0x1e0] sm:$0xff]
  %v5968 = vld [vmem:[%s7 + $0x1e8] sm:$0xff]
  %v5969 = vld [vmem:[%s7 + $0x1f0] sm:$0xff]
  %v5970 = vld [vmem:[%s7 + $0x1f8] sm:$0xff]
  %v5971 = vld [vmem:[%s8] sm:$0xff]
  %v5973 = vlaneseq
  %v5974 = vshrl.u32 %v5973, 7
  %v5975 = vsub.s32 0, %v5974
  %v5976 = vrot.slane %v5971, %v5975
  %v5977 = vlaneseq
  %v5978 = vshrl.u32 %v5977, 7
  %v5979 = vsub.s32 1, %v5978
  %v5980 = vrot.slane %v5971, %v5979
  %v5981 = vlaneseq
  %v5982 = vshrl.u32 %v5981, 7
  %v5983 = vsub.s32 2, %v5982
  %v5984 = vrot.slane %v5971, %v5983
  %v5985 = vlaneseq
  %v5986 = vshrl.u32 %v5985, 7
  %v5987 = vsub.s32 3, %v5986
  %v5988 = vrot.slane %v5971, %v5987
  %v5989 = vlaneseq
  %v5990 = vshrl.u32 %v5989, 7
  %v5991 = vsub.s32 4, %v5990
  %v5992 = vrot.slane %v5971, %v5991
  %v5993 = vlaneseq
  %v5994 = vshrl.u32 %v5993, 7
  %v5995 = vsub.s32 5, %v5994
  %v5996 = vrot.slane %v5971, %v5995
  %v5997 = vlaneseq
  %v5998 = vshrl.u32 %v5997, 7
  %v5999 = vsub.s32 6, %v5998
  %v6000 = vrot.slane %v5971, %v5999
  %v6001 = vlaneseq
  %v6002 = vshrl.u32 %v6001, 7
  %v6003 = vsub.s32 7, %v6002
  %v6004 = vrot.slane %v5971, %v6003
  %v6077 = vunpack.c.l.b16 %v5907
  %v6078 = vunpack.c.h.b16 %v5907
  %v6079 = vunpack.c.l.b16 %v5908
  %v6080 = vunpack.c.h.b16 %v5908
  %v6081 = vunpack.c.l.b16 %v5909
  %v6082 = vunpack.c.h.b16 %v5909
  %v6083 = vunpack.c.l.b16 %v5910
  %v6084 = vunpack.c.h.b16 %v5910
  %v6085 = vunpack.c.l.b16 %v5911
  %v6086 = vunpack.c.h.b16 %v5911
  %v6087 = vunpack.c.l.b16 %v5912
  %v6088 = vunpack.c.h.b16 %v5912
  %v6089 = vunpack.c.l.b16 %v5913
  %v6090 = vunpack.c.h.b16 %v5913
  %v6091 = vunpack.c.l.b16 %v5914
  %v6092 = vunpack.c.h.b16 %v5914
  %v6093 = vunpack.c.l.b16 %v5915
  %v6094 = vunpack.c.h.b16 %v5915
  %v6095 = vunpack.c.l.b16 %v5916
  %v6096 = vunpack.c.h.b16 %v5916
  %v6097 = vunpack.c.l.b16 %v5917
  %v6098 = vunpack.c.h.b16 %v5917
  %v6099 = vunpack.c.l.b16 %v5918
  %v6100 = vunpack.c.h.b16 %v5918
  %v6101 = vunpack.c.l.b16 %v5919
  %v6102 = vunpack.c.h.b16 %v5919
  %v6103 = vunpack.c.l.b16 %v5920
  %v6104 = vunpack.c.h.b16 %v5920
  %v6105 = vunpack.c.l.b16 %v5921
  %v6106 = vunpack.c.h.b16 %v5921
  %v6107 = vunpack.c.l.b16 %v5922
  %v6108 = vunpack.c.h.b16 %v5922
  %v6109 = vunpack.c.l.b16 %v5923
  %v6110 = vunpack.c.h.b16 %v5923
  %v6111 = vunpack.c.l.b16 %v5924
  %v6112 = vunpack.c.h.b16 %v5924
  %v6113 = vunpack.c.l.b16 %v5925
  %v6114 = vunpack.c.h.b16 %v5925
  %v6115 = vunpack.c.l.b16 %v5926
  %v6116 = vunpack.c.h.b16 %v5926
  %v6117 = vunpack.c.l.b16 %v5927
  %v6118 = vunpack.c.h.b16 %v5927
  %v6119 = vunpack.c.l.b16 %v5928
  %v6120 = vunpack.c.h.b16 %v5928
  %v6121 = vunpack.c.l.b16 %v5929
  %v6122 = vunpack.c.h.b16 %v5929
  %v6123 = vunpack.c.l.b16 %v5930
  %v6124 = vunpack.c.h.b16 %v5930
  %v6125 = vunpack.c.l.b16 %v5931
  %v6126 = vunpack.c.h.b16 %v5931
  %v6127 = vunpack.c.l.b16 %v5932
  %v6128 = vunpack.c.h.b16 %v5932
  %v6129 = vunpack.c.l.b16 %v5933
  %v6130 = vunpack.c.h.b16 %v5933
  %v6131 = vunpack.c.l.b16 %v5934
  %v6132 = vunpack.c.h.b16 %v5934
  %v6133 = vunpack.c.l.b16 %v5935
  %v6134 = vunpack.c.h.b16 %v5935
  %v6135 = vunpack.c.l.b16 %v5936
  %v6136 = vunpack.c.h.b16 %v5936
  %v6137 = vunpack.c.l.b16 %v5937
  %v6138 = vunpack.c.h.b16 %v5937
  %v6139 = vunpack.c.l.b16 %v5938
  %v6140 = vunpack.c.h.b16 %v5938
  %v6141 = vunpack.c.l.b16 %v5939
  %v6142 = vunpack.c.h.b16 %v5939
  %v6143 = vunpack.c.l.b16 %v5940
  %v6144 = vunpack.c.h.b16 %v5940
  %v6145 = vunpack.c.l.b16 %v5941
  %v6146 = vunpack.c.h.b16 %v5941
  %v6147 = vunpack.c.l.b16 %v5942
  %v6148 = vunpack.c.h.b16 %v5942
  %v6149 = vunpack.c.l.b16 %v5943
  %v6150 = vunpack.c.h.b16 %v5943
  %v6151 = vunpack.c.l.b16 %v5944
  %v6152 = vunpack.c.h.b16 %v5944
  %v6153 = vunpack.c.l.b16 %v5945
  %v6154 = vunpack.c.h.b16 %v5945
  %v6155 = vunpack.c.l.b16 %v5946
  %v6156 = vunpack.c.h.b16 %v5946
  %v6157 = vunpack.c.l.b16 %v5947
  %v6158 = vunpack.c.h.b16 %v5947
  %v6159 = vunpack.c.l.b16 %v5948
  %v6160 = vunpack.c.h.b16 %v5948
  %v6161 = vunpack.c.l.b16 %v5949
  %v6162 = vunpack.c.h.b16 %v5949
  %v6163 = vunpack.c.l.b16 %v5950
  %v6164 = vunpack.c.h.b16 %v5950
  %v6165 = vunpack.c.l.b16 %v5951
  %v6166 = vunpack.c.h.b16 %v5951
  %v6167 = vunpack.c.l.b16 %v5952
  %v6168 = vunpack.c.h.b16 %v5952
  %v6169 = vunpack.c.l.b16 %v5953
  %v6170 = vunpack.c.h.b16 %v5953
  %v6171 = vunpack.c.l.b16 %v5954
  %v6172 = vunpack.c.h.b16 %v5954
  %v6173 = vunpack.c.l.b16 %v5955
  %v6174 = vunpack.c.h.b16 %v5955
  %v6175 = vunpack.c.l.b16 %v5956
  %v6176 = vunpack.c.h.b16 %v5956
  %v6177 = vunpack.c.l.b16 %v5957
  %v6178 = vunpack.c.h.b16 %v5957
  %v6179 = vunpack.c.l.b16 %v5958
  %v6180 = vunpack.c.h.b16 %v5958
  %v6181 = vunpack.c.l.b16 %v5959
  %v6182 = vunpack.c.h.b16 %v5959
  %v6183 = vunpack.c.l.b16 %v5960
  %v6184 = vunpack.c.h.b16 %v5960
  %v6185 = vunpack.c.l.b16 %v5961
  %v6186 = vunpack.c.h.b16 %v5961
  %v6187 = vunpack.c.l.b16 %v5962
  %v6188 = vunpack.c.h.b16 %v5962
  %v6189 = vunpack.c.l.b16 %v5963
  %v6190 = vunpack.c.h.b16 %v5963
  %v6191 = vunpack.c.l.b16 %v5964
  %v6192 = vunpack.c.h.b16 %v5964
  %v6193 = vunpack.c.l.b16 %v5965
  %v6194 = vunpack.c.h.b16 %v5965
  %v6195 = vunpack.c.l.b16 %v5966
  %v6196 = vunpack.c.h.b16 %v5966
  %v6197 = vunpack.c.l.b16 %v5967
  %v6198 = vunpack.c.h.b16 %v5967
  %v6199 = vunpack.c.l.b16 %v5968
  %v6200 = vunpack.c.h.b16 %v5968
  %v6201 = vunpack.c.l.b16 %v5969
  %v6202 = vunpack.c.h.b16 %v5969
  %v6203 = vunpack.c.l.b16 %v5970
  %v6204 = vunpack.c.h.b16 %v5970
  %v6205 = vpack.c.b16 %v6085, %v6077
  %v6206 = vpack.c.b16 %v6086, %v6078
  %v6207 = vpack.c.b16 %v6087, %v6079
  %v6208 = vpack.c.b16 %v6088, %v6080
  %v6209 = vpack.c.b16 %v6089, %v6081
  %v6210 = vpack.c.b16 %v6090, %v6082
  %v6211 = vpack.c.b16 %v6091, %v6083
  %v6212 = vpack.c.b16 %v6092, %v6084
  %v6213 = vpack.c.b16 %v6101, %v6093
  %v6214 = vpack.c.b16 %v6102, %v6094
  %v6215 = vpack.c.b16 %v6103, %v6095
  %v6216 = vpack.c.b16 %v6104, %v6096
  %v6217 = vpack.c.b16 %v6105, %v6097
  %v6218 = vpack.c.b16 %v6106, %v6098
  %v6219 = vpack.c.b16 %v6107, %v6099
  %v6220 = vpack.c.b16 %v6108, %v6100
  %v6221 = vpack.c.b16 %v6117, %v6109
  %v6222 = vpack.c.b16 %v6118, %v6110
  %v6223 = vpack.c.b16 %v6119, %v6111
  %v6224 = vpack.c.b16 %v6120, %v6112
  %v6225 = vpack.c.b16 %v6121, %v6113
  %v6226 = vpack.c.b16 %v6122, %v6114
  %v6227 = vpack.c.b16 %v6123, %v6115
  %v6228 = vpack.c.b16 %v6124, %v6116
  %v6229 = vpack.c.b16 %v6133, %v6125
  %v6230 = vpack.c.b16 %v6134, %v6126
  %v6231 = vpack.c.b16 %v6135, %v6127
  %v6232 = vpack.c.b16 %v6136, %v6128
  %v6233 = vpack.c.b16 %v6137, %v6129
  %v6234 = vpack.c.b16 %v6138, %v6130
  %v6235 = vpack.c.b16 %v6139, %v6131
  %v6236 = vpack.c.b16 %v6140, %v6132
  %v6237 = vpack.c.b16 %v6149, %v6141
  %v6238 = vpack.c.b16 %v6150, %v6142
  %v6239 = vpack.c.b16 %v6151, %v6143
  %v6240 = vpack.c.b16 %v6152, %v6144
  %v6241 = vpack.c.b16 %v6153, %v6145
  %v6242 = vpack.c.b16 %v6154, %v6146
  %v6243 = vpack.c.b16 %v6155, %v6147
  %v6244 = vpack.c.b16 %v6156, %v6148
  %v6245 = vpack.c.b16 %v6165, %v6157
  %v6246 = vpack.c.b16 %v6166, %v6158
  %v6247 = vpack.c.b16 %v6167, %v6159
  %v6248 = vpack.c.b16 %v6168, %v6160
  %v6249 = vpack.c.b16 %v6169, %v6161
  %v6250 = vpack.c.b16 %v6170, %v6162
  %v6251 = vpack.c.b16 %v6171, %v6163
  %v6252 = vpack.c.b16 %v6172, %v6164
  %v6253 = vpack.c.b16 %v6181, %v6173
  %v6254 = vpack.c.b16 %v6182, %v6174
  %v6255 = vpack.c.b16 %v6183, %v6175
  %v6256 = vpack.c.b16 %v6184, %v6176
  %v6257 = vpack.c.b16 %v6185, %v6177
  %v6258 = vpack.c.b16 %v6186, %v6178
  %v6259 = vpack.c.b16 %v6187, %v6179
  %v6260 = vpack.c.b16 %v6188, %v6180
  %v6261 = vpack.c.b16 %v6197, %v6189
  %v6262 = vpack.c.b16 %v6198, %v6190
  %v6263 = vpack.c.b16 %v6199, %v6191
  %v6264 = vpack.c.b16 %v6200, %v6192
  %v6265 = vpack.c.b16 %v6201, %v6193
  %v6266 = vpack.c.b16 %v6202, %v6194
  %v6267 = vpack.c.b16 %v6203, %v6195
  %v6268 = vpack.c.b16 %v6204, %v6196
  %6333 = vmatprep.subr.bf16.mxu0 %v6206
  %6334 = vmatpush1.bf16.msra.mxu0 %v6205
  %6335 = vmatprep.subr.bf16.mxu0 %v6214
  %6336 = vmatpush1.bf16.msra.mxu0 %v6213
  %6337 = vmatprep.subr.bf16.mxu0 %v6222
  %6338 = vmatpush1.bf16.msra.mxu0 %v6221
  %6339 = vmatprep.subr.bf16.mxu0 %v6230
  %6340 = vmatpush1.bf16.msra.mxu0 %v6229
  %6341 = vmatprep.subr.bf16.mxu0 %v6238
  %6342 = vmatpush1.bf16.msra.mxu0 %v6237
  %6343 = vmatprep.subr.bf16.mxu0 %v6246
  %6344 = vmatpush1.bf16.msra.mxu0 %v6245
  %6345 = vmatprep.subr.bf16.mxu0 %v6254
  %6346 = vmatpush1.bf16.msra.mxu0 %v6253
  %6347 = vmatprep.subr.bf16.mxu0 %v6262
  %6348 = vmatpush1.bf16.msra.mxu0 %v6261
  %6349 = vmatprep.subr.bf16.mxu0 0
  %6350 = vmatpush1.bf16.msra.mxu0 0
  %6351 = vmatprep.subr.bf16.mxu0 0
  %6352 = vmatpush1.bf16.msra.mxu0 0
  %6353 = vmatprep.subr.bf16.mxu0 0
  %6354 = vmatpush1.bf16.msra.mxu0 0
  %6355 = vmatprep.subr.bf16.mxu0 0
  %6356 = vmatpush1.bf16.msra.mxu0 0
  %6357 = vmatprep.subr.bf16.mxu0 0
  %6358 = vmatpush1.bf16.msra.mxu0 0
  %6359 = vmatprep.subr.bf16.mxu0 0
  %6360 = vmatpush1.bf16.msra.mxu0 0
  %6361 = vmatprep.subr.bf16.mxu0 0
  %6362 = vmatpush1.bf16.msra.mxu0 0
  %6363 = vmatprep.subr.bf16.mxu0 0
  %6364 = vmatpush1.bf16.msra.mxu0 0
  %6365 = vmatprep.mubr.bf16.mxu0 0
  %6366 = vmatmul.mubr.bf16.gmra.mrb[0].mxu0 %v5906
  %v6367 = vpop.f32.mrb[0].mxu0
  %v6368 = vadd.f32 %v5976, %v6367
  %v6369 = vpop.f32.mrb[0].mxu0
  %v6370 = vadd.f32 %v5980, %v6369
  %v6371 = vpop.f32.mrb[0].mxu0
  %v6372 = vpop.f32.mrb[0].mxu0
  %6373 = vdwg.mxu0
  %6374 = vmatprep.subr.bf16.mxu0 %v6208
  %6375 = vmatpush1.bf16.msra.mxu0 %v6207
  %6376 = vmatprep.subr.bf16.mxu0 %v6216
  %6377 = vmatpush1.bf16.msra.mxu0 %v6215
  %6378 = vmatprep.subr.bf16.mxu0 %v6224
  %6379 = vmatpush1.bf16.msra.mxu0 %v6223
  %6380 = vmatprep.subr.bf16.mxu0 %v6232
  %6381 = vmatpush1.bf16.msra.mxu0 %v6231
  %6382 = vmatprep.subr.bf16.mxu0 %v6240
  %6383 = vmatpush1.bf16.msra.mxu0 %v6239
  %6384 = vmatprep.subr.bf16.mxu0 %v6248
  %6385 = vmatpush1.bf16.msra.mxu0 %v6247
  %6386 = vmatprep.subr.bf16.mxu0 %v6256
  %6387 = vmatpush1.bf16.msra.mxu0 %v6255
  %6388 = vmatprep.subr.bf16.mxu0 %v6264
  %6389 = vmatpush1.bf16.msra.mxu0 %v6263
  %6390 = vmatprep.subr.bf16.mxu0 0
  %6391 = vmatpush1.bf16.msra.mxu0 0
  %6392 = vmatprep.subr.bf16.mxu0 0
  %6393 = vmatpush1.bf16.msra.mxu0 0
  %6394 = vmatprep.subr.bf16.mxu0 0
  %6395 = vmatpush1.bf16.msra.mxu0 0
  %6396 = vmatprep.subr.bf16.mxu0 0
  %6397 = vmatpush1.bf16.msra.mxu0 0
  %6398 = vmatprep.subr.bf16.mxu0 0
  %6399 = vmatpush1.bf16.msra.mxu0 0
  %6400 = vmatprep.subr.bf16.mxu0 0
  %6401 = vmatpush1.bf16.msra.mxu0 0
  %6402 = vmatprep.subr.bf16.mxu0 0
  %6403 = vmatpush1.bf16.msra.mxu0 0
  %6404 = vmatprep.subr.bf16.mxu0 0
  %6405 = vmatpush1.bf16.msra.mxu0 0
  %6406 = vmatprep.mubr.bf16.mxu0 0
  %6407 = vmatmul.mubr.bf16.gmra.mrb[0].mxu0 %v5906
  %v6408 = vpop.f32.mrb[0].mxu0
  %v6409 = vadd.f32 %v5984, %v6408
  %v6410 = vpop.f32.mrb[0].mxu0
  %v6411 = vadd.f32 %v5988, %v6410
  %v6412 = vpop.f32.mrb[0].mxu0
  %v6413 = vpop.f32.mrb[0].mxu0
  %6414 = vdwg.mxu0
  %6415 = vmatprep.subr.bf16.mxu0 %v6210
  %6416 = vmatpush1.bf16.msra.mxu0 %v6209
  %6417 = vmatprep.subr.bf16.mxu0 %v6218
  %6418 = vmatpush1.bf16.msra.mxu0 %v6217
  %6419 = vmatprep.subr.bf16.mxu0 %v6226
  %6420 = vmatpush1.bf16.msra.mxu0 %v6225
  %6421 = vmatprep.subr.bf16.mxu0 %v6234
  %6422 = vmatpush1.bf16.msra.mxu0 %v6233
  %6423 = vmatprep.subr.bf16.mxu0 %v6242
  %6424 = vmatpush1.bf16.msra.mxu0 %v6241
  %6425 = vmatprep.subr.bf16.mxu0 %v6250
  %6426 = vmatpush1.bf16.msra.mxu0 %v6249
  %6427 = vmatprep.subr.bf16.mxu0 %v6258
  %6428 = vmatpush1.bf16.msra.mxu0 %v6257
  %6429 = vmatprep.subr.bf16.mxu0 %v6266
  %6430 = vmatpush1.bf16.msra.mxu0 %v6265
  %6431 = vmatprep.subr.bf16.mxu0 0
  %6432 = vmatpush1.bf16.msra.mxu0 0
  %6433 = vmatprep.subr.bf16.mxu0 0
  %6434 = vmatpush1.bf16.msra.mxu0 0
  %6435 = vmatprep.subr.bf16.mxu0 0
  %6436 = vmatpush1.bf16.msra.mxu0 0
  %6437 = vmatprep.subr.bf16.mxu0 0
  %6438 = vmatpush1.bf16.msra.mxu0 0
  %6439 = vmatprep.subr.bf16.mxu0 0
  %6440 = vmatpush1.bf16.msra.mxu0 0
  %6441 = vmatprep.subr.bf16.mxu0 0
  %6442 = vmatpush1.bf16.msra.mxu0 0
  %6443 = vmatprep.subr.bf16.mxu0 0
  %6444 = vmatpush1.bf16.msra.mxu0 0
  %6445 = vmatprep.subr.bf16.mxu0 0
  %6446 = vmatpush1.bf16.msra.mxu0 0
  %6447 = vmatprep.mubr.bf16.mxu0 0
  %6448 = vmatmul.mubr.bf16.gmra.mrb[0].mxu0 %v5906
  %v6449 = vpop.f32.mrb[0].mxu0
  %v6450 = vadd.f32 %v5992, %v6449
  %v6451 = vpop.f32.mrb[0].mxu0
  %v6452 = vadd.f32 %v5996, %v6451
  %v6453 = vpop.f32.mrb[0].mxu0
  %v6454 = vpop.f32.mrb[0].mxu0
  %6455 = vdwg.mxu0
  %6456 = vmatprep.subr.bf16.mxu0 %v6212
  %6457 = vmatpush1.bf16.msra.mxu0 %v6211
  %6458 = vmatprep.subr.bf16.mxu0 %v6220
  %6459 = vmatpush1.bf16.msra.mxu0 %v6219
  %6460 = vmatprep.subr.bf16.mxu0 %v6228
  %6461 = vmatpush1.bf16.msra.mxu0 %v6227
  %6462 = vmatprep.subr.bf16.mxu0 %v6236
  %6463 = vmatpush1.bf16.msra.mxu0 %v6235
  %6464 = vmatprep.subr.bf16.mxu0 %v6244
  %6465 = vmatpush1.bf16.msra.mxu0 %v6243
  %6466 = vmatprep.subr.bf16.mxu0 %v6252
  %6467 = vmatpush1.bf16.msra.mxu0 %v6251
  %6468 = vmatprep.subr.bf16.mxu0 %v6260
  %6469 = vmatpush1.bf16.msra.mxu0 %v6259
  %6470 = vmatprep.subr.bf16.mxu0 %v6268
  %6471 = vmatpush1.bf16.msra.mxu0 %v6267
  %6472 = vmatprep.subr.bf16.mxu0 0
  %6473 = vmatpush1.bf16.msra.mxu0 0
  %6474 = vmatprep.subr.bf16.mxu0 0
  %6475 = vmatpush1.bf16.msra.mxu0 0
  %6476 = vmatprep.subr.bf16.mxu0 0
  %6477 = vmatpush1.bf16.msra.mxu0 0
  %6478 = vmatprep.subr.bf16.mxu0 0
  %6479 = vmatpush1.bf16.msra.mxu0 0
  %6480 = vmatprep.subr.bf16.mxu0 0
  %6481 = vmatpush1.bf16.msra.mxu0 0
  %6482 = vmatprep.subr.bf16.mxu0 0
  %6483 = vmatpush1.bf16.msra.mxu0 0
  %6484 = vmatprep.subr.bf16.mxu0 0
  %6485 = vmatpush1.bf16.msra.mxu0 0
  %6486 = vmatprep.subr.bf16.mxu0 0
  %6487 = vmatpush1.bf16.msra.mxu0 0
  %6488 = vmatprep.mubr.bf16.mxu0 0
  %6489 = vmatmul.mubr.bf16.gmra.mrb[0].mxu0 %v5906
  %v6490 = vpop.f32.mrb[0].mxu0
  %v6491 = vadd.f32 %v6000, %v6490
  %v6492 = vpop.f32.mrb[0].mxu0
  %v6493 = vadd.f32 %v6004, %v6492
  %v6494 = vpop.f32.mrb[0].mxu0
  %v6495 = vpop.f32.mrb[0].mxu0
  %6496 = vdwg.mxu0
  %v6497 = vld [vmem:[%s9] sm:$0xff]
  %v6499 = vlaneseq
  %v6500 = vshrl.u32 %v6499, 7
  %v6501 = vsub.s32 0, %v6500
  %v6502 = vrot.slane %v6497, %v6501
  %v6503 = vlaneseq
  %v6504 = vshrl.u32 %v6503, 7
  %v6505 = vsub.s32 1, %v6504
  %v6506 = vrot.slane %v6497, %v6505
  %v6507 = vlaneseq
  %v6508 = vshrl.u32 %v6507, 7
  %v6509 = vsub.s32 2, %v6508
  %v6510 = vrot.slane %v6497, %v6509
  %v6511 = vlaneseq
  %v6512 = vshrl.u32 %v6511, 7
  %v6513 = vsub.s32 3, %v6512
  %v6514 = vrot.slane %v6497, %v6513
  %v6515 = vlaneseq
  %v6516 = vshrl.u32 %v6515, 7
  %v6517 = vsub.s32 4, %v6516
  %v6518 = vrot.slane %v6497, %v6517
  %v6519 = vlaneseq
  %v6520 = vshrl.u32 %v6519, 7
  %v6521 = vsub.s32 5, %v6520
  %v6522 = vrot.slane %v6497, %v6521
  %v6523 = vlaneseq
  %v6524 = vshrl.u32 %v6523, 7
  %v6525 = vsub.s32 6, %v6524
  %v6526 = vrot.slane %v6497, %v6525
  %v6527 = vlaneseq
  %v6528 = vshrl.u32 %v6527, 7
  %v6529 = vsub.s32 7, %v6528
  %v6530 = vrot.slane %v6497, %v6529
  %v6539 = vmul.f32 %v6368, %v6502
  %v6540 = vmul.f32 %v6370, %v6506
  %v6541 = vmul.f32 %v6409, %v6510
  %v6542 = vmul.f32 %v6411, %v6514
  %v6543 = vmul.f32 %v6450, %v6518
  %v6544 = vmul.f32 %v6452, %v6522
  %v6545 = vmul.f32 %v6491, %v6526
  %v6546 = vmul.f32 %v6493, %v6530
  %v6547 = vadd.f32 %v6539, %v6540
  %v6548 = vadd.f32 %v6547, %v6541
  %v6549 = vadd.f32 %v6548, %v6542
  %v6550 = vadd.f32 %v6549, %v6543
  %v6551 = vadd.f32 %v6550, %v6544
  %v6552 = vadd.f32 %v6551, %v6545
  %v6553 = vadd.f32 %v6552, %v6546
  %6554 = vadd.xlane.f32.xlu0 %v6553
  %v6555 = vpop.xlane.xlu0 %6554
  %v6556 = vld [vmem:[#allocation2] sm:$0x1]
  %v6558 = vlaneseq
  %v6559 = vshrl.u32 %v6558, 7
  %v6560 = vsub.s32 0, %v6559
  %v6561 = vrot.slane %v6556, %v6560
  %v6563 = vadd.f32 %v6555, %v6561
  %vm6564 = vcmask 7168
  %6565 = vst.msk [vmem:[%s11] sm:$0xff] %vm6564, %v6563
  // Predicated region
  $region46: #{fishnet201_cls_forward.7} parent=0 // pred_check
    _
  $region47: #{fishnet201_cls_forward.7} parent=0 // pred_check_branch
    %6567 = sbr.rel (0) target = $region49
  $region48: #{fishnet201_cls_forward.7} parent=0 // pred_region
    _
  $region49: #{fishnet201_cls_forward.7} parent=0 // pred_fallthru
    _
  // Predicated region
  $region50: #{fishnet201_cls_forward.7} parent=0 // pred_check
    _
  $region51: #{fishnet201_cls_forward.7} parent=0 // pred_check_branch
    %6569 = sbr.rel (0) target = $region53
  $region52: #{fishnet201_cls_forward.7} parent=0 // pred_region
    _
  $region53: #{fishnet201_cls_forward.7} parent=0 // pred_fallthru
    _

</llo_original>
